<compile_context>
chip_gen: v6e
topology: v6e:2x2x1
jax: 0.10.0
libtpu: 0.0.40
codegen_flags: <defaults>
</compile_context>

<pallas_src>
import jax
import jax.numpy as jnp
from jax.experimental import pallas as pl
from jax.experimental.pallas import tpu as pltpu

_BN_EPS = 1e-5


# ----------------------------------------------------------------------------
# In-kernel helpers (traced inline; all operate on refs / values in VMEM)
# ----------------------------------------------------------------------------
def _im2col_into(patch_ref, padded_ref, N, H, W, C):
    """Assemble the (N*H*W, 9*C) im2col patch from a zero-padded NHWC buffer."""
    k = 0
    for dy in range(3):
        for dx in range(3):
            col = padded_ref[:, dy:dy + H, dx:dx + W, :].reshape(N * H * W, C)
            patch_ref[:, k * C:(k + 1) * C] = col
            k += 1


def _conv_bn_relu(patch_ref, w_ref, g_ref, beta_ref):
    """One MXU matmul (bf16 operands, f32 accum) + folded BatchNorm + ReLU.

    The conv bias is omitted: under training-mode BatchNorm the batch-mean
    subtraction cancels a per-channel constant bias exactly.
    """
    patch = patch_ref[...].astype(jnp.bfloat16)              # (M, 9*Cin) bf16
    acc = jnp.dot(patch, w_ref[...],                         # single MXU matmul
                  preferred_element_type=jnp.float32)        # (M, Cout) f32

    # BatchNorm2d (training mode): per-channel stats over all pixels, folded
    # into one scale/shift FMA.  var = E[x^2] - E[x]^2 (single pass over acc).
    m = jnp.mean(acc, axis=0, keepdims=True)                 # (1, Cout)
    m2 = jnp.mean(acc * acc, axis=0, keepdims=True)          # (1, Cout)
    var = m2 - m * m
    scale = g_ref[...] * jax.lax.rsqrt(var + _BN_EPS)        # (1, Cout)
    shift = beta_ref[...] - m * scale                        # (1, Cout)
    return jnp.maximum(acc * scale + shift, 0.0)             # ReLU, f32


# ----------------------------------------------------------------------------
# Fused kernel: conv1+BN1+ReLU -> conv2+BN2+ReLU -> (y, maxpool2x2(y))
# ----------------------------------------------------------------------------
def _encoder_block_kernel(x_ref, w1_ref, g1_ref, bt1_ref, w2_ref, g2_ref, bt2_ref,
                          y_ref, p_ref,
                          xpad_ref, ypad_ref, patch1_ref, patch2_ref, wtmp_ref):
    N, H, W, Cin = x_ref.shape
    Cout = y_ref.shape[-1]
    Hh, Wh = H // 2, W // 2

    # ---- stage 1: halo built in VMEM (no wrapper jnp.pad), then 1 matmul ----
    xpad_ref[...] = jnp.zeros_like(xpad_ref)
    xpad_ref[:, 1:H + 1, 1:W + 1, :] = x_ref[...]
    _im2col_into(patch1_ref, xpad_ref, N, H, W, Cin)
    h1 = _conv_bn_relu(patch1_ref, w1_ref, g1_ref, bt1_ref)   # (N*H*W, Cout) f32

    # ---- stage 2: intermediate stays in VMEM scratch ------------------------
    ypad_ref[...] = jnp.zeros_like(ypad_ref)
    ypad_ref[:, 1:H + 1, 1:W + 1, :] = h1.reshape(N, H, W, Cout)
    _im2col_into(patch2_ref, ypad_ref, N, H, W, Cout)
    h2 = _conv_bn_relu(patch2_ref, w2_ref, g2_ref, bt2_ref)   # (N*H*W, Cout) f32

    # ---- output: pre-pool feature map (single full store) -------------------
    y_ref[...] = h2.reshape(N, H, W, Cout).astype(y_ref.dtype)

    # ---- 2x2 maxpool, fully vectorised, single store ------------------------
    # Rows of h2 are ordered (n, h, w), so the W pairs are adjacent rows:
    # pool W with strided sublane reads, then pool H by exposing the H pair
    # index on a major dim and taking one pairwise max.
    wtmp_ref[...] = h2
    even = wtmp_ref[pl.ds(0, N * H * Wh, stride=2), :]        # w even
    odd = wtmp_ref[pl.ds(1, N * H * Wh, stride=2), :]         # w odd
    rw = jnp.maximum(even, odd)                               # (N*H*Wh, Cout)
    rw5 = rw.reshape(N, Hh, 2, Wh, Cout)                      # pair index on a major dim
    p = jnp.maximum(rw5[:, :, 0], rw5[:, :, 1])               # (N, Hh, Wh, Cout)
    p_ref[...] = p.astype(p_ref.dtype)


# ----------------------------------------------------------------------------
# Wrapper (NCHW public interface, NHWC inside the kernel)
# ----------------------------------------------------------------------------
_VMEM = pl.BlockSpec(memory_space=pltpu.MemorySpace.VMEM)


def encoder_block_forward(x_nchw, params):
    """Pallas implementation of encoder_block.forward. Input/outputs are NCHW."""
    N, Cin, H, W = x_nchw.shape
    Cout = params["w1"].shape[-1]
    assert H % 2 == 0 and W % 2 == 0, "MaxPool2d(2) floors; even H/W required here"

    x = jnp.transpose(x_nchw, (0, 2, 3, 1)).astype(jnp.float32)   # NCHW -> NHWC

    # Weights pre-reshaped to (9*Cin, Cout) and pre-cast to bf16 (MXU operands).
    # Conv biases b1/b2 are NOT passed: exactly cancelled by training-mode BN.
    w1 = params["w1"].reshape(9 * Cin, Cout).astype(jnp.bfloat16)
    w2 = params["w2"].reshape(9 * Cout, Cout).astype(jnp.bfloat16)
    g1 = params["g1"].reshape(1, Cout).astype(jnp.float32)
    bt1 = params["beta1"].reshape(1, Cout).astype(jnp.float32)
    g2 = params["g2"].reshape(1, Cout).astype(jnp.float32)
    bt2 = params["beta2"].reshape(1, Cout).astype(jnp.float32)

    y, p = pl.pallas_call(
        _encoder_block_kernel,
        out_shape=(jax.ShapeDtypeStruct((N, H, W, Cout), jnp.float32),
                   jax.ShapeDtypeStruct((N, H // 2, W // 2, Cout), jnp.float32)),
        in_specs=[_VMEM] * 7,
        out_specs=(_VMEM, _VMEM),
        scratch_shapes=[
            pltpu.VMEM((N, H + 2, W + 2, Cin), jnp.float32),    # padded input
            pltpu.VMEM((N, H + 2, W + 2, Cout), jnp.float32),   # padded stage-1 out
            pltpu.VMEM((N * H * W, 9 * Cin), jnp.float32),      # im2col patch 1
            pltpu.VMEM((N * H * W, 9 * Cout), jnp.float32),     # im2col patch 2
            pltpu.VMEM((N * H * W, Cout), jnp.float32),         # maxpool staging
        ],
    )(x, w1, g1, bt1, w2, g2, bt2)

    return jnp.transpose(y, (0, 3, 1, 2)), jnp.transpose(p, (0, 3, 1, 2))


# ----------------------------------------------------------------------------
# Pure-JAX reference (f32, HIGHEST precision) for a self-check
# ----------------------------------------------------------------------------
def _ref_encoder_block(x_nchw, params):
    x = jnp.transpose(x_nchw, (0, 2, 3, 1)).astype(jnp.float32)

    def cbr(x, w, b, g, bt):
        y = jax.lax.conv_general_dilated(
            x, w, (1, 1), "SAME",
            dimension_numbers=("NHWC", "HWIO", "NHWC"),
            precision=jax.lax.Precision.HIGHEST) + b
        m = jnp.mean(y, axis=(0, 1, 2), keepdims=True)
        v = jnp.mean((y - m) ** 2, axis=(0, 1, 2), keepdims=True)
        y = (y - m) * jax.lax.rsqrt(v + _BN_EPS) * g + bt
        return jnp.maximum(y, 0.0)

    y = cbr(x, params["w1"], params["b1"], params["g1"], params["beta1"])
    y = cbr(y, params["w2"], params["b2"], params["g2"], params["beta2"])
    N, H, W, C = y.shape
    p = y.reshape(N, H // 2, 2, W // 2, 2, C).max(axis=(2, 4))
    return jnp.transpose(y, (0, 3, 1, 2)), jnp.transpose(p, (0, 3, 1, 2))


if __name__ == "__main__":
    key = jax.random.PRNGKey(0)
    kx, k1, k2, k3, k4, k5, k6, k7, k8 = jax.random.split(key, 9)

    N, Cin, H, W, Cout = 2, 4, 16, 16, 8
    x_nchw = jax.random.normal(kx, (N, Cin, H, W), jnp.float32)

    # Deterministic synthetic parameters (conv weights stored HWIO).
    # b1/b2 exist (PyTorch Conv2d has bias) but are mathematically inert under
    # training-mode BatchNorm; the reference uses them, the kernel drops them.
    params = dict(
        w1=0.1 * jax.random.normal(k1, (3, 3, Cin, Cout), jnp.float32),
        b1=0.1 * jax.random.normal(k2, (Cout,), jnp.float32),
        g1=1.0 + 0.1 * jax.random.normal(k3, (Cout,), jnp.float32),
        beta1=0.1 * jax.random.normal(k4, (Cout,), jnp.float32),
        w2=0.1 * jax.random.normal(k5, (3, 3, Cout, Cout), jnp.float32),
        b2=0.1 * jax.random.normal(k6, (Cout,), jnp.float32),
        g2=1.0 + 0.1 * jax.random.normal(k7, (Cout,), jnp.float32),
        beta2=0.1 * jax.random.normal(k8, (Cout,), jnp.float32),
    )

    x_out, p_out = jax.jit(encoder_block_forward)(x_nchw, params)
    jax.block_until_ready((x_out, p_out))

    assert x_out.shape == (N, Cout, H, W)
    assert p_out.shape == (N, Cout, H // 2, W // 2)

    x_exp, p_exp = _ref_encoder_block(x_nchw, params)
    # bf16 MXU operands vs an f32 HIGHEST-precision reference -> loose tolerance.
    assert jnp.allclose(x_out, x_exp, atol=5e-2, rtol=5e-2)
    assert jnp.allclose(p_out, p_exp, atol=5e-2, rtol=5e-2)

    print("KERNEL_OK")
</pallas_src>

<mosaic_0001>
module attributes {stable_mosaic.version = 11 : i64} {
  func.func @_encoder_block_kernel(%arg0: memref<2x16x16x4xf32, #tpu.memory_space<vmem>>, %arg1: memref<36x8xbf16, #tpu.memory_space<vmem>>, %arg2: memref<1x8xf32, #tpu.memory_space<vmem>>, %arg3: memref<1x8xf32, #tpu.memory_space<vmem>>, %arg4: memref<72x8xbf16, #tpu.memory_space<vmem>>, %arg5: memref<1x8xf32, #tpu.memory_space<vmem>>, %arg6: memref<1x8xf32, #tpu.memory_space<vmem>>, %arg7: memref<2x16x16x8xf32, #tpu.memory_space<vmem>>, %arg8: memref<2x8x8x8xf32, #tpu.memory_space<vmem>>, %arg9: memref<2x18x18x4xf32, #tpu.memory_space<vmem>>, %arg10: memref<2x18x18x8xf32, #tpu.memory_space<vmem>>, %arg11: memref<512x36xf32, #tpu.memory_space<vmem>>, %arg12: memref<512x72xf32, #tpu.memory_space<vmem>>, %arg13: memref<512x8xf32, #tpu.memory_space<vmem>>) attributes {dimension_semantics = [], scalar_prefetch = 0 : i64, scratch_operands = 5 : i64, tpu.core_type = #tpu.core_type<tc>} {
    %cst = arith.constant 0.000000e+00 : f32
    %0 = vector.broadcast %cst : f32 to vector<2x18x18x4xf32>
    %c0 = arith.constant 0 : index
    %c0_0 = arith.constant 0 : index
    %c0_1 = arith.constant 0 : index
    %c0_2 = arith.constant 0 : index
    %1 = vector.load %arg9[%c0, %c0_0, %c0_1, %c0_2] : memref<2x18x18x4xf32, #tpu.memory_space<vmem>>, vector<2x18x18x4xf32>
    tpu.vector_store %arg9[%c0, %c0_0, %c0_1, %c0_2], %0 {strides = array<i32>} : memref<2x18x18x4xf32, #tpu.memory_space<vmem>>, vector<2x18x18x4xf32>,
    %c0_3 = arith.constant 0 : index
    %c0_4 = arith.constant 0 : index
    %c0_5 = arith.constant 0 : index
    %c0_6 = arith.constant 0 : index
    %2 = vector.load %arg0[%c0_3, %c0_4, %c0_5, %c0_6] : memref<2x16x16x4xf32, #tpu.memory_space<vmem>>, vector<2x16x16x4xf32>
    %c0_7 = arith.constant 0 : index
    %c1 = arith.constant 1 : index
    %c1_8 = arith.constant 1 : index
    %c0_9 = arith.constant 0 : index
    %3 = vector.load %arg9[%c0_7, %c1, %c1_8, %c0_9] : memref<2x18x18x4xf32, #tpu.memory_space<vmem>>, vector<2x16x16x4xf32>
    tpu.vector_store %arg9[%c0_7, %c1, %c1_8, %c0_9], %2 {strides = array<i32>} : memref<2x18x18x4xf32, #tpu.memory_space<vmem>>, vector<2x16x16x4xf32>,
    %c0_10 = arith.constant 0 : index
    %c0_11 = arith.constant 0 : index
    %c0_12 = arith.constant 0 : index
    %c0_13 = arith.constant 0 : index
    %4 = vector.load %arg9[%c0_10, %c0_11, %c0_12, %c0_13] : memref<2x18x18x4xf32, #tpu.memory_space<vmem>>, vector<2x16x16x4xf32>
    %5 = vector.shape_cast %4 : vector<2x16x16x4xf32> to vector<512x4xf32>
    %c0_14 = arith.constant 0 : index
    %c0_15 = arith.constant 0 : index
    %6 = vector.load %arg11[%c0_14, %c0_15] : memref<512x36xf32, #tpu.memory_space<vmem>>, vector<512x4xf32>
    tpu.vector_store %arg11[%c0_14, %c0_15], %5 {strides = array<i32>} : memref<512x36xf32, #tpu.memory_space<vmem>>, vector<512x4xf32>,
    %c0_16 = arith.constant 0 : index
    %c0_17 = arith.constant 0 : index
    %c1_18 = arith.constant 1 : index
    %c0_19 = arith.constant 0 : index
    %7 = vector.load %arg9[%c0_16, %c0_17, %c1_18, %c0_19] : memref<2x18x18x4xf32, #tpu.memory_space<vmem>>, vector<2x16x16x4xf32>
    %8 = vector.shape_cast %7 : vector<2x16x16x4xf32> to vector<512x4xf32>
    %c0_20 = arith.constant 0 : index
    %c4 = arith.constant 4 : index
    %9 = vector.load %arg11[%c0_20, %c4] : memref<512x36xf32, #tpu.memory_space<vmem>>, vector<512x4xf32>
    tpu.vector_store %arg11[%c0_20, %c4], %8 {strides = array<i32>} : memref<512x36xf32, #tpu.memory_space<vmem>>, vector<512x4xf32>,
    %c0_21 = arith.constant 0 : index
    %c0_22 = arith.constant 0 : index
    %c2 = arith.constant 2 : index
    %c0_23 = arith.constant 0 : index
    %10 = vector.load %arg9[%c0_21, %c0_22, %c2, %c0_23] : memref<2x18x18x4xf32, #tpu.memory_space<vmem>>, vector<2x16x16x4xf32>
    %11 = vector.shape_cast %10 : vector<2x16x16x4xf32> to vector<512x4xf32>
    %c0_24 = arith.constant 0 : index
    %c8 = arith.constant 8 : index
    %12 = vector.load %arg11[%c0_24, %c8] : memref<512x36xf32, #tpu.memory_space<vmem>>, vector<512x4xf32>
    tpu.vector_store %arg11[%c0_24, %c8], %11 {strides = array<i32>} : memref<512x36xf32, #tpu.memory_space<vmem>>, vector<512x4xf32>,
    %c0_25 = arith.constant 0 : index
    %c1_26 = arith.constant 1 : index
    %c0_27 = arith.constant 0 : index
    %c0_28 = arith.constant 0 : index
    %13 = vector.load %arg9[%c0_25, %c1_26, %c0_27, %c0_28] : memref<2x18x18x4xf32, #tpu.memory_space<vmem>>, vector<2x16x16x4xf32>
    %14 = vector.shape_cast %13 : vector<2x16x16x4xf32> to vector<512x4xf32>
    %c0_29 = arith.constant 0 : index
    %c12 = arith.constant 12 : index
    %15 = vector.load %arg11[%c0_29, %c12] : memref<512x36xf32, #tpu.memory_space<vmem>>, vector<512x4xf32>
    tpu.vector_store %arg11[%c0_29, %c12], %14 {strides = array<i32>} : memref<512x36xf32, #tpu.memory_space<vmem>>, vector<512x4xf32>,
    %c0_30 = arith.constant 0 : index
    %c1_31 = arith.constant 1 : index
    %c1_32 = arith.constant 1 : index
    %c0_33 = arith.constant 0 : index
    %16 = vector.load %arg9[%c0_30, %c1_31, %c1_32, %c0_33] : memref<2x18x18x4xf32, #tpu.memory_space<vmem>>, vector<2x16x16x4xf32>
    %17 = vector.shape_cast %16 : vector<2x16x16x4xf32> to vector<512x4xf32>
    %c0_34 = arith.constant 0 : index
    %c16 = arith.constant 16 : index
    %18 = vector.load %arg11[%c0_34, %c16] : memref<512x36xf32, #tpu.memory_space<vmem>>, vector<512x4xf32>
    tpu.vector_store %arg11[%c0_34, %c16], %17 {strides = array<i32>} : memref<512x36xf32, #tpu.memory_space<vmem>>, vector<512x4xf32>,
    %c0_35 = arith.constant 0 : index
    %c1_36 = arith.constant 1 : index
    %c2_37 = arith.constant 2 : index
    %c0_38 = arith.constant 0 : index
    %19 = vector.load %arg9[%c0_35, %c1_36, %c2_37, %c0_38] : memref<2x18x18x4xf32, #tpu.memory_space<vmem>>, vector<2x16x16x4xf32>
    %20 = vector.shape_cast %19 : vector<2x16x16x4xf32> to vector<512x4xf32>
    %c0_39 = arith.constant 0 : index
    %c20 = arith.constant 20 : index
    %21 = vector.load %arg11[%c0_39, %c20] : memref<512x36xf32, #tpu.memory_space<vmem>>, vector<512x4xf32>
    tpu.vector_store %arg11[%c0_39, %c20], %20 {strides = array<i32>} : memref<512x36xf32, #tpu.memory_space<vmem>>, vector<512x4xf32>,
    %c0_40 = arith.constant 0 : index
    %c2_41 = arith.constant 2 : index
    %c0_42 = arith.constant 0 : index
    %c0_43 = arith.constant 0 : index
    %22 = vector.load %arg9[%c0_40, %c2_41, %c0_42, %c0_43] : memref<2x18x18x4xf32, #tpu.memory_space<vmem>>, vector<2x16x16x4xf32>
    %23 = vector.shape_cast %22 : vector<2x16x16x4xf32> to vector<512x4xf32>
    %c0_44 = arith.constant 0 : index
    %c24 = arith.constant 24 : index
    %24 = vector.load %arg11[%c0_44, %c24] : memref<512x36xf32, #tpu.memory_space<vmem>>, vector<512x4xf32>
    tpu.vector_store %arg11[%c0_44, %c24], %23 {strides = array<i32>} : memref<512x36xf32, #tpu.memory_space<vmem>>, vector<512x4xf32>,
    %c0_45 = arith.constant 0 : index
    %c2_46 = arith.constant 2 : index
    %c1_47 = arith.constant 1 : index
    %c0_48 = arith.constant 0 : index
    %25 = vector.load %arg9[%c0_45, %c2_46, %c1_47, %c0_48] : memref<2x18x18x4xf32, #tpu.memory_space<vmem>>, vector<2x16x16x4xf32>
    %26 = vector.shape_cast %25 : vector<2x16x16x4xf32> to vector<512x4xf32>
    %c0_49 = arith.constant 0 : index
    %c28 = arith.constant 28 : index
    %27 = vector.load %arg11[%c0_49, %c28] : memref<512x36xf32, #tpu.memory_space<vmem>>, vector<512x4xf32>
    tpu.vector_store %arg11[%c0_49, %c28], %26 {strides = array<i32>} : memref<512x36xf32, #tpu.memory_space<vmem>>, vector<512x4xf32>,
    %c0_50 = arith.constant 0 : index
    %c2_51 = arith.constant 2 : index
    %c2_52 = arith.constant 2 : index
    %c0_53 = arith.constant 0 : index
    %28 = vector.load %arg9[%c0_50, %c2_51, %c2_52, %c0_53] : memref<2x18x18x4xf32, #tpu.memory_space<vmem>>, vector<2x16x16x4xf32>
    %29 = vector.shape_cast %28 : vector<2x16x16x4xf32> to vector<512x4xf32>
    %c0_54 = arith.constant 0 : index
    %c32 = arith.constant 32 : index
    %30 = vector.load %arg11[%c0_54, %c32] : memref<512x36xf32, #tpu.memory_space<vmem>>, vector<512x4xf32>
    tpu.vector_store %arg11[%c0_54, %c32], %29 {strides = array<i32>} : memref<512x36xf32, #tpu.memory_space<vmem>>, vector<512x4xf32>,
    %c0_55 = arith.constant 0 : index
    %c0_56 = arith.constant 0 : index
    %31 = vector.load %arg11[%c0_55, %c0_56] : memref<512x36xf32, #tpu.memory_space<vmem>>, vector<512x36xf32>
    %32 = arith.truncf %31 : vector<512x36xf32> to vector<512x36xbf16>
    %c0_57 = arith.constant 0 : index
    %c0_58 = arith.constant 0 : index
    %33 = vector.load %arg1[%c0_57, %c0_58] : memref<36x8xbf16, #tpu.memory_space<vmem>>, vector<36x8xbf16>
    %cst_59 = arith.constant dense<0.000000e+00> : vector<512x8xf32>
    %34 = tpu.matmul %32, %33, %cst_59 {dimension_numbers = #tpu.dot_dimension_numbers<[1], [0], [0], [1], [0, 0, 1, 1], [], []>} : vector<512x36xbf16>, vector<36x8xbf16>, vector<512x8xf32> -> vector<512x8xf32>
    %cst_60 = arith.constant dense<0.000000e+00> : vector<8xf32>
    %35 = vector.multi_reduction <add>, %34, %cst_60 [0] : vector<512x8xf32> to vector<8xf32>
    %36 = vector.shape_cast %35 : vector<8xf32> to vector<1x8xf32>
    %cst_61 = arith.constant 5.120000e+02 : f32
    %37 = vector.broadcast %cst_61 : f32 to vector<1x8xf32>
    %38 = arith.divf %36, %37 : vector<1x8xf32>
    %39 = arith.mulf %34, %34 : vector<512x8xf32>
    %cst_62 = arith.constant dense<0.000000e+00> : vector<8xf32>
    %40 = vector.multi_reduction <add>, %39, %cst_62 [0] : vector<512x8xf32> to vector<8xf32>
    %41 = vector.shape_cast %40 : vector<8xf32> to vector<1x8xf32>
    %cst_63 = arith.constant 5.120000e+02 : f32
    %42 = vector.broadcast %cst_63 : f32 to vector<1x8xf32>
    %43 = arith.divf %41, %42 : vector<1x8xf32>
    %44 = arith.mulf %38, %38 : vector<1x8xf32>
    %45 = arith.subf %43, %44 : vector<1x8xf32>
    %c0_64 = arith.constant 0 : index
    %c0_65 = arith.constant 0 : index
    %46 = vector.load %arg2[%c0_64, %c0_65] : memref<1x8xf32, #tpu.memory_space<vmem>>, vector<1x8xf32>
    %cst_66 = arith.constant 9.99999974E-6 : f32
    %47 = vector.broadcast %cst_66 : f32 to vector<1x8xf32>
    %48 = arith.addf %45, %47 : vector<1x8xf32>
    %49 = math.rsqrt %48 : vector<1x8xf32>
    %50 = arith.mulf %46, %49 : vector<1x8xf32>
    %c0_67 = arith.constant 0 : index
    %c0_68 = arith.constant 0 : index
    %51 = vector.load %arg3[%c0_67, %c0_68] : memref<1x8xf32, #tpu.memory_space<vmem>>, vector<1x8xf32>
    %52 = arith.mulf %38, %50 : vector<1x8xf32>
    %53 = arith.subf %51, %52 : vector<1x8xf32>
    %54 = vector.broadcast %50 : vector<1x8xf32> to vector<512x8xf32>
    %55 = arith.mulf %34, %54 : vector<512x8xf32>
    %56 = vector.broadcast %53 : vector<1x8xf32> to vector<512x8xf32>
    %57 = arith.addf %55, %56 : vector<512x8xf32>
    %cst_69 = arith.constant 0.000000e+00 : f32
    %58 = vector.broadcast %cst_69 : f32 to vector<512x8xf32>
    %59 = arith.maximumf %57, %58 : vector<512x8xf32>
    %cst_70 = arith.constant 0.000000e+00 : f32
    %60 = vector.broadcast %cst_70 : f32 to vector<2x18x18x8xf32>
    %c0_71 = arith.constant 0 : index
    %c0_72 = arith.constant 0 : index
    %c0_73 = arith.constant 0 : index
    %c0_74 = arith.constant 0 : index
    %61 = vector.load %arg10[%c0_71, %c0_72, %c0_73, %c0_74] : memref<2x18x18x8xf32, #tpu.memory_space<vmem>>, vector<2x18x18x8xf32>
    tpu.vector_store %arg10[%c0_71, %c0_72, %c0_73, %c0_74], %60 {strides = array<i32>} : memref<2x18x18x8xf32, #tpu.memory_space<vmem>>, vector<2x18x18x8xf32>,
    %62 = vector.shape_cast %59 : vector<512x8xf32> to vector<2x16x16x8xf32>
    %c0_75 = arith.constant 0 : index
    %c1_76 = arith.constant 1 : index
    %c1_77 = arith.constant 1 : index
    %c0_78 = arith.constant 0 : index
    %63 = vector.load %arg10[%c0_75, %c1_76, %c1_77, %c0_78] : memref<2x18x18x8xf32, #tpu.memory_space<vmem>>, vector<2x16x16x8xf32>
    tpu.vector_store %arg10[%c0_75, %c1_76, %c1_77, %c0_78], %62 {strides = array<i32>} : memref<2x18x18x8xf32, #tpu.memory_space<vmem>>, vector<2x16x16x8xf32>,
    %c0_79 = arith.constant 0 : index
    %c0_80 = arith.constant 0 : index
    %c0_81 = arith.constant 0 : index
    %c0_82 = arith.constant 0 : index
    %64 = vector.load %arg10[%c0_79, %c0_80, %c0_81, %c0_82] : memref<2x18x18x8xf32, #tpu.memory_space<vmem>>, vector<2x16x16x8xf32>
    %65 = vector.shape_cast %64 : vector<2x16x16x8xf32> to vector<512x8xf32>
    %c0_83 = arith.constant 0 : index
    %c0_84 = arith.constant 0 : index
    %66 = vector.load %arg12[%c0_83, %c0_84] : memref<512x72xf32, #tpu.memory_space<vmem>>, vector<512x8xf32>
    tpu.vector_store %arg12[%c0_83, %c0_84], %65 {strides = array<i32>} : memref<512x72xf32, #tpu.memory_space<vmem>>, vector<512x8xf32>,
    %c0_85 = arith.constant 0 : index
    %c0_86 = arith.constant 0 : index
    %c1_87 = arith.constant 1 : index
    %c0_88 = arith.constant 0 : index
    %67 = vector.load %arg10[%c0_85, %c0_86, %c1_87, %c0_88] : memref<2x18x18x8xf32, #tpu.memory_space<vmem>>, vector<2x16x16x8xf32>
    %68 = vector.shape_cast %67 : vector<2x16x16x8xf32> to vector<512x8xf32>
    %c0_89 = arith.constant 0 : index
    %c8_90 = arith.constant 8 : index
    %69 = vector.load %arg12[%c0_89, %c8_90] : memref<512x72xf32, #tpu.memory_space<vmem>>, vector<512x8xf32>
    tpu.vector_store %arg12[%c0_89, %c8_90], %68 {strides = array<i32>} : memref<512x72xf32, #tpu.memory_space<vmem>>, vector<512x8xf32>,
    %c0_91 = arith.constant 0 : index
    %c0_92 = arith.constant 0 : index
    %c2_93 = arith.constant 2 : index
    %c0_94 = arith.constant 0 : index
    %70 = vector.load %arg10[%c0_91, %c0_92, %c2_93, %c0_94] : memref<2x18x18x8xf32, #tpu.memory_space<vmem>>, vector<2x16x16x8xf32>
    %71 = vector.shape_cast %70 : vector<2x16x16x8xf32> to vector<512x8xf32>
    %c0_95 = arith.constant 0 : index
    %c16_96 = arith.constant 16 : index
    %72 = vector.load %arg12[%c0_95, %c16_96] : memref<512x72xf32, #tpu.memory_space<vmem>>, vector<512x8xf32>
    tpu.vector_store %arg12[%c0_95, %c16_96], %71 {strides = array<i32>} : memref<512x72xf32, #tpu.memory_space<vmem>>, vector<512x8xf32>,
    %c0_97 = arith.constant 0 : index
    %c1_98 = arith.constant 1 : index
    %c0_99 = arith.constant 0 : index
    %c0_100 = arith.constant 0 : index
    %73 = vector.load %arg10[%c0_97, %c1_98, %c0_99, %c0_100] : memref<2x18x18x8xf32, #tpu.memory_space<vmem>>, vector<2x16x16x8xf32>
    %74 = vector.shape_cast %73 : vector<2x16x16x8xf32> to vector<512x8xf32>
    %c0_101 = arith.constant 0 : index
    %c24_102 = arith.constant 24 : index
    %75 = vector.load %arg12[%c0_101, %c24_102] : memref<512x72xf32, #tpu.memory_space<vmem>>, vector<512x8xf32>
    tpu.vector_store %arg12[%c0_101, %c24_102], %74 {strides = array<i32>} : memref<512x72xf32, #tpu.memory_space<vmem>>, vector<512x8xf32>,
    %c0_103 = arith.constant 0 : index
    %c1_104 = arith.constant 1 : index
    %c1_105 = arith.constant 1 : index
    %c0_106 = arith.constant 0 : index
    %76 = vector.load %arg10[%c0_103, %c1_104, %c1_105, %c0_106] : memref<2x18x18x8xf32, #tpu.memory_space<vmem>>, vector<2x16x16x8xf32>
    %77 = vector.shape_cast %76 : vector<2x16x16x8xf32> to vector<512x8xf32>
    %c0_107 = arith.constant 0 : index
    %c32_108 = arith.constant 32 : index
    %78 = vector.load %arg12[%c0_107, %c32_108] : memref<512x72xf32, #tpu.memory_space<vmem>>, vector<512x8xf32>
    tpu.vector_store %arg12[%c0_107, %c32_108], %77 {strides = array<i32>} : memref<512x72xf32, #tpu.memory_space<vmem>>, vector<512x8xf32>,
    %c0_109 = arith.constant 0 : index
    %c1_110 = arith.constant 1 : index
    %c2_111 = arith.constant 2 : index
    %c0_112 = arith.constant 0 : index
    %79 = vector.load %arg10[%c0_109, %c1_110, %c2_111, %c0_112] : memref<2x18x18x8xf32, #tpu.memory_space<vmem>>, vector<2x16x16x8xf32>
    %80 = vector.shape_cast %79 : vector<2x16x16x8xf32> to vector<512x8xf32>
    %c0_113 = arith.constant 0 : index
    %c40 = arith.constant 40 : index
    %81 = vector.load %arg12[%c0_113, %c40] : memref<512x72xf32, #tpu.memory_space<vmem>>, vector<512x8xf32>
    tpu.vector_store %arg12[%c0_113, %c40], %80 {strides = array<i32>} : memref<512x72xf32, #tpu.memory_space<vmem>>, vector<512x8xf32>,
    %c0_114 = arith.constant 0 : index
    %c2_115 = arith.constant 2 : index
    %c0_116 = arith.constant 0 : index
    %c0_117 = arith.constant 0 : index
    %82 = vector.load %arg10[%c0_114, %c2_115, %c0_116, %c0_117] : memref<2x18x18x8xf32, #tpu.memory_space<vmem>>, vector<2x16x16x8xf32>
    %83 = vector.shape_cast %82 : vector<2x16x16x8xf32> to vector<512x8xf32>
    %c0_118 = arith.constant 0 : index
    %c48 = arith.constant 48 : index
    %84 = vector.load %arg12[%c0_118, %c48] : memref<512x72xf32, #tpu.memory_space<vmem>>, vector<512x8xf32>
    tpu.vector_store %arg12[%c0_118, %c48], %83 {strides = array<i32>} : memref<512x72xf32, #tpu.memory_space<vmem>>, vector<512x8xf32>,
    %c0_119 = arith.constant 0 : index
    %c2_120 = arith.constant 2 : index
    %c1_121 = arith.constant 1 : index
    %c0_122 = arith.constant 0 : index
    %85 = vector.load %arg10[%c0_119, %c2_120, %c1_121, %c0_122] : memref<2x18x18x8xf32, #tpu.memory_space<vmem>>, vector<2x16x16x8xf32>
    %86 = vector.shape_cast %85 : vector<2x16x16x8xf32> to vector<512x8xf32>
    %c0_123 = arith.constant 0 : index
    %c56 = arith.constant 56 : index
    %87 = vector.load %arg12[%c0_123, %c56] : memref<512x72xf32, #tpu.memory_space<vmem>>, vector<512x8xf32>
    tpu.vector_store %arg12[%c0_123, %c56], %86 {strides = array<i32>} : memref<512x72xf32, #tpu.memory_space<vmem>>, vector<512x8xf32>,
    %c0_124 = arith.constant 0 : index
    %c2_125 = arith.constant 2 : index
    %c2_126 = arith.constant 2 : index
    %c0_127 = arith.constant 0 : index
    %88 = vector.load %arg10[%c0_124, %c2_125, %c2_126, %c0_127] : memref<2x18x18x8xf32, #tpu.memory_space<vmem>>, vector<2x16x16x8xf32>
    %89 = vector.shape_cast %88 : vector<2x16x16x8xf32> to vector<512x8xf32>
    %c0_128 = arith.constant 0 : index
    %c64 = arith.constant 64 : index
    %90 = vector.load %arg12[%c0_128, %c64] : memref<512x72xf32, #tpu.memory_space<vmem>>, vector<512x8xf32>
    tpu.vector_store %arg12[%c0_128, %c64], %89 {strides = array<i32>} : memref<512x72xf32, #tpu.memory_space<vmem>>, vector<512x8xf32>,
    %c0_129 = arith.constant 0 : index
    %c0_130 = arith.constant 0 : index
    %91 = vector.load %arg12[%c0_129, %c0_130] : memref<512x72xf32, #tpu.memory_space<vmem>>, vector<512x72xf32>
    %92 = arith.truncf %91 : vector<512x72xf32> to vector<512x72xbf16>
    %c0_131 = arith.constant 0 : index
    %c0_132 = arith.constant 0 : index
    %93 = vector.load %arg4[%c0_131, %c0_132] : memref<72x8xbf16, #tpu.memory_space<vmem>>, vector<72x8xbf16>
    %cst_133 = arith.constant dense<0.000000e+00> : vector<512x8xf32>
    %94 = tpu.matmul %92, %93, %cst_133 {dimension_numbers = #tpu.dot_dimension_numbers<[1], [0], [0], [1], [0, 0, 1, 1], [], []>} : vector<512x72xbf16>, vector<72x8xbf16>, vector<512x8xf32> -> vector<512x8xf32>
    %cst_134 = arith.constant dense<0.000000e+00> : vector<8xf32>
    %95 = vector.multi_reduction <add>, %94, %cst_134 [0] : vector<512x8xf32> to vector<8xf32>
    %96 = vector.shape_cast %95 : vector<8xf32> to vector<1x8xf32>
    %cst_135 = arith.constant 5.120000e+02 : f32
    %97 = vector.broadcast %cst_135 : f32 to vector<1x8xf32>
    %98 = arith.divf %96, %97 : vector<1x8xf32>
    %99 = arith.mulf %94, %94 : vector<512x8xf32>
    %cst_136 = arith.constant dense<0.000000e+00> : vector<8xf32>
    %100 = vector.multi_reduction <add>, %99, %cst_136 [0] : vector<512x8xf32> to vector<8xf32>
    %101 = vector.shape_cast %100 : vector<8xf32> to vector<1x8xf32>
    %cst_137 = arith.constant 5.120000e+02 : f32
    %102 = vector.broadcast %cst_137 : f32 to vector<1x8xf32>
    %103 = arith.divf %101, %102 : vector<1x8xf32>
    %104 = arith.mulf %98, %98 : vector<1x8xf32>
    %105 = arith.subf %103, %104 : vector<1x8xf32>
    %c0_138 = arith.constant 0 : index
    %c0_139 = arith.constant 0 : index
    %106 = vector.load %arg5[%c0_138, %c0_139] : memref<1x8xf32, #tpu.memory_space<vmem>>, vector<1x8xf32>
    %cst_140 = arith.constant 9.99999974E-6 : f32
    %107 = vector.broadcast %cst_140 : f32 to vector<1x8xf32>
    %108 = arith.addf %105, %107 : vector<1x8xf32>
    %109 = math.rsqrt %108 : vector<1x8xf32>
    %110 = arith.mulf %106, %109 : vector<1x8xf32>
    %c0_141 = arith.constant 0 : index
    %c0_142 = arith.constant 0 : index
    %111 = vector.load %arg6[%c0_141, %c0_142] : memref<1x8xf32, #tpu.memory_space<vmem>>, vector<1x8xf32>
    %112 = arith.mulf %98, %110 : vector<1x8xf32>
    %113 = arith.subf %111, %112 : vector<1x8xf32>
    %114 = vector.broadcast %110 : vector<1x8xf32> to vector<512x8xf32>
    %115 = arith.mulf %94, %114 : vector<512x8xf32>
    %116 = vector.broadcast %113 : vector<1x8xf32> to vector<512x8xf32>
    %117 = arith.addf %115, %116 : vector<512x8xf32>
    %cst_143 = arith.constant 0.000000e+00 : f32
    %118 = vector.broadcast %cst_143 : f32 to vector<512x8xf32>
    %119 = arith.maximumf %117, %118 : vector<512x8xf32>
    %120 = vector.shape_cast %119 : vector<512x8xf32> to vector<2x16x16x8xf32>
    %c0_144 = arith.constant 0 : index
    %c0_145 = arith.constant 0 : index
    %c0_146 = arith.constant 0 : index
    %c0_147 = arith.constant 0 : index
    %121 = vector.load %arg7[%c0_144, %c0_145, %c0_146, %c0_147] : memref<2x16x16x8xf32, #tpu.memory_space<vmem>>, vector<2x16x16x8xf32>
    tpu.vector_store %arg7[%c0_144, %c0_145, %c0_146, %c0_147], %120 {strides = array<i32>} : memref<2x16x16x8xf32, #tpu.memory_space<vmem>>, vector<2x16x16x8xf32>,
    %c0_148 = arith.constant 0 : index
    %c0_149 = arith.constant 0 : index
    %122 = vector.load %arg13[%c0_148, %c0_149] : memref<512x8xf32, #tpu.memory_space<vmem>>, vector<512x8xf32>
    tpu.vector_store %arg13[%c0_148, %c0_149], %119 {strides = array<i32>} : memref<512x8xf32, #tpu.memory_space<vmem>>, vector<512x8xf32>,
    %c0_150 = arith.constant 0 : index
    %c0_151 = arith.constant 0 : index
    %123 = tpu.strided_load %arg13[%c0_150, %c0_151] {strides = array<i32: 2, 1>} : memref<512x8xf32, #tpu.memory_space<vmem>>, vector<256x8xf32>
    %c1_152 = arith.constant 1 : index
    %c0_153 = arith.constant 0 : index
    %124 = tpu.strided_load %arg13[%c1_152, %c0_153] {strides = array<i32: 2, 1>} : memref<512x8xf32, #tpu.memory_space<vmem>>, vector<256x8xf32>
    %125 = arith.maximumf %123, %124 : vector<256x8xf32>
    %126 = vector.shape_cast %125 : vector<256x8xf32> to vector<2x8x2x8x8xf32>
    %127 = vector.extract_strided_slice %126 {offsets = [0, 0, 0, 0, 0], sizes = [2, 8, 1, 8, 8], strides = [1, 1, 1, 1, 1]} : vector<2x8x2x8x8xf32> to vector<2x8x1x8x8xf32>
    %128 = vector.shape_cast %127 : vector<2x8x1x8x8xf32> to vector<2x8x8x8xf32>
    %129 = vector.extract_strided_slice %126 {offsets = [0, 0, 1, 0, 0], sizes = [2, 8, 1, 8, 8], strides = [1, 1, 1, 1, 1]} : vector<2x8x2x8x8xf32> to vector<2x8x1x8x8xf32>
    %130 = vector.shape_cast %129 : vector<2x8x1x8x8xf32> to vector<2x8x8x8xf32>
    %131 = arith.maximumf %128, %130 : vector<2x8x8x8xf32>
    %c0_154 = arith.constant 0 : index
    %c0_155 = arith.constant 0 : index
    %c0_156 = arith.constant 0 : index
    %c0_157 = arith.constant 0 : index
    %132 = vector.load %arg8[%c0_154, %c0_155, %c0_156, %c0_157] : memref<2x8x8x8xf32, #tpu.memory_space<vmem>>, vector<2x8x8x8xf32>
    tpu.vector_store %arg8[%c0_154, %c0_155, %c0_156, %c0_157], %131 {strides = array<i32>} : memref<2x8x8x8xf32, #tpu.memory_space<vmem>>, vector<2x8x8x8xf32>,
    return
  }
}

</mosaic_0001>

<llo_original>
// kernel: encoder_block_forward.1
$region0: #{encoder_block_forward.1}
  #allocation0 [shape = 'u32[]', space=smem, size = 0x4, offset = 0x4, fixed_abs, tag = 'smem constant byte address 0x4 - core index']
  #allocation1 [shape = 'u32[144,128]{1,0:T(1,128)}', space=vmem, size = 0x12000, scoped, tag = 'internal scratch']
  #allocation2 [shape = 'f32[2,18,18,4]{3,2,1,0:T(8,128)}', space=vmem, size = 0x6c000, scoped, tag = 'scratch operand']
  #allocation3 [shape = 'f32[2,18,18,8]{3,2,1,0:T(8,128)}', space=vmem, size = 0x6c000, scoped, tag = 'scratch operand']
  #allocation4 [shape = 'f32[512,36]{1,0:T(8,128)}', space=vmem, size = 0x40000, scoped, tag = 'scratch operand']
  #allocation5 [shape = 'f32[512,72]{1,0:T(8,128)}', space=vmem, size = 0x40000, scoped, tag = 'scratch operand']
  #allocation6 [shape = 'f32[512,8]{1,0:T(8,128)}', space=vmem, size = 0x40000, scoped, tag = 'scratch operand']
  %s0 = inlined_call_operand.vmem [shape: f32[2,16,16,4], index: 0, kind: input, shape index: {}]
  %s1 = inlined_call_operand.vmem [shape: bf16[36,8], index: 1, kind: input, shape index: {}]
  %s2 = inlined_call_operand.vmem [shape: f32[1,8], index: 2, kind: input, shape index: {}]
  %s3 = inlined_call_operand.vmem [shape: f32[1,8], index: 3, kind: input, shape index: {}]
  %s4 = inlined_call_operand.vmem [shape: bf16[72,8], index: 4, kind: input, shape index: {}]
  %s5 = inlined_call_operand.vmem [shape: f32[1,8], index: 5, kind: input, shape index: {}]
  %s6 = inlined_call_operand.vmem [shape: f32[1,8], index: 6, kind: input, shape index: {}]
  %s7 = inlined_call_operand.vmem [shape: f32[2,16,16,8], index: 7, kind: output, shape index: {0}]
  %s8 = inlined_call_operand.vmem [shape: f32[2,8,8,8], index: 8, kind: output, shape index: {1}]
  %9 = xla_tuple %s7, %s8
  %s10 = sld [smem:[#allocation0]]
  $region46: #{encoder_block_forward.1} parent=0
    _
  %s12 = ssub.s32 1, %s10
  %s13 = scalar_select 0, %s12, %s10
  // Predicated region
  $region2: #{encoder_block_forward.1} parent=0 // pred_check
    _
  $region3: #{encoder_block_forward.1} parent=0 // pred_check_branch
    %15 = sbr.rel (0) target = $region5
  $region4: #{encoder_block_forward.1} parent=0 // pred_region
    _
  $region5: #{encoder_block_forward.1} parent=0 // pred_fallthru
    _
  // Predicated region
  $region6: #{encoder_block_forward.1} parent=0 // pred_check
    _
  $region7: #{encoder_block_forward.1} parent=0 // pred_check_branch
    %17 = sbr.rel (0) target = $region9
  $region8: #{encoder_block_forward.1} parent=0 // pred_region
    _
  $region9: #{encoder_block_forward.1} parent=0 // pred_fallthru
    _
  // Predicated region
  $region10: #{encoder_block_forward.1} parent=0 // pred_check
    _
  $region11: #{encoder_block_forward.1} parent=0 // pred_check_branch
    %19 = sbr.rel (0) target = $region13
  $region12: #{encoder_block_forward.1} parent=0 // pred_region
    _
  $region13: #{encoder_block_forward.1} parent=0 // pred_fallthru
    _
  // Predicated region
  $region14: #{encoder_block_forward.1} parent=0 // pred_check
    _
  $region15: #{encoder_block_forward.1} parent=0 // pred_check_branch
    %21 = sbr.rel (0) target = $region17
  $region16: #{encoder_block_forward.1} parent=0 // pred_region
    _
  $region17: #{encoder_block_forward.1} parent=0 // pred_fallthru
    _
  // Predicated region
  $region18: #{encoder_block_forward.1} parent=0 // pred_check
    _
  $region19: #{encoder_block_forward.1} parent=0 // pred_check_branch
    %23 = sbr.rel (0) target = $region21
  $region20: #{encoder_block_forward.1} parent=0 // pred_region
    _
  $region21: #{encoder_block_forward.1} parent=0 // pred_fallthru
    _
  // Predicated region
  $region22: #{encoder_block_forward.1} parent=0 // pred_check
    _
  $region23: #{encoder_block_forward.1} parent=0 // pred_check_branch
    %25 = sbr.rel (0) target = $region25
  $region24: #{encoder_block_forward.1} parent=0 // pred_region
    _
  $region25: #{encoder_block_forward.1} parent=0 // pred_fallthru
    _
  // Predicated region
  $region26: #{encoder_block_forward.1} parent=0 // pred_check
    _
  $region27: #{encoder_block_forward.1} parent=0 // pred_check_branch
    %27 = sbr.rel (0) target = $region29
  $region28: #{encoder_block_forward.1} parent=0 // pred_region
    _
  $region29: #{encoder_block_forward.1} parent=0 // pred_fallthru
    _
  %vm29 = vcmask 31744
  %30 = vst.msk [vmem:[#allocation2] sm:$0xff] %vm29, 0.0
  %31 = vst.msk [vmem:[#allocation2 + $0x8] sm:$0xff] %vm29, 0.0
  %vm32 = vcmask 25600
  %33 = vst.msk [vmem:[#allocation2 + $0x10] sm:$0x3] %vm32, 0.0
  %34 = vst.msk [vmem:[#allocation2 + $0x18] sm:$0xff] %vm29, 0.0
  %35 = vst.msk [vmem:[#allocation2 + $0x20] sm:$0xff] %vm29, 0.0
  %36 = vst.msk [vmem:[#allocation2 + $0x28] sm:$0x3] %vm32, 0.0
  %37 = vst.msk [vmem:[#allocation2 + $0x30] sm:$0xff] %vm29, 0.0
  %38 = vst.msk [vmem:[#allocation2 + $0x38] sm:$0xff] %vm29, 0.0
  %39 = vst.msk [vmem:[#allocation2 + $0x40] sm:$0x3] %vm32, 0.0
  %40 = vst.msk [vmem:[#allocation2 + $0x48] sm:$0xff] %vm29, 0.0
  %41 = vst.msk [vmem:[#allocation2 + $0x50] sm:$0xff] %vm29, 0.0
  %42 = vst.msk [vmem:[#allocation2 + $0x58] sm:$0x3] %vm32, 0.0
  %43 = vst.msk [vmem:[#allocation2 + $0x60] sm:$0xff] %vm29, 0.0
  %44 = vst.msk [vmem:[#allocation2 + $0x68] sm:$0xff] %vm29, 0.0
  %45 = vst.msk [vmem:[#allocation2 + $0x70] sm:$0x3] %vm32, 0.0
  %46 = vst.msk [vmem:[#allocation2 + $0x78] sm:$0xff] %vm29, 0.0
  %47 = vst.msk [vmem:[#allocation2 + $0x80] sm:$0xff] %vm29, 0.0
  %48 = vst.msk [vmem:[#allocation2 + $0x88] sm:$0x3] %vm32, 0.0
  %49 = vst.msk [vmem:[#allocation2 + $0x90] sm:$0xff] %vm29, 0.0
  %50 = vst.msk [vmem:[#allocation2 + $0x98] sm:$0xff] %vm29, 0.0
  %51 = vst.msk [vmem:[#allocation2 + $0xa0] sm:$0x3] %vm32, 0.0
  %52 = vst.msk [vmem:[#allocation2 + $0xa8] sm:$0xff] %vm29, 0.0
  %53 = vst.msk [vmem:[#allocation2 + $0xb0] sm:$0xff] %vm29, 0.0
  %54 = vst.msk [vmem:[#allocation2 + $0xb8] sm:$0x3] %vm32, 0.0
  %55 = vst.msk [vmem:[#allocation2 + $0xc0] sm:$0xff] %vm29, 0.0
  %56 = vst.msk [vmem:[#allocation2 + $0xc8] sm:$0xff] %vm29, 0.0
  %57 = vst.msk [vmem:[#allocation2 + $0xd0] sm:$0x3] %vm32, 0.0
  %58 = vst.msk [vmem:[#allocation2 + $0xd8] sm:$0xff] %vm29, 0.0
  %59 = vst.msk [vmem:[#allocation2 + $0xe0] sm:$0xff] %vm29, 0.0
  %60 = vst.msk [vmem:[#allocation2 + $0xe8] sm:$0x3] %vm32, 0.0
  %61 = vst.msk [vmem:[#allocation2 + $0xf0] sm:$0xff] %vm29, 0.0
  %62 = vst.msk [vmem:[#allocation2 + $0xf8] sm:$0xff] %vm29, 0.0
  %63 = vst.msk [vmem:[#allocation2 + $0x100] sm:$0x3] %vm32, 0.0
  %64 = vst.msk [vmem:[#allocation2 + $0x108] sm:$0xff] %vm29, 0.0
  %65 = vst.msk [vmem:[#allocation2 + $0x110] sm:$0xff] %vm29, 0.0
  %66 = vst.msk [vmem:[#allocation2 + $0x118] sm:$0x3] %vm32, 0.0
  %67 = vst.msk [vmem:[#allocation2 + $0x120] sm:$0xff] %vm29, 0.0
  %68 = vst.msk [vmem:[#allocation2 + $0x128] sm:$0xff] %vm29, 0.0
  %69 = vst.msk [vmem:[#allocation2 + $0x130] sm:$0x3] %vm32, 0.0
  %70 = vst.msk [vmem:[#allocation2 + $0x138] sm:$0xff] %vm29, 0.0
  %71 = vst.msk [vmem:[#allocation2 + $0x140] sm:$0xff] %vm29, 0.0
  %72 = vst.msk [vmem:[#allocation2 + $0x148] sm:$0x3] %vm32, 0.0
  %73 = vst.msk [vmem:[#allocation2 + $0x150] sm:$0xff] %vm29, 0.0
  %74 = vst.msk [vmem:[#allocation2 + $0x158] sm:$0xff] %vm29, 0.0
  %75 = vst.msk [vmem:[#allocation2 + $0x160] sm:$0x3] %vm32, 0.0
  %76 = vst.msk [vmem:[#allocation2 + $0x168] sm:$0xff] %vm29, 0.0
  %77 = vst.msk [vmem:[#allocation2 + $0x170] sm:$0xff] %vm29, 0.0
  %78 = vst.msk [vmem:[#allocation2 + $0x178] sm:$0x3] %vm32, 0.0
  %79 = vst.msk [vmem:[#allocation2 + $0x180] sm:$0xff] %vm29, 0.0
  %80 = vst.msk [vmem:[#allocation2 + $0x188] sm:$0xff] %vm29, 0.0
  %81 = vst.msk [vmem:[#allocation2 + $0x190] sm:$0x3] %vm32, 0.0
  %82 = vst.msk [vmem:[#allocation2 + $0x198] sm:$0xff] %vm29, 0.0
  %83 = vst.msk [vmem:[#allocation2 + $0x1a0] sm:$0xff] %vm29, 0.0
  %84 = vst.msk [vmem:[#allocation2 + $0x1a8] sm:$0x3] %vm32, 0.0
  %85 = vst.msk [vmem:[#allocation2 + $0x1b0] sm:$0xff] %vm29, 0.0
  %86 = vst.msk [vmem:[#allocation2 + $0x1b8] sm:$0xff] %vm29, 0.0
  %87 = vst.msk [vmem:[#allocation2 + $0x1c0] sm:$0x3] %vm32, 0.0
  %88 = vst.msk [vmem:[#allocation2 + $0x1c8] sm:$0xff] %vm29, 0.0
  %89 = vst.msk [vmem:[#allocation2 + $0x1d0] sm:$0xff] %vm29, 0.0
  %90 = vst.msk [vmem:[#allocation2 + $0x1d8] sm:$0x3] %vm32, 0.0
  %91 = vst.msk [vmem:[#allocation2 + $0x1e0] sm:$0xff] %vm29, 0.0
  %92 = vst.msk [vmem:[#allocation2 + $0x1e8] sm:$0xff] %vm29, 0.0
  %93 = vst.msk [vmem:[#allocation2 + $0x1f0] sm:$0x3] %vm32, 0.0
  %94 = vst.msk [vmem:[#allocation2 + $0x1f8] sm:$0xff] %vm29, 0.0
  %95 = vst.msk [vmem:[#allocation2 + $0x200] sm:$0xff] %vm29, 0.0
  %96 = vst.msk [vmem:[#allocation2 + $0x208] sm:$0x3] %vm32, 0.0
  %97 = vst.msk [vmem:[#allocation2 + $0x210] sm:$0xff] %vm29, 0.0
  %98 = vst.msk [vmem:[#allocation2 + $0x218] sm:$0xff] %vm29, 0.0
  %99 = vst.msk [vmem:[#allocation2 + $0x220] sm:$0x3] %vm32, 0.0
  %100 = vst.msk [vmem:[#allocation2 + $0x228] sm:$0xff] %vm29, 0.0
  %101 = vst.msk [vmem:[#allocation2 + $0x230] sm:$0xff] %vm29, 0.0
  %102 = vst.msk [vmem:[#allocation2 + $0x238] sm:$0x3] %vm32, 0.0
  %103 = vst.msk [vmem:[#allocation2 + $0x240] sm:$0xff] %vm29, 0.0
  %104 = vst.msk [vmem:[#allocation2 + $0x248] sm:$0xff] %vm29, 0.0
  %105 = vst.msk [vmem:[#allocation2 + $0x250] sm:$0x3] %vm32, 0.0
  %106 = vst.msk [vmem:[#allocation2 + $0x258] sm:$0xff] %vm29, 0.0
  %107 = vst.msk [vmem:[#allocation2 + $0x260] sm:$0xff] %vm29, 0.0
  %108 = vst.msk [vmem:[#allocation2 + $0x268] sm:$0x3] %vm32, 0.0
  %109 = vst.msk [vmem:[#allocation2 + $0x270] sm:$0xff] %vm29, 0.0
  %110 = vst.msk [vmem:[#allocation2 + $0x278] sm:$0xff] %vm29, 0.0
  %111 = vst.msk [vmem:[#allocation2 + $0x280] sm:$0x3] %vm32, 0.0
  %112 = vst.msk [vmem:[#allocation2 + $0x288] sm:$0xff] %vm29, 0.0
  %113 = vst.msk [vmem:[#allocation2 + $0x290] sm:$0xff] %vm29, 0.0
  %114 = vst.msk [vmem:[#allocation2 + $0x298] sm:$0x3] %vm32, 0.0
  %115 = vst.msk [vmem:[#allocation2 + $0x2a0] sm:$0xff] %vm29, 0.0
  %116 = vst.msk [vmem:[#allocation2 + $0x2a8] sm:$0xff] %vm29, 0.0
  %117 = vst.msk [vmem:[#allocation2 + $0x2b0] sm:$0x3] %vm32, 0.0
  %118 = vst.msk [vmem:[#allocation2 + $0x2b8] sm:$0xff] %vm29, 0.0
  %119 = vst.msk [vmem:[#allocation2 + $0x2c0] sm:$0xff] %vm29, 0.0
  %120 = vst.msk [vmem:[#allocation2 + $0x2c8] sm:$0x3] %vm32, 0.0
  %121 = vst.msk [vmem:[#allocation2 + $0x2d0] sm:$0xff] %vm29, 0.0
  %122 = vst.msk [vmem:[#allocation2 + $0x2d8] sm:$0xff] %vm29, 0.0
  %123 = vst.msk [vmem:[#allocation2 + $0x2e0] sm:$0x3] %vm32, 0.0
  %124 = vst.msk [vmem:[#allocation2 + $0x2e8] sm:$0xff] %vm29, 0.0
  %125 = vst.msk [vmem:[#allocation2 + $0x2f0] sm:$0xff] %vm29, 0.0
  %126 = vst.msk [vmem:[#allocation2 + $0x2f8] sm:$0x3] %vm32, 0.0
  %127 = vst.msk [vmem:[#allocation2 + $0x300] sm:$0xff] %vm29, 0.0
  %128 = vst.msk [vmem:[#allocation2 + $0x308] sm:$0xff] %vm29, 0.0
  %129 = vst.msk [vmem:[#allocation2 + $0x310] sm:$0x3] %vm32, 0.0
  %130 = vst.msk [vmem:[#allocation2 + $0x318] sm:$0xff] %vm29, 0.0
  %131 = vst.msk [vmem:[#allocation2 + $0x320] sm:$0xff] %vm29, 0.0
  %132 = vst.msk [vmem:[#allocation2 + $0x328] sm:$0x3] %vm32, 0.0
  %133 = vst.msk [vmem:[#allocation2 + $0x330] sm:$0xff] %vm29, 0.0
  %134 = vst.msk [vmem:[#allocation2 + $0x338] sm:$0xff] %vm29, 0.0
  %135 = vst.msk [vmem:[#allocation2 + $0x340] sm:$0x3] %vm32, 0.0
  %136 = vst.msk [vmem:[#allocation2 + $0x348] sm:$0xff] %vm29, 0.0
  %137 = vst.msk [vmem:[#allocation2 + $0x350] sm:$0xff] %vm29, 0.0
  %138 = vst.msk [vmem:[#allocation2 + $0x358] sm:$0x3] %vm32, 0.0
  %v139 = vld [vmem:[%s0] sm:$0xff]
  %v140 = vld [vmem:[%s0 + $0x8] sm:$0xff]
  %v141 = vld [vmem:[%s0 + $0x10] sm:$0xff]
  %v142 = vld [vmem:[%s0 + $0x18] sm:$0xff]
  %v143 = vld [vmem:[%s0 + $0x20] sm:$0xff]
  %v144 = vld [vmem:[%s0 + $0x28] sm:$0xff]
  %v145 = vld [vmem:[%s0 + $0x30] sm:$0xff]
  %v146 = vld [vmem:[%s0 + $0x38] sm:$0xff]
  %v147 = vld [vmem:[%s0 + $0x40] sm:$0xff]
  %v148 = vld [vmem:[%s0 + $0x48] sm:$0xff]
  %v149 = vld [vmem:[%s0 + $0x50] sm:$0xff]
  %v150 = vld [vmem:[%s0 + $0x58] sm:$0xff]
  %v151 = vld [vmem:[%s0 + $0x60] sm:$0xff]
  %v152 = vld [vmem:[%s0 + $0x68] sm:$0xff]
  %v153 = vld [vmem:[%s0 + $0x70] sm:$0xff]
  %v154 = vld [vmem:[%s0 + $0x78] sm:$0xff]
  %v155 = vld [vmem:[%s0 + $0x80] sm:$0xff]
  %v156 = vld [vmem:[%s0 + $0x88] sm:$0xff]
  %v157 = vld [vmem:[%s0 + $0x90] sm:$0xff]
  %v158 = vld [vmem:[%s0 + $0x98] sm:$0xff]
  %v159 = vld [vmem:[%s0 + $0xa0] sm:$0xff]
  %v160 = vld [vmem:[%s0 + $0xa8] sm:$0xff]
  %v161 = vld [vmem:[%s0 + $0xb0] sm:$0xff]
  %v162 = vld [vmem:[%s0 + $0xb8] sm:$0xff]
  %v163 = vld [vmem:[%s0 + $0xc0] sm:$0xff]
  %v164 = vld [vmem:[%s0 + $0xc8] sm:$0xff]
  %v165 = vld [vmem:[%s0 + $0xd0] sm:$0xff]
  %v166 = vld [vmem:[%s0 + $0xd8] sm:$0xff]
  %v167 = vld [vmem:[%s0 + $0xe0] sm:$0xff]
  %v168 = vld [vmem:[%s0 + $0xe8] sm:$0xff]
  %v169 = vld [vmem:[%s0 + $0xf0] sm:$0xff]
  %v170 = vld [vmem:[%s0 + $0xf8] sm:$0xff]
  %v171 = vld [vmem:[%s0 + $0x100] sm:$0xff]
  %v172 = vld [vmem:[%s0 + $0x108] sm:$0xff]
  %v173 = vld [vmem:[%s0 + $0x110] sm:$0xff]
  %v174 = vld [vmem:[%s0 + $0x118] sm:$0xff]
  %v175 = vld [vmem:[%s0 + $0x120] sm:$0xff]
  %v176 = vld [vmem:[%s0 + $0x128] sm:$0xff]
  %v177 = vld [vmem:[%s0 + $0x130] sm:$0xff]
  %v178 = vld [vmem:[%s0 + $0x138] sm:$0xff]
  %v179 = vld [vmem:[%s0 + $0x140] sm:$0xff]
  %v180 = vld [vmem:[%s0 + $0x148] sm:$0xff]
  %v181 = vld [vmem:[%s0 + $0x150] sm:$0xff]
  %v182 = vld [vmem:[%s0 + $0x158] sm:$0xff]
  %v183 = vld [vmem:[%s0 + $0x160] sm:$0xff]
  %v184 = vld [vmem:[%s0 + $0x168] sm:$0xff]
  %v185 = vld [vmem:[%s0 + $0x170] sm:$0xff]
  %v186 = vld [vmem:[%s0 + $0x178] sm:$0xff]
  %v187 = vld [vmem:[%s0 + $0x180] sm:$0xff]
  %v188 = vld [vmem:[%s0 + $0x188] sm:$0xff]
  %v189 = vld [vmem:[%s0 + $0x190] sm:$0xff]
  %v190 = vld [vmem:[%s0 + $0x198] sm:$0xff]
  %v191 = vld [vmem:[%s0 + $0x1a0] sm:$0xff]
  %v192 = vld [vmem:[%s0 + $0x1a8] sm:$0xff]
  %v193 = vld [vmem:[%s0 + $0x1b0] sm:$0xff]
  %v194 = vld [vmem:[%s0 + $0x1b8] sm:$0xff]
  %v195 = vld [vmem:[%s0 + $0x1c0] sm:$0xff]
  %v196 = vld [vmem:[%s0 + $0x1c8] sm:$0xff]
  %v197 = vld [vmem:[%s0 + $0x1d0] sm:$0xff]
  %v198 = vld [vmem:[%s0 + $0x1d8] sm:$0xff]
  %v199 = vld [vmem:[%s0 + $0x1e0] sm:$0xff]
  %v200 = vld [vmem:[%s0 + $0x1e8] sm:$0xff]
  %v201 = vld [vmem:[%s0 + $0x1f0] sm:$0xff]
  %v202 = vld [vmem:[%s0 + $0x1f8] sm:$0xff]
  %s203 = scalar_lea.vmem [#allocation2], 24
  %204 = vst.msk [vmem:[%s203 + $0x1] sm:$0xff] %vm29, %v139
  %205 = vst.msk [vmem:[%s203 + $0x9] sm:$0xff] %vm29, %v140
  %206 = vst.msk [vmem:[%s203 + $0x19] sm:$0xff] %vm29, %v141
  %207 = vst.msk [vmem:[%s203 + $0x21] sm:$0xff] %vm29, %v142
  %208 = vst.msk [vmem:[%s203 + $0x31] sm:$0xff] %vm29, %v143
  %209 = vst.msk [vmem:[%s203 + $0x39] sm:$0xff] %vm29, %v144
  %210 = vst.msk [vmem:[%s203 + $0x49] sm:$0xff] %vm29, %v145
  %211 = vst.msk [vmem:[%s203 + $0x51] sm:$0xff] %vm29, %v146
  %212 = vst.msk [vmem:[%s203 + $0x61] sm:$0xff] %vm29, %v147
  %213 = vst.msk [vmem:[%s203 + $0x69] sm:$0xff] %vm29, %v148
  %214 = vst.msk [vmem:[%s203 + $0x79] sm:$0xff] %vm29, %v149
  %215 = vst.msk [vmem:[%s203 + $0x81] sm:$0xff] %vm29, %v150
  %216 = vst.msk [vmem:[%s203 + $0x91] sm:$0xff] %vm29, %v151
  %217 = vst.msk [vmem:[%s203 + $0x99] sm:$0xff] %vm29, %v152
  %218 = vst.msk [vmem:[%s203 + $0xa9] sm:$0xff] %vm29, %v153
  %219 = vst.msk [vmem:[%s203 + $0xb1] sm:$0xff] %vm29, %v154
  %220 = vst.msk [vmem:[%s203 + $0xc1] sm:$0xff] %vm29, %v155
  %221 = vst.msk [vmem:[%s203 + $0xc9] sm:$0xff] %vm29, %v156
  %222 = vst.msk [vmem:[%s203 + $0xd9] sm:$0xff] %vm29, %v157
  %223 = vst.msk [vmem:[%s203 + $0xe1] sm:$0xff] %vm29, %v158
  %224 = vst.msk [vmem:[%s203 + $0xf1] sm:$0xff] %vm29, %v159
  %225 = vst.msk [vmem:[%s203 + $0xf9] sm:$0xff] %vm29, %v160
  %226 = vst.msk [vmem:[%s203 + $0x109] sm:$0xff] %vm29, %v161
  %227 = vst.msk [vmem:[%s203 + $0x111] sm:$0xff] %vm29, %v162
  %228 = vst.msk [vmem:[%s203 + $0x121] sm:$0xff] %vm29, %v163
  %229 = vst.msk [vmem:[%s203 + $0x129] sm:$0xff] %vm29, %v164
  %230 = vst.msk [vmem:[%s203 + $0x139] sm:$0xff] %vm29, %v165
  %231 = vst.msk [vmem:[%s203 + $0x141] sm:$0xff] %vm29, %v166
  %232 = vst.msk [vmem:[%s203 + $0x151] sm:$0xff] %vm29, %v167
  %233 = vst.msk [vmem:[%s203 + $0x159] sm:$0xff] %vm29, %v168
  %234 = vst.msk [vmem:[%s203 + $0x169] sm:$0xff] %vm29, %v169
  %235 = vst.msk [vmem:[%s203 + $0x171] sm:$0xff] %vm29, %v170
  %236 = vst.msk [vmem:[%s203 + $0x1b1] sm:$0xff] %vm29, %v171
  %237 = vst.msk [vmem:[%s203 + $0x1b9] sm:$0xff] %vm29, %v172
  %238 = vst.msk [vmem:[%s203 + $0x1c9] sm:$0xff] %vm29, %v173
  %239 = vst.msk [vmem:[%s203 + $0x1d1] sm:$0xff] %vm29, %v174
  %240 = vst.msk [vmem:[%s203 + $0x1e1] sm:$0xff] %vm29, %v175
  %241 = vst.msk [vmem:[%s203 + $0x1e9] sm:$0xff] %vm29, %v176
  %242 = vst.msk [vmem:[%s203 + $0x1f9] sm:$0xff] %vm29, %v177
  %243 = vst.msk [vmem:[%s203 + $0x201] sm:$0xff] %vm29, %v178
  %244 = vst.msk [vmem:[%s203 + $0x211] sm:$0xff] %vm29, %v179
  %245 = vst.msk [vmem:[%s203 + $0x219] sm:$0xff] %vm29, %v180
  %246 = vst.msk [vmem:[%s203 + $0x229] sm:$0xff] %vm29, %v181
  %247 = vst.msk [vmem:[%s203 + $0x231] sm:$0xff] %vm29, %v182
  %248 = vst.msk [vmem:[%s203 + $0x241] sm:$0xff] %vm29, %v183
  %249 = vst.msk [vmem:[%s203 + $0x249] sm:$0xff] %vm29, %v184
  %250 = vst.msk [vmem:[%s203 + $0x259] sm:$0xff] %vm29, %v185
  %251 = vst.msk [vmem:[%s203 + $0x261] sm:$0xff] %vm29, %v186
  %252 = vst.msk [vmem:[%s203 + $0x271] sm:$0xff] %vm29, %v187
  %253 = vst.msk [vmem:[%s203 + $0x279] sm:$0xff] %vm29, %v188
  %254 = vst.msk [vmem:[%s203 + $0x289] sm:$0xff] %vm29, %v189
  %255 = vst.msk [vmem:[%s203 + $0x291] sm:$0xff] %vm29, %v190
  %256 = vst.msk [vmem:[%s203 + $0x2a1] sm:$0xff] %vm29, %v191
  %257 = vst.msk [vmem:[%s203 + $0x2a9] sm:$0xff] %vm29, %v192
  %258 = vst.msk [vmem:[%s203 + $0x2b9] sm:$0xff] %vm29, %v193
  %259 = vst.msk [vmem:[%s203 + $0x2c1] sm:$0xff] %vm29, %v194
  %260 = vst.msk [vmem:[%s203 + $0x2d1] sm:$0xff] %vm29, %v195
  %261 = vst.msk [vmem:[%s203 + $0x2d9] sm:$0xff] %vm29, %v196
  %262 = vst.msk [vmem:[%s203 + $0x2e9] sm:$0xff] %vm29, %v197
  %263 = vst.msk [vmem:[%s203 + $0x2f1] sm:$0xff] %vm29, %v198
  %264 = vst.msk [vmem:[%s203 + $0x301] sm:$0xff] %vm29, %v199
  %265 = vst.msk [vmem:[%s203 + $0x309] sm:$0xff] %vm29, %v200
  %266 = vst.msk [vmem:[%s203 + $0x319] sm:$0xff] %vm29, %v201
  %267 = vst.msk [vmem:[%s203 + $0x321] sm:$0xff] %vm29, %v202
  %v268 = vld [vmem:[#allocation2] sm:$0xff]
  %v269 = vld [vmem:[#allocation2 + $0x8] sm:$0xff]
  %v270 = vld [vmem:[#allocation2 + $0x18] sm:$0xff]
  %v271 = vld [vmem:[#allocation2 + $0x20] sm:$0xff]
  %v272 = vld [vmem:[#allocation2 + $0x30] sm:$0xff]
  %v273 = vld [vmem:[#allocation2 + $0x38] sm:$0xff]
  %v274 = vld [vmem:[#allocation2 + $0x48] sm:$0xff]
  %v275 = vld [vmem:[#allocation2 + $0x50] sm:$0xff]
  %v276 = vld [vmem:[#allocation2 + $0x60] sm:$0xff]
  %v277 = vld [vmem:[#allocation2 + $0x68] sm:$0xff]
  %v278 = vld [vmem:[#allocation2 + $0x78] sm:$0xff]
  %v279 = vld [vmem:[#allocation2 + $0x80] sm:$0xff]
  %v280 = vld [vmem:[#allocation2 + $0x90] sm:$0xff]
  %v281 = vld [vmem:[#allocation2 + $0x98] sm:$0xff]
  %v282 = vld [vmem:[#allocation2 + $0xa8] sm:$0xff]
  %v283 = vld [vmem:[#allocation2 + $0xb0] sm:$0xff]
  %v284 = vld [vmem:[#allocation2 + $0xc0] sm:$0xff]
  %v285 = vld [vmem:[#allocation2 + $0xc8] sm:$0xff]
  %v286 = vld [vmem:[#allocation2 + $0xd8] sm:$0xff]
  %v287 = vld [vmem:[#allocation2 + $0xe0] sm:$0xff]
  %v288 = vld [vmem:[#allocation2 + $0xf0] sm:$0xff]
  %v289 = vld [vmem:[#allocation2 + $0xf8] sm:$0xff]
  %v290 = vld [vmem:[#allocation2 + $0x108] sm:$0xff]
  %v291 = vld [vmem:[#allocation2 + $0x110] sm:$0xff]
  %v292 = vld [vmem:[#allocation2 + $0x120] sm:$0xff]
  %v293 = vld [vmem:[#allocation2 + $0x128] sm:$0xff]
  %v294 = vld [vmem:[#allocation2 + $0x138] sm:$0xff]
  %v295 = vld [vmem:[#allocation2 + $0x140] sm:$0xff]
  %v296 = vld [vmem:[#allocation2 + $0x150] sm:$0xff]
  %v297 = vld [vmem:[#allocation2 + $0x158] sm:$0xff]
  %v298 = vld [vmem:[#allocation2 + $0x168] sm:$0xff]
  %v299 = vld [vmem:[#allocation2 + $0x170] sm:$0xff]
  %v300 = vld [vmem:[#allocation2 + $0x1b0] sm:$0xff]
  %v301 = vld [vmem:[#allocation2 + $0x1b8] sm:$0xff]
  %v302 = vld [vmem:[#allocation2 + $0x1c8] sm:$0xff]
  %v303 = vld [vmem:[#allocation2 + $0x1d0] sm:$0xff]
  %v304 = vld [vmem:[#allocation2 + $0x1e0] sm:$0xff]
  %v305 = vld [vmem:[#allocation2 + $0x1e8] sm:$0xff]
  %v306 = vld [vmem:[#allocation2 + $0x1f8] sm:$0xff]
  %v307 = vld [vmem:[#allocation2 + $0x200] sm:$0xff]
  %v308 = vld [vmem:[#allocation2 + $0x210] sm:$0xff]
  %v309 = vld [vmem:[#allocation2 + $0x218] sm:$0xff]
  %v310 = vld [vmem:[#allocation2 + $0x228] sm:$0xff]
  %v311 = vld [vmem:[#allocation2 + $0x230] sm:$0xff]
  %v312 = vld [vmem:[#allocation2 + $0x240] sm:$0xff]
  %v313 = vld [vmem:[#allocation2 + $0x248] sm:$0xff]
  %v314 = vld [vmem:[#allocation2 + $0x258] sm:$0xff]
  %v315 = vld [vmem:[#allocation2 + $0x260] sm:$0xff]
  %v316 = vld [vmem:[#allocation2 + $0x270] sm:$0xff]
  %v317 = vld [vmem:[#allocation2 + $0x278] sm:$0xff]
  %v318 = vld [vmem:[#allocation2 + $0x288] sm:$0xff]
  %v319 = vld [vmem:[#allocation2 + $0x290] sm:$0xff]
  %v320 = vld [vmem:[#allocation2 + $0x2a0] sm:$0xff]
  %v321 = vld [vmem:[#allocation2 + $0x2a8] sm:$0xff]
  %v322 = vld [vmem:[#allocation2 + $0x2b8] sm:$0xff]
  %v323 = vld [vmem:[#allocation2 + $0x2c0] sm:$0xff]
  %v324 = vld [vmem:[#allocation2 + $0x2d0] sm:$0xff]
  %v325 = vld [vmem:[#allocation2 + $0x2d8] sm:$0xff]
  %v326 = vld [vmem:[#allocation2 + $0x2e8] sm:$0xff]
  %v327 = vld [vmem:[#allocation2 + $0x2f0] sm:$0xff]
  %v328 = vld [vmem:[#allocation2 + $0x300] sm:$0xff]
  %v329 = vld [vmem:[#allocation2 + $0x308] sm:$0xff]
  %v330 = vld [vmem:[#allocation2 + $0x318] sm:$0xff]
  %v331 = vld [vmem:[#allocation2 + $0x320] sm:$0xff]
  %332 = vst.msk [vmem:[#allocation4] sm:$0xff] %vm29, %v268
  %333 = vst.msk [vmem:[#allocation4 + $0x8] sm:$0xff] %vm29, %v269
  %334 = vst.msk [vmem:[#allocation4 + $0x10] sm:$0xff] %vm29, %v270
  %335 = vst.msk [vmem:[#allocation4 + $0x18] sm:$0xff] %vm29, %v271
  %336 = vst.msk [vmem:[#allocation4 + $0x20] sm:$0xff] %vm29, %v272
  %337 = vst.msk [vmem:[#allocation4 + $0x28] sm:$0xff] %vm29, %v273
  %338 = vst.msk [vmem:[#allocation4 + $0x30] sm:$0xff] %vm29, %v274
  %339 = vst.msk [vmem:[#allocation4 + $0x38] sm:$0xff] %vm29, %v275
  %340 = vst.msk [vmem:[#allocation4 + $0x40] sm:$0xff] %vm29, %v276
  %341 = vst.msk [vmem:[#allocation4 + $0x48] sm:$0xff] %vm29, %v277
  %342 = vst.msk [vmem:[#allocation4 + $0x50] sm:$0xff] %vm29, %v278
  %343 = vst.msk [vmem:[#allocation4 + $0x58] sm:$0xff] %vm29, %v279
  %344 = vst.msk [vmem:[#allocation4 + $0x60] sm:$0xff] %vm29, %v280
  %345 = vst.msk [vmem:[#allocation4 + $0x68] sm:$0xff] %vm29, %v281
  %346 = vst.msk [vmem:[#allocation4 + $0x70] sm:$0xff] %vm29, %v282
  %347 = vst.msk [vmem:[#allocation4 + $0x78] sm:$0xff] %vm29, %v283
  %348 = vst.msk [vmem:[#allocation4 + $0x80] sm:$0xff] %vm29, %v284
  %349 = vst.msk [vmem:[#allocation4 + $0x88] sm:$0xff] %vm29, %v285
  %350 = vst.msk [vmem:[#allocation4 + $0x90] sm:$0xff] %vm29, %v286
  %351 = vst.msk [vmem:[#allocation4 + $0x98] sm:$0xff] %vm29, %v287
  %352 = vst.msk [vmem:[#allocation4 + $0xa0] sm:$0xff] %vm29, %v288
  %353 = vst.msk [vmem:[#allocation4 + $0xa8] sm:$0xff] %vm29, %v289
  %354 = vst.msk [vmem:[#allocation4 + $0xb0] sm:$0xff] %vm29, %v290
  %355 = vst.msk [vmem:[#allocation4 + $0xb8] sm:$0xff] %vm29, %v291
  %356 = vst.msk [vmem:[#allocation4 + $0xc0] sm:$0xff] %vm29, %v292
  %357 = vst.msk [vmem:[#allocation4 + $0xc8] sm:$0xff] %vm29, %v293
  %358 = vst.msk [vmem:[#allocation4 + $0xd0] sm:$0xff] %vm29, %v294
  %359 = vst.msk [vmem:[#allocation4 + $0xd8] sm:$0xff] %vm29, %v295
  %360 = vst.msk [vmem:[#allocation4 + $0xe0] sm:$0xff] %vm29, %v296
  %361 = vst.msk [vmem:[#allocation4 + $0xe8] sm:$0xff] %vm29, %v297
  %362 = vst.msk [vmem:[#allocation4 + $0xf0] sm:$0xff] %vm29, %v298
  %363 = vst.msk [vmem:[#allocation4 + $0xf8] sm:$0xff] %vm29, %v299
  %364 = vst.msk [vmem:[#allocation4 + $0x100] sm:$0xff] %vm29, %v300
  %365 = vst.msk [vmem:[#allocation4 + $0x108] sm:$0xff] %vm29, %v301
  %366 = vst.msk [vmem:[#allocation4 + $0x110] sm:$0xff] %vm29, %v302
  %367 = vst.msk [vmem:[#allocation4 + $0x118] sm:$0xff] %vm29, %v303
  %368 = vst.msk [vmem:[#allocation4 + $0x120] sm:$0xff] %vm29, %v304
  %369 = vst.msk [vmem:[#allocation4 + $0x128] sm:$0xff] %vm29, %v305
  %370 = vst.msk [vmem:[#allocation4 + $0x130] sm:$0xff] %vm29, %v306
  %371 = vst.msk [vmem:[#allocation4 + $0x138] sm:$0xff] %vm29, %v307
  %372 = vst.msk [vmem:[#allocation4 + $0x140] sm:$0xff] %vm29, %v308
  %373 = vst.msk [vmem:[#allocation4 + $0x148] sm:$0xff] %vm29, %v309
  %374 = vst.msk [vmem:[#allocation4 + $0x150] sm:$0xff] %vm29, %v310
  %375 = vst.msk [vmem:[#allocation4 + $0x158] sm:$0xff] %vm29, %v311
  %376 = vst.msk [vmem:[#allocation4 + $0x160] sm:$0xff] %vm29, %v312
  %377 = vst.msk [vmem:[#allocation4 + $0x168] sm:$0xff] %vm29, %v313
  %378 = vst.msk [vmem:[#allocation4 + $0x170] sm:$0xff] %vm29, %v314
  %379 = vst.msk [vmem:[#allocation4 + $0x178] sm:$0xff] %vm29, %v315
  %380 = vst.msk [vmem:[#allocation4 + $0x180] sm:$0xff] %vm29, %v316
  %381 = vst.msk [vmem:[#allocation4 + $0x188] sm:$0xff] %vm29, %v317
  %382 = vst.msk [vmem:[#allocation4 + $0x190] sm:$0xff] %vm29, %v318
  %383 = vst.msk [vmem:[#allocation4 + $0x198] sm:$0xff] %vm29, %v319
  %384 = vst.msk [vmem:[#allocation4 + $0x1a0] sm:$0xff] %vm29, %v320
  %385 = vst.msk [vmem:[#allocation4 + $0x1a8] sm:$0xff] %vm29, %v321
  %386 = vst.msk [vmem:[#allocation4 + $0x1b0] sm:$0xff] %vm29, %v322
  %387 = vst.msk [vmem:[#allocation4 + $0x1b8] sm:$0xff] %vm29, %v323
  %388 = vst.msk [vmem:[#allocation4 + $0x1c0] sm:$0xff] %vm29, %v324
  %389 = vst.msk [vmem:[#allocation4 + $0x1c8] sm:$0xff] %vm29, %v325
  %390 = vst.msk [vmem:[#allocation4 + $0x1d0] sm:$0xff] %vm29, %v326
  %391 = vst.msk [vmem:[#allocation4 + $0x1d8] sm:$0xff] %vm29, %v327
  %392 = vst.msk [vmem:[#allocation4 + $0x1e0] sm:$0xff] %vm29, %v328
  %393 = vst.msk [vmem:[#allocation4 + $0x1e8] sm:$0xff] %vm29, %v329
  %394 = vst.msk [vmem:[#allocation4 + $0x1f0] sm:$0xff] %vm29, %v330
  %395 = vst.msk [vmem:[#allocation4 + $0x1f8] sm:$0xff] %vm29, %v331
  %v396 = vld [vmem:[#allocation2 + $0x1] sm:$0xff]
  %v397 = vld [vmem:[#allocation2 + $0x9] sm:$0xff]
  %v398 = vld [vmem:[#allocation2 + $0x19] sm:$0xff]
  %v399 = vld [vmem:[#allocation2 + $0x21] sm:$0xff]
  %v400 = vld [vmem:[#allocation2 + $0x31] sm:$0xff]
  %v401 = vld [vmem:[#allocation2 + $0x39] sm:$0xff]
  %v402 = vld [vmem:[#allocation2 + $0x49] sm:$0xff]
  %v403 = vld [vmem:[#allocation2 + $0x51] sm:$0xff]
  %v404 = vld [vmem:[#allocation2 + $0x61] sm:$0xff]
  %v405 = vld [vmem:[#allocation2 + $0x69] sm:$0xff]
  %v406 = vld [vmem:[#allocation2 + $0x79] sm:$0xff]
  %v407 = vld [vmem:[#allocation2 + $0x81] sm:$0xff]
  %v408 = vld [vmem:[#allocation2 + $0x91] sm:$0xff]
  %v409 = vld [vmem:[#allocation2 + $0x99] sm:$0xff]
  %v410 = vld [vmem:[#allocation2 + $0xa9] sm:$0xff]
  %v411 = vld [vmem:[#allocation2 + $0xb1] sm:$0xff]
  %v412 = vld [vmem:[#allocation2 + $0xc1] sm:$0xff]
  %v413 = vld [vmem:[#allocation2 + $0xc9] sm:$0xff]
  %v414 = vld [vmem:[#allocation2 + $0xd9] sm:$0xff]
  %v415 = vld [vmem:[#allocation2 + $0xe1] sm:$0xff]
  %v416 = vld [vmem:[#allocation2 + $0xf1] sm:$0xff]
  %v417 = vld [vmem:[#allocation2 + $0xf9] sm:$0xff]
  %v418 = vld [vmem:[#allocation2 + $0x109] sm:$0xff]
  %v419 = vld [vmem:[#allocation2 + $0x111] sm:$0xff]
  %v420 = vld [vmem:[#allocation2 + $0x121] sm:$0xff]
  %v421 = vld [vmem:[#allocation2 + $0x129] sm:$0xff]
  %v422 = vld [vmem:[#allocation2 + $0x139] sm:$0xff]
  %v423 = vld [vmem:[#allocation2 + $0x141] sm:$0xff]
  %v424 = vld [vmem:[#allocation2 + $0x151] sm:$0xff]
  %v425 = vld [vmem:[#allocation2 + $0x159] sm:$0xff]
  %v426 = vld [vmem:[#allocation2 + $0x169] sm:$0xff]
  %v427 = vld [vmem:[#allocation2 + $0x171] sm:$0xff]
  %v428 = vld [vmem:[#allocation2 + $0x1b1] sm:$0xff]
  %v429 = vld [vmem:[#allocation2 + $0x1b9] sm:$0xff]
  %v430 = vld [vmem:[#allocation2 + $0x1c9] sm:$0xff]
  %v431 = vld [vmem:[#allocation2 + $0x1d1] sm:$0xff]
  %v432 = vld [vmem:[#allocation2 + $0x1e1] sm:$0xff]
  %v433 = vld [vmem:[#allocation2 + $0x1e9] sm:$0xff]
  %v434 = vld [vmem:[#allocation2 + $0x1f9] sm:$0xff]
  %v435 = vld [vmem:[#allocation2 + $0x201] sm:$0xff]
  %v436 = vld [vmem:[#allocation2 + $0x211] sm:$0xff]
  %v437 = vld [vmem:[#allocation2 + $0x219] sm:$0xff]
  %v438 = vld [vmem:[#allocation2 + $0x229] sm:$0xff]
  %v439 = vld [vmem:[#allocation2 + $0x231] sm:$0xff]
  %v440 = vld [vmem:[#allocation2 + $0x241] sm:$0xff]
  %v441 = vld [vmem:[#allocation2 + $0x249] sm:$0xff]
  %v442 = vld [vmem:[#allocation2 + $0x259] sm:$0xff]
  %v443 = vld [vmem:[#allocation2 + $0x261] sm:$0xff]
  %v444 = vld [vmem:[#allocation2 + $0x271] sm:$0xff]
  %v445 = vld [vmem:[#allocation2 + $0x279] sm:$0xff]
  %v446 = vld [vmem:[#allocation2 + $0x289] sm:$0xff]
  %v447 = vld [vmem:[#allocation2 + $0x291] sm:$0xff]
  %v448 = vld [vmem:[#allocation2 + $0x2a1] sm:$0xff]
  %v449 = vld [vmem:[#allocation2 + $0x2a9] sm:$0xff]
  %v450 = vld [vmem:[#allocation2 + $0x2b9] sm:$0xff]
  %v451 = vld [vmem:[#allocation2 + $0x2c1] sm:$0xff]
  %v452 = vld [vmem:[#allocation2 + $0x2d1] sm:$0xff]
  %v453 = vld [vmem:[#allocation2 + $0x2d9] sm:$0xff]
  %v454 = vld [vmem:[#allocation2 + $0x2e9] sm:$0xff]
  %v455 = vld [vmem:[#allocation2 + $0x2f1] sm:$0xff]
  %v456 = vld [vmem:[#allocation2 + $0x301] sm:$0xff]
  %v457 = vld [vmem:[#allocation2 + $0x309] sm:$0xff]
  %v458 = vld [vmem:[#allocation2 + $0x319] sm:$0xff]
  %v459 = vld [vmem:[#allocation2 + $0x321] sm:$0xff]
  %524 = vrot.lane.b32.xlu0 %v396, 4
  %v525 = vpop.permute.xlu0 %524
  %526 = vrot.lane.b32.xlu0 %v397, 4
  %v527 = vpop.permute.xlu0 %526
  %528 = vrot.lane.b32.xlu0 %v398, 4
  %v529 = vpop.permute.xlu0 %528
  %530 = vrot.lane.b32.xlu0 %v399, 4
  %v531 = vpop.permute.xlu0 %530
  %532 = vrot.lane.b32.xlu0 %v400, 4
  %v533 = vpop.permute.xlu0 %532
  %534 = vrot.lane.b32.xlu0 %v401, 4
  %v535 = vpop.permute.xlu0 %534
  %536 = vrot.lane.b32.xlu0 %v402, 4
  %v537 = vpop.permute.xlu0 %536
  %538 = vrot.lane.b32.xlu0 %v403, 4
  %v539 = vpop.permute.xlu0 %538
  %540 = vrot.lane.b32.xlu0 %v404, 4
  %v541 = vpop.permute.xlu0 %540
  %542 = vrot.lane.b32.xlu0 %v405, 4
  %v543 = vpop.permute.xlu0 %542
  %544 = vrot.lane.b32.xlu0 %v406, 4
  %v545 = vpop.permute.xlu0 %544
  %546 = vrot.lane.b32.xlu0 %v407, 4
  %v547 = vpop.permute.xlu0 %546
  %548 = vrot.lane.b32.xlu0 %v408, 4
  %v549 = vpop.permute.xlu0 %548
  %550 = vrot.lane.b32.xlu0 %v409, 4
  %v551 = vpop.permute.xlu0 %550
  %552 = vrot.lane.b32.xlu0 %v410, 4
  %v553 = vpop.permute.xlu0 %552
  %554 = vrot.lane.b32.xlu0 %v411, 4
  %v555 = vpop.permute.xlu0 %554
  %556 = vrot.lane.b32.xlu0 %v412, 4
  %v557 = vpop.permute.xlu0 %556
  %558 = vrot.lane.b32.xlu0 %v413, 4
  %v559 = vpop.permute.xlu0 %558
  %560 = vrot.lane.b32.xlu0 %v414, 4
  %v561 = vpop.permute.xlu0 %560
  %562 = vrot.lane.b32.xlu0 %v415, 4
  %v563 = vpop.permute.xlu0 %562
  %564 = vrot.lane.b32.xlu0 %v416, 4
  %v565 = vpop.permute.xlu0 %564
  %566 = vrot.lane.b32.xlu0 %v417, 4
  %v567 = vpop.permute.xlu0 %566
  %568 = vrot.lane.b32.xlu0 %v418, 4
  %v569 = vpop.permute.xlu0 %568
  %570 = vrot.lane.b32.xlu0 %v419, 4
  %v571 = vpop.permute.xlu0 %570
  %572 = vrot.lane.b32.xlu0 %v420, 4
  %v573 = vpop.permute.xlu0 %572
  %574 = vrot.lane.b32.xlu0 %v421, 4
  %v575 = vpop.permute.xlu0 %574
  %576 = vrot.lane.b32.xlu0 %v422, 4
  %v577 = vpop.permute.xlu0 %576
  %578 = vrot.lane.b32.xlu0 %v423, 4
  %v579 = vpop.permute.xlu0 %578
  %580 = vrot.lane.b32.xlu0 %v424, 4
  %v581 = vpop.permute.xlu0 %580
  %582 = vrot.lane.b32.xlu0 %v425, 4
  %v583 = vpop.permute.xlu0 %582
  %584 = vrot.lane.b32.xlu0 %v426, 4
  %v585 = vpop.permute.xlu0 %584
  %586 = vrot.lane.b32.xlu0 %v427, 4
  %v587 = vpop.permute.xlu0 %586
  %588 = vrot.lane.b32.xlu0 %v428, 4
  %v589 = vpop.permute.xlu0 %588
  %590 = vrot.lane.b32.xlu0 %v429, 4
  %v591 = vpop.permute.xlu0 %590
  %592 = vrot.lane.b32.xlu0 %v430, 4
  %v593 = vpop.permute.xlu0 %592
  %594 = vrot.lane.b32.xlu0 %v431, 4
  %v595 = vpop.permute.xlu0 %594
  %596 = vrot.lane.b32.xlu0 %v432, 4
  %v597 = vpop.permute.xlu0 %596
  %598 = vrot.lane.b32.xlu0 %v433, 4
  %v599 = vpop.permute.xlu0 %598
  %600 = vrot.lane.b32.xlu0 %v434, 4
  %v601 = vpop.permute.xlu0 %600
  %602 = vrot.lane.b32.xlu0 %v435, 4
  %v603 = vpop.permute.xlu0 %602
  %604 = vrot.lane.b32.xlu0 %v436, 4
  %v605 = vpop.permute.xlu0 %604
  %606 = vrot.lane.b32.xlu0 %v437, 4
  %v607 = vpop.permute.xlu0 %606
  %608 = vrot.lane.b32.xlu0 %v438, 4
  %v609 = vpop.permute.xlu0 %608
  %610 = vrot.lane.b32.xlu0 %v439, 4
  %v611 = vpop.permute.xlu0 %610
  %612 = vrot.lane.b32.xlu0 %v440, 4
  %v613 = vpop.permute.xlu0 %612
  %614 = vrot.lane.b32.xlu0 %v441, 4
  %v615 = vpop.permute.xlu0 %614
  %616 = vrot.lane.b32.xlu0 %v442, 4
  %v617 = vpop.permute.xlu0 %616
  %618 = vrot.lane.b32.xlu0 %v443, 4
  %v619 = vpop.permute.xlu0 %618
  %620 = vrot.lane.b32.xlu0 %v444, 4
  %v621 = vpop.permute.xlu0 %620
  %622 = vrot.lane.b32.xlu0 %v445, 4
  %v623 = vpop.permute.xlu0 %622
  %624 = vrot.lane.b32.xlu0 %v446, 4
  %v625 = vpop.permute.xlu0 %624
  %626 = vrot.lane.b32.xlu0 %v447, 4
  %v627 = vpop.permute.xlu0 %626
  %628 = vrot.lane.b32.xlu0 %v448, 4
  %v629 = vpop.permute.xlu0 %628
  %630 = vrot.lane.b32.xlu0 %v449, 4
  %v631 = vpop.permute.xlu0 %630
  %632 = vrot.lane.b32.xlu0 %v450, 4
  %v633 = vpop.permute.xlu0 %632
  %634 = vrot.lane.b32.xlu0 %v451, 4
  %v635 = vpop.permute.xlu0 %634
  %636 = vrot.lane.b32.xlu0 %v452, 4
  %v637 = vpop.permute.xlu0 %636
  %638 = vrot.lane.b32.xlu0 %v453, 4
  %v639 = vpop.permute.xlu0 %638
  %640 = vrot.lane.b32.xlu0 %v454, 4
  %v641 = vpop.permute.xlu0 %640
  %642 = vrot.lane.b32.xlu0 %v455, 4
  %v643 = vpop.permute.xlu0 %642
  %644 = vrot.lane.b32.xlu0 %v456, 4
  %v645 = vpop.permute.xlu0 %644
  %646 = vrot.lane.b32.xlu0 %v457, 4
  %v647 = vpop.permute.xlu0 %646
  %648 = vrot.lane.b32.xlu0 %v458, 4
  %v649 = vpop.permute.xlu0 %648
  %650 = vrot.lane.b32.xlu0 %v459, 4
  %v651 = vpop.permute.xlu0 %650
  %vm716 = vcmask 64544
  %717 = vst.msk [vmem:[#allocation4] sm:$0xff] %vm716, %v525
  %718 = vst.msk [vmem:[#allocation4 + $0x8] sm:$0xff] %vm716, %v527
  %719 = vst.msk [vmem:[#allocation4 + $0x10] sm:$0xff] %vm716, %v529
  %720 = vst.msk [vmem:[#allocation4 + $0x18] sm:$0xff] %vm716, %v531
  %721 = vst.msk [vmem:[#allocation4 + $0x20] sm:$0xff] %vm716, %v533
  %722 = vst.msk [vmem:[#allocation4 + $0x28] sm:$0xff] %vm716, %v535
  %723 = vst.msk [vmem:[#allocation4 + $0x30] sm:$0xff] %vm716, %v537
  %724 = vst.msk [vmem:[#allocation4 + $0x38] sm:$0xff] %vm716, %v539
  %725 = vst.msk [vmem:[#allocation4 + $0x40] sm:$0xff] %vm716, %v541
  %726 = vst.msk [vmem:[#allocation4 + $0x48] sm:$0xff] %vm716, %v543
  %727 = vst.msk [vmem:[#allocation4 + $0x50] sm:$0xff] %vm716, %v545
  %728 = vst.msk [vmem:[#allocation4 + $0x58] sm:$0xff] %vm716, %v547
  %729 = vst.msk [vmem:[#allocation4 + $0x60] sm:$0xff] %vm716, %v549
  %730 = vst.msk [vmem:[#allocation4 + $0x68] sm:$0xff] %vm716, %v551
  %731 = vst.msk [vmem:[#allocation4 + $0x70] sm:$0xff] %vm716, %v553
  %732 = vst.msk [vmem:[#allocation4 + $0x78] sm:$0xff] %vm716, %v555
  %733 = vst.msk [vmem:[#allocation4 + $0x80] sm:$0xff] %vm716, %v557
  %734 = vst.msk [vmem:[#allocation4 + $0x88] sm:$0xff] %vm716, %v559
  %735 = vst.msk [vmem:[#allocation4 + $0x90] sm:$0xff] %vm716, %v561
  %736 = vst.msk [vmem:[#allocation4 + $0x98] sm:$0xff] %vm716, %v563
  %737 = vst.msk [vmem:[#allocation4 + $0xa0] sm:$0xff] %vm716, %v565
  %738 = vst.msk [vmem:[#allocation4 + $0xa8] sm:$0xff] %vm716, %v567
  %739 = vst.msk [vmem:[#allocation4 + $0xb0] sm:$0xff] %vm716, %v569
  %740 = vst.msk [vmem:[#allocation4 + $0xb8] sm:$0xff] %vm716, %v571
  %741 = vst.msk [vmem:[#allocation4 + $0xc0] sm:$0xff] %vm716, %v573
  %742 = vst.msk [vmem:[#allocation4 + $0xc8] sm:$0xff] %vm716, %v575
  %743 = vst.msk [vmem:[#allocation4 + $0xd0] sm:$0xff] %vm716, %v577
  %744 = vst.msk [vmem:[#allocation4 + $0xd8] sm:$0xff] %vm716, %v579
  %745 = vst.msk [vmem:[#allocation4 + $0xe0] sm:$0xff] %vm716, %v581
  %746 = vst.msk [vmem:[#allocation4 + $0xe8] sm:$0xff] %vm716, %v583
  %747 = vst.msk [vmem:[#allocation4 + $0xf0] sm:$0xff] %vm716, %v585
  %748 = vst.msk [vmem:[#allocation4 + $0xf8] sm:$0xff] %vm716, %v587
  %749 = vst.msk [vmem:[#allocation4 + $0x100] sm:$0xff] %vm716, %v589
  %750 = vst.msk [vmem:[#allocation4 + $0x108] sm:$0xff] %vm716, %v591
  %751 = vst.msk [vmem:[#allocation4 + $0x110] sm:$0xff] %vm716, %v593
  %752 = vst.msk [vmem:[#allocation4 + $0x118] sm:$0xff] %vm716, %v595
  %753 = vst.msk [vmem:[#allocation4 + $0x120] sm:$0xff] %vm716, %v597
  %754 = vst.msk [vmem:[#allocation4 + $0x128] sm:$0xff] %vm716, %v599
  %755 = vst.msk [vmem:[#allocation4 + $0x130] sm:$0xff] %vm716, %v601
  %756 = vst.msk [vmem:[#allocation4 + $0x138] sm:$0xff] %vm716, %v603
  %757 = vst.msk [vmem:[#allocation4 + $0x140] sm:$0xff] %vm716, %v605
  %758 = vst.msk [vmem:[#allocation4 + $0x148] sm:$0xff] %vm716, %v607
  %759 = vst.msk [vmem:[#allocation4 + $0x150] sm:$0xff] %vm716, %v609
  %760 = vst.msk [vmem:[#allocation4 + $0x158] sm:$0xff] %vm716, %v611
  %761 = vst.msk [vmem:[#allocation4 + $0x160] sm:$0xff] %vm716, %v613
  %762 = vst.msk [vmem:[#allocation4 + $0x168] sm:$0xff] %vm716, %v615
  %763 = vst.msk [vmem:[#allocation4 + $0x170] sm:$0xff] %vm716, %v617
  %764 = vst.msk [vmem:[#allocation4 + $0x178] sm:$0xff] %vm716, %v619
  %765 = vst.msk [vmem:[#allocation4 + $0x180] sm:$0xff] %vm716, %v621
  %766 = vst.msk [vmem:[#allocation4 + $0x188] sm:$0xff] %vm716, %v623
  %767 = vst.msk [vmem:[#allocation4 + $0x190] sm:$0xff] %vm716, %v625
  %768 = vst.msk [vmem:[#allocation4 + $0x198] sm:$0xff] %vm716, %v627
  %769 = vst.msk [vmem:[#allocation4 + $0x1a0] sm:$0xff] %vm716, %v629
  %770 = vst.msk [vmem:[#allocation4 + $0x1a8] sm:$0xff] %vm716, %v631
  %771 = vst.msk [vmem:[#allocation4 + $0x1b0] sm:$0xff] %vm716, %v633
  %772 = vst.msk [vmem:[#allocation4 + $0x1b8] sm:$0xff] %vm716, %v635
  %773 = vst.msk [vmem:[#allocation4 + $0x1c0] sm:$0xff] %vm716, %v637
  %774 = vst.msk [vmem:[#allocation4 + $0x1c8] sm:$0xff] %vm716, %v639
  %775 = vst.msk [vmem:[#allocation4 + $0x1d0] sm:$0xff] %vm716, %v641
  %776 = vst.msk [vmem:[#allocation4 + $0x1d8] sm:$0xff] %vm716, %v643
  %777 = vst.msk [vmem:[#allocation4 + $0x1e0] sm:$0xff] %vm716, %v645
  %778 = vst.msk [vmem:[#allocation4 + $0x1e8] sm:$0xff] %vm716, %v647
  %779 = vst.msk [vmem:[#allocation4 + $0x1f0] sm:$0xff] %vm716, %v649
  %780 = vst.msk [vmem:[#allocation4 + $0x1f8] sm:$0xff] %vm716, %v651
  %v781 = vld [vmem:[#allocation2 + $0x2] sm:$0xff]
  %v782 = vld [vmem:[#allocation2 + $0xa] sm:$0xff]
  %v783 = vld [vmem:[#allocation2 + $0x1a] sm:$0xff]
  %v784 = vld [vmem:[#allocation2 + $0x22] sm:$0xff]
  %v785 = vld [vmem:[#allocation2 + $0x32] sm:$0xff]
  %v786 = vld [vmem:[#allocation2 + $0x3a] sm:$0xff]
  %v787 = vld [vmem:[#allocation2 + $0x4a] sm:$0xff]
  %v788 = vld [vmem:[#allocation2 + $0x52] sm:$0xff]
  %v789 = vld [vmem:[#allocation2 + $0x62] sm:$0xff]
  %v790 = vld [vmem:[#allocation2 + $0x6a] sm:$0xff]
  %v791 = vld [vmem:[#allocation2 + $0x7a] sm:$0xff]
  %v792 = vld [vmem:[#allocation2 + $0x82] sm:$0xff]
  %v793 = vld [vmem:[#allocation2 + $0x92] sm:$0xff]
  %v794 = vld [vmem:[#allocation2 + $0x9a] sm:$0xff]
  %v795 = vld [vmem:[#allocation2 + $0xaa] sm:$0xff]
  %v796 = vld [vmem:[#allocation2 + $0xb2] sm:$0xff]
  %v797 = vld [vmem:[#allocation2 + $0xc2] sm:$0xff]
  %v798 = vld [vmem:[#allocation2 + $0xca] sm:$0xff]
  %v799 = vld [vmem:[#allocation2 + $0xda] sm:$0xff]
  %v800 = vld [vmem:[#allocation2 + $0xe2] sm:$0xff]
  %v801 = vld [vmem:[#allocation2 + $0xf2] sm:$0xff]
  %v802 = vld [vmem:[#allocation2 + $0xfa] sm:$0xff]
  %v803 = vld [vmem:[#allocation2 + $0x10a] sm:$0xff]
  %v804 = vld [vmem:[#allocation2 + $0x112] sm:$0xff]
  %v805 = vld [vmem:[#allocation2 + $0x122] sm:$0xff]
  %v806 = vld [vmem:[#allocation2 + $0x12a] sm:$0xff]
  %v807 = vld [vmem:[#allocation2 + $0x13a] sm:$0xff]
  %v808 = vld [vmem:[#allocation2 + $0x142] sm:$0xff]
  %v809 = vld [vmem:[#allocation2 + $0x152] sm:$0xff]
  %v810 = vld [vmem:[#allocation2 + $0x15a] sm:$0xff]
  %v811 = vld [vmem:[#allocation2 + $0x16a] sm:$0xff]
  %v812 = vld [vmem:[#allocation2 + $0x172] sm:$0xff]
  %v813 = vld [vmem:[#allocation2 + $0x1b2] sm:$0xff]
  %v814 = vld [vmem:[#allocation2 + $0x1ba] sm:$0xff]
  %v815 = vld [vmem:[#allocation2 + $0x1ca] sm:$0xff]
  %v816 = vld [vmem:[#allocation2 + $0x1d2] sm:$0xff]
  %v817 = vld [vmem:[#allocation2 + $0x1e2] sm:$0xff]
  %v818 = vld [vmem:[#allocation2 + $0x1ea] sm:$0xff]
  %v819 = vld [vmem:[#allocation2 + $0x1fa] sm:$0xff]
  %v820 = vld [vmem:[#allocation2 + $0x202] sm:$0xff]
  %v821 = vld [vmem:[#allocation2 + $0x212] sm:$0xff]
  %v822 = vld [vmem:[#allocation2 + $0x21a] sm:$0xff]
  %v823 = vld [vmem:[#allocation2 + $0x22a] sm:$0xff]
  %v824 = vld [vmem:[#allocation2 + $0x232] sm:$0xff]
  %v825 = vld [vmem:[#allocation2 + $0x242] sm:$0xff]
  %v826 = vld [vmem:[#allocation2 + $0x24a] sm:$0xff]
  %v827 = vld [vmem:[#allocation2 + $0x25a] sm:$0xff]
  %v828 = vld [vmem:[#allocation2 + $0x262] sm:$0xff]
  %v829 = vld [vmem:[#allocation2 + $0x272] sm:$0xff]
  %v830 = vld [vmem:[#allocation2 + $0x27a] sm:$0xff]
  %v831 = vld [vmem:[#allocation2 + $0x28a] sm:$0xff]
  %v832 = vld [vmem:[#allocation2 + $0x292] sm:$0xff]
  %v833 = vld [vmem:[#allocation2 + $0x2a2] sm:$0xff]
  %v834 = vld [vmem:[#allocation2 + $0x2aa] sm:$0xff]
  %v835 = vld [vmem:[#allocation2 + $0x2ba] sm:$0xff]
  %v836 = vld [vmem:[#allocation2 + $0x2c2] sm:$0xff]
  %v837 = vld [vmem:[#allocation2 + $0x2d2] sm:$0xff]
  %v838 = vld [vmem:[#allocation2 + $0x2da] sm:$0xff]
  %v839 = vld [vmem:[#allocation2 + $0x2ea] sm:$0xff]
  %v840 = vld [vmem:[#allocation2 + $0x2f2] sm:$0xff]
  %v841 = vld [vmem:[#allocation2 + $0x302] sm:$0xff]
  %v842 = vld [vmem:[#allocation2 + $0x30a] sm:$0xff]
  %v843 = vld [vmem:[#allocation2 + $0x31a] sm:$0xff]
  %v844 = vld [vmem:[#allocation2 + $0x322] sm:$0xff]
  %909 = vrot.lane.b32.xlu0 %v781, 8
  %v910 = vpop.permute.xlu0 %909
  %911 = vrot.lane.b32.xlu0 %v782, 8
  %v912 = vpop.permute.xlu0 %911
  %913 = vrot.lane.b32.xlu0 %v783, 8
  %v914 = vpop.permute.xlu0 %913
  %915 = vrot.lane.b32.xlu0 %v784, 8
  %v916 = vpop.permute.xlu0 %915
  %917 = vrot.lane.b32.xlu0 %v785, 8
  %v918 = vpop.permute.xlu0 %917
  %919 = vrot.lane.b32.xlu0 %v786, 8
  %v920 = vpop.permute.xlu0 %919
  %921 = vrot.lane.b32.xlu0 %v787, 8
  %v922 = vpop.permute.xlu0 %921
  %923 = vrot.lane.b32.xlu0 %v788, 8
  %v924 = vpop.permute.xlu0 %923
  %925 = vrot.lane.b32.xlu0 %v789, 8
  %v926 = vpop.permute.xlu0 %925
  %927 = vrot.lane.b32.xlu0 %v790, 8
  %v928 = vpop.permute.xlu0 %927
  %929 = vrot.lane.b32.xlu0 %v791, 8
  %v930 = vpop.permute.xlu0 %929
  %931 = vrot.lane.b32.xlu0 %v792, 8
  %v932 = vpop.permute.xlu0 %931
  %933 = vrot.lane.b32.xlu0 %v793, 8
  %v934 = vpop.permute.xlu0 %933
  %935 = vrot.lane.b32.xlu0 %v794, 8
  %v936 = vpop.permute.xlu0 %935
  %937 = vrot.lane.b32.xlu0 %v795, 8
  %v938 = vpop.permute.xlu0 %937
  %939 = vrot.lane.b32.xlu0 %v796, 8
  %v940 = vpop.permute.xlu0 %939
  %941 = vrot.lane.b32.xlu0 %v797, 8
  %v942 = vpop.permute.xlu0 %941
  %943 = vrot.lane.b32.xlu0 %v798, 8
  %v944 = vpop.permute.xlu0 %943
  %945 = vrot.lane.b32.xlu0 %v799, 8
  %v946 = vpop.permute.xlu0 %945
  %947 = vrot.lane.b32.xlu0 %v800, 8
  %v948 = vpop.permute.xlu0 %947
  %949 = vrot.lane.b32.xlu0 %v801, 8
  %v950 = vpop.permute.xlu0 %949
  %951 = vrot.lane.b32.xlu0 %v802, 8
  %v952 = vpop.permute.xlu0 %951
  %953 = vrot.lane.b32.xlu0 %v803, 8
  %v954 = vpop.permute.xlu0 %953
  %955 = vrot.lane.b32.xlu0 %v804, 8
  %v956 = vpop.permute.xlu0 %955
  %957 = vrot.lane.b32.xlu0 %v805, 8
  %v958 = vpop.permute.xlu0 %957
  %959 = vrot.lane.b32.xlu0 %v806, 8
  %v960 = vpop.permute.xlu0 %959
  %961 = vrot.lane.b32.xlu0 %v807, 8
  %v962 = vpop.permute.xlu0 %961
  %963 = vrot.lane.b32.xlu0 %v808, 8
  %v964 = vpop.permute.xlu0 %963
  %965 = vrot.lane.b32.xlu0 %v809, 8
  %v966 = vpop.permute.xlu0 %965
  %967 = vrot.lane.b32.xlu0 %v810, 8
  %v968 = vpop.permute.xlu0 %967
  %969 = vrot.lane.b32.xlu0 %v811, 8
  %v970 = vpop.permute.xlu0 %969
  %971 = vrot.lane.b32.xlu0 %v812, 8
  %v972 = vpop.permute.xlu0 %971
  %973 = vrot.lane.b32.xlu0 %v813, 8
  %v974 = vpop.permute.xlu0 %973
  %975 = vrot.lane.b32.xlu0 %v814, 8
  %v976 = vpop.permute.xlu0 %975
  %977 = vrot.lane.b32.xlu0 %v815, 8
  %v978 = vpop.permute.xlu0 %977
  %979 = vrot.lane.b32.xlu0 %v816, 8
  %v980 = vpop.permute.xlu0 %979
  %981 = vrot.lane.b32.xlu0 %v817, 8
  %v982 = vpop.permute.xlu0 %981
  %983 = vrot.lane.b32.xlu0 %v818, 8
  %v984 = vpop.permute.xlu0 %983
  %985 = vrot.lane.b32.xlu0 %v819, 8
  %v986 = vpop.permute.xlu0 %985
  %987 = vrot.lane.b32.xlu0 %v820, 8
  %v988 = vpop.permute.xlu0 %987
  %989 = vrot.lane.b32.xlu0 %v821, 8
  %v990 = vpop.permute.xlu0 %989
  %991 = vrot.lane.b32.xlu0 %v822, 8
  %v992 = vpop.permute.xlu0 %991
  %993 = vrot.lane.b32.xlu0 %v823, 8
  %v994 = vpop.permute.xlu0 %993
  %995 = vrot.lane.b32.xlu0 %v824, 8
  %v996 = vpop.permute.xlu0 %995
  %997 = vrot.lane.b32.xlu0 %v825, 8
  %v998 = vpop.permute.xlu0 %997
  %999 = vrot.lane.b32.xlu0 %v826, 8
  %v1000 = vpop.permute.xlu0 %999
  %1001 = vrot.lane.b32.xlu0 %v827, 8
  %v1002 = vpop.permute.xlu0 %1001
  %1003 = vrot.lane.b32.xlu0 %v828, 8
  %v1004 = vpop.permute.xlu0 %1003
  %1005 = vrot.lane.b32.xlu0 %v829, 8
  %v1006 = vpop.permute.xlu0 %1005
  %1007 = vrot.lane.b32.xlu0 %v830, 8
  %v1008 = vpop.permute.xlu0 %1007
  %1009 = vrot.lane.b32.xlu0 %v831, 8
  %v1010 = vpop.permute.xlu0 %1009
  %1011 = vrot.lane.b32.xlu0 %v832, 8
  %v1012 = vpop.permute.xlu0 %1011
  %1013 = vrot.lane.b32.xlu0 %v833, 8
  %v1014 = vpop.permute.xlu0 %1013
  %1015 = vrot.lane.b32.xlu0 %v834, 8
  %v1016 = vpop.permute.xlu0 %1015
  %1017 = vrot.lane.b32.xlu0 %v835, 8
  %v1018 = vpop.permute.xlu0 %1017
  %1019 = vrot.lane.b32.xlu0 %v836, 8
  %v1020 = vpop.permute.xlu0 %1019
  %1021 = vrot.lane.b32.xlu0 %v837, 8
  %v1022 = vpop.permute.xlu0 %1021
  %1023 = vrot.lane.b32.xlu0 %v838, 8
  %v1024 = vpop.permute.xlu0 %1023
  %1025 = vrot.lane.b32.xlu0 %v839, 8
  %v1026 = vpop.permute.xlu0 %1025
  %1027 = vrot.lane.b32.xlu0 %v840, 8
  %v1028 = vpop.permute.xlu0 %1027
  %1029 = vrot.lane.b32.xlu0 %v841, 8
  %v1030 = vpop.permute.xlu0 %1029
  %1031 = vrot.lane.b32.xlu0 %v842, 8
  %v1032 = vpop.permute.xlu0 %1031
  %1033 = vrot.lane.b32.xlu0 %v843, 8
  %v1034 = vpop.permute.xlu0 %1033
  %1035 = vrot.lane.b32.xlu0 %v844, 8
  %v1036 = vpop.permute.xlu0 %1035
  %vm1101 = vcmask 97344
  %1102 = vst.msk [vmem:[#allocation4] sm:$0xff] %vm1101, %v910
  %1103 = vst.msk [vmem:[#allocation4 + $0x8] sm:$0xff] %vm1101, %v912
  %1104 = vst.msk [vmem:[#allocation4 + $0x10] sm:$0xff] %vm1101, %v914
  %1105 = vst.msk [vmem:[#allocation4 + $0x18] sm:$0xff] %vm1101, %v916
  %1106 = vst.msk [vmem:[#allocation4 + $0x20] sm:$0xff] %vm1101, %v918
  %1107 = vst.msk [vmem:[#allocation4 + $0x28] sm:$0xff] %vm1101, %v920
  %1108 = vst.msk [vmem:[#allocation4 + $0x30] sm:$0xff] %vm1101, %v922
  %1109 = vst.msk [vmem:[#allocation4 + $0x38] sm:$0xff] %vm1101, %v924
  %1110 = vst.msk [vmem:[#allocation4 + $0x40] sm:$0xff] %vm1101, %v926
  %1111 = vst.msk [vmem:[#allocation4 + $0x48] sm:$0xff] %vm1101, %v928
  %1112 = vst.msk [vmem:[#allocation4 + $0x50] sm:$0xff] %vm1101, %v930
  %1113 = vst.msk [vmem:[#allocation4 + $0x58] sm:$0xff] %vm1101, %v932
  %1114 = vst.msk [vmem:[#allocation4 + $0x60] sm:$0xff] %vm1101, %v934
  %1115 = vst.msk [vmem:[#allocation4 + $0x68] sm:$0xff] %vm1101, %v936
  %1116 = vst.msk [vmem:[#allocation4 + $0x70] sm:$0xff] %vm1101, %v938
  %1117 = vst.msk [vmem:[#allocation4 + $0x78] sm:$0xff] %vm1101, %v940
  %1118 = vst.msk [vmem:[#allocation4 + $0x80] sm:$0xff] %vm1101, %v942
  %1119 = vst.msk [vmem:[#allocation4 + $0x88] sm:$0xff] %vm1101, %v944
  %1120 = vst.msk [vmem:[#allocation4 + $0x90] sm:$0xff] %vm1101, %v946
  %1121 = vst.msk [vmem:[#allocation4 + $0x98] sm:$0xff] %vm1101, %v948
  %1122 = vst.msk [vmem:[#allocation4 + $0xa0] sm:$0xff] %vm1101, %v950
  %1123 = vst.msk [vmem:[#allocation4 + $0xa8] sm:$0xff] %vm1101, %v952
  %1124 = vst.msk [vmem:[#allocation4 + $0xb0] sm:$0xff] %vm1101, %v954
  %1125 = vst.msk [vmem:[#allocation4 + $0xb8] sm:$0xff] %vm1101, %v956
  %1126 = vst.msk [vmem:[#allocation4 + $0xc0] sm:$0xff] %vm1101, %v958
  %1127 = vst.msk [vmem:[#allocation4 + $0xc8] sm:$0xff] %vm1101, %v960
  %1128 = vst.msk [vmem:[#allocation4 + $0xd0] sm:$0xff] %vm1101, %v962
  %1129 = vst.msk [vmem:[#allocation4 + $0xd8] sm:$0xff] %vm1101, %v964
  %1130 = vst.msk [vmem:[#allocation4 + $0xe0] sm:$0xff] %vm1101, %v966
  %1131 = vst.msk [vmem:[#allocation4 + $0xe8] sm:$0xff] %vm1101, %v968
  %1132 = vst.msk [vmem:[#allocation4 + $0xf0] sm:$0xff] %vm1101, %v970
  %1133 = vst.msk [vmem:[#allocation4 + $0xf8] sm:$0xff] %vm1101, %v972
  %1134 = vst.msk [vmem:[#allocation4 + $0x100] sm:$0xff] %vm1101, %v974
  %1135 = vst.msk [vmem:[#allocation4 + $0x108] sm:$0xff] %vm1101, %v976
  %1136 = vst.msk [vmem:[#allocation4 + $0x110] sm:$0xff] %vm1101, %v978
  %1137 = vst.msk [vmem:[#allocation4 + $0x118] sm:$0xff] %vm1101, %v980
  %1138 = vst.msk [vmem:[#allocation4 + $0x120] sm:$0xff] %vm1101, %v982
  %1139 = vst.msk [vmem:[#allocation4 + $0x128] sm:$0xff] %vm1101, %v984
  %1140 = vst.msk [vmem:[#allocation4 + $0x130] sm:$0xff] %vm1101, %v986
  %1141 = vst.msk [vmem:[#allocation4 + $0x138] sm:$0xff] %vm1101, %v988
  %1142 = vst.msk [vmem:[#allocation4 + $0x140] sm:$0xff] %vm1101, %v990
  %1143 = vst.msk [vmem:[#allocation4 + $0x148] sm:$0xff] %vm1101, %v992
  %1144 = vst.msk [vmem:[#allocation4 + $0x150] sm:$0xff] %vm1101, %v994
  %1145 = vst.msk [vmem:[#allocation4 + $0x158] sm:$0xff] %vm1101, %v996
  %1146 = vst.msk [vmem:[#allocation4 + $0x160] sm:$0xff] %vm1101, %v998
  %1147 = vst.msk [vmem:[#allocation4 + $0x168] sm:$0xff] %vm1101, %v1000
  %1148 = vst.msk [vmem:[#allocation4 + $0x170] sm:$0xff] %vm1101, %v1002
  %1149 = vst.msk [vmem:[#allocation4 + $0x178] sm:$0xff] %vm1101, %v1004
  %1150 = vst.msk [vmem:[#allocation4 + $0x180] sm:$0xff] %vm1101, %v1006
  %1151 = vst.msk [vmem:[#allocation4 + $0x188] sm:$0xff] %vm1101, %v1008
  %1152 = vst.msk [vmem:[#allocation4 + $0x190] sm:$0xff] %vm1101, %v1010
  %1153 = vst.msk [vmem:[#allocation4 + $0x198] sm:$0xff] %vm1101, %v1012
  %1154 = vst.msk [vmem:[#allocation4 + $0x1a0] sm:$0xff] %vm1101, %v1014
  %1155 = vst.msk [vmem:[#allocation4 + $0x1a8] sm:$0xff] %vm1101, %v1016
  %1156 = vst.msk [vmem:[#allocation4 + $0x1b0] sm:$0xff] %vm1101, %v1018
  %1157 = vst.msk [vmem:[#allocation4 + $0x1b8] sm:$0xff] %vm1101, %v1020
  %1158 = vst.msk [vmem:[#allocation4 + $0x1c0] sm:$0xff] %vm1101, %v1022
  %1159 = vst.msk [vmem:[#allocation4 + $0x1c8] sm:$0xff] %vm1101, %v1024
  %1160 = vst.msk [vmem:[#allocation4 + $0x1d0] sm:$0xff] %vm1101, %v1026
  %1161 = vst.msk [vmem:[#allocation4 + $0x1d8] sm:$0xff] %vm1101, %v1028
  %1162 = vst.msk [vmem:[#allocation4 + $0x1e0] sm:$0xff] %vm1101, %v1030
  %1163 = vst.msk [vmem:[#allocation4 + $0x1e8] sm:$0xff] %vm1101, %v1032
  %1164 = vst.msk [vmem:[#allocation4 + $0x1f0] sm:$0xff] %vm1101, %v1034
  %1165 = vst.msk [vmem:[#allocation4 + $0x1f8] sm:$0xff] %vm1101, %v1036
  %v1166 = vld [vmem:[%s203] sm:$0xff]
  %v1167 = vld [vmem:[%s203 + $0x8] sm:$0xff]
  %v1168 = vld [vmem:[%s203 + $0x18] sm:$0xff]
  %v1169 = vld [vmem:[%s203 + $0x20] sm:$0xff]
  %v1170 = vld [vmem:[%s203 + $0x30] sm:$0xff]
  %v1171 = vld [vmem:[%s203 + $0x38] sm:$0xff]
  %v1172 = vld [vmem:[%s203 + $0x48] sm:$0xff]
  %v1173 = vld [vmem:[%s203 + $0x50] sm:$0xff]
  %v1174 = vld [vmem:[%s203 + $0x60] sm:$0xff]
  %v1175 = vld [vmem:[%s203 + $0x68] sm:$0xff]
  %v1176 = vld [vmem:[%s203 + $0x78] sm:$0xff]
  %v1177 = vld [vmem:[%s203 + $0x80] sm:$0xff]
  %v1178 = vld [vmem:[%s203 + $0x90] sm:$0xff]
  %v1179 = vld [vmem:[%s203 + $0x98] sm:$0xff]
  %v1180 = vld [vmem:[%s203 + $0xa8] sm:$0xff]
  %v1181 = vld [vmem:[%s203 + $0xb0] sm:$0xff]
  %v1182 = vld [vmem:[%s203 + $0xc0] sm:$0xff]
  %v1183 = vld [vmem:[%s203 + $0xc8] sm:$0xff]
  %v1184 = vld [vmem:[%s203 + $0xd8] sm:$0xff]
  %v1185 = vld [vmem:[%s203 + $0xe0] sm:$0xff]
  %v1186 = vld [vmem:[%s203 + $0xf0] sm:$0xff]
  %v1187 = vld [vmem:[%s203 + $0xf8] sm:$0xff]
  %v1188 = vld [vmem:[%s203 + $0x108] sm:$0xff]
  %v1189 = vld [vmem:[%s203 + $0x110] sm:$0xff]
  %v1190 = vld [vmem:[%s203 + $0x120] sm:$0xff]
  %v1191 = vld [vmem:[%s203 + $0x128] sm:$0xff]
  %v1192 = vld [vmem:[%s203 + $0x138] sm:$0xff]
  %v1193 = vld [vmem:[%s203 + $0x140] sm:$0xff]
  %v1194 = vld [vmem:[%s203 + $0x150] sm:$0xff]
  %v1195 = vld [vmem:[%s203 + $0x158] sm:$0xff]
  %v1196 = vld [vmem:[%s203 + $0x168] sm:$0xff]
  %v1197 = vld [vmem:[%s203 + $0x170] sm:$0xff]
  %v1198 = vld [vmem:[%s203 + $0x1b0] sm:$0xff]
  %v1199 = vld [vmem:[%s203 + $0x1b8] sm:$0xff]
  %v1200 = vld [vmem:[%s203 + $0x1c8] sm:$0xff]
  %v1201 = vld [vmem:[%s203 + $0x1d0] sm:$0xff]
  %v1202 = vld [vmem:[%s203 + $0x1e0] sm:$0xff]
  %v1203 = vld [vmem:[%s203 + $0x1e8] sm:$0xff]
  %v1204 = vld [vmem:[%s203 + $0x1f8] sm:$0xff]
  %v1205 = vld [vmem:[%s203 + $0x200] sm:$0xff]
  %v1206 = vld [vmem:[%s203 + $0x210] sm:$0xff]
  %v1207 = vld [vmem:[%s203 + $0x218] sm:$0xff]
  %v1208 = vld [vmem:[%s203 + $0x228] sm:$0xff]
  %v1209 = vld [vmem:[%s203 + $0x230] sm:$0xff]
  %v1210 = vld [vmem:[%s203 + $0x240] sm:$0xff]
  %v1211 = vld [vmem:[%s203 + $0x248] sm:$0xff]
  %v1212 = vld [vmem:[%s203 + $0x258] sm:$0xff]
  %v1213 = vld [vmem:[%s203 + $0x260] sm:$0xff]
  %v1214 = vld [vmem:[%s203 + $0x270] sm:$0xff]
  %v1215 = vld [vmem:[%s203 + $0x278] sm:$0xff]
  %v1216 = vld [vmem:[%s203 + $0x288] sm:$0xff]
  %v1217 = vld [vmem:[%s203 + $0x290] sm:$0xff]
  %v1218 = vld [vmem:[%s203 + $0x2a0] sm:$0xff]
  %v1219 = vld [vmem:[%s203 + $0x2a8] sm:$0xff]
  %v1220 = vld [vmem:[%s203 + $0x2b8] sm:$0xff]
  %v1221 = vld [vmem:[%s203 + $0x2c0] sm:$0xff]
  %v1222 = vld [vmem:[%s203 + $0x2d0] sm:$0xff]
  %v1223 = vld [vmem:[%s203 + $0x2d8] sm:$0xff]
  %v1224 = vld [vmem:[%s203 + $0x2e8] sm:$0xff]
  %v1225 = vld [vmem:[%s203 + $0x2f0] sm:$0xff]
  %v1226 = vld [vmem:[%s203 + $0x300] sm:$0xff]
  %v1227 = vld [vmem:[%s203 + $0x308] sm:$0xff]
  %v1228 = vld [vmem:[%s203 + $0x318] sm:$0xff]
  %v1229 = vld [vmem:[%s203 + $0x320] sm:$0xff]
  %1294 = vrot.lane.b32.xlu0 %v1166, 12
  %v1295 = vpop.permute.xlu0 %1294
  %1296 = vrot.lane.b32.xlu0 %v1167, 12
  %v1297 = vpop.permute.xlu0 %1296
  %1298 = vrot.lane.b32.xlu0 %v1168, 12
  %v1299 = vpop.permute.xlu0 %1298
  %1300 = vrot.lane.b32.xlu0 %v1169, 12
  %v1301 = vpop.permute.xlu0 %1300
  %1302 = vrot.lane.b32.xlu0 %v1170, 12
  %v1303 = vpop.permute.xlu0 %1302
  %1304 = vrot.lane.b32.xlu0 %v1171, 12
  %v1305 = vpop.permute.xlu0 %1304
  %1306 = vrot.lane.b32.xlu0 %v1172, 12
  %v1307 = vpop.permute.xlu0 %1306
  %1308 = vrot.lane.b32.xlu0 %v1173, 12
  %v1309 = vpop.permute.xlu0 %1308
  %1310 = vrot.lane.b32.xlu0 %v1174, 12
  %v1311 = vpop.permute.xlu0 %1310
  %1312 = vrot.lane.b32.xlu0 %v1175, 12
  %v1313 = vpop.permute.xlu0 %1312
  %1314 = vrot.lane.b32.xlu0 %v1176, 12
  %v1315 = vpop.permute.xlu0 %1314
  %1316 = vrot.lane.b32.xlu0 %v1177, 12
  %v1317 = vpop.permute.xlu0 %1316
  %1318 = vrot.lane.b32.xlu0 %v1178, 12
  %v1319 = vpop.permute.xlu0 %1318
  %1320 = vrot.lane.b32.xlu0 %v1179, 12
  %v1321 = vpop.permute.xlu0 %1320
  %1322 = vrot.lane.b32.xlu0 %v1180, 12
  %v1323 = vpop.permute.xlu0 %1322
  %1324 = vrot.lane.b32.xlu0 %v1181, 12
  %v1325 = vpop.permute.xlu0 %1324
  %1326 = vrot.lane.b32.xlu0 %v1182, 12
  %v1327 = vpop.permute.xlu0 %1326
  %1328 = vrot.lane.b32.xlu0 %v1183, 12
  %v1329 = vpop.permute.xlu0 %1328
  %1330 = vrot.lane.b32.xlu0 %v1184, 12
  %v1331 = vpop.permute.xlu0 %1330
  %1332 = vrot.lane.b32.xlu0 %v1185, 12
  %v1333 = vpop.permute.xlu0 %1332
  %1334 = vrot.lane.b32.xlu0 %v1186, 12
  %v1335 = vpop.permute.xlu0 %1334
  %1336 = vrot.lane.b32.xlu0 %v1187, 12
  %v1337 = vpop.permute.xlu0 %1336
  %1338 = vrot.lane.b32.xlu0 %v1188, 12
  %v1339 = vpop.permute.xlu0 %1338
  %1340 = vrot.lane.b32.xlu0 %v1189, 12
  %v1341 = vpop.permute.xlu0 %1340
  %1342 = vrot.lane.b32.xlu0 %v1190, 12
  %v1343 = vpop.permute.xlu0 %1342
  %1344 = vrot.lane.b32.xlu0 %v1191, 12
  %v1345 = vpop.permute.xlu0 %1344
  %1346 = vrot.lane.b32.xlu0 %v1192, 12
  %v1347 = vpop.permute.xlu0 %1346
  %1348 = vrot.lane.b32.xlu0 %v1193, 12
  %v1349 = vpop.permute.xlu0 %1348
  %1350 = vrot.lane.b32.xlu0 %v1194, 12
  %v1351 = vpop.permute.xlu0 %1350
  %1352 = vrot.lane.b32.xlu0 %v1195, 12
  %v1353 = vpop.permute.xlu0 %1352
  %1354 = vrot.lane.b32.xlu0 %v1196, 12
  %v1355 = vpop.permute.xlu0 %1354
  %1356 = vrot.lane.b32.xlu0 %v1197, 12
  %v1357 = vpop.permute.xlu0 %1356
  %1358 = vrot.lane.b32.xlu0 %v1198, 12
  %v1359 = vpop.permute.xlu0 %1358
  %1360 = vrot.lane.b32.xlu0 %v1199, 12
  %v1361 = vpop.permute.xlu0 %1360
  %1362 = vrot.lane.b32.xlu0 %v1200, 12
  %v1363 = vpop.permute.xlu0 %1362
  %1364 = vrot.lane.b32.xlu0 %v1201, 12
  %v1365 = vpop.permute.xlu0 %1364
  %1366 = vrot.lane.b32.xlu0 %v1202, 12
  %v1367 = vpop.permute.xlu0 %1366
  %1368 = vrot.lane.b32.xlu0 %v1203, 12
  %v1369 = vpop.permute.xlu0 %1368
  %1370 = vrot.lane.b32.xlu0 %v1204, 12
  %v1371 = vpop.permute.xlu0 %1370
  %1372 = vrot.lane.b32.xlu0 %v1205, 12
  %v1373 = vpop.permute.xlu0 %1372
  %1374 = vrot.lane.b32.xlu0 %v1206, 12
  %v1375 = vpop.permute.xlu0 %1374
  %1376 = vrot.lane.b32.xlu0 %v1207, 12
  %v1377 = vpop.permute.xlu0 %1376
  %1378 = vrot.lane.b32.xlu0 %v1208, 12
  %v1379 = vpop.permute.xlu0 %1378
  %1380 = vrot.lane.b32.xlu0 %v1209, 12
  %v1381 = vpop.permute.xlu0 %1380
  %1382 = vrot.lane.b32.xlu0 %v1210, 12
  %v1383 = vpop.permute.xlu0 %1382
  %1384 = vrot.lane.b32.xlu0 %v1211, 12
  %v1385 = vpop.permute.xlu0 %1384
  %1386 = vrot.lane.b32.xlu0 %v1212, 12
  %v1387 = vpop.permute.xlu0 %1386
  %1388 = vrot.lane.b32.xlu0 %v1213, 12
  %v1389 = vpop.permute.xlu0 %1388
  %1390 = vrot.lane.b32.xlu0 %v1214, 12
  %v1391 = vpop.permute.xlu0 %1390
  %1392 = vrot.lane.b32.xlu0 %v1215, 12
  %v1393 = vpop.permute.xlu0 %1392
  %1394 = vrot.lane.b32.xlu0 %v1216, 12
  %v1395 = vpop.permute.xlu0 %1394
  %1396 = vrot.lane.b32.xlu0 %v1217, 12
  %v1397 = vpop.permute.xlu0 %1396
  %1398 = vrot.lane.b32.xlu0 %v1218, 12
  %v1399 = vpop.permute.xlu0 %1398
  %1400 = vrot.lane.b32.xlu0 %v1219, 12
  %v1401 = vpop.permute.xlu0 %1400
  %1402 = vrot.lane.b32.xlu0 %v1220, 12
  %v1403 = vpop.permute.xlu0 %1402
  %1404 = vrot.lane.b32.xlu0 %v1221, 12
  %v1405 = vpop.permute.xlu0 %1404
  %1406 = vrot.lane.b32.xlu0 %v1222, 12
  %v1407 = vpop.permute.xlu0 %1406
  %1408 = vrot.lane.b32.xlu0 %v1223, 12
  %v1409 = vpop.permute.xlu0 %1408
  %1410 = vrot.lane.b32.xlu0 %v1224, 12
  %v1411 = vpop.permute.xlu0 %1410
  %1412 = vrot.lane.b32.xlu0 %v1225, 12
  %v1413 = vpop.permute.xlu0 %1412
  %1414 = vrot.lane.b32.xlu0 %v1226, 12
  %v1415 = vpop.permute.xlu0 %1414
  %1416 = vrot.lane.b32.xlu0 %v1227, 12
  %v1417 = vpop.permute.xlu0 %1416
  %1418 = vrot.lane.b32.xlu0 %v1228, 12
  %v1419 = vpop.permute.xlu0 %1418
  %1420 = vrot.lane.b32.xlu0 %v1229, 12
  %v1421 = vpop.permute.xlu0 %1420
  %vm1486 = vcmask 130144
  %1487 = vst.msk [vmem:[#allocation4] sm:$0xff] %vm1486, %v1295
  %1488 = vst.msk [vmem:[#allocation4 + $0x8] sm:$0xff] %vm1486, %v1297
  %1489 = vst.msk [vmem:[#allocation4 + $0x10] sm:$0xff] %vm1486, %v1299
  %1490 = vst.msk [vmem:[#allocation4 + $0x18] sm:$0xff] %vm1486, %v1301
  %1491 = vst.msk [vmem:[#allocation4 + $0x20] sm:$0xff] %vm1486, %v1303
  %1492 = vst.msk [vmem:[#allocation4 + $0x28] sm:$0xff] %vm1486, %v1305
  %1493 = vst.msk [vmem:[#allocation4 + $0x30] sm:$0xff] %vm1486, %v1307
  %1494 = vst.msk [vmem:[#allocation4 + $0x38] sm:$0xff] %vm1486, %v1309
  %1495 = vst.msk [vmem:[#allocation4 + $0x40] sm:$0xff] %vm1486, %v1311
  %1496 = vst.msk [vmem:[#allocation4 + $0x48] sm:$0xff] %vm1486, %v1313
  %1497 = vst.msk [vmem:[#allocation4 + $0x50] sm:$0xff] %vm1486, %v1315
  %1498 = vst.msk [vmem:[#allocation4 + $0x58] sm:$0xff] %vm1486, %v1317
  %1499 = vst.msk [vmem:[#allocation4 + $0x60] sm:$0xff] %vm1486, %v1319
  %1500 = vst.msk [vmem:[#allocation4 + $0x68] sm:$0xff] %vm1486, %v1321
  %1501 = vst.msk [vmem:[#allocation4 + $0x70] sm:$0xff] %vm1486, %v1323
  %1502 = vst.msk [vmem:[#allocation4 + $0x78] sm:$0xff] %vm1486, %v1325
  %1503 = vst.msk [vmem:[#allocation4 + $0x80] sm:$0xff] %vm1486, %v1327
  %1504 = vst.msk [vmem:[#allocation4 + $0x88] sm:$0xff] %vm1486, %v1329
  %1505 = vst.msk [vmem:[#allocation4 + $0x90] sm:$0xff] %vm1486, %v1331
  %1506 = vst.msk [vmem:[#allocation4 + $0x98] sm:$0xff] %vm1486, %v1333
  %1507 = vst.msk [vmem:[#allocation4 + $0xa0] sm:$0xff] %vm1486, %v1335
  %1508 = vst.msk [vmem:[#allocation4 + $0xa8] sm:$0xff] %vm1486, %v1337
  %1509 = vst.msk [vmem:[#allocation4 + $0xb0] sm:$0xff] %vm1486, %v1339
  %1510 = vst.msk [vmem:[#allocation4 + $0xb8] sm:$0xff] %vm1486, %v1341
  %1511 = vst.msk [vmem:[#allocation4 + $0xc0] sm:$0xff] %vm1486, %v1343
  %1512 = vst.msk [vmem:[#allocation4 + $0xc8] sm:$0xff] %vm1486, %v1345
  %1513 = vst.msk [vmem:[#allocation4 + $0xd0] sm:$0xff] %vm1486, %v1347
  %1514 = vst.msk [vmem:[#allocation4 + $0xd8] sm:$0xff] %vm1486, %v1349
  %1515 = vst.msk [vmem:[#allocation4 + $0xe0] sm:$0xff] %vm1486, %v1351
  %1516 = vst.msk [vmem:[#allocation4 + $0xe8] sm:$0xff] %vm1486, %v1353
  %1517 = vst.msk [vmem:[#allocation4 + $0xf0] sm:$0xff] %vm1486, %v1355
  %1518 = vst.msk [vmem:[#allocation4 + $0xf8] sm:$0xff] %vm1486, %v1357
  %1519 = vst.msk [vmem:[#allocation4 + $0x100] sm:$0xff] %vm1486, %v1359
  %1520 = vst.msk [vmem:[#allocation4 + $0x108] sm:$0xff] %vm1486, %v1361
  %1521 = vst.msk [vmem:[#allocation4 + $0x110] sm:$0xff] %vm1486, %v1363
  %1522 = vst.msk [vmem:[#allocation4 + $0x118] sm:$0xff] %vm1486, %v1365
  %1523 = vst.msk [vmem:[#allocation4 + $0x120] sm:$0xff] %vm1486, %v1367
  %1524 = vst.msk [vmem:[#allocation4 + $0x128] sm:$0xff] %vm1486, %v1369
  %1525 = vst.msk [vmem:[#allocation4 + $0x130] sm:$0xff] %vm1486, %v1371
  %1526 = vst.msk [vmem:[#allocation4 + $0x138] sm:$0xff] %vm1486, %v1373
  %1527 = vst.msk [vmem:[#allocation4 + $0x140] sm:$0xff] %vm1486, %v1375
  %1528 = vst.msk [vmem:[#allocation4 + $0x148] sm:$0xff] %vm1486, %v1377
  %1529 = vst.msk [vmem:[#allocation4 + $0x150] sm:$0xff] %vm1486, %v1379
  %1530 = vst.msk [vmem:[#allocation4 + $0x158] sm:$0xff] %vm1486, %v1381
  %1531 = vst.msk [vmem:[#allocation4 + $0x160] sm:$0xff] %vm1486, %v1383
  %1532 = vst.msk [vmem:[#allocation4 + $0x168] sm:$0xff] %vm1486, %v1385
  %1533 = vst.msk [vmem:[#allocation4 + $0x170] sm:$0xff] %vm1486, %v1387
  %1534 = vst.msk [vmem:[#allocation4 + $0x178] sm:$0xff] %vm1486, %v1389
  %1535 = vst.msk [vmem:[#allocation4 + $0x180] sm:$0xff] %vm1486, %v1391
  %1536 = vst.msk [vmem:[#allocation4 + $0x188] sm:$0xff] %vm1486, %v1393
  %1537 = vst.msk [vmem:[#allocation4 + $0x190] sm:$0xff] %vm1486, %v1395
  %1538 = vst.msk [vmem:[#allocation4 + $0x198] sm:$0xff] %vm1486, %v1397
  %1539 = vst.msk [vmem:[#allocation4 + $0x1a0] sm:$0xff] %vm1486, %v1399
  %1540 = vst.msk [vmem:[#allocation4 + $0x1a8] sm:$0xff] %vm1486, %v1401
  %1541 = vst.msk [vmem:[#allocation4 + $0x1b0] sm:$0xff] %vm1486, %v1403
  %1542 = vst.msk [vmem:[#allocation4 + $0x1b8] sm:$0xff] %vm1486, %v1405
  %1543 = vst.msk [vmem:[#allocation4 + $0x1c0] sm:$0xff] %vm1486, %v1407
  %1544 = vst.msk [vmem:[#allocation4 + $0x1c8] sm:$0xff] %vm1486, %v1409
  %1545 = vst.msk [vmem:[#allocation4 + $0x1d0] sm:$0xff] %vm1486, %v1411
  %1546 = vst.msk [vmem:[#allocation4 + $0x1d8] sm:$0xff] %vm1486, %v1413
  %1547 = vst.msk [vmem:[#allocation4 + $0x1e0] sm:$0xff] %vm1486, %v1415
  %1548 = vst.msk [vmem:[#allocation4 + $0x1e8] sm:$0xff] %vm1486, %v1417
  %1549 = vst.msk [vmem:[#allocation4 + $0x1f0] sm:$0xff] %vm1486, %v1419
  %1550 = vst.msk [vmem:[#allocation4 + $0x1f8] sm:$0xff] %vm1486, %v1421
  %v1551 = vld [vmem:[%s203 + $0x1] sm:$0xff]
  %v1552 = vld [vmem:[%s203 + $0x9] sm:$0xff]
  %v1553 = vld [vmem:[%s203 + $0x19] sm:$0xff]
  %v1554 = vld [vmem:[%s203 + $0x21] sm:$0xff]
  %v1555 = vld [vmem:[%s203 + $0x31] sm:$0xff]
  %v1556 = vld [vmem:[%s203 + $0x39] sm:$0xff]
  %v1557 = vld [vmem:[%s203 + $0x49] sm:$0xff]
  %v1558 = vld [vmem:[%s203 + $0x51] sm:$0xff]
  %v1559 = vld [vmem:[%s203 + $0x61] sm:$0xff]
  %v1560 = vld [vmem:[%s203 + $0x69] sm:$0xff]
  %v1561 = vld [vmem:[%s203 + $0x79] sm:$0xff]
  %v1562 = vld [vmem:[%s203 + $0x81] sm:$0xff]
  %v1563 = vld [vmem:[%s203 + $0x91] sm:$0xff]
  %v1564 = vld [vmem:[%s203 + $0x99] sm:$0xff]
  %v1565 = vld [vmem:[%s203 + $0xa9] sm:$0xff]
  %v1566 = vld [vmem:[%s203 + $0xb1] sm:$0xff]
  %v1567 = vld [vmem:[%s203 + $0xc1] sm:$0xff]
  %v1568 = vld [vmem:[%s203 + $0xc9] sm:$0xff]
  %v1569 = vld [vmem:[%s203 + $0xd9] sm:$0xff]
  %v1570 = vld [vmem:[%s203 + $0xe1] sm:$0xff]
  %v1571 = vld [vmem:[%s203 + $0xf1] sm:$0xff]
  %v1572 = vld [vmem:[%s203 + $0xf9] sm:$0xff]
  %v1573 = vld [vmem:[%s203 + $0x109] sm:$0xff]
  %v1574 = vld [vmem:[%s203 + $0x111] sm:$0xff]
  %v1575 = vld [vmem:[%s203 + $0x121] sm:$0xff]
  %v1576 = vld [vmem:[%s203 + $0x129] sm:$0xff]
  %v1577 = vld [vmem:[%s203 + $0x139] sm:$0xff]
  %v1578 = vld [vmem:[%s203 + $0x141] sm:$0xff]
  %v1579 = vld [vmem:[%s203 + $0x151] sm:$0xff]
  %v1580 = vld [vmem:[%s203 + $0x159] sm:$0xff]
  %v1581 = vld [vmem:[%s203 + $0x169] sm:$0xff]
  %v1582 = vld [vmem:[%s203 + $0x171] sm:$0xff]
  %v1583 = vld [vmem:[%s203 + $0x1b1] sm:$0xff]
  %v1584 = vld [vmem:[%s203 + $0x1b9] sm:$0xff]
  %v1585 = vld [vmem:[%s203 + $0x1c9] sm:$0xff]
  %v1586 = vld [vmem:[%s203 + $0x1d1] sm:$0xff]
  %v1587 = vld [vmem:[%s203 + $0x1e1] sm:$0xff]
  %v1588 = vld [vmem:[%s203 + $0x1e9] sm:$0xff]
  %v1589 = vld [vmem:[%s203 + $0x1f9] sm:$0xff]
  %v1590 = vld [vmem:[%s203 + $0x201] sm:$0xff]
  %v1591 = vld [vmem:[%s203 + $0x211] sm:$0xff]
  %v1592 = vld [vmem:[%s203 + $0x219] sm:$0xff]
  %v1593 = vld [vmem:[%s203 + $0x229] sm:$0xff]
  %v1594 = vld [vmem:[%s203 + $0x231] sm:$0xff]
  %v1595 = vld [vmem:[%s203 + $0x241] sm:$0xff]
  %v1596 = vld [vmem:[%s203 + $0x249] sm:$0xff]
  %v1597 = vld [vmem:[%s203 + $0x259] sm:$0xff]
  %v1598 = vld [vmem:[%s203 + $0x261] sm:$0xff]
  %v1599 = vld [vmem:[%s203 + $0x271] sm:$0xff]
  %v1600 = vld [vmem:[%s203 + $0x279] sm:$0xff]
  %v1601 = vld [vmem:[%s203 + $0x289] sm:$0xff]
  %v1602 = vld [vmem:[%s203 + $0x291] sm:$0xff]
  %v1603 = vld [vmem:[%s203 + $0x2a1] sm:$0xff]
  %v1604 = vld [vmem:[%s203 + $0x2a9] sm:$0xff]
  %v1605 = vld [vmem:[%s203 + $0x2b9] sm:$0xff]
  %v1606 = vld [vmem:[%s203 + $0x2c1] sm:$0xff]
  %v1607 = vld [vmem:[%s203 + $0x2d1] sm:$0xff]
  %v1608 = vld [vmem:[%s203 + $0x2d9] sm:$0xff]
  %v1609 = vld [vmem:[%s203 + $0x2e9] sm:$0xff]
  %v1610 = vld [vmem:[%s203 + $0x2f1] sm:$0xff]
  %v1611 = vld [vmem:[%s203 + $0x301] sm:$0xff]
  %v1612 = vld [vmem:[%s203 + $0x309] sm:$0xff]
  %v1613 = vld [vmem:[%s203 + $0x319] sm:$0xff]
  %v1614 = vld [vmem:[%s203 + $0x321] sm:$0xff]
  %1679 = vrot.lane.b32.xlu0 %v1551, 16
  %v1680 = vpop.permute.xlu0 %1679
  %1681 = vrot.lane.b32.xlu0 %v1552, 16
  %v1682 = vpop.permute.xlu0 %1681
  %1683 = vrot.lane.b32.xlu0 %v1553, 16
  %v1684 = vpop.permute.xlu0 %1683
  %1685 = vrot.lane.b32.xlu0 %v1554, 16
  %v1686 = vpop.permute.xlu0 %1685
  %1687 = vrot.lane.b32.xlu0 %v1555, 16
  %v1688 = vpop.permute.xlu0 %1687
  %1689 = vrot.lane.b32.xlu0 %v1556, 16
  %v1690 = vpop.permute.xlu0 %1689
  %1691 = vrot.lane.b32.xlu0 %v1557, 16
  %v1692 = vpop.permute.xlu0 %1691
  %1693 = vrot.lane.b32.xlu0 %v1558, 16
  %v1694 = vpop.permute.xlu0 %1693
  %1695 = vrot.lane.b32.xlu0 %v1559, 16
  %v1696 = vpop.permute.xlu0 %1695
  %1697 = vrot.lane.b32.xlu0 %v1560, 16
  %v1698 = vpop.permute.xlu0 %1697
  %1699 = vrot.lane.b32.xlu0 %v1561, 16
  %v1700 = vpop.permute.xlu0 %1699
  %1701 = vrot.lane.b32.xlu0 %v1562, 16
  %v1702 = vpop.permute.xlu0 %1701
  %1703 = vrot.lane.b32.xlu0 %v1563, 16
  %v1704 = vpop.permute.xlu0 %1703
  %1705 = vrot.lane.b32.xlu0 %v1564, 16
  %v1706 = vpop.permute.xlu0 %1705
  %1707 = vrot.lane.b32.xlu0 %v1565, 16
  %v1708 = vpop.permute.xlu0 %1707
  %1709 = vrot.lane.b32.xlu0 %v1566, 16
  %v1710 = vpop.permute.xlu0 %1709
  %1711 = vrot.lane.b32.xlu0 %v1567, 16
  %v1712 = vpop.permute.xlu0 %1711
  %1713 = vrot.lane.b32.xlu0 %v1568, 16
  %v1714 = vpop.permute.xlu0 %1713
  %1715 = vrot.lane.b32.xlu0 %v1569, 16
  %v1716 = vpop.permute.xlu0 %1715
  %1717 = vrot.lane.b32.xlu0 %v1570, 16
  %v1718 = vpop.permute.xlu0 %1717
  %1719 = vrot.lane.b32.xlu0 %v1571, 16
  %v1720 = vpop.permute.xlu0 %1719
  %1721 = vrot.lane.b32.xlu0 %v1572, 16
  %v1722 = vpop.permute.xlu0 %1721
  %1723 = vrot.lane.b32.xlu0 %v1573, 16
  %v1724 = vpop.permute.xlu0 %1723
  %1725 = vrot.lane.b32.xlu0 %v1574, 16
  %v1726 = vpop.permute.xlu0 %1725
  %1727 = vrot.lane.b32.xlu0 %v1575, 16
  %v1728 = vpop.permute.xlu0 %1727
  %1729 = vrot.lane.b32.xlu0 %v1576, 16
  %v1730 = vpop.permute.xlu0 %1729
  %1731 = vrot.lane.b32.xlu0 %v1577, 16
  %v1732 = vpop.permute.xlu0 %1731
  %1733 = vrot.lane.b32.xlu0 %v1578, 16
  %v1734 = vpop.permute.xlu0 %1733
  %1735 = vrot.lane.b32.xlu0 %v1579, 16
  %v1736 = vpop.permute.xlu0 %1735
  %1737 = vrot.lane.b32.xlu0 %v1580, 16
  %v1738 = vpop.permute.xlu0 %1737
  %1739 = vrot.lane.b32.xlu0 %v1581, 16
  %v1740 = vpop.permute.xlu0 %1739
  %1741 = vrot.lane.b32.xlu0 %v1582, 16
  %v1742 = vpop.permute.xlu0 %1741
  %1743 = vrot.lane.b32.xlu0 %v1583, 16
  %v1744 = vpop.permute.xlu0 %1743
  %1745 = vrot.lane.b32.xlu0 %v1584, 16
  %v1746 = vpop.permute.xlu0 %1745
  %1747 = vrot.lane.b32.xlu0 %v1585, 16
  %v1748 = vpop.permute.xlu0 %1747
  %1749 = vrot.lane.b32.xlu0 %v1586, 16
  %v1750 = vpop.permute.xlu0 %1749
  %1751 = vrot.lane.b32.xlu0 %v1587, 16
  %v1752 = vpop.permute.xlu0 %1751
  %1753 = vrot.lane.b32.xlu0 %v1588, 16
  %v1754 = vpop.permute.xlu0 %1753
  %1755 = vrot.lane.b32.xlu0 %v1589, 16
  %v1756 = vpop.permute.xlu0 %1755
  %1757 = vrot.lane.b32.xlu0 %v1590, 16
  %v1758 = vpop.permute.xlu0 %1757
  %1759 = vrot.lane.b32.xlu0 %v1591, 16
  %v1760 = vpop.permute.xlu0 %1759
  %1761 = vrot.lane.b32.xlu0 %v1592, 16
  %v1762 = vpop.permute.xlu0 %1761
  %1763 = vrot.lane.b32.xlu0 %v1593, 16
  %v1764 = vpop.permute.xlu0 %1763
  %1765 = vrot.lane.b32.xlu0 %v1594, 16
  %v1766 = vpop.permute.xlu0 %1765
  %1767 = vrot.lane.b32.xlu0 %v1595, 16
  %v1768 = vpop.permute.xlu0 %1767
  %1769 = vrot.lane.b32.xlu0 %v1596, 16
  %v1770 = vpop.permute.xlu0 %1769
  %1771 = vrot.lane.b32.xlu0 %v1597, 16
  %v1772 = vpop.permute.xlu0 %1771
  %1773 = vrot.lane.b32.xlu0 %v1598, 16
  %v1774 = vpop.permute.xlu0 %1773
  %1775 = vrot.lane.b32.xlu0 %v1599, 16
  %v1776 = vpop.permute.xlu0 %1775
  %1777 = vrot.lane.b32.xlu0 %v1600, 16
  %v1778 = vpop.permute.xlu0 %1777
  %1779 = vrot.lane.b32.xlu0 %v1601, 16
  %v1780 = vpop.permute.xlu0 %1779
  %1781 = vrot.lane.b32.xlu0 %v1602, 16
  %v1782 = vpop.permute.xlu0 %1781
  %1783 = vrot.lane.b32.xlu0 %v1603, 16
  %v1784 = vpop.permute.xlu0 %1783
  %1785 = vrot.lane.b32.xlu0 %v1604, 16
  %v1786 = vpop.permute.xlu0 %1785
  %1787 = vrot.lane.b32.xlu0 %v1605, 16
  %v1788 = vpop.permute.xlu0 %1787
  %1789 = vrot.lane.b32.xlu0 %v1606, 16
  %v1790 = vpop.permute.xlu0 %1789
  %1791 = vrot.lane.b32.xlu0 %v1607, 16
  %v1792 = vpop.permute.xlu0 %1791
  %1793 = vrot.lane.b32.xlu0 %v1608, 16
  %v1794 = vpop.permute.xlu0 %1793
  %1795 = vrot.lane.b32.xlu0 %v1609, 16
  %v1796 = vpop.permute.xlu0 %1795
  %1797 = vrot.lane.b32.xlu0 %v1610, 16
  %v1798 = vpop.permute.xlu0 %1797
  %1799 = vrot.lane.b32.xlu0 %v1611, 16
  %v1800 = vpop.permute.xlu0 %1799
  %1801 = vrot.lane.b32.xlu0 %v1612, 16
  %v1802 = vpop.permute.xlu0 %1801
  %1803 = vrot.lane.b32.xlu0 %v1613, 16
  %v1804 = vpop.permute.xlu0 %1803
  %1805 = vrot.lane.b32.xlu0 %v1614, 16
  %v1806 = vpop.permute.xlu0 %1805
  %vm1871 = vcmask 162944
  %1872 = vst.msk [vmem:[#allocation4] sm:$0xff] %vm1871, %v1680
  %1873 = vst.msk [vmem:[#allocation4 + $0x8] sm:$0xff] %vm1871, %v1682
  %1874 = vst.msk [vmem:[#allocation4 + $0x10] sm:$0xff] %vm1871, %v1684
  %1875 = vst.msk [vmem:[#allocation4 + $0x18] sm:$0xff] %vm1871, %v1686
  %1876 = vst.msk [vmem:[#allocation4 + $0x20] sm:$0xff] %vm1871, %v1688
  %1877 = vst.msk [vmem:[#allocation4 + $0x28] sm:$0xff] %vm1871, %v1690
  %1878 = vst.msk [vmem:[#allocation4 + $0x30] sm:$0xff] %vm1871, %v1692
  %1879 = vst.msk [vmem:[#allocation4 + $0x38] sm:$0xff] %vm1871, %v1694
  %1880 = vst.msk [vmem:[#allocation4 + $0x40] sm:$0xff] %vm1871, %v1696
  %1881 = vst.msk [vmem:[#allocation4 + $0x48] sm:$0xff] %vm1871, %v1698
  %1882 = vst.msk [vmem:[#allocation4 + $0x50] sm:$0xff] %vm1871, %v1700
  %1883 = vst.msk [vmem:[#allocation4 + $0x58] sm:$0xff] %vm1871, %v1702
  %1884 = vst.msk [vmem:[#allocation4 + $0x60] sm:$0xff] %vm1871, %v1704
  %1885 = vst.msk [vmem:[#allocation4 + $0x68] sm:$0xff] %vm1871, %v1706
  %1886 = vst.msk [vmem:[#allocation4 + $0x70] sm:$0xff] %vm1871, %v1708
  %1887 = vst.msk [vmem:[#allocation4 + $0x78] sm:$0xff] %vm1871, %v1710
  %1888 = vst.msk [vmem:[#allocation4 + $0x80] sm:$0xff] %vm1871, %v1712
  %1889 = vst.msk [vmem:[#allocation4 + $0x88] sm:$0xff] %vm1871, %v1714
  %1890 = vst.msk [vmem:[#allocation4 + $0x90] sm:$0xff] %vm1871, %v1716
  %1891 = vst.msk [vmem:[#allocation4 + $0x98] sm:$0xff] %vm1871, %v1718
  %1892 = vst.msk [vmem:[#allocation4 + $0xa0] sm:$0xff] %vm1871, %v1720
  %1893 = vst.msk [vmem:[#allocation4 + $0xa8] sm:$0xff] %vm1871, %v1722
  %1894 = vst.msk [vmem:[#allocation4 + $0xb0] sm:$0xff] %vm1871, %v1724
  %1895 = vst.msk [vmem:[#allocation4 + $0xb8] sm:$0xff] %vm1871, %v1726
  %1896 = vst.msk [vmem:[#allocation4 + $0xc0] sm:$0xff] %vm1871, %v1728
  %1897 = vst.msk [vmem:[#allocation4 + $0xc8] sm:$0xff] %vm1871, %v1730
  %1898 = vst.msk [vmem:[#allocation4 + $0xd0] sm:$0xff] %vm1871, %v1732
  %1899 = vst.msk [vmem:[#allocation4 + $0xd8] sm:$0xff] %vm1871, %v1734
  %1900 = vst.msk [vmem:[#allocation4 + $0xe0] sm:$0xff] %vm1871, %v1736
  %1901 = vst.msk [vmem:[#allocation4 + $0xe8] sm:$0xff] %vm1871, %v1738
  %1902 = vst.msk [vmem:[#allocation4 + $0xf0] sm:$0xff] %vm1871, %v1740
  %1903 = vst.msk [vmem:[#allocation4 + $0xf8] sm:$0xff] %vm1871, %v1742
  %1904 = vst.msk [vmem:[#allocation4 + $0x100] sm:$0xff] %vm1871, %v1744
  %1905 = vst.msk [vmem:[#allocation4 + $0x108] sm:$0xff] %vm1871, %v1746
  %1906 = vst.msk [vmem:[#allocation4 + $0x110] sm:$0xff] %vm1871, %v1748
  %1907 = vst.msk [vmem:[#allocation4 + $0x118] sm:$0xff] %vm1871, %v1750
  %1908 = vst.msk [vmem:[#allocation4 + $0x120] sm:$0xff] %vm1871, %v1752
  %1909 = vst.msk [vmem:[#allocation4 + $0x128] sm:$0xff] %vm1871, %v1754
  %1910 = vst.msk [vmem:[#allocation4 + $0x130] sm:$0xff] %vm1871, %v1756
  %1911 = vst.msk [vmem:[#allocation4 + $0x138] sm:$0xff] %vm1871, %v1758
  %1912 = vst.msk [vmem:[#allocation4 + $0x140] sm:$0xff] %vm1871, %v1760
  %1913 = vst.msk [vmem:[#allocation4 + $0x148] sm:$0xff] %vm1871, %v1762
  %1914 = vst.msk [vmem:[#allocation4 + $0x150] sm:$0xff] %vm1871, %v1764
  %1915 = vst.msk [vmem:[#allocation4 + $0x158] sm:$0xff] %vm1871, %v1766
  %1916 = vst.msk [vmem:[#allocation4 + $0x160] sm:$0xff] %vm1871, %v1768
  %1917 = vst.msk [vmem:[#allocation4 + $0x168] sm:$0xff] %vm1871, %v1770
  %1918 = vst.msk [vmem:[#allocation4 + $0x170] sm:$0xff] %vm1871, %v1772
  %1919 = vst.msk [vmem:[#allocation4 + $0x178] sm:$0xff] %vm1871, %v1774
  %1920 = vst.msk [vmem:[#allocation4 + $0x180] sm:$0xff] %vm1871, %v1776
  %1921 = vst.msk [vmem:[#allocation4 + $0x188] sm:$0xff] %vm1871, %v1778
  %1922 = vst.msk [vmem:[#allocation4 + $0x190] sm:$0xff] %vm1871, %v1780
  %1923 = vst.msk [vmem:[#allocation4 + $0x198] sm:$0xff] %vm1871, %v1782
  %1924 = vst.msk [vmem:[#allocation4 + $0x1a0] sm:$0xff] %vm1871, %v1784
  %1925 = vst.msk [vmem:[#allocation4 + $0x1a8] sm:$0xff] %vm1871, %v1786
  %1926 = vst.msk [vmem:[#allocation4 + $0x1b0] sm:$0xff] %vm1871, %v1788
  %1927 = vst.msk [vmem:[#allocation4 + $0x1b8] sm:$0xff] %vm1871, %v1790
  %1928 = vst.msk [vmem:[#allocation4 + $0x1c0] sm:$0xff] %vm1871, %v1792
  %1929 = vst.msk [vmem:[#allocation4 + $0x1c8] sm:$0xff] %vm1871, %v1794
  %1930 = vst.msk [vmem:[#allocation4 + $0x1d0] sm:$0xff] %vm1871, %v1796
  %1931 = vst.msk [vmem:[#allocation4 + $0x1d8] sm:$0xff] %vm1871, %v1798
  %1932 = vst.msk [vmem:[#allocation4 + $0x1e0] sm:$0xff] %vm1871, %v1800
  %1933 = vst.msk [vmem:[#allocation4 + $0x1e8] sm:$0xff] %vm1871, %v1802
  %1934 = vst.msk [vmem:[#allocation4 + $0x1f0] sm:$0xff] %vm1871, %v1804
  %1935 = vst.msk [vmem:[#allocation4 + $0x1f8] sm:$0xff] %vm1871, %v1806
  %v1936 = vld [vmem:[%s203 + $0x2] sm:$0xff]
  %v1937 = vld [vmem:[%s203 + $0xa] sm:$0xff]
  %v1938 = vld [vmem:[%s203 + $0x1a] sm:$0xff]
  %v1939 = vld [vmem:[%s203 + $0x22] sm:$0xff]
  %v1940 = vld [vmem:[%s203 + $0x32] sm:$0xff]
  %v1941 = vld [vmem:[%s203 + $0x3a] sm:$0xff]
  %v1942 = vld [vmem:[%s203 + $0x4a] sm:$0xff]
  %v1943 = vld [vmem:[%s203 + $0x52] sm:$0xff]
  %v1944 = vld [vmem:[%s203 + $0x62] sm:$0xff]
  %v1945 = vld [vmem:[%s203 + $0x6a] sm:$0xff]
  %v1946 = vld [vmem:[%s203 + $0x7a] sm:$0xff]
  %v1947 = vld [vmem:[%s203 + $0x82] sm:$0xff]
  %v1948 = vld [vmem:[%s203 + $0x92] sm:$0xff]
  %v1949 = vld [vmem:[%s203 + $0x9a] sm:$0xff]
  %v1950 = vld [vmem:[%s203 + $0xaa] sm:$0xff]
  %v1951 = vld [vmem:[%s203 + $0xb2] sm:$0xff]
  %v1952 = vld [vmem:[%s203 + $0xc2] sm:$0xff]
  %v1953 = vld [vmem:[%s203 + $0xca] sm:$0xff]
  %v1954 = vld [vmem:[%s203 + $0xda] sm:$0xff]
  %v1955 = vld [vmem:[%s203 + $0xe2] sm:$0xff]
  %v1956 = vld [vmem:[%s203 + $0xf2] sm:$0xff]
  %v1957 = vld [vmem:[%s203 + $0xfa] sm:$0xff]
  %v1958 = vld [vmem:[%s203 + $0x10a] sm:$0xff]
  %v1959 = vld [vmem:[%s203 + $0x112] sm:$0xff]
  %v1960 = vld [vmem:[%s203 + $0x122] sm:$0xff]
  %v1961 = vld [vmem:[%s203 + $0x12a] sm:$0xff]
  %v1962 = vld [vmem:[%s203 + $0x13a] sm:$0xff]
  %v1963 = vld [vmem:[%s203 + $0x142] sm:$0xff]
  %v1964 = vld [vmem:[%s203 + $0x152] sm:$0xff]
  %v1965 = vld [vmem:[%s203 + $0x15a] sm:$0xff]
  %v1966 = vld [vmem:[%s203 + $0x16a] sm:$0xff]
  %v1967 = vld [vmem:[%s203 + $0x172] sm:$0xff]
  %v1968 = vld [vmem:[%s203 + $0x1b2] sm:$0xff]
  %v1969 = vld [vmem:[%s203 + $0x1ba] sm:$0xff]
  %v1970 = vld [vmem:[%s203 + $0x1ca] sm:$0xff]
  %v1971 = vld [vmem:[%s203 + $0x1d2] sm:$0xff]
  %v1972 = vld [vmem:[%s203 + $0x1e2] sm:$0xff]
  %v1973 = vld [vmem:[%s203 + $0x1ea] sm:$0xff]
  %v1974 = vld [vmem:[%s203 + $0x1fa] sm:$0xff]
  %v1975 = vld [vmem:[%s203 + $0x202] sm:$0xff]
  %v1976 = vld [vmem:[%s203 + $0x212] sm:$0xff]
  %v1977 = vld [vmem:[%s203 + $0x21a] sm:$0xff]
  %v1978 = vld [vmem:[%s203 + $0x22a] sm:$0xff]
  %v1979 = vld [vmem:[%s203 + $0x232] sm:$0xff]
  %v1980 = vld [vmem:[%s203 + $0x242] sm:$0xff]
  %v1981 = vld [vmem:[%s203 + $0x24a] sm:$0xff]
  %v1982 = vld [vmem:[%s203 + $0x25a] sm:$0xff]
  %v1983 = vld [vmem:[%s203 + $0x262] sm:$0xff]
  %v1984 = vld [vmem:[%s203 + $0x272] sm:$0xff]
  %v1985 = vld [vmem:[%s203 + $0x27a] sm:$0xff]
  %v1986 = vld [vmem:[%s203 + $0x28a] sm:$0xff]
  %v1987 = vld [vmem:[%s203 + $0x292] sm:$0xff]
  %v1988 = vld [vmem:[%s203 + $0x2a2] sm:$0xff]
  %v1989 = vld [vmem:[%s203 + $0x2aa] sm:$0xff]
  %v1990 = vld [vmem:[%s203 + $0x2ba] sm:$0xff]
  %v1991 = vld [vmem:[%s203 + $0x2c2] sm:$0xff]
  %v1992 = vld [vmem:[%s203 + $0x2d2] sm:$0xff]
  %v1993 = vld [vmem:[%s203 + $0x2da] sm:$0xff]
  %v1994 = vld [vmem:[%s203 + $0x2ea] sm:$0xff]
  %v1995 = vld [vmem:[%s203 + $0x2f2] sm:$0xff]
  %v1996 = vld [vmem:[%s203 + $0x302] sm:$0xff]
  %v1997 = vld [vmem:[%s203 + $0x30a] sm:$0xff]
  %v1998 = vld [vmem:[%s203 + $0x31a] sm:$0xff]
  %v1999 = vld [vmem:[%s203 + $0x322] sm:$0xff]
  %2064 = vrot.lane.b32.xlu0 %v1936, 20
  %v2065 = vpop.permute.xlu0 %2064
  %2066 = vrot.lane.b32.xlu0 %v1937, 20
  %v2067 = vpop.permute.xlu0 %2066
  %2068 = vrot.lane.b32.xlu0 %v1938, 20
  %v2069 = vpop.permute.xlu0 %2068
  %2070 = vrot.lane.b32.xlu0 %v1939, 20
  %v2071 = vpop.permute.xlu0 %2070
  %2072 = vrot.lane.b32.xlu0 %v1940, 20
  %v2073 = vpop.permute.xlu0 %2072
  %2074 = vrot.lane.b32.xlu0 %v1941, 20
  %v2075 = vpop.permute.xlu0 %2074
  %2076 = vrot.lane.b32.xlu0 %v1942, 20
  %v2077 = vpop.permute.xlu0 %2076
  %2078 = vrot.lane.b32.xlu0 %v1943, 20
  %v2079 = vpop.permute.xlu0 %2078
  %2080 = vrot.lane.b32.xlu0 %v1944, 20
  %v2081 = vpop.permute.xlu0 %2080
  %2082 = vrot.lane.b32.xlu0 %v1945, 20
  %v2083 = vpop.permute.xlu0 %2082
  %2084 = vrot.lane.b32.xlu0 %v1946, 20
  %v2085 = vpop.permute.xlu0 %2084
  %2086 = vrot.lane.b32.xlu0 %v1947, 20
  %v2087 = vpop.permute.xlu0 %2086
  %2088 = vrot.lane.b32.xlu0 %v1948, 20
  %v2089 = vpop.permute.xlu0 %2088
  %2090 = vrot.lane.b32.xlu0 %v1949, 20
  %v2091 = vpop.permute.xlu0 %2090
  %2092 = vrot.lane.b32.xlu0 %v1950, 20
  %v2093 = vpop.permute.xlu0 %2092
  %2094 = vrot.lane.b32.xlu0 %v1951, 20
  %v2095 = vpop.permute.xlu0 %2094
  %2096 = vrot.lane.b32.xlu0 %v1952, 20
  %v2097 = vpop.permute.xlu0 %2096
  %2098 = vrot.lane.b32.xlu0 %v1953, 20
  %v2099 = vpop.permute.xlu0 %2098
  %2100 = vrot.lane.b32.xlu0 %v1954, 20
  %v2101 = vpop.permute.xlu0 %2100
  %2102 = vrot.lane.b32.xlu0 %v1955, 20
  %v2103 = vpop.permute.xlu0 %2102
  %2104 = vrot.lane.b32.xlu0 %v1956, 20
  %v2105 = vpop.permute.xlu0 %2104
  %2106 = vrot.lane.b32.xlu0 %v1957, 20
  %v2107 = vpop.permute.xlu0 %2106
  %2108 = vrot.lane.b32.xlu0 %v1958, 20
  %v2109 = vpop.permute.xlu0 %2108
  %2110 = vrot.lane.b32.xlu0 %v1959, 20
  %v2111 = vpop.permute.xlu0 %2110
  %2112 = vrot.lane.b32.xlu0 %v1960, 20
  %v2113 = vpop.permute.xlu0 %2112
  %2114 = vrot.lane.b32.xlu0 %v1961, 20
  %v2115 = vpop.permute.xlu0 %2114
  %2116 = vrot.lane.b32.xlu0 %v1962, 20
  %v2117 = vpop.permute.xlu0 %2116
  %2118 = vrot.lane.b32.xlu0 %v1963, 20
  %v2119 = vpop.permute.xlu0 %2118
  %2120 = vrot.lane.b32.xlu0 %v1964, 20
  %v2121 = vpop.permute.xlu0 %2120
  %2122 = vrot.lane.b32.xlu0 %v1965, 20
  %v2123 = vpop.permute.xlu0 %2122
  %2124 = vrot.lane.b32.xlu0 %v1966, 20
  %v2125 = vpop.permute.xlu0 %2124
  %2126 = vrot.lane.b32.xlu0 %v1967, 20
  %v2127 = vpop.permute.xlu0 %2126
  %2128 = vrot.lane.b32.xlu0 %v1968, 20
  %v2129 = vpop.permute.xlu0 %2128
  %2130 = vrot.lane.b32.xlu0 %v1969, 20
  %v2131 = vpop.permute.xlu0 %2130
  %2132 = vrot.lane.b32.xlu0 %v1970, 20
  %v2133 = vpop.permute.xlu0 %2132
  %2134 = vrot.lane.b32.xlu0 %v1971, 20
  %v2135 = vpop.permute.xlu0 %2134
  %2136 = vrot.lane.b32.xlu0 %v1972, 20
  %v2137 = vpop.permute.xlu0 %2136
  %2138 = vrot.lane.b32.xlu0 %v1973, 20
  %v2139 = vpop.permute.xlu0 %2138
  %2140 = vrot.lane.b32.xlu0 %v1974, 20
  %v2141 = vpop.permute.xlu0 %2140
  %2142 = vrot.lane.b32.xlu0 %v1975, 20
  %v2143 = vpop.permute.xlu0 %2142
  %2144 = vrot.lane.b32.xlu0 %v1976, 20
  %v2145 = vpop.permute.xlu0 %2144
  %2146 = vrot.lane.b32.xlu0 %v1977, 20
  %v2147 = vpop.permute.xlu0 %2146
  %2148 = vrot.lane.b32.xlu0 %v1978, 20
  %v2149 = vpop.permute.xlu0 %2148
  %2150 = vrot.lane.b32.xlu0 %v1979, 20
  %v2151 = vpop.permute.xlu0 %2150
  %2152 = vrot.lane.b32.xlu0 %v1980, 20
  %v2153 = vpop.permute.xlu0 %2152
  %2154 = vrot.lane.b32.xlu0 %v1981, 20
  %v2155 = vpop.permute.xlu0 %2154
  %2156 = vrot.lane.b32.xlu0 %v1982, 20
  %v2157 = vpop.permute.xlu0 %2156
  %2158 = vrot.lane.b32.xlu0 %v1983, 20
  %v2159 = vpop.permute.xlu0 %2158
  %2160 = vrot.lane.b32.xlu0 %v1984, 20
  %v2161 = vpop.permute.xlu0 %2160
  %2162 = vrot.lane.b32.xlu0 %v1985, 20
  %v2163 = vpop.permute.xlu0 %2162
  %2164 = vrot.lane.b32.xlu0 %v1986, 20
  %v2165 = vpop.permute.xlu0 %2164
  %2166 = vrot.lane.b32.xlu0 %v1987, 20
  %v2167 = vpop.permute.xlu0 %2166
  %2168 = vrot.lane.b32.xlu0 %v1988, 20
  %v2169 = vpop.permute.xlu0 %2168
  %2170 = vrot.lane.b32.xlu0 %v1989, 20
  %v2171 = vpop.permute.xlu0 %2170
  %2172 = vrot.lane.b32.xlu0 %v1990, 20
  %v2173 = vpop.permute.xlu0 %2172
  %2174 = vrot.lane.b32.xlu0 %v1991, 20
  %v2175 = vpop.permute.xlu0 %2174
  %2176 = vrot.lane.b32.xlu0 %v1992, 20
  %v2177 = vpop.permute.xlu0 %2176
  %2178 = vrot.lane.b32.xlu0 %v1993, 20
  %v2179 = vpop.permute.xlu0 %2178
  %2180 = vrot.lane.b32.xlu0 %v1994, 20
  %v2181 = vpop.permute.xlu0 %2180
  %2182 = vrot.lane.b32.xlu0 %v1995, 20
  %v2183 = vpop.permute.xlu0 %2182
  %2184 = vrot.lane.b32.xlu0 %v1996, 20
  %v2185 = vpop.permute.xlu0 %2184
  %2186 = vrot.lane.b32.xlu0 %v1997, 20
  %v2187 = vpop.permute.xlu0 %2186
  %2188 = vrot.lane.b32.xlu0 %v1998, 20
  %v2189 = vpop.permute.xlu0 %2188
  %2190 = vrot.lane.b32.xlu0 %v1999, 20
  %v2191 = vpop.permute.xlu0 %2190
  %vm2256 = vcmask 195744
  %2257 = vst.msk [vmem:[#allocation4] sm:$0xff] %vm2256, %v2065
  %2258 = vst.msk [vmem:[#allocation4 + $0x8] sm:$0xff] %vm2256, %v2067
  %2259 = vst.msk [vmem:[#allocation4 + $0x10] sm:$0xff] %vm2256, %v2069
  %2260 = vst.msk [vmem:[#allocation4 + $0x18] sm:$0xff] %vm2256, %v2071
  %2261 = vst.msk [vmem:[#allocation4 + $0x20] sm:$0xff] %vm2256, %v2073
  %2262 = vst.msk [vmem:[#allocation4 + $0x28] sm:$0xff] %vm2256, %v2075
  %2263 = vst.msk [vmem:[#allocation4 + $0x30] sm:$0xff] %vm2256, %v2077
  %2264 = vst.msk [vmem:[#allocation4 + $0x38] sm:$0xff] %vm2256, %v2079
  %2265 = vst.msk [vmem:[#allocation4 + $0x40] sm:$0xff] %vm2256, %v2081
  %2266 = vst.msk [vmem:[#allocation4 + $0x48] sm:$0xff] %vm2256, %v2083
  %2267 = vst.msk [vmem:[#allocation4 + $0x50] sm:$0xff] %vm2256, %v2085
  %2268 = vst.msk [vmem:[#allocation4 + $0x58] sm:$0xff] %vm2256, %v2087
  %2269 = vst.msk [vmem:[#allocation4 + $0x60] sm:$0xff] %vm2256, %v2089
  %2270 = vst.msk [vmem:[#allocation4 + $0x68] sm:$0xff] %vm2256, %v2091
  %2271 = vst.msk [vmem:[#allocation4 + $0x70] sm:$0xff] %vm2256, %v2093
  %2272 = vst.msk [vmem:[#allocation4 + $0x78] sm:$0xff] %vm2256, %v2095
  %2273 = vst.msk [vmem:[#allocation4 + $0x80] sm:$0xff] %vm2256, %v2097
  %2274 = vst.msk [vmem:[#allocation4 + $0x88] sm:$0xff] %vm2256, %v2099
  %2275 = vst.msk [vmem:[#allocation4 + $0x90] sm:$0xff] %vm2256, %v2101
  %2276 = vst.msk [vmem:[#allocation4 + $0x98] sm:$0xff] %vm2256, %v2103
  %2277 = vst.msk [vmem:[#allocation4 + $0xa0] sm:$0xff] %vm2256, %v2105
  %2278 = vst.msk [vmem:[#allocation4 + $0xa8] sm:$0xff] %vm2256, %v2107
  %2279 = vst.msk [vmem:[#allocation4 + $0xb0] sm:$0xff] %vm2256, %v2109
  %2280 = vst.msk [vmem:[#allocation4 + $0xb8] sm:$0xff] %vm2256, %v2111
  %2281 = vst.msk [vmem:[#allocation4 + $0xc0] sm:$0xff] %vm2256, %v2113
  %2282 = vst.msk [vmem:[#allocation4 + $0xc8] sm:$0xff] %vm2256, %v2115
  %2283 = vst.msk [vmem:[#allocation4 + $0xd0] sm:$0xff] %vm2256, %v2117
  %2284 = vst.msk [vmem:[#allocation4 + $0xd8] sm:$0xff] %vm2256, %v2119
  %2285 = vst.msk [vmem:[#allocation4 + $0xe0] sm:$0xff] %vm2256, %v2121
  %2286 = vst.msk [vmem:[#allocation4 + $0xe8] sm:$0xff] %vm2256, %v2123
  %2287 = vst.msk [vmem:[#allocation4 + $0xf0] sm:$0xff] %vm2256, %v2125
  %2288 = vst.msk [vmem:[#allocation4 + $0xf8] sm:$0xff] %vm2256, %v2127
  %2289 = vst.msk [vmem:[#allocation4 + $0x100] sm:$0xff] %vm2256, %v2129
  %2290 = vst.msk [vmem:[#allocation4 + $0x108] sm:$0xff] %vm2256, %v2131
  %2291 = vst.msk [vmem:[#allocation4 + $0x110] sm:$0xff] %vm2256, %v2133
  %2292 = vst.msk [vmem:[#allocation4 + $0x118] sm:$0xff] %vm2256, %v2135
  %2293 = vst.msk [vmem:[#allocation4 + $0x120] sm:$0xff] %vm2256, %v2137
  %2294 = vst.msk [vmem:[#allocation4 + $0x128] sm:$0xff] %vm2256, %v2139
  %2295 = vst.msk [vmem:[#allocation4 + $0x130] sm:$0xff] %vm2256, %v2141
  %2296 = vst.msk [vmem:[#allocation4 + $0x138] sm:$0xff] %vm2256, %v2143
  %2297 = vst.msk [vmem:[#allocation4 + $0x140] sm:$0xff] %vm2256, %v2145
  %2298 = vst.msk [vmem:[#allocation4 + $0x148] sm:$0xff] %vm2256, %v2147
  %2299 = vst.msk [vmem:[#allocation4 + $0x150] sm:$0xff] %vm2256, %v2149
  %2300 = vst.msk [vmem:[#allocation4 + $0x158] sm:$0xff] %vm2256, %v2151
  %2301 = vst.msk [vmem:[#allocation4 + $0x160] sm:$0xff] %vm2256, %v2153
  %2302 = vst.msk [vmem:[#allocation4 + $0x168] sm:$0xff] %vm2256, %v2155
  %2303 = vst.msk [vmem:[#allocation4 + $0x170] sm:$0xff] %vm2256, %v2157
  %2304 = vst.msk [vmem:[#allocation4 + $0x178] sm:$0xff] %vm2256, %v2159
  %2305 = vst.msk [vmem:[#allocation4 + $0x180] sm:$0xff] %vm2256, %v2161
  %2306 = vst.msk [vmem:[#allocation4 + $0x188] sm:$0xff] %vm2256, %v2163
  %2307 = vst.msk [vmem:[#allocation4 + $0x190] sm:$0xff] %vm2256, %v2165
  %2308 = vst.msk [vmem:[#allocation4 + $0x198] sm:$0xff] %vm2256, %v2167
  %2309 = vst.msk [vmem:[#allocation4 + $0x1a0] sm:$0xff] %vm2256, %v2169
  %2310 = vst.msk [vmem:[#allocation4 + $0x1a8] sm:$0xff] %vm2256, %v2171
  %2311 = vst.msk [vmem:[#allocation4 + $0x1b0] sm:$0xff] %vm2256, %v2173
  %2312 = vst.msk [vmem:[#allocation4 + $0x1b8] sm:$0xff] %vm2256, %v2175
  %2313 = vst.msk [vmem:[#allocation4 + $0x1c0] sm:$0xff] %vm2256, %v2177
  %2314 = vst.msk [vmem:[#allocation4 + $0x1c8] sm:$0xff] %vm2256, %v2179
  %2315 = vst.msk [vmem:[#allocation4 + $0x1d0] sm:$0xff] %vm2256, %v2181
  %2316 = vst.msk [vmem:[#allocation4 + $0x1d8] sm:$0xff] %vm2256, %v2183
  %2317 = vst.msk [vmem:[#allocation4 + $0x1e0] sm:$0xff] %vm2256, %v2185
  %2318 = vst.msk [vmem:[#allocation4 + $0x1e8] sm:$0xff] %vm2256, %v2187
  %2319 = vst.msk [vmem:[#allocation4 + $0x1f0] sm:$0xff] %vm2256, %v2189
  %2320 = vst.msk [vmem:[#allocation4 + $0x1f8] sm:$0xff] %vm2256, %v2191
  %s2321 = scalar_lea.vmem [#allocation2], 48
  %v2322 = vld [vmem:[%s2321] sm:$0xff]
  %v2323 = vld [vmem:[%s2321 + $0x8] sm:$0xff]
  %v2324 = vld [vmem:[%s2321 + $0x18] sm:$0xff]
  %v2325 = vld [vmem:[%s2321 + $0x20] sm:$0xff]
  %v2326 = vld [vmem:[%s2321 + $0x30] sm:$0xff]
  %v2327 = vld [vmem:[%s2321 + $0x38] sm:$0xff]
  %v2328 = vld [vmem:[%s2321 + $0x48] sm:$0xff]
  %v2329 = vld [vmem:[%s2321 + $0x50] sm:$0xff]
  %v2330 = vld [vmem:[%s2321 + $0x60] sm:$0xff]
  %v2331 = vld [vmem:[%s2321 + $0x68] sm:$0xff]
  %v2332 = vld [vmem:[%s2321 + $0x78] sm:$0xff]
  %v2333 = vld [vmem:[%s2321 + $0x80] sm:$0xff]
  %v2334 = vld [vmem:[%s2321 + $0x90] sm:$0xff]
  %v2335 = vld [vmem:[%s2321 + $0x98] sm:$0xff]
  %v2336 = vld [vmem:[%s2321 + $0xa8] sm:$0xff]
  %v2337 = vld [vmem:[%s2321 + $0xb0] sm:$0xff]
  %v2338 = vld [vmem:[%s2321 + $0xc0] sm:$0xff]
  %v2339 = vld [vmem:[%s2321 + $0xc8] sm:$0xff]
  %v2340 = vld [vmem:[%s2321 + $0xd8] sm:$0xff]
  %v2341 = vld [vmem:[%s2321 + $0xe0] sm:$0xff]
  %v2342 = vld [vmem:[%s2321 + $0xf0] sm:$0xff]
  %v2343 = vld [vmem:[%s2321 + $0xf8] sm:$0xff]
  %v2344 = vld [vmem:[%s2321 + $0x108] sm:$0xff]
  %v2345 = vld [vmem:[%s2321 + $0x110] sm:$0xff]
  %v2346 = vld [vmem:[%s2321 + $0x120] sm:$0xff]
  %v2347 = vld [vmem:[%s2321 + $0x128] sm:$0xff]
  %v2348 = vld [vmem:[%s2321 + $0x138] sm:$0xff]
  %v2349 = vld [vmem:[%s2321 + $0x140] sm:$0xff]
  %v2350 = vld [vmem:[%s2321 + $0x150] sm:$0xff]
  %v2351 = vld [vmem:[%s2321 + $0x158] sm:$0xff]
  %v2352 = vld [vmem:[%s2321 + $0x168] sm:$0xff]
  %v2353 = vld [vmem:[%s2321 + $0x170] sm:$0xff]
  %v2354 = vld [vmem:[%s2321 + $0x1b0] sm:$0xff]
  %v2355 = vld [vmem:[%s2321 + $0x1b8] sm:$0xff]
  %v2356 = vld [vmem:[%s2321 + $0x1c8] sm:$0xff]
  %v2357 = vld [vmem:[%s2321 + $0x1d0] sm:$0xff]
  %v2358 = vld [vmem:[%s2321 + $0x1e0] sm:$0xff]
  %v2359 = vld [vmem:[%s2321 + $0x1e8] sm:$0xff]
  %v2360 = vld [vmem:[%s2321 + $0x1f8] sm:$0xff]
  %v2361 = vld [vmem:[%s2321 + $0x200] sm:$0xff]
  %v2362 = vld [vmem:[%s2321 + $0x210] sm:$0xff]
  %v2363 = vld [vmem:[%s2321 + $0x218] sm:$0xff]
  %v2364 = vld [vmem:[%s2321 + $0x228] sm:$0xff]
  %v2365 = vld [vmem:[%s2321 + $0x230] sm:$0xff]
  %v2366 = vld [vmem:[%s2321 + $0x240] sm:$0xff]
  %v2367 = vld [vmem:[%s2321 + $0x248] sm:$0xff]
  %v2368 = vld [vmem:[%s2321 + $0x258] sm:$0xff]
  %v2369 = vld [vmem:[%s2321 + $0x260] sm:$0xff]
  %v2370 = vld [vmem:[%s2321 + $0x270] sm:$0xff]
  %v2371 = vld [vmem:[%s2321 + $0x278] sm:$0xff]
  %v2372 = vld [vmem:[%s2321 + $0x288] sm:$0xff]
  %v2373 = vld [vmem:[%s2321 + $0x290] sm:$0xff]
  %v2374 = vld [vmem:[%s2321 + $0x2a0] sm:$0xff]
  %v2375 = vld [vmem:[%s2321 + $0x2a8] sm:$0xff]
  %v2376 = vld [vmem:[%s2321 + $0x2b8] sm:$0xff]
  %v2377 = vld [vmem:[%s2321 + $0x2c0] sm:$0xff]
  %v2378 = vld [vmem:[%s2321 + $0x2d0] sm:$0xff]
  %v2379 = vld [vmem:[%s2321 + $0x2d8] sm:$0xff]
  %v2380 = vld [vmem:[%s2321 + $0x2e8] sm:$0xff]
  %v2381 = vld [vmem:[%s2321 + $0x2f0] sm:$0xff]
  %v2382 = vld [vmem:[%s2321 + $0x300] sm:$0xff]
  %v2383 = vld [vmem:[%s2321 + $0x308] sm:$0xff]
  %v2384 = vld [vmem:[%s2321 + $0x318] sm:$0xff]
  %v2385 = vld [vmem:[%s2321 + $0x320] sm:$0xff]
  %2450 = vrot.lane.b32.xlu0 %v2322, 24
  %v2451 = vpop.permute.xlu0 %2450
  %2452 = vrot.lane.b32.xlu0 %v2323, 24
  %v2453 = vpop.permute.xlu0 %2452
  %2454 = vrot.lane.b32.xlu0 %v2324, 24
  %v2455 = vpop.permute.xlu0 %2454
  %2456 = vrot.lane.b32.xlu0 %v2325, 24
  %v2457 = vpop.permute.xlu0 %2456
  %2458 = vrot.lane.b32.xlu0 %v2326, 24
  %v2459 = vpop.permute.xlu0 %2458
  %2460 = vrot.lane.b32.xlu0 %v2327, 24
  %v2461 = vpop.permute.xlu0 %2460
  %2462 = vrot.lane.b32.xlu0 %v2328, 24
  %v2463 = vpop.permute.xlu0 %2462
  %2464 = vrot.lane.b32.xlu0 %v2329, 24
  %v2465 = vpop.permute.xlu0 %2464
  %2466 = vrot.lane.b32.xlu0 %v2330, 24
  %v2467 = vpop.permute.xlu0 %2466
  %2468 = vrot.lane.b32.xlu0 %v2331, 24
  %v2469 = vpop.permute.xlu0 %2468
  %2470 = vrot.lane.b32.xlu0 %v2332, 24
  %v2471 = vpop.permute.xlu0 %2470
  %2472 = vrot.lane.b32.xlu0 %v2333, 24
  %v2473 = vpop.permute.xlu0 %2472
  %2474 = vrot.lane.b32.xlu0 %v2334, 24
  %v2475 = vpop.permute.xlu0 %2474
  %2476 = vrot.lane.b32.xlu0 %v2335, 24
  %v2477 = vpop.permute.xlu0 %2476
  %2478 = vrot.lane.b32.xlu0 %v2336, 24
  %v2479 = vpop.permute.xlu0 %2478
  %2480 = vrot.lane.b32.xlu0 %v2337, 24
  %v2481 = vpop.permute.xlu0 %2480
  %2482 = vrot.lane.b32.xlu0 %v2338, 24
  %v2483 = vpop.permute.xlu0 %2482
  %2484 = vrot.lane.b32.xlu0 %v2339, 24
  %v2485 = vpop.permute.xlu0 %2484
  %2486 = vrot.lane.b32.xlu0 %v2340, 24
  %v2487 = vpop.permute.xlu0 %2486
  %2488 = vrot.lane.b32.xlu0 %v2341, 24
  %v2489 = vpop.permute.xlu0 %2488
  %2490 = vrot.lane.b32.xlu0 %v2342, 24
  %v2491 = vpop.permute.xlu0 %2490
  %2492 = vrot.lane.b32.xlu0 %v2343, 24
  %v2493 = vpop.permute.xlu0 %2492
  %2494 = vrot.lane.b32.xlu0 %v2344, 24
  %v2495 = vpop.permute.xlu0 %2494
  %2496 = vrot.lane.b32.xlu0 %v2345, 24
  %v2497 = vpop.permute.xlu0 %2496
  %2498 = vrot.lane.b32.xlu0 %v2346, 24
  %v2499 = vpop.permute.xlu0 %2498
  %2500 = vrot.lane.b32.xlu0 %v2347, 24
  %v2501 = vpop.permute.xlu0 %2500
  %2502 = vrot.lane.b32.xlu0 %v2348, 24
  %v2503 = vpop.permute.xlu0 %2502
  %2504 = vrot.lane.b32.xlu0 %v2349, 24
  %v2505 = vpop.permute.xlu0 %2504
  %2506 = vrot.lane.b32.xlu0 %v2350, 24
  %v2507 = vpop.permute.xlu0 %2506
  %2508 = vrot.lane.b32.xlu0 %v2351, 24
  %v2509 = vpop.permute.xlu0 %2508
  %2510 = vrot.lane.b32.xlu0 %v2352, 24
  %v2511 = vpop.permute.xlu0 %2510
  %2512 = vrot.lane.b32.xlu0 %v2353, 24
  %v2513 = vpop.permute.xlu0 %2512
  %2514 = vrot.lane.b32.xlu0 %v2354, 24
  %v2515 = vpop.permute.xlu0 %2514
  %2516 = vrot.lane.b32.xlu0 %v2355, 24
  %v2517 = vpop.permute.xlu0 %2516
  %2518 = vrot.lane.b32.xlu0 %v2356, 24
  %v2519 = vpop.permute.xlu0 %2518
  %2520 = vrot.lane.b32.xlu0 %v2357, 24
  %v2521 = vpop.permute.xlu0 %2520
  %2522 = vrot.lane.b32.xlu0 %v2358, 24
  %v2523 = vpop.permute.xlu0 %2522
  %2524 = vrot.lane.b32.xlu0 %v2359, 24
  %v2525 = vpop.permute.xlu0 %2524
  %2526 = vrot.lane.b32.xlu0 %v2360, 24
  %v2527 = vpop.permute.xlu0 %2526
  %2528 = vrot.lane.b32.xlu0 %v2361, 24
  %v2529 = vpop.permute.xlu0 %2528
  %2530 = vrot.lane.b32.xlu0 %v2362, 24
  %v2531 = vpop.permute.xlu0 %2530
  %2532 = vrot.lane.b32.xlu0 %v2363, 24
  %v2533 = vpop.permute.xlu0 %2532
  %2534 = vrot.lane.b32.xlu0 %v2364, 24
  %v2535 = vpop.permute.xlu0 %2534
  %2536 = vrot.lane.b32.xlu0 %v2365, 24
  %v2537 = vpop.permute.xlu0 %2536
  %2538 = vrot.lane.b32.xlu0 %v2366, 24
  %v2539 = vpop.permute.xlu0 %2538
  %2540 = vrot.lane.b32.xlu0 %v2367, 24
  %v2541 = vpop.permute.xlu0 %2540
  %2542 = vrot.lane.b32.xlu0 %v2368, 24
  %v2543 = vpop.permute.xlu0 %2542
  %2544 = vrot.lane.b32.xlu0 %v2369, 24
  %v2545 = vpop.permute.xlu0 %2544
  %2546 = vrot.lane.b32.xlu0 %v2370, 24
  %v2547 = vpop.permute.xlu0 %2546
  %2548 = vrot.lane.b32.xlu0 %v2371, 24
  %v2549 = vpop.permute.xlu0 %2548
  %2550 = vrot.lane.b32.xlu0 %v2372, 24
  %v2551 = vpop.permute.xlu0 %2550
  %2552 = vrot.lane.b32.xlu0 %v2373, 24
  %v2553 = vpop.permute.xlu0 %2552
  %2554 = vrot.lane.b32.xlu0 %v2374, 24
  %v2555 = vpop.permute.xlu0 %2554
  %2556 = vrot.lane.b32.xlu0 %v2375, 24
  %v2557 = vpop.permute.xlu0 %2556
  %2558 = vrot.lane.b32.xlu0 %v2376, 24
  %v2559 = vpop.permute.xlu0 %2558
  %2560 = vrot.lane.b32.xlu0 %v2377, 24
  %v2561 = vpop.permute.xlu0 %2560
  %2562 = vrot.lane.b32.xlu0 %v2378, 24
  %v2563 = vpop.permute.xlu0 %2562
  %2564 = vrot.lane.b32.xlu0 %v2379, 24
  %v2565 = vpop.permute.xlu0 %2564
  %2566 = vrot.lane.b32.xlu0 %v2380, 24
  %v2567 = vpop.permute.xlu0 %2566
  %2568 = vrot.lane.b32.xlu0 %v2381, 24
  %v2569 = vpop.permute.xlu0 %2568
  %2570 = vrot.lane.b32.xlu0 %v2382, 24
  %v2571 = vpop.permute.xlu0 %2570
  %2572 = vrot.lane.b32.xlu0 %v2383, 24
  %v2573 = vpop.permute.xlu0 %2572
  %2574 = vrot.lane.b32.xlu0 %v2384, 24
  %v2575 = vpop.permute.xlu0 %2574
  %2576 = vrot.lane.b32.xlu0 %v2385, 24
  %v2577 = vpop.permute.xlu0 %2576
  %vm2642 = vcmask 228544
  %2643 = vst.msk [vmem:[#allocation4] sm:$0xff] %vm2642, %v2451
  %2644 = vst.msk [vmem:[#allocation4 + $0x8] sm:$0xff] %vm2642, %v2453
  %2645 = vst.msk [vmem:[#allocation4 + $0x10] sm:$0xff] %vm2642, %v2455
  %2646 = vst.msk [vmem:[#allocation4 + $0x18] sm:$0xff] %vm2642, %v2457
  %2647 = vst.msk [vmem:[#allocation4 + $0x20] sm:$0xff] %vm2642, %v2459
  %2648 = vst.msk [vmem:[#allocation4 + $0x28] sm:$0xff] %vm2642, %v2461
  %2649 = vst.msk [vmem:[#allocation4 + $0x30] sm:$0xff] %vm2642, %v2463
  %2650 = vst.msk [vmem:[#allocation4 + $0x38] sm:$0xff] %vm2642, %v2465
  %2651 = vst.msk [vmem:[#allocation4 + $0x40] sm:$0xff] %vm2642, %v2467
  %2652 = vst.msk [vmem:[#allocation4 + $0x48] sm:$0xff] %vm2642, %v2469
  %2653 = vst.msk [vmem:[#allocation4 + $0x50] sm:$0xff] %vm2642, %v2471
  %2654 = vst.msk [vmem:[#allocation4 + $0x58] sm:$0xff] %vm2642, %v2473
  %2655 = vst.msk [vmem:[#allocation4 + $0x60] sm:$0xff] %vm2642, %v2475
  %2656 = vst.msk [vmem:[#allocation4 + $0x68] sm:$0xff] %vm2642, %v2477
  %2657 = vst.msk [vmem:[#allocation4 + $0x70] sm:$0xff] %vm2642, %v2479
  %2658 = vst.msk [vmem:[#allocation4 + $0x78] sm:$0xff] %vm2642, %v2481
  %2659 = vst.msk [vmem:[#allocation4 + $0x80] sm:$0xff] %vm2642, %v2483
  %2660 = vst.msk [vmem:[#allocation4 + $0x88] sm:$0xff] %vm2642, %v2485
  %2661 = vst.msk [vmem:[#allocation4 + $0x90] sm:$0xff] %vm2642, %v2487
  %2662 = vst.msk [vmem:[#allocation4 + $0x98] sm:$0xff] %vm2642, %v2489
  %2663 = vst.msk [vmem:[#allocation4 + $0xa0] sm:$0xff] %vm2642, %v2491
  %2664 = vst.msk [vmem:[#allocation4 + $0xa8] sm:$0xff] %vm2642, %v2493
  %2665 = vst.msk [vmem:[#allocation4 + $0xb0] sm:$0xff] %vm2642, %v2495
  %2666 = vst.msk [vmem:[#allocation4 + $0xb8] sm:$0xff] %vm2642, %v2497
  %2667 = vst.msk [vmem:[#allocation4 + $0xc0] sm:$0xff] %vm2642, %v2499
  %2668 = vst.msk [vmem:[#allocation4 + $0xc8] sm:$0xff] %vm2642, %v2501
  %2669 = vst.msk [vmem:[#allocation4 + $0xd0] sm:$0xff] %vm2642, %v2503
  %2670 = vst.msk [vmem:[#allocation4 + $0xd8] sm:$0xff] %vm2642, %v2505
  %2671 = vst.msk [vmem:[#allocation4 + $0xe0] sm:$0xff] %vm2642, %v2507
  %2672 = vst.msk [vmem:[#allocation4 + $0xe8] sm:$0xff] %vm2642, %v2509
  %2673 = vst.msk [vmem:[#allocation4 + $0xf0] sm:$0xff] %vm2642, %v2511
  %2674 = vst.msk [vmem:[#allocation4 + $0xf8] sm:$0xff] %vm2642, %v2513
  %2675 = vst.msk [vmem:[#allocation4 + $0x100] sm:$0xff] %vm2642, %v2515
  %2676 = vst.msk [vmem:[#allocation4 + $0x108] sm:$0xff] %vm2642, %v2517
  %2677 = vst.msk [vmem:[#allocation4 + $0x110] sm:$0xff] %vm2642, %v2519
  %2678 = vst.msk [vmem:[#allocation4 + $0x118] sm:$0xff] %vm2642, %v2521
  %2679 = vst.msk [vmem:[#allocation4 + $0x120] sm:$0xff] %vm2642, %v2523
  %2680 = vst.msk [vmem:[#allocation4 + $0x128] sm:$0xff] %vm2642, %v2525
  %2681 = vst.msk [vmem:[#allocation4 + $0x130] sm:$0xff] %vm2642, %v2527
  %2682 = vst.msk [vmem:[#allocation4 + $0x138] sm:$0xff] %vm2642, %v2529
  %2683 = vst.msk [vmem:[#allocation4 + $0x140] sm:$0xff] %vm2642, %v2531
  %2684 = vst.msk [vmem:[#allocation4 + $0x148] sm:$0xff] %vm2642, %v2533
  %2685 = vst.msk [vmem:[#allocation4 + $0x150] sm:$0xff] %vm2642, %v2535
  %2686 = vst.msk [vmem:[#allocation4 + $0x158] sm:$0xff] %vm2642, %v2537
  %2687 = vst.msk [vmem:[#allocation4 + $0x160] sm:$0xff] %vm2642, %v2539
  %2688 = vst.msk [vmem:[#allocation4 + $0x168] sm:$0xff] %vm2642, %v2541
  %2689 = vst.msk [vmem:[#allocation4 + $0x170] sm:$0xff] %vm2642, %v2543
  %2690 = vst.msk [vmem:[#allocation4 + $0x178] sm:$0xff] %vm2642, %v2545
  %2691 = vst.msk [vmem:[#allocation4 + $0x180] sm:$0xff] %vm2642, %v2547
  %2692 = vst.msk [vmem:[#allocation4 + $0x188] sm:$0xff] %vm2642, %v2549
  %2693 = vst.msk [vmem:[#allocation4 + $0x190] sm:$0xff] %vm2642, %v2551
  %2694 = vst.msk [vmem:[#allocation4 + $0x198] sm:$0xff] %vm2642, %v2553
  %2695 = vst.msk [vmem:[#allocation4 + $0x1a0] sm:$0xff] %vm2642, %v2555
  %2696 = vst.msk [vmem:[#allocation4 + $0x1a8] sm:$0xff] %vm2642, %v2557
  %2697 = vst.msk [vmem:[#allocation4 + $0x1b0] sm:$0xff] %vm2642, %v2559
  %2698 = vst.msk [vmem:[#allocation4 + $0x1b8] sm:$0xff] %vm2642, %v2561
  %2699 = vst.msk [vmem:[#allocation4 + $0x1c0] sm:$0xff] %vm2642, %v2563
  %2700 = vst.msk [vmem:[#allocation4 + $0x1c8] sm:$0xff] %vm2642, %v2565
  %2701 = vst.msk [vmem:[#allocation4 + $0x1d0] sm:$0xff] %vm2642, %v2567
  %2702 = vst.msk [vmem:[#allocation4 + $0x1d8] sm:$0xff] %vm2642, %v2569
  %2703 = vst.msk [vmem:[#allocation4 + $0x1e0] sm:$0xff] %vm2642, %v2571
  %2704 = vst.msk [vmem:[#allocation4 + $0x1e8] sm:$0xff] %vm2642, %v2573
  %2705 = vst.msk [vmem:[#allocation4 + $0x1f0] sm:$0xff] %vm2642, %v2575
  %2706 = vst.msk [vmem:[#allocation4 + $0x1f8] sm:$0xff] %vm2642, %v2577
  %v2707 = vld [vmem:[%s2321 + $0x1] sm:$0xff]
  %v2708 = vld [vmem:[%s2321 + $0x9] sm:$0xff]
  %v2709 = vld [vmem:[%s2321 + $0x19] sm:$0xff]
  %v2710 = vld [vmem:[%s2321 + $0x21] sm:$0xff]
  %v2711 = vld [vmem:[%s2321 + $0x31] sm:$0xff]
  %v2712 = vld [vmem:[%s2321 + $0x39] sm:$0xff]
  %v2713 = vld [vmem:[%s2321 + $0x49] sm:$0xff]
  %v2714 = vld [vmem:[%s2321 + $0x51] sm:$0xff]
  %v2715 = vld [vmem:[%s2321 + $0x61] sm:$0xff]
  %v2716 = vld [vmem:[%s2321 + $0x69] sm:$0xff]
  %v2717 = vld [vmem:[%s2321 + $0x79] sm:$0xff]
  %v2718 = vld [vmem:[%s2321 + $0x81] sm:$0xff]
  %v2719 = vld [vmem:[%s2321 + $0x91] sm:$0xff]
  %v2720 = vld [vmem:[%s2321 + $0x99] sm:$0xff]
  %v2721 = vld [vmem:[%s2321 + $0xa9] sm:$0xff]
  %v2722 = vld [vmem:[%s2321 + $0xb1] sm:$0xff]
  %v2723 = vld [vmem:[%s2321 + $0xc1] sm:$0xff]
  %v2724 = vld [vmem:[%s2321 + $0xc9] sm:$0xff]
  %v2725 = vld [vmem:[%s2321 + $0xd9] sm:$0xff]
  %v2726 = vld [vmem:[%s2321 + $0xe1] sm:$0xff]
  %v2727 = vld [vmem:[%s2321 + $0xf1] sm:$0xff]
  %v2728 = vld [vmem:[%s2321 + $0xf9] sm:$0xff]
  %v2729 = vld [vmem:[%s2321 + $0x109] sm:$0xff]
  %v2730 = vld [vmem:[%s2321 + $0x111] sm:$0xff]
  %v2731 = vld [vmem:[%s2321 + $0x121] sm:$0xff]
  %v2732 = vld [vmem:[%s2321 + $0x129] sm:$0xff]
  %v2733 = vld [vmem:[%s2321 + $0x139] sm:$0xff]
  %v2734 = vld [vmem:[%s2321 + $0x141] sm:$0xff]
  %v2735 = vld [vmem:[%s2321 + $0x151] sm:$0xff]
  %v2736 = vld [vmem:[%s2321 + $0x159] sm:$0xff]
  %v2737 = vld [vmem:[%s2321 + $0x169] sm:$0xff]
  %v2738 = vld [vmem:[%s2321 + $0x171] sm:$0xff]
  %v2739 = vld [vmem:[%s2321 + $0x1b1] sm:$0xff]
  %v2740 = vld [vmem:[%s2321 + $0x1b9] sm:$0xff]
  %v2741 = vld [vmem:[%s2321 + $0x1c9] sm:$0xff]
  %v2742 = vld [vmem:[%s2321 + $0x1d1] sm:$0xff]
  %v2743 = vld [vmem:[%s2321 + $0x1e1] sm:$0xff]
  %v2744 = vld [vmem:[%s2321 + $0x1e9] sm:$0xff]
  %v2745 = vld [vmem:[%s2321 + $0x1f9] sm:$0xff]
  %v2746 = vld [vmem:[%s2321 + $0x201] sm:$0xff]
  %v2747 = vld [vmem:[%s2321 + $0x211] sm:$0xff]
  %v2748 = vld [vmem:[%s2321 + $0x219] sm:$0xff]
  %v2749 = vld [vmem:[%s2321 + $0x229] sm:$0xff]
  %v2750 = vld [vmem:[%s2321 + $0x231] sm:$0xff]
  %v2751 = vld [vmem:[%s2321 + $0x241] sm:$0xff]
  %v2752 = vld [vmem:[%s2321 + $0x249] sm:$0xff]
  %v2753 = vld [vmem:[%s2321 + $0x259] sm:$0xff]
  %v2754 = vld [vmem:[%s2321 + $0x261] sm:$0xff]
  %v2755 = vld [vmem:[%s2321 + $0x271] sm:$0xff]
  %v2756 = vld [vmem:[%s2321 + $0x279] sm:$0xff]
  %v2757 = vld [vmem:[%s2321 + $0x289] sm:$0xff]
  %v2758 = vld [vmem:[%s2321 + $0x291] sm:$0xff]
  %v2759 = vld [vmem:[%s2321 + $0x2a1] sm:$0xff]
  %v2760 = vld [vmem:[%s2321 + $0x2a9] sm:$0xff]
  %v2761 = vld [vmem:[%s2321 + $0x2b9] sm:$0xff]
  %v2762 = vld [vmem:[%s2321 + $0x2c1] sm:$0xff]
  %v2763 = vld [vmem:[%s2321 + $0x2d1] sm:$0xff]
  %v2764 = vld [vmem:[%s2321 + $0x2d9] sm:$0xff]
  %v2765 = vld [vmem:[%s2321 + $0x2e9] sm:$0xff]
  %v2766 = vld [vmem:[%s2321 + $0x2f1] sm:$0xff]
  %v2767 = vld [vmem:[%s2321 + $0x301] sm:$0xff]
  %v2768 = vld [vmem:[%s2321 + $0x309] sm:$0xff]
  %v2769 = vld [vmem:[%s2321 + $0x319] sm:$0xff]
  %v2770 = vld [vmem:[%s2321 + $0x321] sm:$0xff]
  %2835 = vrot.lane.b32.xlu0 %v2707, 28
  %v2836 = vpop.permute.xlu0 %2835
  %2837 = vrot.lane.b32.xlu0 %v2708, 28
  %v2838 = vpop.permute.xlu0 %2837
  %2839 = vrot.lane.b32.xlu0 %v2709, 28
  %v2840 = vpop.permute.xlu0 %2839
  %2841 = vrot.lane.b32.xlu0 %v2710, 28
  %v2842 = vpop.permute.xlu0 %2841
  %2843 = vrot.lane.b32.xlu0 %v2711, 28
  %v2844 = vpop.permute.xlu0 %2843
  %2845 = vrot.lane.b32.xlu0 %v2712, 28
  %v2846 = vpop.permute.xlu0 %2845
  %2847 = vrot.lane.b32.xlu0 %v2713, 28
  %v2848 = vpop.permute.xlu0 %2847
  %2849 = vrot.lane.b32.xlu0 %v2714, 28
  %v2850 = vpop.permute.xlu0 %2849
  %2851 = vrot.lane.b32.xlu0 %v2715, 28
  %v2852 = vpop.permute.xlu0 %2851
  %2853 = vrot.lane.b32.xlu0 %v2716, 28
  %v2854 = vpop.permute.xlu0 %2853
  %2855 = vrot.lane.b32.xlu0 %v2717, 28
  %v2856 = vpop.permute.xlu0 %2855
  %2857 = vrot.lane.b32.xlu0 %v2718, 28
  %v2858 = vpop.permute.xlu0 %2857
  %2859 = vrot.lane.b32.xlu0 %v2719, 28
  %v2860 = vpop.permute.xlu0 %2859
  %2861 = vrot.lane.b32.xlu0 %v2720, 28
  %v2862 = vpop.permute.xlu0 %2861
  %2863 = vrot.lane.b32.xlu0 %v2721, 28
  %v2864 = vpop.permute.xlu0 %2863
  %2865 = vrot.lane.b32.xlu0 %v2722, 28
  %v2866 = vpop.permute.xlu0 %2865
  %2867 = vrot.lane.b32.xlu0 %v2723, 28
  %v2868 = vpop.permute.xlu0 %2867
  %2869 = vrot.lane.b32.xlu0 %v2724, 28
  %v2870 = vpop.permute.xlu0 %2869
  %2871 = vrot.lane.b32.xlu0 %v2725, 28
  %v2872 = vpop.permute.xlu0 %2871
  %2873 = vrot.lane.b32.xlu0 %v2726, 28
  %v2874 = vpop.permute.xlu0 %2873
  %2875 = vrot.lane.b32.xlu0 %v2727, 28
  %v2876 = vpop.permute.xlu0 %2875
  %2877 = vrot.lane.b32.xlu0 %v2728, 28
  %v2878 = vpop.permute.xlu0 %2877
  %2879 = vrot.lane.b32.xlu0 %v2729, 28
  %v2880 = vpop.permute.xlu0 %2879
  %2881 = vrot.lane.b32.xlu0 %v2730, 28
  %v2882 = vpop.permute.xlu0 %2881
  %2883 = vrot.lane.b32.xlu0 %v2731, 28
  %v2884 = vpop.permute.xlu0 %2883
  %2885 = vrot.lane.b32.xlu0 %v2732, 28
  %v2886 = vpop.permute.xlu0 %2885
  %2887 = vrot.lane.b32.xlu0 %v2733, 28
  %v2888 = vpop.permute.xlu0 %2887
  %2889 = vrot.lane.b32.xlu0 %v2734, 28
  %v2890 = vpop.permute.xlu0 %2889
  %2891 = vrot.lane.b32.xlu0 %v2735, 28
  %v2892 = vpop.permute.xlu0 %2891
  %2893 = vrot.lane.b32.xlu0 %v2736, 28
  %v2894 = vpop.permute.xlu0 %2893
  %2895 = vrot.lane.b32.xlu0 %v2737, 28
  %v2896 = vpop.permute.xlu0 %2895
  %2897 = vrot.lane.b32.xlu0 %v2738, 28
  %v2898 = vpop.permute.xlu0 %2897
  %2899 = vrot.lane.b32.xlu0 %v2739, 28
  %v2900 = vpop.permute.xlu0 %2899
  %2901 = vrot.lane.b32.xlu0 %v2740, 28
  %v2902 = vpop.permute.xlu0 %2901
  %2903 = vrot.lane.b32.xlu0 %v2741, 28
  %v2904 = vpop.permute.xlu0 %2903
  %2905 = vrot.lane.b32.xlu0 %v2742, 28
  %v2906 = vpop.permute.xlu0 %2905
  %2907 = vrot.lane.b32.xlu0 %v2743, 28
  %v2908 = vpop.permute.xlu0 %2907
  %2909 = vrot.lane.b32.xlu0 %v2744, 28
  %v2910 = vpop.permute.xlu0 %2909
  %2911 = vrot.lane.b32.xlu0 %v2745, 28
  %v2912 = vpop.permute.xlu0 %2911
  %2913 = vrot.lane.b32.xlu0 %v2746, 28
  %v2914 = vpop.permute.xlu0 %2913
  %2915 = vrot.lane.b32.xlu0 %v2747, 28
  %v2916 = vpop.permute.xlu0 %2915
  %2917 = vrot.lane.b32.xlu0 %v2748, 28
  %v2918 = vpop.permute.xlu0 %2917
  %2919 = vrot.lane.b32.xlu0 %v2749, 28
  %v2920 = vpop.permute.xlu0 %2919
  %2921 = vrot.lane.b32.xlu0 %v2750, 28
  %v2922 = vpop.permute.xlu0 %2921
  %2923 = vrot.lane.b32.xlu0 %v2751, 28
  %v2924 = vpop.permute.xlu0 %2923
  %2925 = vrot.lane.b32.xlu0 %v2752, 28
  %v2926 = vpop.permute.xlu0 %2925
  %2927 = vrot.lane.b32.xlu0 %v2753, 28
  %v2928 = vpop.permute.xlu0 %2927
  %2929 = vrot.lane.b32.xlu0 %v2754, 28
  %v2930 = vpop.permute.xlu0 %2929
  %2931 = vrot.lane.b32.xlu0 %v2755, 28
  %v2932 = vpop.permute.xlu0 %2931
  %2933 = vrot.lane.b32.xlu0 %v2756, 28
  %v2934 = vpop.permute.xlu0 %2933
  %2935 = vrot.lane.b32.xlu0 %v2757, 28
  %v2936 = vpop.permute.xlu0 %2935
  %2937 = vrot.lane.b32.xlu0 %v2758, 28
  %v2938 = vpop.permute.xlu0 %2937
  %2939 = vrot.lane.b32.xlu0 %v2759, 28
  %v2940 = vpop.permute.xlu0 %2939
  %2941 = vrot.lane.b32.xlu0 %v2760, 28
  %v2942 = vpop.permute.xlu0 %2941
  %2943 = vrot.lane.b32.xlu0 %v2761, 28
  %v2944 = vpop.permute.xlu0 %2943
  %2945 = vrot.lane.b32.xlu0 %v2762, 28
  %v2946 = vpop.permute.xlu0 %2945
  %2947 = vrot.lane.b32.xlu0 %v2763, 28
  %v2948 = vpop.permute.xlu0 %2947
  %2949 = vrot.lane.b32.xlu0 %v2764, 28
  %v2950 = vpop.permute.xlu0 %2949
  %2951 = vrot.lane.b32.xlu0 %v2765, 28
  %v2952 = vpop.permute.xlu0 %2951
  %2953 = vrot.lane.b32.xlu0 %v2766, 28
  %v2954 = vpop.permute.xlu0 %2953
  %2955 = vrot.lane.b32.xlu0 %v2767, 28
  %v2956 = vpop.permute.xlu0 %2955
  %2957 = vrot.lane.b32.xlu0 %v2768, 28
  %v2958 = vpop.permute.xlu0 %2957
  %2959 = vrot.lane.b32.xlu0 %v2769, 28
  %v2960 = vpop.permute.xlu0 %2959
  %2961 = vrot.lane.b32.xlu0 %v2770, 28
  %v2962 = vpop.permute.xlu0 %2961
  %vm3027 = vcmask 261344
  %3028 = vst.msk [vmem:[#allocation4] sm:$0xff] %vm3027, %v2836
  %3029 = vst.msk [vmem:[#allocation4 + $0x8] sm:$0xff] %vm3027, %v2838
  %3030 = vst.msk [vmem:[#allocation4 + $0x10] sm:$0xff] %vm3027, %v2840
  %3031 = vst.msk [vmem:[#allocation4 + $0x18] sm:$0xff] %vm3027, %v2842
  %3032 = vst.msk [vmem:[#allocation4 + $0x20] sm:$0xff] %vm3027, %v2844
  %3033 = vst.msk [vmem:[#allocation4 + $0x28] sm:$0xff] %vm3027, %v2846
  %3034 = vst.msk [vmem:[#allocation4 + $0x30] sm:$0xff] %vm3027, %v2848
  %3035 = vst.msk [vmem:[#allocation4 + $0x38] sm:$0xff] %vm3027, %v2850
  %3036 = vst.msk [vmem:[#allocation4 + $0x40] sm:$0xff] %vm3027, %v2852
  %3037 = vst.msk [vmem:[#allocation4 + $0x48] sm:$0xff] %vm3027, %v2854
  %3038 = vst.msk [vmem:[#allocation4 + $0x50] sm:$0xff] %vm3027, %v2856
  %3039 = vst.msk [vmem:[#allocation4 + $0x58] sm:$0xff] %vm3027, %v2858
  %3040 = vst.msk [vmem:[#allocation4 + $0x60] sm:$0xff] %vm3027, %v2860
  %3041 = vst.msk [vmem:[#allocation4 + $0x68] sm:$0xff] %vm3027, %v2862
  %3042 = vst.msk [vmem:[#allocation4 + $0x70] sm:$0xff] %vm3027, %v2864
  %3043 = vst.msk [vmem:[#allocation4 + $0x78] sm:$0xff] %vm3027, %v2866
  %3044 = vst.msk [vmem:[#allocation4 + $0x80] sm:$0xff] %vm3027, %v2868
  %3045 = vst.msk [vmem:[#allocation4 + $0x88] sm:$0xff] %vm3027, %v2870
  %3046 = vst.msk [vmem:[#allocation4 + $0x90] sm:$0xff] %vm3027, %v2872
  %3047 = vst.msk [vmem:[#allocation4 + $0x98] sm:$0xff] %vm3027, %v2874
  %3048 = vst.msk [vmem:[#allocation4 + $0xa0] sm:$0xff] %vm3027, %v2876
  %3049 = vst.msk [vmem:[#allocation4 + $0xa8] sm:$0xff] %vm3027, %v2878
  %3050 = vst.msk [vmem:[#allocation4 + $0xb0] sm:$0xff] %vm3027, %v2880
  %3051 = vst.msk [vmem:[#allocation4 + $0xb8] sm:$0xff] %vm3027, %v2882
  %3052 = vst.msk [vmem:[#allocation4 + $0xc0] sm:$0xff] %vm3027, %v2884
  %3053 = vst.msk [vmem:[#allocation4 + $0xc8] sm:$0xff] %vm3027, %v2886
  %3054 = vst.msk [vmem:[#allocation4 + $0xd0] sm:$0xff] %vm3027, %v2888
  %3055 = vst.msk [vmem:[#allocation4 + $0xd8] sm:$0xff] %vm3027, %v2890
  %3056 = vst.msk [vmem:[#allocation4 + $0xe0] sm:$0xff] %vm3027, %v2892
  %3057 = vst.msk [vmem:[#allocation4 + $0xe8] sm:$0xff] %vm3027, %v2894
  %3058 = vst.msk [vmem:[#allocation4 + $0xf0] sm:$0xff] %vm3027, %v2896
  %3059 = vst.msk [vmem:[#allocation4 + $0xf8] sm:$0xff] %vm3027, %v2898
  %3060 = vst.msk [vmem:[#allocation4 + $0x100] sm:$0xff] %vm3027, %v2900
  %3061 = vst.msk [vmem:[#allocation4 + $0x108] sm:$0xff] %vm3027, %v2902
  %3062 = vst.msk [vmem:[#allocation4 + $0x110] sm:$0xff] %vm3027, %v2904
  %3063 = vst.msk [vmem:[#allocation4 + $0x118] sm:$0xff] %vm3027, %v2906
  %3064 = vst.msk [vmem:[#allocation4 + $0x120] sm:$0xff] %vm3027, %v2908
  %3065 = vst.msk [vmem:[#allocation4 + $0x128] sm:$0xff] %vm3027, %v2910
  %3066 = vst.msk [vmem:[#allocation4 + $0x130] sm:$0xff] %vm3027, %v2912
  %3067 = vst.msk [vmem:[#allocation4 + $0x138] sm:$0xff] %vm3027, %v2914
  %3068 = vst.msk [vmem:[#allocation4 + $0x140] sm:$0xff] %vm3027, %v2916
  %3069 = vst.msk [vmem:[#allocation4 + $0x148] sm:$0xff] %vm3027, %v2918
  %3070 = vst.msk [vmem:[#allocation4 + $0x150] sm:$0xff] %vm3027, %v2920
  %3071 = vst.msk [vmem:[#allocation4 + $0x158] sm:$0xff] %vm3027, %v2922
  %3072 = vst.msk [vmem:[#allocation4 + $0x160] sm:$0xff] %vm3027, %v2924
  %3073 = vst.msk [vmem:[#allocation4 + $0x168] sm:$0xff] %vm3027, %v2926
  %3074 = vst.msk [vmem:[#allocation4 + $0x170] sm:$0xff] %vm3027, %v2928
  %3075 = vst.msk [vmem:[#allocation4 + $0x178] sm:$0xff] %vm3027, %v2930
  %3076 = vst.msk [vmem:[#allocation4 + $0x180] sm:$0xff] %vm3027, %v2932
  %3077 = vst.msk [vmem:[#allocation4 + $0x188] sm:$0xff] %vm3027, %v2934
  %3078 = vst.msk [vmem:[#allocation4 + $0x190] sm:$0xff] %vm3027, %v2936
  %3079 = vst.msk [vmem:[#allocation4 + $0x198] sm:$0xff] %vm3027, %v2938
  %3080 = vst.msk [vmem:[#allocation4 + $0x1a0] sm:$0xff] %vm3027, %v2940
  %3081 = vst.msk [vmem:[#allocation4 + $0x1a8] sm:$0xff] %vm3027, %v2942
  %3082 = vst.msk [vmem:[#allocation4 + $0x1b0] sm:$0xff] %vm3027, %v2944
  %3083 = vst.msk [vmem:[#allocation4 + $0x1b8] sm:$0xff] %vm3027, %v2946
  %3084 = vst.msk [vmem:[#allocation4 + $0x1c0] sm:$0xff] %vm3027, %v2948
  %3085 = vst.msk [vmem:[#allocation4 + $0x1c8] sm:$0xff] %vm3027, %v2950
  %3086 = vst.msk [vmem:[#allocation4 + $0x1d0] sm:$0xff] %vm3027, %v2952
  %3087 = vst.msk [vmem:[#allocation4 + $0x1d8] sm:$0xff] %vm3027, %v2954
  %3088 = vst.msk [vmem:[#allocation4 + $0x1e0] sm:$0xff] %vm3027, %v2956
  %3089 = vst.msk [vmem:[#allocation4 + $0x1e8] sm:$0xff] %vm3027, %v2958
  %3090 = vst.msk [vmem:[#allocation4 + $0x1f0] sm:$0xff] %vm3027, %v2960
  %3091 = vst.msk [vmem:[#allocation4 + $0x1f8] sm:$0xff] %vm3027, %v2962
  %v3092 = vld [vmem:[%s2321 + $0x2] sm:$0xff]
  %v3093 = vld [vmem:[%s2321 + $0xa] sm:$0xff]
  %v3094 = vld [vmem:[%s2321 + $0x1a] sm:$0xff]
  %v3095 = vld [vmem:[%s2321 + $0x22] sm:$0xff]
  %v3096 = vld [vmem:[%s2321 + $0x32] sm:$0xff]
  %v3097 = vld [vmem:[%s2321 + $0x3a] sm:$0xff]
  %v3098 = vld [vmem:[%s2321 + $0x4a] sm:$0xff]
  %v3099 = vld [vmem:[%s2321 + $0x52] sm:$0xff]
  %v3100 = vld [vmem:[%s2321 + $0x62] sm:$0xff]
  %v3101 = vld [vmem:[%s2321 + $0x6a] sm:$0xff]
  %v3102 = vld [vmem:[%s2321 + $0x7a] sm:$0xff]
  %v3103 = vld [vmem:[%s2321 + $0x82] sm:$0xff]
  %v3104 = vld [vmem:[%s2321 + $0x92] sm:$0xff]
  %v3105 = vld [vmem:[%s2321 + $0x9a] sm:$0xff]
  %v3106 = vld [vmem:[%s2321 + $0xaa] sm:$0xff]
  %v3107 = vld [vmem:[%s2321 + $0xb2] sm:$0xff]
  %v3108 = vld [vmem:[%s2321 + $0xc2] sm:$0xff]
  %v3109 = vld [vmem:[%s2321 + $0xca] sm:$0xff]
  %v3110 = vld [vmem:[%s2321 + $0xda] sm:$0xff]
  %v3111 = vld [vmem:[%s2321 + $0xe2] sm:$0xff]
  %v3112 = vld [vmem:[%s2321 + $0xf2] sm:$0xff]
  %v3113 = vld [vmem:[%s2321 + $0xfa] sm:$0xff]
  %v3114 = vld [vmem:[%s2321 + $0x10a] sm:$0xff]
  %v3115 = vld [vmem:[%s2321 + $0x112] sm:$0xff]
  %v3116 = vld [vmem:[%s2321 + $0x122] sm:$0xff]
  %v3117 = vld [vmem:[%s2321 + $0x12a] sm:$0xff]
  %v3118 = vld [vmem:[%s2321 + $0x13a] sm:$0xff]
  %v3119 = vld [vmem:[%s2321 + $0x142] sm:$0xff]
  %v3120 = vld [vmem:[%s2321 + $0x152] sm:$0xff]
  %v3121 = vld [vmem:[%s2321 + $0x15a] sm:$0xff]
  %v3122 = vld [vmem:[%s2321 + $0x16a] sm:$0xff]
  %v3123 = vld [vmem:[%s2321 + $0x172] sm:$0xff]
  %v3124 = vld [vmem:[%s2321 + $0x1b2] sm:$0xff]
  %v3125 = vld [vmem:[%s2321 + $0x1ba] sm:$0xff]
  %v3126 = vld [vmem:[%s2321 + $0x1ca] sm:$0xff]
  %v3127 = vld [vmem:[%s2321 + $0x1d2] sm:$0xff]
  %v3128 = vld [vmem:[%s2321 + $0x1e2] sm:$0xff]
  %v3129 = vld [vmem:[%s2321 + $0x1ea] sm:$0xff]
  %v3130 = vld [vmem:[%s2321 + $0x1fa] sm:$0xff]
  %v3131 = vld [vmem:[%s2321 + $0x202] sm:$0xff]
  %v3132 = vld [vmem:[%s2321 + $0x212] sm:$0xff]
  %v3133 = vld [vmem:[%s2321 + $0x21a] sm:$0xff]
  %v3134 = vld [vmem:[%s2321 + $0x22a] sm:$0xff]
  %v3135 = vld [vmem:[%s2321 + $0x232] sm:$0xff]
  %v3136 = vld [vmem:[%s2321 + $0x242] sm:$0xff]
  %v3137 = vld [vmem:[%s2321 + $0x24a] sm:$0xff]
  %v3138 = vld [vmem:[%s2321 + $0x25a] sm:$0xff]
  %v3139 = vld [vmem:[%s2321 + $0x262] sm:$0xff]
  %v3140 = vld [vmem:[%s2321 + $0x272] sm:$0xff]
  %v3141 = vld [vmem:[%s2321 + $0x27a] sm:$0xff]
  %v3142 = vld [vmem:[%s2321 + $0x28a] sm:$0xff]
  %v3143 = vld [vmem:[%s2321 + $0x292] sm:$0xff]
  %v3144 = vld [vmem:[%s2321 + $0x2a2] sm:$0xff]
  %v3145 = vld [vmem:[%s2321 + $0x2aa] sm:$0xff]
  %v3146 = vld [vmem:[%s2321 + $0x2ba] sm:$0xff]
  %v3147 = vld [vmem:[%s2321 + $0x2c2] sm:$0xff]
  %v3148 = vld [vmem:[%s2321 + $0x2d2] sm:$0xff]
  %v3149 = vld [vmem:[%s2321 + $0x2da] sm:$0xff]
  %v3150 = vld [vmem:[%s2321 + $0x2ea] sm:$0xff]
  %v3151 = vld [vmem:[%s2321 + $0x2f2] sm:$0xff]
  %v3152 = vld [vmem:[%s2321 + $0x302] sm:$0xff]
  %v3153 = vld [vmem:[%s2321 + $0x30a] sm:$0xff]
  %v3154 = vld [vmem:[%s2321 + $0x31a] sm:$0xff]
  %v3155 = vld [vmem:[%s2321 + $0x322] sm:$0xff]
  %3220 = vrot.lane.b32.xlu0 %v3092, 32
  %v3221 = vpop.permute.xlu0 %3220
  %3222 = vrot.lane.b32.xlu0 %v3093, 32
  %v3223 = vpop.permute.xlu0 %3222
  %3224 = vrot.lane.b32.xlu0 %v3094, 32
  %v3225 = vpop.permute.xlu0 %3224
  %3226 = vrot.lane.b32.xlu0 %v3095, 32
  %v3227 = vpop.permute.xlu0 %3226
  %3228 = vrot.lane.b32.xlu0 %v3096, 32
  %v3229 = vpop.permute.xlu0 %3228
  %3230 = vrot.lane.b32.xlu0 %v3097, 32
  %v3231 = vpop.permute.xlu0 %3230
  %3232 = vrot.lane.b32.xlu0 %v3098, 32
  %v3233 = vpop.permute.xlu0 %3232
  %3234 = vrot.lane.b32.xlu0 %v3099, 32
  %v3235 = vpop.permute.xlu0 %3234
  %3236 = vrot.lane.b32.xlu0 %v3100, 32
  %v3237 = vpop.permute.xlu0 %3236
  %3238 = vrot.lane.b32.xlu0 %v3101, 32
  %v3239 = vpop.permute.xlu0 %3238
  %3240 = vrot.lane.b32.xlu0 %v3102, 32
  %v3241 = vpop.permute.xlu0 %3240
  %3242 = vrot.lane.b32.xlu0 %v3103, 32
  %v3243 = vpop.permute.xlu0 %3242
  %3244 = vrot.lane.b32.xlu0 %v3104, 32
  %v3245 = vpop.permute.xlu0 %3244
  %3246 = vrot.lane.b32.xlu0 %v3105, 32
  %v3247 = vpop.permute.xlu0 %3246
  %3248 = vrot.lane.b32.xlu0 %v3106, 32
  %v3249 = vpop.permute.xlu0 %3248
  %3250 = vrot.lane.b32.xlu0 %v3107, 32
  %v3251 = vpop.permute.xlu0 %3250
  %3252 = vrot.lane.b32.xlu0 %v3108, 32
  %v3253 = vpop.permute.xlu0 %3252
  %3254 = vrot.lane.b32.xlu0 %v3109, 32
  %v3255 = vpop.permute.xlu0 %3254
  %3256 = vrot.lane.b32.xlu0 %v3110, 32
  %v3257 = vpop.permute.xlu0 %3256
  %3258 = vrot.lane.b32.xlu0 %v3111, 32
  %v3259 = vpop.permute.xlu0 %3258
  %3260 = vrot.lane.b32.xlu0 %v3112, 32
  %v3261 = vpop.permute.xlu0 %3260
  %3262 = vrot.lane.b32.xlu0 %v3113, 32
  %v3263 = vpop.permute.xlu0 %3262
  %3264 = vrot.lane.b32.xlu0 %v3114, 32
  %v3265 = vpop.permute.xlu0 %3264
  %3266 = vrot.lane.b32.xlu0 %v3115, 32
  %v3267 = vpop.permute.xlu0 %3266
  %3268 = vrot.lane.b32.xlu0 %v3116, 32
  %v3269 = vpop.permute.xlu0 %3268
  %3270 = vrot.lane.b32.xlu0 %v3117, 32
  %v3271 = vpop.permute.xlu0 %3270
  %3272 = vrot.lane.b32.xlu0 %v3118, 32
  %v3273 = vpop.permute.xlu0 %3272
  %3274 = vrot.lane.b32.xlu0 %v3119, 32
  %v3275 = vpop.permute.xlu0 %3274
  %3276 = vrot.lane.b32.xlu0 %v3120, 32
  %v3277 = vpop.permute.xlu0 %3276
  %3278 = vrot.lane.b32.xlu0 %v3121, 32
  %v3279 = vpop.permute.xlu0 %3278
  %3280 = vrot.lane.b32.xlu0 %v3122, 32
  %v3281 = vpop.permute.xlu0 %3280
  %3282 = vrot.lane.b32.xlu0 %v3123, 32
  %v3283 = vpop.permute.xlu0 %3282
  %3284 = vrot.lane.b32.xlu0 %v3124, 32
  %v3285 = vpop.permute.xlu0 %3284
  %3286 = vrot.lane.b32.xlu0 %v3125, 32
  %v3287 = vpop.permute.xlu0 %3286
  %3288 = vrot.lane.b32.xlu0 %v3126, 32
  %v3289 = vpop.permute.xlu0 %3288
  %3290 = vrot.lane.b32.xlu0 %v3127, 32
  %v3291 = vpop.permute.xlu0 %3290
  %3292 = vrot.lane.b32.xlu0 %v3128, 32
  %v3293 = vpop.permute.xlu0 %3292
  %3294 = vrot.lane.b32.xlu0 %v3129, 32
  %v3295 = vpop.permute.xlu0 %3294
  %3296 = vrot.lane.b32.xlu0 %v3130, 32
  %v3297 = vpop.permute.xlu0 %3296
  %3298 = vrot.lane.b32.xlu0 %v3131, 32
  %v3299 = vpop.permute.xlu0 %3298
  %3300 = vrot.lane.b32.xlu0 %v3132, 32
  %v3301 = vpop.permute.xlu0 %3300
  %3302 = vrot.lane.b32.xlu0 %v3133, 32
  %v3303 = vpop.permute.xlu0 %3302
  %3304 = vrot.lane.b32.xlu0 %v3134, 32
  %v3305 = vpop.permute.xlu0 %3304
  %3306 = vrot.lane.b32.xlu0 %v3135, 32
  %v3307 = vpop.permute.xlu0 %3306
  %3308 = vrot.lane.b32.xlu0 %v3136, 32
  %v3309 = vpop.permute.xlu0 %3308
  %3310 = vrot.lane.b32.xlu0 %v3137, 32
  %v3311 = vpop.permute.xlu0 %3310
  %3312 = vrot.lane.b32.xlu0 %v3138, 32
  %v3313 = vpop.permute.xlu0 %3312
  %3314 = vrot.lane.b32.xlu0 %v3139, 32
  %v3315 = vpop.permute.xlu0 %3314
  %3316 = vrot.lane.b32.xlu0 %v3140, 32
  %v3317 = vpop.permute.xlu0 %3316
  %3318 = vrot.lane.b32.xlu0 %v3141, 32
  %v3319 = vpop.permute.xlu0 %3318
  %3320 = vrot.lane.b32.xlu0 %v3142, 32
  %v3321 = vpop.permute.xlu0 %3320
  %3322 = vrot.lane.b32.xlu0 %v3143, 32
  %v3323 = vpop.permute.xlu0 %3322
  %3324 = vrot.lane.b32.xlu0 %v3144, 32
  %v3325 = vpop.permute.xlu0 %3324
  %3326 = vrot.lane.b32.xlu0 %v3145, 32
  %v3327 = vpop.permute.xlu0 %3326
  %3328 = vrot.lane.b32.xlu0 %v3146, 32
  %v3329 = vpop.permute.xlu0 %3328
  %3330 = vrot.lane.b32.xlu0 %v3147, 32
  %v3331 = vpop.permute.xlu0 %3330
  %3332 = vrot.lane.b32.xlu0 %v3148, 32
  %v3333 = vpop.permute.xlu0 %3332
  %3334 = vrot.lane.b32.xlu0 %v3149, 32
  %v3335 = vpop.permute.xlu0 %3334
  %3336 = vrot.lane.b32.xlu0 %v3150, 32
  %v3337 = vpop.permute.xlu0 %3336
  %3338 = vrot.lane.b32.xlu0 %v3151, 32
  %v3339 = vpop.permute.xlu0 %3338
  %3340 = vrot.lane.b32.xlu0 %v3152, 32
  %v3341 = vpop.permute.xlu0 %3340
  %3342 = vrot.lane.b32.xlu0 %v3153, 32
  %v3343 = vpop.permute.xlu0 %3342
  %3344 = vrot.lane.b32.xlu0 %v3154, 32
  %v3345 = vpop.permute.xlu0 %3344
  %3346 = vrot.lane.b32.xlu0 %v3155, 32
  %v3347 = vpop.permute.xlu0 %3346
  %vm3412 = vcmask 294144
  %3413 = vst.msk [vmem:[#allocation4] sm:$0xff] %vm3412, %v3221
  %3414 = vst.msk [vmem:[#allocation4 + $0x8] sm:$0xff] %vm3412, %v3223
  %3415 = vst.msk [vmem:[#allocation4 + $0x10] sm:$0xff] %vm3412, %v3225
  %3416 = vst.msk [vmem:[#allocation4 + $0x18] sm:$0xff] %vm3412, %v3227
  %3417 = vst.msk [vmem:[#allocation4 + $0x20] sm:$0xff] %vm3412, %v3229
  %3418 = vst.msk [vmem:[#allocation4 + $0x28] sm:$0xff] %vm3412, %v3231
  %3419 = vst.msk [vmem:[#allocation4 + $0x30] sm:$0xff] %vm3412, %v3233
  %3420 = vst.msk [vmem:[#allocation4 + $0x38] sm:$0xff] %vm3412, %v3235
  %3421 = vst.msk [vmem:[#allocation4 + $0x40] sm:$0xff] %vm3412, %v3237
  %3422 = vst.msk [vmem:[#allocation4 + $0x48] sm:$0xff] %vm3412, %v3239
  %3423 = vst.msk [vmem:[#allocation4 + $0x50] sm:$0xff] %vm3412, %v3241
  %3424 = vst.msk [vmem:[#allocation4 + $0x58] sm:$0xff] %vm3412, %v3243
  %3425 = vst.msk [vmem:[#allocation4 + $0x60] sm:$0xff] %vm3412, %v3245
  %3426 = vst.msk [vmem:[#allocation4 + $0x68] sm:$0xff] %vm3412, %v3247
  %3427 = vst.msk [vmem:[#allocation4 + $0x70] sm:$0xff] %vm3412, %v3249
  %3428 = vst.msk [vmem:[#allocation4 + $0x78] sm:$0xff] %vm3412, %v3251
  %3429 = vst.msk [vmem:[#allocation4 + $0x80] sm:$0xff] %vm3412, %v3253
  %3430 = vst.msk [vmem:[#allocation4 + $0x88] sm:$0xff] %vm3412, %v3255
  %3431 = vst.msk [vmem:[#allocation4 + $0x90] sm:$0xff] %vm3412, %v3257
  %3432 = vst.msk [vmem:[#allocation4 + $0x98] sm:$0xff] %vm3412, %v3259
  %3433 = vst.msk [vmem:[#allocation4 + $0xa0] sm:$0xff] %vm3412, %v3261
  %3434 = vst.msk [vmem:[#allocation4 + $0xa8] sm:$0xff] %vm3412, %v3263
  %3435 = vst.msk [vmem:[#allocation4 + $0xb0] sm:$0xff] %vm3412, %v3265
  %3436 = vst.msk [vmem:[#allocation4 + $0xb8] sm:$0xff] %vm3412, %v3267
  %3437 = vst.msk [vmem:[#allocation4 + $0xc0] sm:$0xff] %vm3412, %v3269
  %3438 = vst.msk [vmem:[#allocation4 + $0xc8] sm:$0xff] %vm3412, %v3271
  %3439 = vst.msk [vmem:[#allocation4 + $0xd0] sm:$0xff] %vm3412, %v3273
  %3440 = vst.msk [vmem:[#allocation4 + $0xd8] sm:$0xff] %vm3412, %v3275
  %3441 = vst.msk [vmem:[#allocation4 + $0xe0] sm:$0xff] %vm3412, %v3277
  %3442 = vst.msk [vmem:[#allocation4 + $0xe8] sm:$0xff] %vm3412, %v3279
  %3443 = vst.msk [vmem:[#allocation4 + $0xf0] sm:$0xff] %vm3412, %v3281
  %3444 = vst.msk [vmem:[#allocation4 + $0xf8] sm:$0xff] %vm3412, %v3283
  %3445 = vst.msk [vmem:[#allocation4 + $0x100] sm:$0xff] %vm3412, %v3285
  %3446 = vst.msk [vmem:[#allocation4 + $0x108] sm:$0xff] %vm3412, %v3287
  %3447 = vst.msk [vmem:[#allocation4 + $0x110] sm:$0xff] %vm3412, %v3289
  %3448 = vst.msk [vmem:[#allocation4 + $0x118] sm:$0xff] %vm3412, %v3291
  %3449 = vst.msk [vmem:[#allocation4 + $0x120] sm:$0xff] %vm3412, %v3293
  %3450 = vst.msk [vmem:[#allocation4 + $0x128] sm:$0xff] %vm3412, %v3295
  %3451 = vst.msk [vmem:[#allocation4 + $0x130] sm:$0xff] %vm3412, %v3297
  %3452 = vst.msk [vmem:[#allocation4 + $0x138] sm:$0xff] %vm3412, %v3299
  %3453 = vst.msk [vmem:[#allocation4 + $0x140] sm:$0xff] %vm3412, %v3301
  %3454 = vst.msk [vmem:[#allocation4 + $0x148] sm:$0xff] %vm3412, %v3303
  %3455 = vst.msk [vmem:[#allocation4 + $0x150] sm:$0xff] %vm3412, %v3305
  %3456 = vst.msk [vmem:[#allocation4 + $0x158] sm:$0xff] %vm3412, %v3307
  %3457 = vst.msk [vmem:[#allocation4 + $0x160] sm:$0xff] %vm3412, %v3309
  %3458 = vst.msk [vmem:[#allocation4 + $0x168] sm:$0xff] %vm3412, %v3311
  %3459 = vst.msk [vmem:[#allocation4 + $0x170] sm:$0xff] %vm3412, %v3313
  %3460 = vst.msk [vmem:[#allocation4 + $0x178] sm:$0xff] %vm3412, %v3315
  %3461 = vst.msk [vmem:[#allocation4 + $0x180] sm:$0xff] %vm3412, %v3317
  %3462 = vst.msk [vmem:[#allocation4 + $0x188] sm:$0xff] %vm3412, %v3319
  %3463 = vst.msk [vmem:[#allocation4 + $0x190] sm:$0xff] %vm3412, %v3321
  %3464 = vst.msk [vmem:[#allocation4 + $0x198] sm:$0xff] %vm3412, %v3323
  %3465 = vst.msk [vmem:[#allocation4 + $0x1a0] sm:$0xff] %vm3412, %v3325
  %3466 = vst.msk [vmem:[#allocation4 + $0x1a8] sm:$0xff] %vm3412, %v3327
  %3467 = vst.msk [vmem:[#allocation4 + $0x1b0] sm:$0xff] %vm3412, %v3329
  %3468 = vst.msk [vmem:[#allocation4 + $0x1b8] sm:$0xff] %vm3412, %v3331
  %3469 = vst.msk [vmem:[#allocation4 + $0x1c0] sm:$0xff] %vm3412, %v3333
  %3470 = vst.msk [vmem:[#allocation4 + $0x1c8] sm:$0xff] %vm3412, %v3335
  %3471 = vst.msk [vmem:[#allocation4 + $0x1d0] sm:$0xff] %vm3412, %v3337
  %3472 = vst.msk [vmem:[#allocation4 + $0x1d8] sm:$0xff] %vm3412, %v3339
  %3473 = vst.msk [vmem:[#allocation4 + $0x1e0] sm:$0xff] %vm3412, %v3341
  %3474 = vst.msk [vmem:[#allocation4 + $0x1e8] sm:$0xff] %vm3412, %v3343
  %3475 = vst.msk [vmem:[#allocation4 + $0x1f0] sm:$0xff] %vm3412, %v3345
  %3476 = vst.msk [vmem:[#allocation4 + $0x1f8] sm:$0xff] %vm3412, %v3347
  %v3477 = vld [vmem:[#allocation4] sm:$0xff]
  %v3478 = vld [vmem:[#allocation4 + $0x8] sm:$0xff]
  %v3479 = vld [vmem:[#allocation4 + $0x10] sm:$0xff]
  %v3480 = vld [vmem:[#allocation4 + $0x18] sm:$0xff]
  %v3481 = vld [vmem:[#allocation4 + $0x20] sm:$0xff]
  %v3482 = vld [vmem:[#allocation4 + $0x28] sm:$0xff]
  %v3483 = vld [vmem:[#allocation4 + $0x30] sm:$0xff]
  %v3484 = vld [vmem:[#allocation4 + $0x38] sm:$0xff]
  %v3485 = vld [vmem:[#allocation4 + $0x40] sm:$0xff]
  %v3486 = vld [vmem:[#allocation4 + $0x48] sm:$0xff]
  %v3487 = vld [vmem:[#allocation4 + $0x50] sm:$0xff]
  %v3488 = vld [vmem:[#allocation4 + $0x58] sm:$0xff]
  %v3489 = vld [vmem:[#allocation4 + $0x60] sm:$0xff]
  %v3490 = vld [vmem:[#allocation4 + $0x68] sm:$0xff]
  %v3491 = vld [vmem:[#allocation4 + $0x70] sm:$0xff]
  %v3492 = vld [vmem:[#allocation4 + $0x78] sm:$0xff]
  %v3493 = vld [vmem:[#allocation4 + $0x80] sm:$0xff]
  %v3494 = vld [vmem:[#allocation4 + $0x88] sm:$0xff]
  %v3495 = vld [vmem:[#allocation4 + $0x90] sm:$0xff]
  %v3496 = vld [vmem:[#allocation4 + $0x98] sm:$0xff]
  %v3497 = vld [vmem:[#allocation4 + $0xa0] sm:$0xff]
  %v3498 = vld [vmem:[#allocation4 + $0xa8] sm:$0xff]
  %v3499 = vld [vmem:[#allocation4 + $0xb0] sm:$0xff]
  %v3500 = vld [vmem:[#allocation4 + $0xb8] sm:$0xff]
  %v3501 = vld [vmem:[#allocation4 + $0xc0] sm:$0xff]
  %v3502 = vld [vmem:[#allocation4 + $0xc8] sm:$0xff]
  %v3503 = vld [vmem:[#allocation4 + $0xd0] sm:$0xff]
  %v3504 = vld [vmem:[#allocation4 + $0xd8] sm:$0xff]
  %v3505 = vld [vmem:[#allocation4 + $0xe0] sm:$0xff]
  %v3506 = vld [vmem:[#allocation4 + $0xe8] sm:$0xff]
  %v3507 = vld [vmem:[#allocation4 + $0xf0] sm:$0xff]
  %v3508 = vld [vmem:[#allocation4 + $0xf8] sm:$0xff]
  %v3509 = vld [vmem:[#allocation4 + $0x100] sm:$0xff]
  %v3510 = vld [vmem:[#allocation4 + $0x108] sm:$0xff]
  %v3511 = vld [vmem:[#allocation4 + $0x110] sm:$0xff]
  %v3512 = vld [vmem:[#allocation4 + $0x118] sm:$0xff]
  %v3513 = vld [vmem:[#allocation4 + $0x120] sm:$0xff]
  %v3514 = vld [vmem:[#allocation4 + $0x128] sm:$0xff]
  %v3515 = vld [vmem:[#allocation4 + $0x130] sm:$0xff]
  %v3516 = vld [vmem:[#allocation4 + $0x138] sm:$0xff]
  %v3517 = vld [vmem:[#allocation4 + $0x140] sm:$0xff]
  %v3518 = vld [vmem:[#allocation4 + $0x148] sm:$0xff]
  %v3519 = vld [vmem:[#allocation4 + $0x150] sm:$0xff]
  %v3520 = vld [vmem:[#allocation4 + $0x158] sm:$0xff]
  %v3521 = vld [vmem:[#allocation4 + $0x160] sm:$0xff]
  %v3522 = vld [vmem:[#allocation4 + $0x168] sm:$0xff]
  %v3523 = vld [vmem:[#allocation4 + $0x170] sm:$0xff]
  %v3524 = vld [vmem:[#allocation4 + $0x178] sm:$0xff]
  %v3525 = vld [vmem:[#allocation4 + $0x180] sm:$0xff]
  %v3526 = vld [vmem:[#allocation4 + $0x188] sm:$0xff]
  %v3527 = vld [vmem:[#allocation4 + $0x190] sm:$0xff]
  %v3528 = vld [vmem:[#allocation4 + $0x198] sm:$0xff]
  %v3529 = vld [vmem:[#allocation4 + $0x1a0] sm:$0xff]
  %v3530 = vld [vmem:[#allocation4 + $0x1a8] sm:$0xff]
  %v3531 = vld [vmem:[#allocation4 + $0x1b0] sm:$0xff]
  %v3532 = vld [vmem:[#allocation4 + $0x1b8] sm:$0xff]
  %v3533 = vld [vmem:[#allocation4 + $0x1c0] sm:$0xff]
  %v3534 = vld [vmem:[#allocation4 + $0x1c8] sm:$0xff]
  %v3535 = vld [vmem:[#allocation4 + $0x1d0] sm:$0xff]
  %v3536 = vld [vmem:[#allocation4 + $0x1d8] sm:$0xff]
  %v3537 = vld [vmem:[#allocation4 + $0x1e0] sm:$0xff]
  %v3538 = vld [vmem:[#allocation4 + $0x1e8] sm:$0xff]
  %v3539 = vld [vmem:[#allocation4 + $0x1f0] sm:$0xff]
  %v3540 = vld [vmem:[#allocation4 + $0x1f8] sm:$0xff]
  %v3541 = vpack.c.bf16 %v3478, %v3477
  %v3542 = vpack.c.bf16 %v3480, %v3479
  %v3543 = vpack.c.bf16 %v3482, %v3481
  %v3544 = vpack.c.bf16 %v3484, %v3483
  %v3545 = vpack.c.bf16 %v3486, %v3485
  %v3546 = vpack.c.bf16 %v3488, %v3487
  %v3547 = vpack.c.bf16 %v3490, %v3489
  %v3548 = vpack.c.bf16 %v3492, %v3491
  %v3549 = vpack.c.bf16 %v3494, %v3493
  %v3550 = vpack.c.bf16 %v3496, %v3495
  %v3551 = vpack.c.bf16 %v3498, %v3497
  %v3552 = vpack.c.bf16 %v3500, %v3499
  %v3553 = vpack.c.bf16 %v3502, %v3501
  %v3554 = vpack.c.bf16 %v3504, %v3503
  %v3555 = vpack.c.bf16 %v3506, %v3505
  %v3556 = vpack.c.bf16 %v3508, %v3507
  %v3557 = vpack.c.bf16 %v3510, %v3509
  %v3558 = vpack.c.bf16 %v3512, %v3511
  %v3559 = vpack.c.bf16 %v3514, %v3513
  %v3560 = vpack.c.bf16 %v3516, %v3515
  %v3561 = vpack.c.bf16 %v3518, %v3517
  %v3562 = vpack.c.bf16 %v3520, %v3519
  %v3563 = vpack.c.bf16 %v3522, %v3521
  %v3564 = vpack.c.bf16 %v3524, %v3523
  %v3565 = vpack.c.bf16 %v3526, %v3525
  %v3566 = vpack.c.bf16 %v3528, %v3527
  %v3567 = vpack.c.bf16 %v3530, %v3529
  %v3568 = vpack.c.bf16 %v3532, %v3531
  %v3569 = vpack.c.bf16 %v3534, %v3533
  %v3570 = vpack.c.bf16 %v3536, %v3535
  %v3571 = vpack.c.bf16 %v3538, %v3537
  %v3572 = vpack.c.bf16 %v3540, %v3539
  %v3573 = vld [vmem:[%s1] sm:$0xf]
  %v3574 = vld [vmem:[%s1 + $0x4] sm:$0xf]
  %v3575 = vld [vmem:[%s1 + $0x8] sm:$0xf]
  %v3576 = vld [vmem:[%s1 + $0xc] sm:$0xf]
  %v3577 = vld [vmem:[%s1 + $0x10] sm:$0x3]
  %v3583 = vunpack.c.l.b16 %v3573
  %v3584 = vunpack.c.l.b16 %v3574
  %v3585 = vunpack.c.l.b16 %v3575
  %v3586 = vunpack.c.l.b16 %v3576
  %v3587 = vunpack.c.l.b16 %v3577
  %v3588 = vpack.c.b16 %v3584, %v3583
  %v3589 = vpack.c.b16 %v3586, %v3585
  %v3590 = vpack.c.b16 %v3587, %v3587
  %vm3593 = vcmask 293888
  %v3595 = vsel %vm3593, %v3541, 0
  %v3598 = vsel %vm3593, %v3542, 0
  %v3601 = vsel %vm3593, %v3543, 0
  %v3604 = vsel %vm3593, %v3544, 0
  %v3607 = vsel %vm3593, %v3545, 0
  %v3610 = vsel %vm3593, %v3546, 0
  %v3613 = vsel %vm3593, %v3547, 0
  %v3616 = vsel %vm3593, %v3548, 0
  %v3619 = vsel %vm3593, %v3549, 0
  %v3622 = vsel %vm3593, %v3550, 0
  %v3625 = vsel %vm3593, %v3551, 0
  %v3628 = vsel %vm3593, %v3552, 0
  %v3631 = vsel %vm3593, %v3553, 0
  %v3634 = vsel %vm3593, %v3554, 0
  %v3637 = vsel %vm3593, %v3555, 0
  %v3640 = vsel %vm3593, %v3556, 0
  %v3643 = vsel %vm3593, %v3557, 0
  %v3646 = vsel %vm3593, %v3558, 0
  %v3649 = vsel %vm3593, %v3559, 0
  %v3652 = vsel %vm3593, %v3560, 0
  %v3655 = vsel %vm3593, %v3561, 0
  %v3658 = vsel %vm3593, %v3562, 0
  %v3661 = vsel %vm3593, %v3563, 0
  %v3664 = vsel %vm3593, %v3564, 0
  %v3667 = vsel %vm3593, %v3565, 0
  %v3670 = vsel %vm3593, %v3566, 0
  %v3673 = vsel %vm3593, %v3567, 0
  %v3676 = vsel %vm3593, %v3568, 0
  %v3679 = vsel %vm3593, %v3569, 0
  %v3682 = vsel %vm3593, %v3570, 0
  %v3685 = vsel %vm3593, %v3571, 0
  %v3688 = vsel %vm3593, %v3572, 0
  %vm3690 = vcmask 1041408
  %v3692 = vsel %vm3690, %v3590, 0
  %3694 = vmatprep.subr.bf16.mxu0 0
  %3695 = vmatpush1.bf16.msra.mxu0 0
  %3696 = vmatprep.subr.bf16.mxu0 0
  %3697 = vmatpush1.bf16.msra.mxu0 0
  %3698 = vmatprep.subr.bf16.mxu0 0
  %3699 = vmatpush1.bf16.msra.mxu0 0
  %3700 = vmatprep.subr.bf16.mxu0 0
  %3701 = vmatpush1.bf16.msra.mxu0 0
  %3702 = vmatprep.subr.bf16.mxu0 0
  %3703 = vmatpush1.bf16.msra.mxu0 0
  %3704 = vmatprep.subr.bf16.mxu0 0
  %3705 = vmatpush1.bf16.msra.mxu0 %v3692
  %3706 = vmatprep.subr.bf16.mxu0 0
  %3707 = vmatpush1.bf16.msra.mxu0 %v3589
  %3708 = vmatprep.subr.bf16.mxu0 0
  %3709 = vmatpush1.bf16.msra.mxu0 %v3588
  %3710 = vmatprep.subr.bf16.mxu0 0
  %3711 = vmatpush2.bf16.msra.mxu0 0
  %3712 = vmatprep.subr.bf16.mxu0 0
  %3713 = vmatpush2.bf16.msra.mxu0 0
  %3714 = vmatprep.subr.bf16.mxu0 0
  %3715 = vmatpush2.bf16.msra.mxu0 0
  %3716 = vmatprep.subr.bf16.mxu0 0
  %3717 = vmatpush2.bf16.msra.mxu0 0
  %3718 = vmatprep.subr.bf16.mxu0 0
  %3719 = vmatpush2.bf16.msra.mxu0 0
  %3720 = vmatprep.subr.bf16.mxu0 0
  %3721 = vmatpush2.bf16.msra.mxu0 0
  %3722 = vmatprep.subr.bf16.mxu0 0
  %3723 = vmatpush2.bf16.msra.mxu0 0
  %3724 = vmatprep.subr.bf16.mxu0 0
  %3725 = vmatpush2.bf16.msra.mxu0 0
  %3726 = vmatprep.mubr.bf16.mxu0 0
  %3727 = vmatmul.mubr.bf16.gmra.mxu0 %v3595
  %v3728 = vpop.f32.mrf.mxu0
  %v3729 = vadd.f32 0.0, %v3728
  %v3730 = vpop.f32.mrf.mxu0
  %v3731 = vpop.f32.mrf.mxu0
  %v3732 = vadd.f32 0.0, %v3731
  %v3733 = vpop.f32.mrf.mxu0
  %3734 = vmatprep.mubr.bf16.mxu0 0
  %3735 = vmatmul.mubr.bf16.gmra.mxu0 %v3598
  %v3736 = vpop.f32.mrf.mxu0
  %v3737 = vadd.f32 0.0, %v3736
  %v3738 = vpop.f32.mrf.mxu0
  %v3739 = vpop.f32.mrf.mxu0
  %v3740 = vadd.f32 0.0, %v3739
  %v3741 = vpop.f32.mrf.mxu0
  %3742 = vmatprep.mubr.bf16.mxu0 0
  %3743 = vmatmul.mubr.bf16.gmra.mxu0 %v3601
  %v3744 = vpop.f32.mrf.mxu0
  %v3745 = vadd.f32 0.0, %v3744
  %v3746 = vpop.f32.mrf.mxu0
  %v3747 = vpop.f32.mrf.mxu0
  %v3748 = vadd.f32 0.0, %v3747
  %v3749 = vpop.f32.mrf.mxu0
  %3750 = vmatprep.mubr.bf16.mxu0 0
  %3751 = vmatmul.mubr.bf16.gmra.mxu0 %v3604
  %v3752 = vpop.f32.mrf.mxu0
  %v3753 = vadd.f32 0.0, %v3752
  %v3754 = vpop.f32.mrf.mxu0
  %v3755 = vpop.f32.mrf.mxu0
  %v3756 = vadd.f32 0.0, %v3755
  %v3757 = vpop.f32.mrf.mxu0
  %3758 = vmatprep.mubr.bf16.mxu0 0
  %3759 = vmatmul.mubr.bf16.gmra.mxu0 %v3607
  %v3760 = vpop.f32.mrf.mxu0
  %v3761 = vadd.f32 0.0, %v3760
  %v3762 = vpop.f32.mrf.mxu0
  %v3763 = vpop.f32.mrf.mxu0
  %v3764 = vadd.f32 0.0, %v3763
  %v3765 = vpop.f32.mrf.mxu0
  %3766 = vmatprep.mubr.bf16.mxu0 0
  %3767 = vmatmul.mubr.bf16.gmra.mxu0 %v3610
  %v3768 = vpop.f32.mrf.mxu0
  %v3769 = vadd.f32 0.0, %v3768
  %v3770 = vpop.f32.mrf.mxu0
  %v3771 = vpop.f32.mrf.mxu0
  %v3772 = vadd.f32 0.0, %v3771
  %v3773 = vpop.f32.mrf.mxu0
  %3774 = vmatprep.mubr.bf16.mxu0 0
  %3775 = vmatmul.mubr.bf16.gmra.mxu0 %v3613
  %v3776 = vpop.f32.mrf.mxu0
  %v3777 = vadd.f32 0.0, %v3776
  %v3778 = vpop.f32.mrf.mxu0
  %v3779 = vpop.f32.mrf.mxu0
  %v3780 = vadd.f32 0.0, %v3779
  %v3781 = vpop.f32.mrf.mxu0
  %3782 = vmatprep.mubr.bf16.mxu0 0
  %3783 = vmatmul.mubr.bf16.gmra.mxu0 %v3616
  %v3784 = vpop.f32.mrf.mxu0
  %v3785 = vadd.f32 0.0, %v3784
  %v3786 = vpop.f32.mrf.mxu0
  %v3787 = vpop.f32.mrf.mxu0
  %v3788 = vadd.f32 0.0, %v3787
  %v3789 = vpop.f32.mrf.mxu0
  %3790 = vmatprep.mubr.bf16.mxu0 0
  %3791 = vmatmul.mubr.bf16.gmra.mxu0 %v3619
  %v3792 = vpop.f32.mrf.mxu0
  %v3793 = vadd.f32 0.0, %v3792
  %v3794 = vpop.f32.mrf.mxu0
  %v3795 = vpop.f32.mrf.mxu0
  %v3796 = vadd.f32 0.0, %v3795
  %v3797 = vpop.f32.mrf.mxu0
  %3798 = vmatprep.mubr.bf16.mxu0 0
  %3799 = vmatmul.mubr.bf16.gmra.mxu0 %v3622
  %v3800 = vpop.f32.mrf.mxu0
  %v3801 = vadd.f32 0.0, %v3800
  %v3802 = vpop.f32.mrf.mxu0
  %v3803 = vpop.f32.mrf.mxu0
  %v3804 = vadd.f32 0.0, %v3803
  %v3805 = vpop.f32.mrf.mxu0
  %3806 = vmatprep.mubr.bf16.mxu0 0
  %3807 = vmatmul.mubr.bf16.gmra.mxu0 %v3625
  %v3808 = vpop.f32.mrf.mxu0
  %v3809 = vadd.f32 0.0, %v3808
  %v3810 = vpop.f32.mrf.mxu0
  %v3811 = vpop.f32.mrf.mxu0
  %v3812 = vadd.f32 0.0, %v3811
  %v3813 = vpop.f32.mrf.mxu0
  %3814 = vmatprep.mubr.bf16.mxu0 0
  %3815 = vmatmul.mubr.bf16.gmra.mxu0 %v3628
  %v3816 = vpop.f32.mrf.mxu0
  %v3817 = vadd.f32 0.0, %v3816
  %v3818 = vpop.f32.mrf.mxu0
  %v3819 = vpop.f32.mrf.mxu0
  %v3820 = vadd.f32 0.0, %v3819
  %v3821 = vpop.f32.mrf.mxu0
  %3822 = vmatprep.mubr.bf16.mxu0 0
  %3823 = vmatmul.mubr.bf16.gmra.mxu0 %v3631
  %v3824 = vpop.f32.mrf.mxu0
  %v3825 = vadd.f32 0.0, %v3824
  %v3826 = vpop.f32.mrf.mxu0
  %v3827 = vpop.f32.mrf.mxu0
  %v3828 = vadd.f32 0.0, %v3827
  %v3829 = vpop.f32.mrf.mxu0
  %3830 = vmatprep.mubr.bf16.mxu0 0
  %3831 = vmatmul.mubr.bf16.gmra.mxu0 %v3634
  %v3832 = vpop.f32.mrf.mxu0
  %v3833 = vadd.f32 0.0, %v3832
  %v3834 = vpop.f32.mrf.mxu0
  %v3835 = vpop.f32.mrf.mxu0
  %v3836 = vadd.f32 0.0, %v3835
  %v3837 = vpop.f32.mrf.mxu0
  %3838 = vmatprep.mubr.bf16.mxu0 0
  %3839 = vmatmul.mubr.bf16.gmra.mxu0 %v3637
  %v3840 = vpop.f32.mrf.mxu0
  %v3841 = vadd.f32 0.0, %v3840
  %v3842 = vpop.f32.mrf.mxu0
  %v3843 = vpop.f32.mrf.mxu0
  %v3844 = vadd.f32 0.0, %v3843
  %v3845 = vpop.f32.mrf.mxu0
  %3846 = vmatprep.mubr.bf16.mxu0 0
  %3847 = vmatmul.mubr.bf16.gmra.mxu0 %v3640
  %v3848 = vpop.f32.mrf.mxu0
  %v3849 = vadd.f32 0.0, %v3848
  %v3850 = vpop.f32.mrf.mxu0
  %v3851 = vpop.f32.mrf.mxu0
  %v3852 = vadd.f32 0.0, %v3851
  %v3853 = vpop.f32.mrf.mxu0
  %3854 = vmatprep.mubr.bf16.mxu0 0
  %3855 = vmatmul.mubr.bf16.gmra.mxu0 %v3643
  %v3856 = vpop.f32.mrf.mxu0
  %v3857 = vadd.f32 0.0, %v3856
  %v3858 = vpop.f32.mrf.mxu0
  %v3859 = vpop.f32.mrf.mxu0
  %v3860 = vadd.f32 0.0, %v3859
  %v3861 = vpop.f32.mrf.mxu0
  %3862 = vmatprep.mubr.bf16.mxu0 0
  %3863 = vmatmul.mubr.bf16.gmra.mxu0 %v3646
  %v3864 = vpop.f32.mrf.mxu0
  %v3865 = vadd.f32 0.0, %v3864
  %v3866 = vpop.f32.mrf.mxu0
  %v3867 = vpop.f32.mrf.mxu0
  %v3868 = vadd.f32 0.0, %v3867
  %v3869 = vpop.f32.mrf.mxu0
  %3870 = vmatprep.mubr.bf16.mxu0 0
  %3871 = vmatmul.mubr.bf16.gmra.mxu0 %v3649
  %v3872 = vpop.f32.mrf.mxu0
  %v3873 = vadd.f32 0.0, %v3872
  %v3874 = vpop.f32.mrf.mxu0
  %v3875 = vpop.f32.mrf.mxu0
  %v3876 = vadd.f32 0.0, %v3875
  %v3877 = vpop.f32.mrf.mxu0
  %3878 = vmatprep.mubr.bf16.mxu0 0
  %3879 = vmatmul.mubr.bf16.gmra.mxu0 %v3652
  %v3880 = vpop.f32.mrf.mxu0
  %v3881 = vadd.f32 0.0, %v3880
  %v3882 = vpop.f32.mrf.mxu0
  %v3883 = vpop.f32.mrf.mxu0
  %v3884 = vadd.f32 0.0, %v3883
  %v3885 = vpop.f32.mrf.mxu0
  %3886 = vmatprep.mubr.bf16.mxu0 0
  %3887 = vmatmul.mubr.bf16.gmra.mxu0 %v3655
  %v3888 = vpop.f32.mrf.mxu0
  %v3889 = vadd.f32 0.0, %v3888
  %v3890 = vpop.f32.mrf.mxu0
  %v3891 = vpop.f32.mrf.mxu0
  %v3892 = vadd.f32 0.0, %v3891
  %v3893 = vpop.f32.mrf.mxu0
  %3894 = vmatprep.mubr.bf16.mxu0 0
  %3895 = vmatmul.mubr.bf16.gmra.mxu0 %v3658
  %v3896 = vpop.f32.mrf.mxu0
  %v3897 = vadd.f32 0.0, %v3896
  %v3898 = vpop.f32.mrf.mxu0
  %v3899 = vpop.f32.mrf.mxu0
  %v3900 = vadd.f32 0.0, %v3899
  %v3901 = vpop.f32.mrf.mxu0
  %3902 = vmatprep.mubr.bf16.mxu0 0
  %3903 = vmatmul.mubr.bf16.gmra.mxu0 %v3661
  %v3904 = vpop.f32.mrf.mxu0
  %v3905 = vadd.f32 0.0, %v3904
  %v3906 = vpop.f32.mrf.mxu0
  %v3907 = vpop.f32.mrf.mxu0
  %v3908 = vadd.f32 0.0, %v3907
  %v3909 = vpop.f32.mrf.mxu0
  %3910 = vmatprep.mubr.bf16.mxu0 0
  %3911 = vmatmul.mubr.bf16.gmra.mxu0 %v3664
  %v3912 = vpop.f32.mrf.mxu0
  %v3913 = vadd.f32 0.0, %v3912
  %v3914 = vpop.f32.mrf.mxu0
  %v3915 = vpop.f32.mrf.mxu0
  %v3916 = vadd.f32 0.0, %v3915
  %v3917 = vpop.f32.mrf.mxu0
  %3918 = vmatprep.mubr.bf16.mxu0 0
  %3919 = vmatmul.mubr.bf16.gmra.mxu0 %v3667
  %v3920 = vpop.f32.mrf.mxu0
  %v3921 = vadd.f32 0.0, %v3920
  %v3922 = vpop.f32.mrf.mxu0
  %v3923 = vpop.f32.mrf.mxu0
  %v3924 = vadd.f32 0.0, %v3923
  %v3925 = vpop.f32.mrf.mxu0
  %3926 = vmatprep.mubr.bf16.mxu0 0
  %3927 = vmatmul.mubr.bf16.gmra.mxu0 %v3670
  %v3928 = vpop.f32.mrf.mxu0
  %v3929 = vadd.f32 0.0, %v3928
  %v3930 = vpop.f32.mrf.mxu0
  %v3931 = vpop.f32.mrf.mxu0
  %v3932 = vadd.f32 0.0, %v3931
  %v3933 = vpop.f32.mrf.mxu0
  %3934 = vmatprep.mubr.bf16.mxu0 0
  %3935 = vmatmul.mubr.bf16.gmra.mxu0 %v3673
  %v3936 = vpop.f32.mrf.mxu0
  %v3937 = vadd.f32 0.0, %v3936
  %v3938 = vpop.f32.mrf.mxu0
  %v3939 = vpop.f32.mrf.mxu0
  %v3940 = vadd.f32 0.0, %v3939
  %v3941 = vpop.f32.mrf.mxu0
  %3942 = vmatprep.mubr.bf16.mxu0 0
  %3943 = vmatmul.mubr.bf16.gmra.mxu0 %v3676
  %v3944 = vpop.f32.mrf.mxu0
  %v3945 = vadd.f32 0.0, %v3944
  %v3946 = vpop.f32.mrf.mxu0
  %v3947 = vpop.f32.mrf.mxu0
  %v3948 = vadd.f32 0.0, %v3947
  %v3949 = vpop.f32.mrf.mxu0
  %3950 = vmatprep.mubr.bf16.mxu0 0
  %3951 = vmatmul.mubr.bf16.gmra.mxu0 %v3679
  %v3952 = vpop.f32.mrf.mxu0
  %v3953 = vadd.f32 0.0, %v3952
  %v3954 = vpop.f32.mrf.mxu0
  %v3955 = vpop.f32.mrf.mxu0
  %v3956 = vadd.f32 0.0, %v3955
  %v3957 = vpop.f32.mrf.mxu0
  %3958 = vmatprep.mubr.bf16.mxu0 0
  %3959 = vmatmul.mubr.bf16.gmra.mxu0 %v3682
  %v3960 = vpop.f32.mrf.mxu0
  %v3961 = vadd.f32 0.0, %v3960
  %v3962 = vpop.f32.mrf.mxu0
  %v3963 = vpop.f32.mrf.mxu0
  %v3964 = vadd.f32 0.0, %v3963
  %v3965 = vpop.f32.mrf.mxu0
  %3966 = vmatprep.mubr.bf16.mxu0 0
  %3967 = vmatmul.mubr.bf16.gmra.mxu0 %v3685
  %v3968 = vpop.f32.mrf.mxu0
  %v3969 = vadd.f32 0.0, %v3968
  %v3970 = vpop.f32.mrf.mxu0
  %v3971 = vpop.f32.mrf.mxu0
  %v3972 = vadd.f32 0.0, %v3971
  %v3973 = vpop.f32.mrf.mxu0
  %3974 = vmatprep.mubr.bf16.mxu0 0
  %3975 = vmatmul.mubr.bf16.gmra.mxu0 %v3688
  %v3976 = vpop.f32.mrf.mxu0
  %v3977 = vadd.f32 0.0, %v3976
  %v3978 = vpop.f32.mrf.mxu0
  %v3979 = vpop.f32.mrf.mxu0
  %v3980 = vadd.f32 0.0, %v3979
  %v3981 = vpop.f32.mrf.mxu0
  %3982 = vdwg.mxu0
  %vm3983 = vcmask 64512
  %v3984 = vsel %vm3983, %v3729, 0.0
  %v3985 = vsel %vm3983, %v3732, 0.0
  %v3986 = vadd.f32 %v3984, %v3985
  %v3987 = vsel %vm3983, %v3737, 0.0
  %v3988 = vadd.f32 %v3986, %v3987
  %v3989 = vsel %vm3983, %v3740, 0.0
  %v3990 = vadd.f32 %v3988, %v3989
  %v3991 = vsel %vm3983, %v3745, 0.0
  %v3992 = vadd.f32 %v3990, %v3991
  %v3993 = vsel %vm3983, %v3748, 0.0
  %v3994 = vadd.f32 %v3992, %v3993
  %v3995 = vsel %vm3983, %v3753, 0.0
  %v3996 = vadd.f32 %v3994, %v3995
  %v3997 = vsel %vm3983, %v3756, 0.0
  %v3998 = vadd.f32 %v3996, %v3997
  %v3999 = vsel %vm3983, %v3761, 0.0
  %v4000 = vadd.f32 %v3998, %v3999
  %v4001 = vsel %vm3983, %v3764, 0.0
  %v4002 = vadd.f32 %v4000, %v4001
  %v4003 = vsel %vm3983, %v3769, 0.0
  %v4004 = vadd.f32 %v4002, %v4003
  %v4005 = vsel %vm3983, %v3772, 0.0
  %v4006 = vadd.f32 %v4004, %v4005
  %v4007 = vsel %vm3983, %v3777, 0.0
  %v4008 = vadd.f32 %v4006, %v4007
  %v4009 = vsel %vm3983, %v3780, 0.0
  %v4010 = vadd.f32 %v4008, %v4009
  %v4011 = vsel %vm3983, %v3785, 0.0
  %v4012 = vadd.f32 %v4010, %v4011
  %v4013 = vsel %vm3983, %v3788, 0.0
  %v4014 = vadd.f32 %v4012, %v4013
  %v4015 = vsel %vm3983, %v3793, 0.0
  %v4016 = vadd.f32 %v4014, %v4015
  %v4017 = vsel %vm3983, %v3796, 0.0
  %v4018 = vadd.f32 %v4016, %v4017
  %v4019 = vsel %vm3983, %v3801, 0.0
  %v4020 = vadd.f32 %v4018, %v4019
  %v4021 = vsel %vm3983, %v3804, 0.0
  %v4022 = vadd.f32 %v4020, %v4021
  %v4023 = vsel %vm3983, %v3809, 0.0
  %v4024 = vadd.f32 %v4022, %v4023
  %v4025 = vsel %vm3983, %v3812, 0.0
  %v4026 = vadd.f32 %v4024, %v4025
  %v4027 = vsel %vm3983, %v3817, 0.0
  %v4028 = vadd.f32 %v4026, %v4027
  %v4029 = vsel %vm3983, %v3820, 0.0
  %v4030 = vadd.f32 %v4028, %v4029
  %v4031 = vsel %vm3983, %v3825, 0.0
  %v4032 = vadd.f32 %v4030, %v4031
  %v4033 = vsel %vm3983, %v3828, 0.0
  %v4034 = vadd.f32 %v4032, %v4033
  %v4035 = vsel %vm3983, %v3833, 0.0
  %v4036 = vadd.f32 %v4034, %v4035
  %v4037 = vsel %vm3983, %v3836, 0.0
  %v4038 = vadd.f32 %v4036, %v4037
  %v4039 = vsel %vm3983, %v3841, 0.0
  %v4040 = vadd.f32 %v4038, %v4039
  %v4041 = vsel %vm3983, %v3844, 0.0
  %v4042 = vadd.f32 %v4040, %v4041
  %v4043 = vsel %vm3983, %v3849, 0.0
  %v4044 = vadd.f32 %v4042, %v4043
  %v4045 = vsel %vm3983, %v3852, 0.0
  %v4046 = vadd.f32 %v4044, %v4045
  %v4047 = vsel %vm3983, %v3857, 0.0
  %v4048 = vadd.f32 %v4046, %v4047
  %v4049 = vsel %vm3983, %v3860, 0.0
  %v4050 = vadd.f32 %v4048, %v4049
  %v4051 = vsel %vm3983, %v3865, 0.0
  %v4052 = vadd.f32 %v4050, %v4051
  %v4053 = vsel %vm3983, %v3868, 0.0
  %v4054 = vadd.f32 %v4052, %v4053
  %v4055 = vsel %vm3983, %v3873, 0.0
  %v4056 = vadd.f32 %v4054, %v4055
  %v4057 = vsel %vm3983, %v3876, 0.0
  %v4058 = vadd.f32 %v4056, %v4057
  %v4059 = vsel %vm3983, %v3881, 0.0
  %v4060 = vadd.f32 %v4058, %v4059
  %v4061 = vsel %vm3983, %v3884, 0.0
  %v4062 = vadd.f32 %v4060, %v4061
  %v4063 = vsel %vm3983, %v3889, 0.0
  %v4064 = vadd.f32 %v4062, %v4063
  %v4065 = vsel %vm3983, %v3892, 0.0
  %v4066 = vadd.f32 %v4064, %v4065
  %v4067 = vsel %vm3983, %v3897, 0.0
  %v4068 = vadd.f32 %v4066, %v4067
  %v4069 = vsel %vm3983, %v3900, 0.0
  %v4070 = vadd.f32 %v4068, %v4069
  %v4071 = vsel %vm3983, %v3905, 0.0
  %v4072 = vadd.f32 %v4070, %v4071
  %v4073 = vsel %vm3983, %v3908, 0.0
  %v4074 = vadd.f32 %v4072, %v4073
  %v4075 = vsel %vm3983, %v3913, 0.0
  %v4076 = vadd.f32 %v4074, %v4075
  %v4077 = vsel %vm3983, %v3916, 0.0
  %v4078 = vadd.f32 %v4076, %v4077
  %v4079 = vsel %vm3983, %v3921, 0.0
  %v4080 = vadd.f32 %v4078, %v4079
  %v4081 = vsel %vm3983, %v3924, 0.0
  %v4082 = vadd.f32 %v4080, %v4081
  %v4083 = vsel %vm3983, %v3929, 0.0
  %v4084 = vadd.f32 %v4082, %v4083
  %v4085 = vsel %vm3983, %v3932, 0.0
  %v4086 = vadd.f32 %v4084, %v4085
  %v4087 = vsel %vm3983, %v3937, 0.0
  %v4088 = vadd.f32 %v4086, %v4087
  %v4089 = vsel %vm3983, %v3940, 0.0
  %v4090 = vadd.f32 %v4088, %v4089
  %v4091 = vsel %vm3983, %v3945, 0.0
  %v4092 = vadd.f32 %v4090, %v4091
  %v4093 = vsel %vm3983, %v3948, 0.0
  %v4094 = vadd.f32 %v4092, %v4093
  %v4095 = vsel %vm3983, %v3953, 0.0
  %v4096 = vadd.f32 %v4094, %v4095
  %v4097 = vsel %vm3983, %v3956, 0.0
  %v4098 = vadd.f32 %v4096, %v4097
  %v4099 = vsel %vm3983, %v3961, 0.0
  %v4100 = vadd.f32 %v4098, %v4099
  %v4101 = vsel %vm3983, %v3964, 0.0
  %v4102 = vadd.f32 %v4100, %v4101
  %v4103 = vsel %vm3983, %v3969, 0.0
  %v4104 = vadd.f32 %v4102, %v4103
  %v4105 = vsel %vm3983, %v3972, 0.0
  %v4106 = vadd.f32 %v4104, %v4105
  %v4107 = vsel %vm3983, %v3977, 0.0
  %v4108 = vadd.f32 %v4106, %v4107
  %v4109 = vsel %vm3983, %v3980, 0.0
  %v4110 = vadd.f32 %v4108, %v4109
  %v4111 = vrot.slane %v4110, 4
  %v4112 = vadd.f32 %v4110, %v4111
  %v4113 = vrot.slane %v4112, 2
  %v4114 = vadd.f32 %v4112, %v4113
  %v4115 = vrot.slane %v4114, 1
  %v4116 = vadd.f32 %v4114, %v4115
  %v4117 = vrcp.pop 512.0
  %v4118 = vmul.f32 %v4116, %v4117
  %v4119 = vmul.f32 %v3729, %v3729
  %v4120 = vmul.f32 %v3732, %v3732
  %v4121 = vmul.f32 %v3737, %v3737
  %v4122 = vmul.f32 %v3740, %v3740
  %v4123 = vmul.f32 %v3745, %v3745
  %v4124 = vmul.f32 %v3748, %v3748
  %v4125 = vmul.f32 %v3753, %v3753
  %v4126 = vmul.f32 %v3756, %v3756
  %v4127 = vmul.f32 %v3761, %v3761
  %v4128 = vmul.f32 %v3764, %v3764
  %v4129 = vmul.f32 %v3769, %v3769
  %v4130 = vmul.f32 %v3772, %v3772
  %v4131 = vmul.f32 %v3777, %v3777
  %v4132 = vmul.f32 %v3780, %v3780
  %v4133 = vmul.f32 %v3785, %v3785
  %v4134 = vmul.f32 %v3788, %v3788
  %v4135 = vmul.f32 %v3793, %v3793
  %v4136 = vmul.f32 %v3796, %v3796
  %v4137 = vmul.f32 %v3801, %v3801
  %v4138 = vmul.f32 %v3804, %v3804
  %v4139 = vmul.f32 %v3809, %v3809
  %v4140 = vmul.f32 %v3812, %v3812
  %v4141 = vmul.f32 %v3817, %v3817
  %v4142 = vmul.f32 %v3820, %v3820
  %v4143 = vmul.f32 %v3825, %v3825
  %v4144 = vmul.f32 %v3828, %v3828
  %v4145 = vmul.f32 %v3833, %v3833
  %v4146 = vmul.f32 %v3836, %v3836
  %v4147 = vmul.f32 %v3841, %v3841
  %v4148 = vmul.f32 %v3844, %v3844
  %v4149 = vmul.f32 %v3849, %v3849
  %v4150 = vmul.f32 %v3852, %v3852
  %v4151 = vmul.f32 %v3857, %v3857
  %v4152 = vmul.f32 %v3860, %v3860
  %v4153 = vmul.f32 %v3865, %v3865
  %v4154 = vmul.f32 %v3868, %v3868
  %v4155 = vmul.f32 %v3873, %v3873
  %v4156 = vmul.f32 %v3876, %v3876
  %v4157 = vmul.f32 %v3881, %v3881
  %v4158 = vmul.f32 %v3884, %v3884
  %v4159 = vmul.f32 %v3889, %v3889
  %v4160 = vmul.f32 %v3892, %v3892
  %v4161 = vmul.f32 %v3897, %v3897
  %v4162 = vmul.f32 %v3900, %v3900
  %v4163 = vmul.f32 %v3905, %v3905
  %v4164 = vmul.f32 %v3908, %v3908
  %v4165 = vmul.f32 %v3913, %v3913
  %v4166 = vmul.f32 %v3916, %v3916
  %v4167 = vmul.f32 %v3921, %v3921
  %v4168 = vmul.f32 %v3924, %v3924
  %v4169 = vmul.f32 %v3929, %v3929
  %v4170 = vmul.f32 %v3932, %v3932
  %v4171 = vmul.f32 %v3937, %v3937
  %v4172 = vmul.f32 %v3940, %v3940
  %v4173 = vmul.f32 %v3945, %v3945
  %v4174 = vmul.f32 %v3948, %v3948
  %v4175 = vmul.f32 %v3953, %v3953
  %v4176 = vmul.f32 %v3956, %v3956
  %v4177 = vmul.f32 %v3961, %v3961
  %v4178 = vmul.f32 %v3964, %v3964
  %v4179 = vmul.f32 %v3969, %v3969
  %v4180 = vmul.f32 %v3972, %v3972
  %v4181 = vmul.f32 %v3977, %v3977
  %v4182 = vmul.f32 %v3980, %v3980
  %v4183 = vsel %vm3983, %v4119, 0.0
  %v4184 = vsel %vm3983, %v4120, 0.0
  %v4185 = vadd.f32 %v4183, %v4184
  %v4186 = vsel %vm3983, %v4121, 0.0
  %v4187 = vadd.f32 %v4185, %v4186
  %v4188 = vsel %vm3983, %v4122, 0.0
  %v4189 = vadd.f32 %v4187, %v4188
  %v4190 = vsel %vm3983, %v4123, 0.0
  %v4191 = vadd.f32 %v4189, %v4190
  %v4192 = vsel %vm3983, %v4124, 0.0
  %v4193 = vadd.f32 %v4191, %v4192
  %v4194 = vsel %vm3983, %v4125, 0.0
  %v4195 = vadd.f32 %v4193, %v4194
  %v4196 = vsel %vm3983, %v4126, 0.0
  %v4197 = vadd.f32 %v4195, %v4196
  %v4198 = vsel %vm3983, %v4127, 0.0
  %v4199 = vadd.f32 %v4197, %v4198
  %v4200 = vsel %vm3983, %v4128, 0.0
  %v4201 = vadd.f32 %v4199, %v4200
  %v4202 = vsel %vm3983, %v4129, 0.0
  %v4203 = vadd.f32 %v4201, %v4202
  %v4204 = vsel %vm3983, %v4130, 0.0
  %v4205 = vadd.f32 %v4203, %v4204
  %v4206 = vsel %vm3983, %v4131, 0.0
  %v4207 = vadd.f32 %v4205, %v4206
  %v4208 = vsel %vm3983, %v4132, 0.0
  %v4209 = vadd.f32 %v4207, %v4208
  %v4210 = vsel %vm3983, %v4133, 0.0
  %v4211 = vadd.f32 %v4209, %v4210
  %v4212 = vsel %vm3983, %v4134, 0.0
  %v4213 = vadd.f32 %v4211, %v4212
  %v4214 = vsel %vm3983, %v4135, 0.0
  %v4215 = vadd.f32 %v4213, %v4214
  %v4216 = vsel %vm3983, %v4136, 0.0
  %v4217 = vadd.f32 %v4215, %v4216
  %v4218 = vsel %vm3983, %v4137, 0.0
  %v4219 = vadd.f32 %v4217, %v4218
  %v4220 = vsel %vm3983, %v4138, 0.0
  %v4221 = vadd.f32 %v4219, %v4220
  %v4222 = vsel %vm3983, %v4139, 0.0
  %v4223 = vadd.f32 %v4221, %v4222
  %v4224 = vsel %vm3983, %v4140, 0.0
  %v4225 = vadd.f32 %v4223, %v4224
  %v4226 = vsel %vm3983, %v4141, 0.0
  %v4227 = vadd.f32 %v4225, %v4226
  %v4228 = vsel %vm3983, %v4142, 0.0
  %v4229 = vadd.f32 %v4227, %v4228
  %v4230 = vsel %vm3983, %v4143, 0.0
  %v4231 = vadd.f32 %v4229, %v4230
  %v4232 = vsel %vm3983, %v4144, 0.0
  %v4233 = vadd.f32 %v4231, %v4232
  %v4234 = vsel %vm3983, %v4145, 0.0
  %v4235 = vadd.f32 %v4233, %v4234
  %v4236 = vsel %vm3983, %v4146, 0.0
  %v4237 = vadd.f32 %v4235, %v4236
  %v4238 = vsel %vm3983, %v4147, 0.0
  %v4239 = vadd.f32 %v4237, %v4238
  %v4240 = vsel %vm3983, %v4148, 0.0
  %v4241 = vadd.f32 %v4239, %v4240
  %v4242 = vsel %vm3983, %v4149, 0.0
  %v4243 = vadd.f32 %v4241, %v4242
  %v4244 = vsel %vm3983, %v4150, 0.0
  %v4245 = vadd.f32 %v4243, %v4244
  %v4246 = vsel %vm3983, %v4151, 0.0
  %v4247 = vadd.f32 %v4245, %v4246
  %v4248 = vsel %vm3983, %v4152, 0.0
  %v4249 = vadd.f32 %v4247, %v4248
  %v4250 = vsel %vm3983, %v4153, 0.0
  %v4251 = vadd.f32 %v4249, %v4250
  %v4252 = vsel %vm3983, %v4154, 0.0
  %v4253 = vadd.f32 %v4251, %v4252
  %v4254 = vsel %vm3983, %v4155, 0.0
  %v4255 = vadd.f32 %v4253, %v4254
  %v4256 = vsel %vm3983, %v4156, 0.0
  %v4257 = vadd.f32 %v4255, %v4256
  %v4258 = vsel %vm3983, %v4157, 0.0
  %v4259 = vadd.f32 %v4257, %v4258
  %v4260 = vsel %vm3983, %v4158, 0.0
  %v4261 = vadd.f32 %v4259, %v4260
  %v4262 = vsel %vm3983, %v4159, 0.0
  %v4263 = vadd.f32 %v4261, %v4262
  %v4264 = vsel %vm3983, %v4160, 0.0
  %v4265 = vadd.f32 %v4263, %v4264
  %v4266 = vsel %vm3983, %v4161, 0.0
  %v4267 = vadd.f32 %v4265, %v4266
  %v4268 = vsel %vm3983, %v4162, 0.0
  %v4269 = vadd.f32 %v4267, %v4268
  %v4270 = vsel %vm3983, %v4163, 0.0
  %v4271 = vadd.f32 %v4269, %v4270
  %v4272 = vsel %vm3983, %v4164, 0.0
  %v4273 = vadd.f32 %v4271, %v4272
  %v4274 = vsel %vm3983, %v4165, 0.0
  %v4275 = vadd.f32 %v4273, %v4274
  %v4276 = vsel %vm3983, %v4166, 0.0
  %v4277 = vadd.f32 %v4275, %v4276
  %v4278 = vsel %vm3983, %v4167, 0.0
  %v4279 = vadd.f32 %v4277, %v4278
  %v4280 = vsel %vm3983, %v4168, 0.0
  %v4281 = vadd.f32 %v4279, %v4280
  %v4282 = vsel %vm3983, %v4169, 0.0
  %v4283 = vadd.f32 %v4281, %v4282
  %v4284 = vsel %vm3983, %v4170, 0.0
  %v4285 = vadd.f32 %v4283, %v4284
  %v4286 = vsel %vm3983, %v4171, 0.0
  %v4287 = vadd.f32 %v4285, %v4286
  %v4288 = vsel %vm3983, %v4172, 0.0
  %v4289 = vadd.f32 %v4287, %v4288
  %v4290 = vsel %vm3983, %v4173, 0.0
  %v4291 = vadd.f32 %v4289, %v4290
  %v4292 = vsel %vm3983, %v4174, 0.0
  %v4293 = vadd.f32 %v4291, %v4292
  %v4294 = vsel %vm3983, %v4175, 0.0
  %v4295 = vadd.f32 %v4293, %v4294
  %v4296 = vsel %vm3983, %v4176, 0.0
  %v4297 = vadd.f32 %v4295, %v4296
  %v4298 = vsel %vm3983, %v4177, 0.0
  %v4299 = vadd.f32 %v4297, %v4298
  %v4300 = vsel %vm3983, %v4178, 0.0
  %v4301 = vadd.f32 %v4299, %v4300
  %v4302 = vsel %vm3983, %v4179, 0.0
  %v4303 = vadd.f32 %v4301, %v4302
  %v4304 = vsel %vm3983, %v4180, 0.0
  %v4305 = vadd.f32 %v4303, %v4304
  %v4306 = vsel %vm3983, %v4181, 0.0
  %v4307 = vadd.f32 %v4305, %v4306
  %v4308 = vsel %vm3983, %v4182, 0.0
  %v4309 = vadd.f32 %v4307, %v4308
  %v4310 = vrot.slane %v4309, 4
  %v4311 = vadd.f32 %v4309, %v4310
  %v4312 = vrot.slane %v4311, 2
  %v4313 = vadd.f32 %v4311, %v4312
  %v4314 = vrot.slane %v4313, 1
  %v4315 = vadd.f32 %v4313, %v4314
  %v4316 = vmul.f32 %v4315, %v4117
  %v4317 = vmul.f32 %v4118, %v4118
  %v4318 = vsub.f32 %v4316, %v4317
  %v4319 = vld [vmem:[%s2] sm:$0x1]
  %v4320 = vadd.f32 %v4318, 1e-05
  %v4321 = vrsqrt.pop %v4320
  %v4322 = vmul.f32 %v4319, %v4321
  %v4323 = vld [vmem:[%s3] sm:$0x1]
  %v4324 = vmul.f32 %v4118, %v4322
  %v4325 = vsub.f32 %v4323, %v4324
  %v4327 = vlaneseq
  %v4328 = vshrl.u32 %v4327, 7
  %v4329 = vsub.s32 0, %v4328
  %v4330 = vrot.slane %v4322, %v4329
  %v4332 = vmul.f32 %v3729, %v4330
  %v4333 = vmul.f32 %v3732, %v4330
  %v4334 = vmul.f32 %v3737, %v4330
  %v4335 = vmul.f32 %v3740, %v4330
  %v4336 = vmul.f32 %v3745, %v4330
  %v4337 = vmul.f32 %v3748, %v4330
  %v4338 = vmul.f32 %v3753, %v4330
  %v4339 = vmul.f32 %v3756, %v4330
  %v4340 = vmul.f32 %v3761, %v4330
  %v4341 = vmul.f32 %v3764, %v4330
  %v4342 = vmul.f32 %v3769, %v4330
  %v4343 = vmul.f32 %v3772, %v4330
  %v4344 = vmul.f32 %v3777, %v4330
  %v4345 = vmul.f32 %v3780, %v4330
  %v4346 = vmul.f32 %v3785, %v4330
  %v4347 = vmul.f32 %v3788, %v4330
  %v4348 = vmul.f32 %v3793, %v4330
  %v4349 = vmul.f32 %v3796, %v4330
  %v4350 = vmul.f32 %v3801, %v4330
  %v4351 = vmul.f32 %v3804, %v4330
  %v4352 = vmul.f32 %v3809, %v4330
  %v4353 = vmul.f32 %v3812, %v4330
  %v4354 = vmul.f32 %v3817, %v4330
  %v4355 = vmul.f32 %v3820, %v4330
  %v4356 = vmul.f32 %v3825, %v4330
  %v4357 = vmul.f32 %v3828, %v4330
  %v4358 = vmul.f32 %v3833, %v4330
  %v4359 = vmul.f32 %v3836, %v4330
  %v4360 = vmul.f32 %v3841, %v4330
  %v4361 = vmul.f32 %v3844, %v4330
  %v4362 = vmul.f32 %v3849, %v4330
  %v4363 = vmul.f32 %v3852, %v4330
  %v4364 = vmul.f32 %v3857, %v4330
  %v4365 = vmul.f32 %v3860, %v4330
  %v4366 = vmul.f32 %v3865, %v4330
  %v4367 = vmul.f32 %v3868, %v4330
  %v4368 = vmul.f32 %v3873, %v4330
  %v4369 = vmul.f32 %v3876, %v4330
  %v4370 = vmul.f32 %v3881, %v4330
  %v4371 = vmul.f32 %v3884, %v4330
  %v4372 = vmul.f32 %v3889, %v4330
  %v4373 = vmul.f32 %v3892, %v4330
  %v4374 = vmul.f32 %v3897, %v4330
  %v4375 = vmul.f32 %v3900, %v4330
  %v4376 = vmul.f32 %v3905, %v4330
  %v4377 = vmul.f32 %v3908, %v4330
  %v4378 = vmul.f32 %v3913, %v4330
  %v4379 = vmul.f32 %v3916, %v4330
  %v4380 = vmul.f32 %v3921, %v4330
  %v4381 = vmul.f32 %v3924, %v4330
  %v4382 = vmul.f32 %v3929, %v4330
  %v4383 = vmul.f32 %v3932, %v4330
  %v4384 = vmul.f32 %v3937, %v4330
  %v4385 = vmul.f32 %v3940, %v4330
  %v4386 = vmul.f32 %v3945, %v4330
  %v4387 = vmul.f32 %v3948, %v4330
  %v4388 = vmul.f32 %v3953, %v4330
  %v4389 = vmul.f32 %v3956, %v4330
  %v4390 = vmul.f32 %v3961, %v4330
  %v4391 = vmul.f32 %v3964, %v4330
  %v4392 = vmul.f32 %v3969, %v4330
  %v4393 = vmul.f32 %v3972, %v4330
  %v4394 = vmul.f32 %v3977, %v4330
  %v4395 = vmul.f32 %v3980, %v4330
  %v4397 = vlaneseq
  %v4398 = vshrl.u32 %v4397, 7
  %v4399 = vsub.s32 0, %v4398
  %v4400 = vrot.slane %v4325, %v4399
  %v4402 = vadd.f32 %v4332, %v4400
  %v4403 = vadd.f32 %v4333, %v4400
  %v4404 = vadd.f32 %v4334, %v4400
  %v4405 = vadd.f32 %v4335, %v4400
  %v4406 = vadd.f32 %v4336, %v4400
  %v4407 = vadd.f32 %v4337, %v4400
  %v4408 = vadd.f32 %v4338, %v4400
  %v4409 = vadd.f32 %v4339, %v4400
  %v4410 = vadd.f32 %v4340, %v4400
  %v4411 = vadd.f32 %v4341, %v4400
  %v4412 = vadd.f32 %v4342, %v4400
  %v4413 = vadd.f32 %v4343, %v4400
  %v4414 = vadd.f32 %v4344, %v4400
  %v4415 = vadd.f32 %v4345, %v4400
  %v4416 = vadd.f32 %v4346, %v4400
  %v4417 = vadd.f32 %v4347, %v4400
  %v4418 = vadd.f32 %v4348, %v4400
  %v4419 = vadd.f32 %v4349, %v4400
  %v4420 = vadd.f32 %v4350, %v4400
  %v4421 = vadd.f32 %v4351, %v4400
  %v4422 = vadd.f32 %v4352, %v4400
  %v4423 = vadd.f32 %v4353, %v4400
  %v4424 = vadd.f32 %v4354, %v4400
  %v4425 = vadd.f32 %v4355, %v4400
  %v4426 = vadd.f32 %v4356, %v4400
  %v4427 = vadd.f32 %v4357, %v4400
  %v4428 = vadd.f32 %v4358, %v4400
  %v4429 = vadd.f32 %v4359, %v4400
  %v4430 = vadd.f32 %v4360, %v4400
  %v4431 = vadd.f32 %v4361, %v4400
  %v4432 = vadd.f32 %v4362, %v4400
  %v4433 = vadd.f32 %v4363, %v4400
  %v4434 = vadd.f32 %v4364, %v4400
  %v4435 = vadd.f32 %v4365, %v4400
  %v4436 = vadd.f32 %v4366, %v4400
  %v4437 = vadd.f32 %v4367, %v4400
  %v4438 = vadd.f32 %v4368, %v4400
  %v4439 = vadd.f32 %v4369, %v4400
  %v4440 = vadd.f32 %v4370, %v4400
  %v4441 = vadd.f32 %v4371, %v4400
  %v4442 = vadd.f32 %v4372, %v4400
  %v4443 = vadd.f32 %v4373, %v4400
  %v4444 = vadd.f32 %v4374, %v4400
  %v4445 = vadd.f32 %v4375, %v4400
  %v4446 = vadd.f32 %v4376, %v4400
  %v4447 = vadd.f32 %v4377, %v4400
  %v4448 = vadd.f32 %v4378, %v4400
  %v4449 = vadd.f32 %v4379, %v4400
  %v4450 = vadd.f32 %v4380, %v4400
  %v4451 = vadd.f32 %v4381, %v4400
  %v4452 = vadd.f32 %v4382, %v4400
  %v4453 = vadd.f32 %v4383, %v4400
  %v4454 = vadd.f32 %v4384, %v4400
  %v4455 = vadd.f32 %v4385, %v4400
  %v4456 = vadd.f32 %v4386, %v4400
  %v4457 = vadd.f32 %v4387, %v4400
  %v4458 = vadd.f32 %v4388, %v4400
  %v4459 = vadd.f32 %v4389, %v4400
  %v4460 = vadd.f32 %v4390, %v4400
  %v4461 = vadd.f32 %v4391, %v4400
  %v4462 = vadd.f32 %v4392, %v4400
  %v4463 = vadd.f32 %v4393, %v4400
  %v4464 = vadd.f32 %v4394, %v4400
  %v4465 = vadd.f32 %v4395, %v4400
  %v4466 = vmax.f32 %v4402, 0.0
  %v4467 = vmax.f32 %v4403, 0.0
  %v4468 = vmax.f32 %v4404, 0.0
  %v4469 = vmax.f32 %v4405, 0.0
  %v4470 = vmax.f32 %v4406, 0.0
  %v4471 = vmax.f32 %v4407, 0.0
  %v4472 = vmax.f32 %v4408, 0.0
  %v4473 = vmax.f32 %v4409, 0.0
  %v4474 = vmax.f32 %v4410, 0.0
  %v4475 = vmax.f32 %v4411, 0.0
  %v4476 = vmax.f32 %v4412, 0.0
  %v4477 = vmax.f32 %v4413, 0.0
  %v4478 = vmax.f32 %v4414, 0.0
  %v4479 = vmax.f32 %v4415, 0.0
  %v4480 = vmax.f32 %v4416, 0.0
  %v4481 = vmax.f32 %v4417, 0.0
  %v4482 = vmax.f32 %v4418, 0.0
  %v4483 = vmax.f32 %v4419, 0.0
  %v4484 = vmax.f32 %v4420, 0.0
  %v4485 = vmax.f32 %v4421, 0.0
  %v4486 = vmax.f32 %v4422, 0.0
  %v4487 = vmax.f32 %v4423, 0.0
  %v4488 = vmax.f32 %v4424, 0.0
  %v4489 = vmax.f32 %v4425, 0.0
  %v4490 = vmax.f32 %v4426, 0.0
  %v4491 = vmax.f32 %v4427, 0.0
  %v4492 = vmax.f32 %v4428, 0.0
  %v4493 = vmax.f32 %v4429, 0.0
  %v4494 = vmax.f32 %v4430, 0.0
  %v4495 = vmax.f32 %v4431, 0.0
  %v4496 = vmax.f32 %v4432, 0.0
  %v4497 = vmax.f32 %v4433, 0.0
  %v4498 = vmax.f32 %v4434, 0.0
  %v4499 = vmax.f32 %v4435, 0.0
  %v4500 = vmax.f32 %v4436, 0.0
  %v4501 = vmax.f32 %v4437, 0.0
  %v4502 = vmax.f32 %v4438, 0.0
  %v4503 = vmax.f32 %v4439, 0.0
  %v4504 = vmax.f32 %v4440, 0.0
  %v4505 = vmax.f32 %v4441, 0.0
  %v4506 = vmax.f32 %v4442, 0.0
  %v4507 = vmax.f32 %v4443, 0.0
  %v4508 = vmax.f32 %v4444, 0.0
  %v4509 = vmax.f32 %v4445, 0.0
  %v4510 = vmax.f32 %v4446, 0.0
  %v4511 = vmax.f32 %v4447, 0.0
  %v4512 = vmax.f32 %v4448, 0.0
  %v4513 = vmax.f32 %v4449, 0.0
  %v4514 = vmax.f32 %v4450, 0.0
  %v4515 = vmax.f32 %v4451, 0.0
  %v4516 = vmax.f32 %v4452, 0.0
  %v4517 = vmax.f32 %v4453, 0.0
  %v4518 = vmax.f32 %v4454, 0.0
  %v4519 = vmax.f32 %v4455, 0.0
  %v4520 = vmax.f32 %v4456, 0.0
  %v4521 = vmax.f32 %v4457, 0.0
  %v4522 = vmax.f32 %v4458, 0.0
  %v4523 = vmax.f32 %v4459, 0.0
  %v4524 = vmax.f32 %v4460, 0.0
  %v4525 = vmax.f32 %v4461, 0.0
  %v4526 = vmax.f32 %v4462, 0.0
  %v4527 = vmax.f32 %v4463, 0.0
  %v4528 = vmax.f32 %v4464, 0.0
  %v4529 = vmax.f32 %v4465, 0.0
  %4530 = vst.msk [vmem:[#allocation3] sm:$0xff] %vm3983, 0.0
  %4531 = vst.msk [vmem:[#allocation3 + $0x8] sm:$0xff] %vm3983, 0.0
  %vm4532 = vcmask 58368
  %4533 = vst.msk [vmem:[#allocation3 + $0x10] sm:$0x3] %vm4532, 0.0
  %4534 = vst.msk [vmem:[#allocation3 + $0x18] sm:$0xff] %vm3983, 0.0
  %4535 = vst.msk [vmem:[#allocation3 + $0x20] sm:$0xff] %vm3983, 0.0
  %4536 = vst.msk [vmem:[#allocation3 + $0x28] sm:$0x3] %vm4532, 0.0
  %4537 = vst.msk [vmem:[#allocation3 + $0x30] sm:$0xff] %vm3983, 0.0
  %4538 = vst.msk [vmem:[#allocation3 + $0x38] sm:$0xff] %vm3983, 0.0
  %4539 = vst.msk [vmem:[#allocation3 + $0x40] sm:$0x3] %vm4532, 0.0
  %4540 = vst.msk [vmem:[#allocation3 + $0x48] sm:$0xff] %vm3983, 0.0
  %4541 = vst.msk [vmem:[#allocation3 + $0x50] sm:$0xff] %vm3983, 0.0
  %4542 = vst.msk [vmem:[#allocation3 + $0x58] sm:$0x3] %vm4532, 0.0
  %4543 = vst.msk [vmem:[#allocation3 + $0x60] sm:$0xff] %vm3983, 0.0
  %4544 = vst.msk [vmem:[#allocation3 + $0x68] sm:$0xff] %vm3983, 0.0
  %4545 = vst.msk [vmem:[#allocation3 + $0x70] sm:$0x3] %vm4532, 0.0
  %4546 = vst.msk [vmem:[#allocation3 + $0x78] sm:$0xff] %vm3983, 0.0
  %4547 = vst.msk [vmem:[#allocation3 + $0x80] sm:$0xff] %vm3983, 0.0
  %4548 = vst.msk [vmem:[#allocation3 + $0x88] sm:$0x3] %vm4532, 0.0
  %4549 = vst.msk [vmem:[#allocation3 + $0x90] sm:$0xff] %vm3983, 0.0
  %4550 = vst.msk [vmem:[#allocation3 + $0x98] sm:$0xff] %vm3983, 0.0
  %4551 = vst.msk [vmem:[#allocation3 + $0xa0] sm:$0x3] %vm4532, 0.0
  %4552 = vst.msk [vmem:[#allocation3 + $0xa8] sm:$0xff] %vm3983, 0.0
  %4553 = vst.msk [vmem:[#allocation3 + $0xb0] sm:$0xff] %vm3983, 0.0
  %4554 = vst.msk [vmem:[#allocation3 + $0xb8] sm:$0x3] %vm4532, 0.0
  %4555 = vst.msk [vmem:[#allocation3 + $0xc0] sm:$0xff] %vm3983, 0.0
  %4556 = vst.msk [vmem:[#allocation3 + $0xc8] sm:$0xff] %vm3983, 0.0
  %4557 = vst.msk [vmem:[#allocation3 + $0xd0] sm:$0x3] %vm4532, 0.0
  %4558 = vst.msk [vmem:[#allocation3 + $0xd8] sm:$0xff] %vm3983, 0.0
  %4559 = vst.msk [vmem:[#allocation3 + $0xe0] sm:$0xff] %vm3983, 0.0
  %4560 = vst.msk [vmem:[#allocation3 + $0xe8] sm:$0x3] %vm4532, 0.0
  %4561 = vst.msk [vmem:[#allocation3 + $0xf0] sm:$0xff] %vm3983, 0.0
  %4562 = vst.msk [vmem:[#allocation3 + $0xf8] sm:$0xff] %vm3983, 0.0
  %4563 = vst.msk [vmem:[#allocation3 + $0x100] sm:$0x3] %vm4532, 0.0
  %4564 = vst.msk [vmem:[#allocation3 + $0x108] sm:$0xff] %vm3983, 0.0
  %4565 = vst.msk [vmem:[#allocation3 + $0x110] sm:$0xff] %vm3983, 0.0
  %4566 = vst.msk [vmem:[#allocation3 + $0x118] sm:$0x3] %vm4532, 0.0
  %4567 = vst.msk [vmem:[#allocation3 + $0x120] sm:$0xff] %vm3983, 0.0
  %4568 = vst.msk [vmem:[#allocation3 + $0x128] sm:$0xff] %vm3983, 0.0
  %4569 = vst.msk [vmem:[#allocation3 + $0x130] sm:$0x3] %vm4532, 0.0
  %4570 = vst.msk [vmem:[#allocation3 + $0x138] sm:$0xff] %vm3983, 0.0
  %4571 = vst.msk [vmem:[#allocation3 + $0x140] sm:$0xff] %vm3983, 0.0
  %4572 = vst.msk [vmem:[#allocation3 + $0x148] sm:$0x3] %vm4532, 0.0
  %4573 = vst.msk [vmem:[#allocation3 + $0x150] sm:$0xff] %vm3983, 0.0
  %4574 = vst.msk [vmem:[#allocation3 + $0x158] sm:$0xff] %vm3983, 0.0
  %4575 = vst.msk [vmem:[#allocation3 + $0x160] sm:$0x3] %vm4532, 0.0
  %4576 = vst.msk [vmem:[#allocation3 + $0x168] sm:$0xff] %vm3983, 0.0
  %4577 = vst.msk [vmem:[#allocation3 + $0x170] sm:$0xff] %vm3983, 0.0
  %4578 = vst.msk [vmem:[#allocation3 + $0x178] sm:$0x3] %vm4532, 0.0
  %4579 = vst.msk [vmem:[#allocation3 + $0x180] sm:$0xff] %vm3983, 0.0
  %4580 = vst.msk [vmem:[#allocation3 + $0x188] sm:$0xff] %vm3983, 0.0
  %4581 = vst.msk [vmem:[#allocation3 + $0x190] sm:$0x3] %vm4532, 0.0
  %4582 = vst.msk [vmem:[#allocation3 + $0x198] sm:$0xff] %vm3983, 0.0
  %4583 = vst.msk [vmem:[#allocation3 + $0x1a0] sm:$0xff] %vm3983, 0.0
  %4584 = vst.msk [vmem:[#allocation3 + $0x1a8] sm:$0x3] %vm4532, 0.0
  %4585 = vst.msk [vmem:[#allocation3 + $0x1b0] sm:$0xff] %vm3983, 0.0
  %4586 = vst.msk [vmem:[#allocation3 + $0x1b8] sm:$0xff] %vm3983, 0.0
  %4587 = vst.msk [vmem:[#allocation3 + $0x1c0] sm:$0x3] %vm4532, 0.0
  %4588 = vst.msk [vmem:[#allocation3 + $0x1c8] sm:$0xff] %vm3983, 0.0
  %4589 = vst.msk [vmem:[#allocation3 + $0x1d0] sm:$0xff] %vm3983, 0.0
  %4590 = vst.msk [vmem:[#allocation3 + $0x1d8] sm:$0x3] %vm4532, 0.0
  %4591 = vst.msk [vmem:[#allocation3 + $0x1e0] sm:$0xff] %vm3983, 0.0
  %4592 = vst.msk [vmem:[#allocation3 + $0x1e8] sm:$0xff] %vm3983, 0.0
  %4593 = vst.msk [vmem:[#allocation3 + $0x1f0] sm:$0x3] %vm4532, 0.0
  %4594 = vst.msk [vmem:[#allocation3 + $0x1f8] sm:$0xff] %vm3983, 0.0
  %4595 = vst.msk [vmem:[#allocation3 + $0x200] sm:$0xff] %vm3983, 0.0
  %4596 = vst.msk [vmem:[#allocation3 + $0x208] sm:$0x3] %vm4532, 0.0
  %4597 = vst.msk [vmem:[#allocation3 + $0x210] sm:$0xff] %vm3983, 0.0
  %4598 = vst.msk [vmem:[#allocation3 + $0x218] sm:$0xff] %vm3983, 0.0
  %4599 = vst.msk [vmem:[#allocation3 + $0x220] sm:$0x3] %vm4532, 0.0
  %4600 = vst.msk [vmem:[#allocation3 + $0x228] sm:$0xff] %vm3983, 0.0
  %4601 = vst.msk [vmem:[#allocation3 + $0x230] sm:$0xff] %vm3983, 0.0
  %4602 = vst.msk [vmem:[#allocation3 + $0x238] sm:$0x3] %vm4532, 0.0
  %4603 = vst.msk [vmem:[#allocation3 + $0x240] sm:$0xff] %vm3983, 0.0
  %4604 = vst.msk [vmem:[#allocation3 + $0x248] sm:$0xff] %vm3983, 0.0
  %4605 = vst.msk [vmem:[#allocation3 + $0x250] sm:$0x3] %vm4532, 0.0
  %4606 = vst.msk [vmem:[#allocation3 + $0x258] sm:$0xff] %vm3983, 0.0
  %4607 = vst.msk [vmem:[#allocation3 + $0x260] sm:$0xff] %vm3983, 0.0
  %4608 = vst.msk [vmem:[#allocation3 + $0x268] sm:$0x3] %vm4532, 0.0
  %4609 = vst.msk [vmem:[#allocation3 + $0x270] sm:$0xff] %vm3983, 0.0
  %4610 = vst.msk [vmem:[#allocation3 + $0x278] sm:$0xff] %vm3983, 0.0
  %4611 = vst.msk [vmem:[#allocation3 + $0x280] sm:$0x3] %vm4532, 0.0
  %4612 = vst.msk [vmem:[#allocation3 + $0x288] sm:$0xff] %vm3983, 0.0
  %4613 = vst.msk [vmem:[#allocation3 + $0x290] sm:$0xff] %vm3983, 0.0
  %4614 = vst.msk [vmem:[#allocation3 + $0x298] sm:$0x3] %vm4532, 0.0
  %4615 = vst.msk [vmem:[#allocation3 + $0x2a0] sm:$0xff] %vm3983, 0.0
  %4616 = vst.msk [vmem:[#allocation3 + $0x2a8] sm:$0xff] %vm3983, 0.0
  %4617 = vst.msk [vmem:[#allocation3 + $0x2b0] sm:$0x3] %vm4532, 0.0
  %4618 = vst.msk [vmem:[#allocation3 + $0x2b8] sm:$0xff] %vm3983, 0.0
  %4619 = vst.msk [vmem:[#allocation3 + $0x2c0] sm:$0xff] %vm3983, 0.0
  %4620 = vst.msk [vmem:[#allocation3 + $0x2c8] sm:$0x3] %vm4532, 0.0
  %4621 = vst.msk [vmem:[#allocation3 + $0x2d0] sm:$0xff] %vm3983, 0.0
  %4622 = vst.msk [vmem:[#allocation3 + $0x2d8] sm:$0xff] %vm3983, 0.0
  %4623 = vst.msk [vmem:[#allocation3 + $0x2e0] sm:$0x3] %vm4532, 0.0
  %4624 = vst.msk [vmem:[#allocation3 + $0x2e8] sm:$0xff] %vm3983, 0.0
  %4625 = vst.msk [vmem:[#allocation3 + $0x2f0] sm:$0xff] %vm3983, 0.0
  %4626 = vst.msk [vmem:[#allocation3 + $0x2f8] sm:$0x3] %vm4532, 0.0
  %4627 = vst.msk [vmem:[#allocation3 + $0x300] sm:$0xff] %vm3983, 0.0
  %4628 = vst.msk [vmem:[#allocation3 + $0x308] sm:$0xff] %vm3983, 0.0
  %4629 = vst.msk [vmem:[#allocation3 + $0x310] sm:$0x3] %vm4532, 0.0
  %4630 = vst.msk [vmem:[#allocation3 + $0x318] sm:$0xff] %vm3983, 0.0
  %4631 = vst.msk [vmem:[#allocation3 + $0x320] sm:$0xff] %vm3983, 0.0
  %4632 = vst.msk [vmem:[#allocation3 + $0x328] sm:$0x3] %vm4532, 0.0
  %4633 = vst.msk [vmem:[#allocation3 + $0x330] sm:$0xff] %vm3983, 0.0
  %4634 = vst.msk [vmem:[#allocation3 + $0x338] sm:$0xff] %vm3983, 0.0
  %4635 = vst.msk [vmem:[#allocation3 + $0x340] sm:$0x3] %vm4532, 0.0
  %4636 = vst.msk [vmem:[#allocation3 + $0x348] sm:$0xff] %vm3983, 0.0
  %4637 = vst.msk [vmem:[#allocation3 + $0x350] sm:$0xff] %vm3983, 0.0
  %4638 = vst.msk [vmem:[#allocation3 + $0x358] sm:$0x3] %vm4532, 0.0
  %s4639 = scalar_lea.vmem [#allocation3], 24
  %4640 = vst.msk [vmem:[%s4639 + $0x1] sm:$0xff] %vm3983, %v4466
  %4641 = vst.msk [vmem:[%s4639 + $0x9] sm:$0xff] %vm3983, %v4467
  %4642 = vst.msk [vmem:[%s4639 + $0x19] sm:$0xff] %vm3983, %v4468
  %4643 = vst.msk [vmem:[%s4639 + $0x21] sm:$0xff] %vm3983, %v4469
  %4644 = vst.msk [vmem:[%s4639 + $0x31] sm:$0xff] %vm3983, %v4470
  %4645 = vst.msk [vmem:[%s4639 + $0x39] sm:$0xff] %vm3983, %v4471
  %4646 = vst.msk [vmem:[%s4639 + $0x49] sm:$0xff] %vm3983, %v4472
  %4647 = vst.msk [vmem:[%s4639 + $0x51] sm:$0xff] %vm3983, %v4473
  %4648 = vst.msk [vmem:[%s4639 + $0x61] sm:$0xff] %vm3983, %v4474
  %4649 = vst.msk [vmem:[%s4639 + $0x69] sm:$0xff] %vm3983, %v4475
  %4650 = vst.msk [vmem:[%s4639 + $0x79] sm:$0xff] %vm3983, %v4476
  %4651 = vst.msk [vmem:[%s4639 + $0x81] sm:$0xff] %vm3983, %v4477
  %4652 = vst.msk [vmem:[%s4639 + $0x91] sm:$0xff] %vm3983, %v4478
  %4653 = vst.msk [vmem:[%s4639 + $0x99] sm:$0xff] %vm3983, %v4479
  %4654 = vst.msk [vmem:[%s4639 + $0xa9] sm:$0xff] %vm3983, %v4480
  %4655 = vst.msk [vmem:[%s4639 + $0xb1] sm:$0xff] %vm3983, %v4481
  %4656 = vst.msk [vmem:[%s4639 + $0xc1] sm:$0xff] %vm3983, %v4482
  %4657 = vst.msk [vmem:[%s4639 + $0xc9] sm:$0xff] %vm3983, %v4483
  %4658 = vst.msk [vmem:[%s4639 + $0xd9] sm:$0xff] %vm3983, %v4484
  %4659 = vst.msk [vmem:[%s4639 + $0xe1] sm:$0xff] %vm3983, %v4485
  %4660 = vst.msk [vmem:[%s4639 + $0xf1] sm:$0xff] %vm3983, %v4486
  %4661 = vst.msk [vmem:[%s4639 + $0xf9] sm:$0xff] %vm3983, %v4487
  %4662 = vst.msk [vmem:[%s4639 + $0x109] sm:$0xff] %vm3983, %v4488
  %4663 = vst.msk [vmem:[%s4639 + $0x111] sm:$0xff] %vm3983, %v4489
  %4664 = vst.msk [vmem:[%s4639 + $0x121] sm:$0xff] %vm3983, %v4490
  %4665 = vst.msk [vmem:[%s4639 + $0x129] sm:$0xff] %vm3983, %v4491
  %4666 = vst.msk [vmem:[%s4639 + $0x139] sm:$0xff] %vm3983, %v4492
  %4667 = vst.msk [vmem:[%s4639 + $0x141] sm:$0xff] %vm3983, %v4493
  %4668 = vst.msk [vmem:[%s4639 + $0x151] sm:$0xff] %vm3983, %v4494
  %4669 = vst.msk [vmem:[%s4639 + $0x159] sm:$0xff] %vm3983, %v4495
  %4670 = vst.msk [vmem:[%s4639 + $0x169] sm:$0xff] %vm3983, %v4496
  %4671 = vst.msk [vmem:[%s4639 + $0x171] sm:$0xff] %vm3983, %v4497
  %4672 = vst.msk [vmem:[%s4639 + $0x1b1] sm:$0xff] %vm3983, %v4498
  %4673 = vst.msk [vmem:[%s4639 + $0x1b9] sm:$0xff] %vm3983, %v4499
  %4674 = vst.msk [vmem:[%s4639 + $0x1c9] sm:$0xff] %vm3983, %v4500
  %4675 = vst.msk [vmem:[%s4639 + $0x1d1] sm:$0xff] %vm3983, %v4501
  %4676 = vst.msk [vmem:[%s4639 + $0x1e1] sm:$0xff] %vm3983, %v4502
  %4677 = vst.msk [vmem:[%s4639 + $0x1e9] sm:$0xff] %vm3983, %v4503
  %4678 = vst.msk [vmem:[%s4639 + $0x1f9] sm:$0xff] %vm3983, %v4504
  %4679 = vst.msk [vmem:[%s4639 + $0x201] sm:$0xff] %vm3983, %v4505
  %4680 = vst.msk [vmem:[%s4639 + $0x211] sm:$0xff] %vm3983, %v4506
  %4681 = vst.msk [vmem:[%s4639 + $0x219] sm:$0xff] %vm3983, %v4507
  %4682 = vst.msk [vmem:[%s4639 + $0x229] sm:$0xff] %vm3983, %v4508
  %4683 = vst.msk [vmem:[%s4639 + $0x231] sm:$0xff] %vm3983, %v4509
  %4684 = vst.msk [vmem:[%s4639 + $0x241] sm:$0xff] %vm3983, %v4510
  %4685 = vst.msk [vmem:[%s4639 + $0x249] sm:$0xff] %vm3983, %v4511
  %4686 = vst.msk [vmem:[%s4639 + $0x259] sm:$0xff] %vm3983, %v4512
  %4687 = vst.msk [vmem:[%s4639 + $0x261] sm:$0xff] %vm3983, %v4513
  %4688 = vst.msk [vmem:[%s4639 + $0x271] sm:$0xff] %vm3983, %v4514
  %4689 = vst.msk [vmem:[%s4639 + $0x279] sm:$0xff] %vm3983, %v4515
  %4690 = vst.msk [vmem:[%s4639 + $0x289] sm:$0xff] %vm3983, %v4516
  %4691 = vst.msk [vmem:[%s4639 + $0x291] sm:$0xff] %vm3983, %v4517
  %4692 = vst.msk [vmem:[%s4639 + $0x2a1] sm:$0xff] %vm3983, %v4518
  %4693 = vst.msk [vmem:[%s4639 + $0x2a9] sm:$0xff] %vm3983, %v4519
  %4694 = vst.msk [vmem:[%s4639 + $0x2b9] sm:$0xff] %vm3983, %v4520
  %4695 = vst.msk [vmem:[%s4639 + $0x2c1] sm:$0xff] %vm3983, %v4521
  %4696 = vst.msk [vmem:[%s4639 + $0x2d1] sm:$0xff] %vm3983, %v4522
  %4697 = vst.msk [vmem:[%s4639 + $0x2d9] sm:$0xff] %vm3983, %v4523
  %4698 = vst.msk [vmem:[%s4639 + $0x2e9] sm:$0xff] %vm3983, %v4524
  %4699 = vst.msk [vmem:[%s4639 + $0x2f1] sm:$0xff] %vm3983, %v4525
  %4700 = vst.msk [vmem:[%s4639 + $0x301] sm:$0xff] %vm3983, %v4526
  %4701 = vst.msk [vmem:[%s4639 + $0x309] sm:$0xff] %vm3983, %v4527
  %4702 = vst.msk [vmem:[%s4639 + $0x319] sm:$0xff] %vm3983, %v4528
  %4703 = vst.msk [vmem:[%s4639 + $0x321] sm:$0xff] %vm3983, %v4529
  %v4704 = vld [vmem:[#allocation3] sm:$0xff]
  %v4705 = vld [vmem:[#allocation3 + $0x8] sm:$0xff]
  %v4706 = vld [vmem:[#allocation3 + $0x18] sm:$0xff]
  %v4707 = vld [vmem:[#allocation3 + $0x20] sm:$0xff]
  %v4708 = vld [vmem:[#allocation3 + $0x30] sm:$0xff]
  %v4709 = vld [vmem:[#allocation3 + $0x38] sm:$0xff]
  %v4710 = vld [vmem:[#allocation3 + $0x48] sm:$0xff]
  %v4711 = vld [vmem:[#allocation3 + $0x50] sm:$0xff]
  %v4712 = vld [vmem:[#allocation3 + $0x60] sm:$0xff]
  %v4713 = vld [vmem:[#allocation3 + $0x68] sm:$0xff]
  %v4714 = vld [vmem:[#allocation3 + $0x78] sm:$0xff]
  %v4715 = vld [vmem:[#allocation3 + $0x80] sm:$0xff]
  %v4716 = vld [vmem:[#allocation3 + $0x90] sm:$0xff]
  %v4717 = vld [vmem:[#allocation3 + $0x98] sm:$0xff]
  %v4718 = vld [vmem:[#allocation3 + $0xa8] sm:$0xff]
  %v4719 = vld [vmem:[#allocation3 + $0xb0] sm:$0xff]
  %v4720 = vld [vmem:[#allocation3 + $0xc0] sm:$0xff]
  %v4721 = vld [vmem:[#allocation3 + $0xc8] sm:$0xff]
  %v4722 = vld [vmem:[#allocation3 + $0xd8] sm:$0xff]
  %v4723 = vld [vmem:[#allocation3 + $0xe0] sm:$0xff]
  %v4724 = vld [vmem:[#allocation3 + $0xf0] sm:$0xff]
  %v4725 = vld [vmem:[#allocation3 + $0xf8] sm:$0xff]
  %v4726 = vld [vmem:[#allocation3 + $0x108] sm:$0xff]
  %v4727 = vld [vmem:[#allocation3 + $0x110] sm:$0xff]
  %v4728 = vld [vmem:[#allocation3 + $0x120] sm:$0xff]
  %v4729 = vld [vmem:[#allocation3 + $0x128] sm:$0xff]
  %v4730 = vld [vmem:[#allocation3 + $0x138] sm:$0xff]
  %v4731 = vld [vmem:[#allocation3 + $0x140] sm:$0xff]
  %v4732 = vld [vmem:[#allocation3 + $0x150] sm:$0xff]
  %v4733 = vld [vmem:[#allocation3 + $0x158] sm:$0xff]
  %v4734 = vld [vmem:[#allocation3 + $0x168] sm:$0xff]
  %v4735 = vld [vmem:[#allocation3 + $0x170] sm:$0xff]
  %v4736 = vld [vmem:[#allocation3 + $0x1b0] sm:$0xff]
  %v4737 = vld [vmem:[#allocation3 + $0x1b8] sm:$0xff]
  %v4738 = vld [vmem:[#allocation3 + $0x1c8] sm:$0xff]
  %v4739 = vld [vmem:[#allocation3 + $0x1d0] sm:$0xff]
  %v4740 = vld [vmem:[#allocation3 + $0x1e0] sm:$0xff]
  %v4741 = vld [vmem:[#allocation3 + $0x1e8] sm:$0xff]
  %v4742 = vld [vmem:[#allocation3 + $0x1f8] sm:$0xff]
  %v4743 = vld [vmem:[#allocation3 + $0x200] sm:$0xff]
  %v4744 = vld [vmem:[#allocation3 + $0x210] sm:$0xff]
  %v4745 = vld [vmem:[#allocation3 + $0x218] sm:$0xff]
  %v4746 = vld [vmem:[#allocation3 + $0x228] sm:$0xff]
  %v4747 = vld [vmem:[#allocation3 + $0x230] sm:$0xff]
  %v4748 = vld [vmem:[#allocation3 + $0x240] sm:$0xff]
  %v4749 = vld [vmem:[#allocation3 + $0x248] sm:$0xff]
  %v4750 = vld [vmem:[#allocation3 + $0x258] sm:$0xff]
  %v4751 = vld [vmem:[#allocation3 + $0x260] sm:$0xff]
  %v4752 = vld [vmem:[#allocation3 + $0x270] sm:$0xff]
  %v4753 = vld [vmem:[#allocation3 + $0x278] sm:$0xff]
  %v4754 = vld [vmem:[#allocation3 + $0x288] sm:$0xff]
  %v4755 = vld [vmem:[#allocation3 + $0x290] sm:$0xff]
  %v4756 = vld [vmem:[#allocation3 + $0x2a0] sm:$0xff]
  %v4757 = vld [vmem:[#allocation3 + $0x2a8] sm:$0xff]
  %v4758 = vld [vmem:[#allocation3 + $0x2b8] sm:$0xff]
  %v4759 = vld [vmem:[#allocation3 + $0x2c0] sm:$0xff]
  %v4760 = vld [vmem:[#allocation3 + $0x2d0] sm:$0xff]
  %v4761 = vld [vmem:[#allocation3 + $0x2d8] sm:$0xff]
  %v4762 = vld [vmem:[#allocation3 + $0x2e8] sm:$0xff]
  %v4763 = vld [vmem:[#allocation3 + $0x2f0] sm:$0xff]
  %v4764 = vld [vmem:[#allocation3 + $0x300] sm:$0xff]
  %v4765 = vld [vmem:[#allocation3 + $0x308] sm:$0xff]
  %v4766 = vld [vmem:[#allocation3 + $0x318] sm:$0xff]
  %v4767 = vld [vmem:[#allocation3 + $0x320] sm:$0xff]
  %4768 = vst.msk [vmem:[#allocation5] sm:$0xff] %vm3983, %v4704
  %4769 = vst.msk [vmem:[#allocation5 + $0x8] sm:$0xff] %vm3983, %v4705
  %4770 = vst.msk [vmem:[#allocation5 + $0x10] sm:$0xff] %vm3983, %v4706
  %4771 = vst.msk [vmem:[#allocation5 + $0x18] sm:$0xff] %vm3983, %v4707
  %4772 = vst.msk [vmem:[#allocation5 + $0x20] sm:$0xff] %vm3983, %v4708
  %4773 = vst.msk [vmem:[#allocation5 + $0x28] sm:$0xff] %vm3983, %v4709
  %4774 = vst.msk [vmem:[#allocation5 + $0x30] sm:$0xff] %vm3983, %v4710
  %4775 = vst.msk [vmem:[#allocation5 + $0x38] sm:$0xff] %vm3983, %v4711
  %4776 = vst.msk [vmem:[#allocation5 + $0x40] sm:$0xff] %vm3983, %v4712
  %4777 = vst.msk [vmem:[#allocation5 + $0x48] sm:$0xff] %vm3983, %v4713
  %4778 = vst.msk [vmem:[#allocation5 + $0x50] sm:$0xff] %vm3983, %v4714
  %4779 = vst.msk [vmem:[#allocation5 + $0x58] sm:$0xff] %vm3983, %v4715
  %4780 = vst.msk [vmem:[#allocation5 + $0x60] sm:$0xff] %vm3983, %v4716
  %4781 = vst.msk [vmem:[#allocation5 + $0x68] sm:$0xff] %vm3983, %v4717
  %4782 = vst.msk [vmem:[#allocation5 + $0x70] sm:$0xff] %vm3983, %v4718
  %4783 = vst.msk [vmem:[#allocation5 + $0x78] sm:$0xff] %vm3983, %v4719
  %4784 = vst.msk [vmem:[#allocation5 + $0x80] sm:$0xff] %vm3983, %v4720
  %4785 = vst.msk [vmem:[#allocation5 + $0x88] sm:$0xff] %vm3983, %v4721
  %4786 = vst.msk [vmem:[#allocation5 + $0x90] sm:$0xff] %vm3983, %v4722
  %4787 = vst.msk [vmem:[#allocation5 + $0x98] sm:$0xff] %vm3983, %v4723
  %4788 = vst.msk [vmem:[#allocation5 + $0xa0] sm:$0xff] %vm3983, %v4724
  %4789 = vst.msk [vmem:[#allocation5 + $0xa8] sm:$0xff] %vm3983, %v4725
  %4790 = vst.msk [vmem:[#allocation5 + $0xb0] sm:$0xff] %vm3983, %v4726
  %4791 = vst.msk [vmem:[#allocation5 + $0xb8] sm:$0xff] %vm3983, %v4727
  %4792 = vst.msk [vmem:[#allocation5 + $0xc0] sm:$0xff] %vm3983, %v4728
  %4793 = vst.msk [vmem:[#allocation5 + $0xc8] sm:$0xff] %vm3983, %v4729
  %4794 = vst.msk [vmem:[#allocation5 + $0xd0] sm:$0xff] %vm3983, %v4730
  %4795 = vst.msk [vmem:[#allocation5 + $0xd8] sm:$0xff] %vm3983, %v4731
  %4796 = vst.msk [vmem:[#allocation5 + $0xe0] sm:$0xff] %vm3983, %v4732
  %4797 = vst.msk [vmem:[#allocation5 + $0xe8] sm:$0xff] %vm3983, %v4733
  %4798 = vst.msk [vmem:[#allocation5 + $0xf0] sm:$0xff] %vm3983, %v4734
  %4799 = vst.msk [vmem:[#allocation5 + $0xf8] sm:$0xff] %vm3983, %v4735
  %4800 = vst.msk [vmem:[#allocation5 + $0x100] sm:$0xff] %vm3983, %v4736
  %4801 = vst.msk [vmem:[#allocation5 + $0x108] sm:$0xff] %vm3983, %v4737
  %4802 = vst.msk [vmem:[#allocation5 + $0x110] sm:$0xff] %vm3983, %v4738
  %4803 = vst.msk [vmem:[#allocation5 + $0x118] sm:$0xff] %vm3983, %v4739
  %4804 = vst.msk [vmem:[#allocation5 + $0x120] sm:$0xff] %vm3983, %v4740
  %4805 = vst.msk [vmem:[#allocation5 + $0x128] sm:$0xff] %vm3983, %v4741
  %4806 = vst.msk [vmem:[#allocation5 + $0x130] sm:$0xff] %vm3983, %v4742
  %4807 = vst.msk [vmem:[#allocation5 + $0x138] sm:$0xff] %vm3983, %v4743
  %4808 = vst.msk [vmem:[#allocation5 + $0x140] sm:$0xff] %vm3983, %v4744
  %4809 = vst.msk [vmem:[#allocation5 + $0x148] sm:$0xff] %vm3983, %v4745
  %4810 = vst.msk [vmem:[#allocation5 + $0x150] sm:$0xff] %vm3983, %v4746
  %4811 = vst.msk [vmem:[#allocation5 + $0x158] sm:$0xff] %vm3983, %v4747
  %4812 = vst.msk [vmem:[#allocation5 + $0x160] sm:$0xff] %vm3983, %v4748
  %4813 = vst.msk [vmem:[#allocation5 + $0x168] sm:$0xff] %vm3983, %v4749
  %4814 = vst.msk [vmem:[#allocation5 + $0x170] sm:$0xff] %vm3983, %v4750
  %4815 = vst.msk [vmem:[#allocation5 + $0x178] sm:$0xff] %vm3983, %v4751
  %4816 = vst.msk [vmem:[#allocation5 + $0x180] sm:$0xff] %vm3983, %v4752
  %4817 = vst.msk [vmem:[#allocation5 + $0x188] sm:$0xff] %vm3983, %v4753
  %4818 = vst.msk [vmem:[#allocation5 + $0x190] sm:$0xff] %vm3983, %v4754
  %4819 = vst.msk [vmem:[#allocation5 + $0x198] sm:$0xff] %vm3983, %v4755
  %4820 = vst.msk [vmem:[#allocation5 + $0x1a0] sm:$0xff] %vm3983, %v4756
  %4821 = vst.msk [vmem:[#allocation5 + $0x1a8] sm:$0xff] %vm3983, %v4757
  %4822 = vst.msk [vmem:[#allocation5 + $0x1b0] sm:$0xff] %vm3983, %v4758
  %4823 = vst.msk [vmem:[#allocation5 + $0x1b8] sm:$0xff] %vm3983, %v4759
  %4824 = vst.msk [vmem:[#allocation5 + $0x1c0] sm:$0xff] %vm3983, %v4760
  %4825 = vst.msk [vmem:[#allocation5 + $0x1c8] sm:$0xff] %vm3983, %v4761
  %4826 = vst.msk [vmem:[#allocation5 + $0x1d0] sm:$0xff] %vm3983, %v4762
  %4827 = vst.msk [vmem:[#allocation5 + $0x1d8] sm:$0xff] %vm3983, %v4763
  %4828 = vst.msk [vmem:[#allocation5 + $0x1e0] sm:$0xff] %vm3983, %v4764
  %4829 = vst.msk [vmem:[#allocation5 + $0x1e8] sm:$0xff] %vm3983, %v4765
  %4830 = vst.msk [vmem:[#allocation5 + $0x1f0] sm:$0xff] %vm3983, %v4766
  %4831 = vst.msk [vmem:[#allocation5 + $0x1f8] sm:$0xff] %vm3983, %v4767
  %v4832 = vld [vmem:[#allocation3 + $0x1] sm:$0xff]
  %v4833 = vld [vmem:[#allocation3 + $0x9] sm:$0xff]
  %v4834 = vld [vmem:[#allocation3 + $0x19] sm:$0xff]
  %v4835 = vld [vmem:[#allocation3 + $0x21] sm:$0xff]
  %v4836 = vld [vmem:[#allocation3 + $0x31] sm:$0xff]
  %v4837 = vld [vmem:[#allocation3 + $0x39] sm:$0xff]
  %v4838 = vld [vmem:[#allocation3 + $0x49] sm:$0xff]
  %v4839 = vld [vmem:[#allocation3 + $0x51] sm:$0xff]
  %v4840 = vld [vmem:[#allocation3 + $0x61] sm:$0xff]
  %v4841 = vld [vmem:[#allocation3 + $0x69] sm:$0xff]
  %v4842 = vld [vmem:[#allocation3 + $0x79] sm:$0xff]
  %v4843 = vld [vmem:[#allocation3 + $0x81] sm:$0xff]
  %v4844 = vld [vmem:[#allocation3 + $0x91] sm:$0xff]
  %v4845 = vld [vmem:[#allocation3 + $0x99] sm:$0xff]
  %v4846 = vld [vmem:[#allocation3 + $0xa9] sm:$0xff]
  %v4847 = vld [vmem:[#allocation3 + $0xb1] sm:$0xff]
  %v4848 = vld [vmem:[#allocation3 + $0xc1] sm:$0xff]
  %v4849 = vld [vmem:[#allocation3 + $0xc9] sm:$0xff]
  %v4850 = vld [vmem:[#allocation3 + $0xd9] sm:$0xff]
  %v4851 = vld [vmem:[#allocation3 + $0xe1] sm:$0xff]
  %v4852 = vld [vmem:[#allocation3 + $0xf1] sm:$0xff]
  %v4853 = vld [vmem:[#allocation3 + $0xf9] sm:$0xff]
  %v4854 = vld [vmem:[#allocation3 + $0x109] sm:$0xff]
  %v4855 = vld [vmem:[#allocation3 + $0x111] sm:$0xff]
  %v4856 = vld [vmem:[#allocation3 + $0x121] sm:$0xff]
  %v4857 = vld [vmem:[#allocation3 + $0x129] sm:$0xff]
  %v4858 = vld [vmem:[#allocation3 + $0x139] sm:$0xff]
  %v4859 = vld [vmem:[#allocation3 + $0x141] sm:$0xff]
  %v4860 = vld [vmem:[#allocation3 + $0x151] sm:$0xff]
  %v4861 = vld [vmem:[#allocation3 + $0x159] sm:$0xff]
  %v4862 = vld [vmem:[#allocation3 + $0x169] sm:$0xff]
  %v4863 = vld [vmem:[#allocation3 + $0x171] sm:$0xff]
  %v4864 = vld [vmem:[#allocation3 + $0x1b1] sm:$0xff]
  %v4865 = vld [vmem:[#allocation3 + $0x1b9] sm:$0xff]
  %v4866 = vld [vmem:[#allocation3 + $0x1c9] sm:$0xff]
  %v4867 = vld [vmem:[#allocation3 + $0x1d1] sm:$0xff]
  %v4868 = vld [vmem:[#allocation3 + $0x1e1] sm:$0xff]
  %v4869 = vld [vmem:[#allocation3 + $0x1e9] sm:$0xff]
  %v4870 = vld [vmem:[#allocation3 + $0x1f9] sm:$0xff]
  %v4871 = vld [vmem:[#allocation3 + $0x201] sm:$0xff]
  %v4872 = vld [vmem:[#allocation3 + $0x211] sm:$0xff]
  %v4873 = vld [vmem:[#allocation3 + $0x219] sm:$0xff]
  %v4874 = vld [vmem:[#allocation3 + $0x229] sm:$0xff]
  %v4875 = vld [vmem:[#allocation3 + $0x231] sm:$0xff]
  %v4876 = vld [vmem:[#allocation3 + $0x241] sm:$0xff]
  %v4877 = vld [vmem:[#allocation3 + $0x249] sm:$0xff]
  %v4878 = vld [vmem:[#allocation3 + $0x259] sm:$0xff]
  %v4879 = vld [vmem:[#allocation3 + $0x261] sm:$0xff]
  %v4880 = vld [vmem:[#allocation3 + $0x271] sm:$0xff]
  %v4881 = vld [vmem:[#allocation3 + $0x279] sm:$0xff]
  %v4882 = vld [vmem:[#allocation3 + $0x289] sm:$0xff]
  %v4883 = vld [vmem:[#allocation3 + $0x291] sm:$0xff]
  %v4884 = vld [vmem:[#allocation3 + $0x2a1] sm:$0xff]
  %v4885 = vld [vmem:[#allocation3 + $0x2a9] sm:$0xff]
  %v4886 = vld [vmem:[#allocation3 + $0x2b9] sm:$0xff]
  %v4887 = vld [vmem:[#allocation3 + $0x2c1] sm:$0xff]
  %v4888 = vld [vmem:[#allocation3 + $0x2d1] sm:$0xff]
  %v4889 = vld [vmem:[#allocation3 + $0x2d9] sm:$0xff]
  %v4890 = vld [vmem:[#allocation3 + $0x2e9] sm:$0xff]
  %v4891 = vld [vmem:[#allocation3 + $0x2f1] sm:$0xff]
  %v4892 = vld [vmem:[#allocation3 + $0x301] sm:$0xff]
  %v4893 = vld [vmem:[#allocation3 + $0x309] sm:$0xff]
  %v4894 = vld [vmem:[#allocation3 + $0x319] sm:$0xff]
  %v4895 = vld [vmem:[#allocation3 + $0x321] sm:$0xff]
  %4960 = vrot.lane.b32.xlu0 %v4832, 8
  %v4961 = vpop.permute.xlu0 %4960
  %4962 = vrot.lane.b32.xlu0 %v4833, 8
  %v4963 = vpop.permute.xlu0 %4962
  %4964 = vrot.lane.b32.xlu0 %v4834, 8
  %v4965 = vpop.permute.xlu0 %4964
  %4966 = vrot.lane.b32.xlu0 %v4835, 8
  %v4967 = vpop.permute.xlu0 %4966
  %4968 = vrot.lane.b32.xlu0 %v4836, 8
  %v4969 = vpop.permute.xlu0 %4968
  %4970 = vrot.lane.b32.xlu0 %v4837, 8
  %v4971 = vpop.permute.xlu0 %4970
  %4972 = vrot.lane.b32.xlu0 %v4838, 8
  %v4973 = vpop.permute.xlu0 %4972
  %4974 = vrot.lane.b32.xlu0 %v4839, 8
  %v4975 = vpop.permute.xlu0 %4974
  %4976 = vrot.lane.b32.xlu0 %v4840, 8
  %v4977 = vpop.permute.xlu0 %4976
  %4978 = vrot.lane.b32.xlu0 %v4841, 8
  %v4979 = vpop.permute.xlu0 %4978
  %4980 = vrot.lane.b32.xlu0 %v4842, 8
  %v4981 = vpop.permute.xlu0 %4980
  %4982 = vrot.lane.b32.xlu0 %v4843, 8
  %v4983 = vpop.permute.xlu0 %4982
  %4984 = vrot.lane.b32.xlu0 %v4844, 8
  %v4985 = vpop.permute.xlu0 %4984
  %4986 = vrot.lane.b32.xlu0 %v4845, 8
  %v4987 = vpop.permute.xlu0 %4986
  %4988 = vrot.lane.b32.xlu0 %v4846, 8
  %v4989 = vpop.permute.xlu0 %4988
  %4990 = vrot.lane.b32.xlu0 %v4847, 8
  %v4991 = vpop.permute.xlu0 %4990
  %4992 = vrot.lane.b32.xlu0 %v4848, 8
  %v4993 = vpop.permute.xlu0 %4992
  %4994 = vrot.lane.b32.xlu0 %v4849, 8
  %v4995 = vpop.permute.xlu0 %4994
  %4996 = vrot.lane.b32.xlu0 %v4850, 8
  %v4997 = vpop.permute.xlu0 %4996
  %4998 = vrot.lane.b32.xlu0 %v4851, 8
  %v4999 = vpop.permute.xlu0 %4998
  %5000 = vrot.lane.b32.xlu0 %v4852, 8
  %v5001 = vpop.permute.xlu0 %5000
  %5002 = vrot.lane.b32.xlu0 %v4853, 8
  %v5003 = vpop.permute.xlu0 %5002
  %5004 = vrot.lane.b32.xlu0 %v4854, 8
  %v5005 = vpop.permute.xlu0 %5004
  %5006 = vrot.lane.b32.xlu0 %v4855, 8
  %v5007 = vpop.permute.xlu0 %5006
  %5008 = vrot.lane.b32.xlu0 %v4856, 8
  %v5009 = vpop.permute.xlu0 %5008
  %5010 = vrot.lane.b32.xlu0 %v4857, 8
  %v5011 = vpop.permute.xlu0 %5010
  %5012 = vrot.lane.b32.xlu0 %v4858, 8
  %v5013 = vpop.permute.xlu0 %5012
  %5014 = vrot.lane.b32.xlu0 %v4859, 8
  %v5015 = vpop.permute.xlu0 %5014
  %5016 = vrot.lane.b32.xlu0 %v4860, 8
  %v5017 = vpop.permute.xlu0 %5016
  %5018 = vrot.lane.b32.xlu0 %v4861, 8
  %v5019 = vpop.permute.xlu0 %5018
  %5020 = vrot.lane.b32.xlu0 %v4862, 8
  %v5021 = vpop.permute.xlu0 %5020
  %5022 = vrot.lane.b32.xlu0 %v4863, 8
  %v5023 = vpop.permute.xlu0 %5022
  %5024 = vrot.lane.b32.xlu0 %v4864, 8
  %v5025 = vpop.permute.xlu0 %5024
  %5026 = vrot.lane.b32.xlu0 %v4865, 8
  %v5027 = vpop.permute.xlu0 %5026
  %5028 = vrot.lane.b32.xlu0 %v4866, 8
  %v5029 = vpop.permute.xlu0 %5028
  %5030 = vrot.lane.b32.xlu0 %v4867, 8
  %v5031 = vpop.permute.xlu0 %5030
  %5032 = vrot.lane.b32.xlu0 %v4868, 8
  %v5033 = vpop.permute.xlu0 %5032
  %5034 = vrot.lane.b32.xlu0 %v4869, 8
  %v5035 = vpop.permute.xlu0 %5034
  %5036 = vrot.lane.b32.xlu0 %v4870, 8
  %v5037 = vpop.permute.xlu0 %5036
  %5038 = vrot.lane.b32.xlu0 %v4871, 8
  %v5039 = vpop.permute.xlu0 %5038
  %5040 = vrot.lane.b32.xlu0 %v4872, 8
  %v5041 = vpop.permute.xlu0 %5040
  %5042 = vrot.lane.b32.xlu0 %v4873, 8
  %v5043 = vpop.permute.xlu0 %5042
  %5044 = vrot.lane.b32.xlu0 %v4874, 8
  %v5045 = vpop.permute.xlu0 %5044
  %5046 = vrot.lane.b32.xlu0 %v4875, 8
  %v5047 = vpop.permute.xlu0 %5046
  %5048 = vrot.lane.b32.xlu0 %v4876, 8
  %v5049 = vpop.permute.xlu0 %5048
  %5050 = vrot.lane.b32.xlu0 %v4877, 8
  %v5051 = vpop.permute.xlu0 %5050
  %5052 = vrot.lane.b32.xlu0 %v4878, 8
  %v5053 = vpop.permute.xlu0 %5052
  %5054 = vrot.lane.b32.xlu0 %v4879, 8
  %v5055 = vpop.permute.xlu0 %5054
  %5056 = vrot.lane.b32.xlu0 %v4880, 8
  %v5057 = vpop.permute.xlu0 %5056
  %5058 = vrot.lane.b32.xlu0 %v4881, 8
  %v5059 = vpop.permute.xlu0 %5058
  %5060 = vrot.lane.b32.xlu0 %v4882, 8
  %v5061 = vpop.permute.xlu0 %5060
  %5062 = vrot.lane.b32.xlu0 %v4883, 8
  %v5063 = vpop.permute.xlu0 %5062
  %5064 = vrot.lane.b32.xlu0 %v4884, 8
  %v5065 = vpop.permute.xlu0 %5064
  %5066 = vrot.lane.b32.xlu0 %v4885, 8
  %v5067 = vpop.permute.xlu0 %5066
  %5068 = vrot.lane.b32.xlu0 %v4886, 8
  %v5069 = vpop.permute.xlu0 %5068
  %5070 = vrot.lane.b32.xlu0 %v4887, 8
  %v5071 = vpop.permute.xlu0 %5070
  %5072 = vrot.lane.b32.xlu0 %v4888, 8
  %v5073 = vpop.permute.xlu0 %5072
  %5074 = vrot.lane.b32.xlu0 %v4889, 8
  %v5075 = vpop.permute.xlu0 %5074
  %5076 = vrot.lane.b32.xlu0 %v4890, 8
  %v5077 = vpop.permute.xlu0 %5076
  %5078 = vrot.lane.b32.xlu0 %v4891, 8
  %v5079 = vpop.permute.xlu0 %5078
  %5080 = vrot.lane.b32.xlu0 %v4892, 8
  %v5081 = vpop.permute.xlu0 %5080
  %5082 = vrot.lane.b32.xlu0 %v4893, 8
  %v5083 = vpop.permute.xlu0 %5082
  %5084 = vrot.lane.b32.xlu0 %v4894, 8
  %v5085 = vpop.permute.xlu0 %5084
  %5086 = vrot.lane.b32.xlu0 %v4895, 8
  %v5087 = vpop.permute.xlu0 %5086
  %vm5152 = vcmask 130112
  %5153 = vst.msk [vmem:[#allocation5] sm:$0xff] %vm5152, %v4961
  %5154 = vst.msk [vmem:[#allocation5 + $0x8] sm:$0xff] %vm5152, %v4963
  %5155 = vst.msk [vmem:[#allocation5 + $0x10] sm:$0xff] %vm5152, %v4965
  %5156 = vst.msk [vmem:[#allocation5 + $0x18] sm:$0xff] %vm5152, %v4967
  %5157 = vst.msk [vmem:[#allocation5 + $0x20] sm:$0xff] %vm5152, %v4969
  %5158 = vst.msk [vmem:[#allocation5 + $0x28] sm:$0xff] %vm5152, %v4971
  %5159 = vst.msk [vmem:[#allocation5 + $0x30] sm:$0xff] %vm5152, %v4973
  %5160 = vst.msk [vmem:[#allocation5 + $0x38] sm:$0xff] %vm5152, %v4975
  %5161 = vst.msk [vmem:[#allocation5 + $0x40] sm:$0xff] %vm5152, %v4977
  %5162 = vst.msk [vmem:[#allocation5 + $0x48] sm:$0xff] %vm5152, %v4979
  %5163 = vst.msk [vmem:[#allocation5 + $0x50] sm:$0xff] %vm5152, %v4981
  %5164 = vst.msk [vmem:[#allocation5 + $0x58] sm:$0xff] %vm5152, %v4983
  %5165 = vst.msk [vmem:[#allocation5 + $0x60] sm:$0xff] %vm5152, %v4985
  %5166 = vst.msk [vmem:[#allocation5 + $0x68] sm:$0xff] %vm5152, %v4987
  %5167 = vst.msk [vmem:[#allocation5 + $0x70] sm:$0xff] %vm5152, %v4989
  %5168 = vst.msk [vmem:[#allocation5 + $0x78] sm:$0xff] %vm5152, %v4991
  %5169 = vst.msk [vmem:[#allocation5 + $0x80] sm:$0xff] %vm5152, %v4993
  %5170 = vst.msk [vmem:[#allocation5 + $0x88] sm:$0xff] %vm5152, %v4995
  %5171 = vst.msk [vmem:[#allocation5 + $0x90] sm:$0xff] %vm5152, %v4997
  %5172 = vst.msk [vmem:[#allocation5 + $0x98] sm:$0xff] %vm5152, %v4999
  %5173 = vst.msk [vmem:[#allocation5 + $0xa0] sm:$0xff] %vm5152, %v5001
  %5174 = vst.msk [vmem:[#allocation5 + $0xa8] sm:$0xff] %vm5152, %v5003
  %5175 = vst.msk [vmem:[#allocation5 + $0xb0] sm:$0xff] %vm5152, %v5005
  %5176 = vst.msk [vmem:[#allocation5 + $0xb8] sm:$0xff] %vm5152, %v5007
  %5177 = vst.msk [vmem:[#allocation5 + $0xc0] sm:$0xff] %vm5152, %v5009
  %5178 = vst.msk [vmem:[#allocation5 + $0xc8] sm:$0xff] %vm5152, %v5011
  %5179 = vst.msk [vmem:[#allocation5 + $0xd0] sm:$0xff] %vm5152, %v5013
  %5180 = vst.msk [vmem:[#allocation5 + $0xd8] sm:$0xff] %vm5152, %v5015
  %5181 = vst.msk [vmem:[#allocation5 + $0xe0] sm:$0xff] %vm5152, %v5017
  %5182 = vst.msk [vmem:[#allocation5 + $0xe8] sm:$0xff] %vm5152, %v5019
  %5183 = vst.msk [vmem:[#allocation5 + $0xf0] sm:$0xff] %vm5152, %v5021
  %5184 = vst.msk [vmem:[#allocation5 + $0xf8] sm:$0xff] %vm5152, %v5023
  %5185 = vst.msk [vmem:[#allocation5 + $0x100] sm:$0xff] %vm5152, %v5025
  %5186 = vst.msk [vmem:[#allocation5 + $0x108] sm:$0xff] %vm5152, %v5027
  %5187 = vst.msk [vmem:[#allocation5 + $0x110] sm:$0xff] %vm5152, %v5029
  %5188 = vst.msk [vmem:[#allocation5 + $0x118] sm:$0xff] %vm5152, %v5031
  %5189 = vst.msk [vmem:[#allocation5 + $0x120] sm:$0xff] %vm5152, %v5033
  %5190 = vst.msk [vmem:[#allocation5 + $0x128] sm:$0xff] %vm5152, %v5035
  %5191 = vst.msk [vmem:[#allocation5 + $0x130] sm:$0xff] %vm5152, %v5037
  %5192 = vst.msk [vmem:[#allocation5 + $0x138] sm:$0xff] %vm5152, %v5039
  %5193 = vst.msk [vmem:[#allocation5 + $0x140] sm:$0xff] %vm5152, %v5041
  %5194 = vst.msk [vmem:[#allocation5 + $0x148] sm:$0xff] %vm5152, %v5043
  %5195 = vst.msk [vmem:[#allocation5 + $0x150] sm:$0xff] %vm5152, %v5045
  %5196 = vst.msk [vmem:[#allocation5 + $0x158] sm:$0xff] %vm5152, %v5047
  %5197 = vst.msk [vmem:[#allocation5 + $0x160] sm:$0xff] %vm5152, %v5049
  %5198 = vst.msk [vmem:[#allocation5 + $0x168] sm:$0xff] %vm5152, %v5051
  %5199 = vst.msk [vmem:[#allocation5 + $0x170] sm:$0xff] %vm5152, %v5053
  %5200 = vst.msk [vmem:[#allocation5 + $0x178] sm:$0xff] %vm5152, %v5055
  %5201 = vst.msk [vmem:[#allocation5 + $0x180] sm:$0xff] %vm5152, %v5057
  %5202 = vst.msk [vmem:[#allocation5 + $0x188] sm:$0xff] %vm5152, %v5059
  %5203 = vst.msk [vmem:[#allocation5 + $0x190] sm:$0xff] %vm5152, %v5061
  %5204 = vst.msk [vmem:[#allocation5 + $0x198] sm:$0xff] %vm5152, %v5063
  %5205 = vst.msk [vmem:[#allocation5 + $0x1a0] sm:$0xff] %vm5152, %v5065
  %5206 = vst.msk [vmem:[#allocation5 + $0x1a8] sm:$0xff] %vm5152, %v5067
  %5207 = vst.msk [vmem:[#allocation5 + $0x1b0] sm:$0xff] %vm5152, %v5069
  %5208 = vst.msk [vmem:[#allocation5 + $0x1b8] sm:$0xff] %vm5152, %v5071
  %5209 = vst.msk [vmem:[#allocation5 + $0x1c0] sm:$0xff] %vm5152, %v5073
  %5210 = vst.msk [vmem:[#allocation5 + $0x1c8] sm:$0xff] %vm5152, %v5075
  %5211 = vst.msk [vmem:[#allocation5 + $0x1d0] sm:$0xff] %vm5152, %v5077
  %5212 = vst.msk [vmem:[#allocation5 + $0x1d8] sm:$0xff] %vm5152, %v5079
  %5213 = vst.msk [vmem:[#allocation5 + $0x1e0] sm:$0xff] %vm5152, %v5081
  %5214 = vst.msk [vmem:[#allocation5 + $0x1e8] sm:$0xff] %vm5152, %v5083
  %5215 = vst.msk [vmem:[#allocation5 + $0x1f0] sm:$0xff] %vm5152, %v5085
  %5216 = vst.msk [vmem:[#allocation5 + $0x1f8] sm:$0xff] %vm5152, %v5087
  %v5217 = vld [vmem:[#allocation3 + $0x2] sm:$0xff]
  %v5218 = vld [vmem:[#allocation3 + $0xa] sm:$0xff]
  %v5219 = vld [vmem:[#allocation3 + $0x1a] sm:$0xff]
  %v5220 = vld [vmem:[#allocation3 + $0x22] sm:$0xff]
  %v5221 = vld [vmem:[#allocation3 + $0x32] sm:$0xff]
  %v5222 = vld [vmem:[#allocation3 + $0x3a] sm:$0xff]
  %v5223 = vld [vmem:[#allocation3 + $0x4a] sm:$0xff]
  %v5224 = vld [vmem:[#allocation3 + $0x52] sm:$0xff]
  %v5225 = vld [vmem:[#allocation3 + $0x62] sm:$0xff]
  %v5226 = vld [vmem:[#allocation3 + $0x6a] sm:$0xff]
  %v5227 = vld [vmem:[#allocation3 + $0x7a] sm:$0xff]
  %v5228 = vld [vmem:[#allocation3 + $0x82] sm:$0xff]
  %v5229 = vld [vmem:[#allocation3 + $0x92] sm:$0xff]
  %v5230 = vld [vmem:[#allocation3 + $0x9a] sm:$0xff]
  %v5231 = vld [vmem:[#allocation3 + $0xaa] sm:$0xff]
  %v5232 = vld [vmem:[#allocation3 + $0xb2] sm:$0xff]
  %v5233 = vld [vmem:[#allocation3 + $0xc2] sm:$0xff]
  %v5234 = vld [vmem:[#allocation3 + $0xca] sm:$0xff]
  %v5235 = vld [vmem:[#allocation3 + $0xda] sm:$0xff]
  %v5236 = vld [vmem:[#allocation3 + $0xe2] sm:$0xff]
  %v5237 = vld [vmem:[#allocation3 + $0xf2] sm:$0xff]
  %v5238 = vld [vmem:[#allocation3 + $0xfa] sm:$0xff]
  %v5239 = vld [vmem:[#allocation3 + $0x10a] sm:$0xff]
  %v5240 = vld [vmem:[#allocation3 + $0x112] sm:$0xff]
  %v5241 = vld [vmem:[#allocation3 + $0x122] sm:$0xff]
  %v5242 = vld [vmem:[#allocation3 + $0x12a] sm:$0xff]
  %v5243 = vld [vmem:[#allocation3 + $0x13a] sm:$0xff]
  %v5244 = vld [vmem:[#allocation3 + $0x142] sm:$0xff]
  %v5245 = vld [vmem:[#allocation3 + $0x152] sm:$0xff]
  %v5246 = vld [vmem:[#allocation3 + $0x15a] sm:$0xff]
  %v5247 = vld [vmem:[#allocation3 + $0x16a] sm:$0xff]
  %v5248 = vld [vmem:[#allocation3 + $0x172] sm:$0xff]
  %v5249 = vld [vmem:[#allocation3 + $0x1b2] sm:$0xff]
  %v5250 = vld [vmem:[#allocation3 + $0x1ba] sm:$0xff]
  %v5251 = vld [vmem:[#allocation3 + $0x1ca] sm:$0xff]
  %v5252 = vld [vmem:[#allocation3 + $0x1d2] sm:$0xff]
  %v5253 = vld [vmem:[#allocation3 + $0x1e2] sm:$0xff]
  %v5254 = vld [vmem:[#allocation3 + $0x1ea] sm:$0xff]
  %v5255 = vld [vmem:[#allocation3 + $0x1fa] sm:$0xff]
  %v5256 = vld [vmem:[#allocation3 + $0x202] sm:$0xff]
  %v5257 = vld [vmem:[#allocation3 + $0x212] sm:$0xff]
  %v5258 = vld [vmem:[#allocation3 + $0x21a] sm:$0xff]
  %v5259 = vld [vmem:[#allocation3 + $0x22a] sm:$0xff]
  %v5260 = vld [vmem:[#allocation3 + $0x232] sm:$0xff]
  %v5261 = vld [vmem:[#allocation3 + $0x242] sm:$0xff]
  %v5262 = vld [vmem:[#allocation3 + $0x24a] sm:$0xff]
  %v5263 = vld [vmem:[#allocation3 + $0x25a] sm:$0xff]
  %v5264 = vld [vmem:[#allocation3 + $0x262] sm:$0xff]
  %v5265 = vld [vmem:[#allocation3 + $0x272] sm:$0xff]
  %v5266 = vld [vmem:[#allocation3 + $0x27a] sm:$0xff]
  %v5267 = vld [vmem:[#allocation3 + $0x28a] sm:$0xff]
  %v5268 = vld [vmem:[#allocation3 + $0x292] sm:$0xff]
  %v5269 = vld [vmem:[#allocation3 + $0x2a2] sm:$0xff]
  %v5270 = vld [vmem:[#allocation3 + $0x2aa] sm:$0xff]
  %v5271 = vld [vmem:[#allocation3 + $0x2ba] sm:$0xff]
  %v5272 = vld [vmem:[#allocation3 + $0x2c2] sm:$0xff]
  %v5273 = vld [vmem:[#allocation3 + $0x2d2] sm:$0xff]
  %v5274 = vld [vmem:[#allocation3 + $0x2da] sm:$0xff]
  %v5275 = vld [vmem:[#allocation3 + $0x2ea] sm:$0xff]
  %v5276 = vld [vmem:[#allocation3 + $0x2f2] sm:$0xff]
  %v5277 = vld [vmem:[#allocation3 + $0x302] sm:$0xff]
  %v5278 = vld [vmem:[#allocation3 + $0x30a] sm:$0xff]
  %v5279 = vld [vmem:[#allocation3 + $0x31a] sm:$0xff]
  %v5280 = vld [vmem:[#allocation3 + $0x322] sm:$0xff]
  %5345 = vrot.lane.b32.xlu0 %v5217, 16
  %v5346 = vpop.permute.xlu0 %5345
  %5347 = vrot.lane.b32.xlu0 %v5218, 16
  %v5348 = vpop.permute.xlu0 %5347
  %5349 = vrot.lane.b32.xlu0 %v5219, 16
  %v5350 = vpop.permute.xlu0 %5349
  %5351 = vrot.lane.b32.xlu0 %v5220, 16
  %v5352 = vpop.permute.xlu0 %5351
  %5353 = vrot.lane.b32.xlu0 %v5221, 16
  %v5354 = vpop.permute.xlu0 %5353
  %5355 = vrot.lane.b32.xlu0 %v5222, 16
  %v5356 = vpop.permute.xlu0 %5355
  %5357 = vrot.lane.b32.xlu0 %v5223, 16
  %v5358 = vpop.permute.xlu0 %5357
  %5359 = vrot.lane.b32.xlu0 %v5224, 16
  %v5360 = vpop.permute.xlu0 %5359
  %5361 = vrot.lane.b32.xlu0 %v5225, 16
  %v5362 = vpop.permute.xlu0 %5361
  %5363 = vrot.lane.b32.xlu0 %v5226, 16
  %v5364 = vpop.permute.xlu0 %5363
  %5365 = vrot.lane.b32.xlu0 %v5227, 16
  %v5366 = vpop.permute.xlu0 %5365
  %5367 = vrot.lane.b32.xlu0 %v5228, 16
  %v5368 = vpop.permute.xlu0 %5367
  %5369 = vrot.lane.b32.xlu0 %v5229, 16
  %v5370 = vpop.permute.xlu0 %5369
  %5371 = vrot.lane.b32.xlu0 %v5230, 16
  %v5372 = vpop.permute.xlu0 %5371
  %5373 = vrot.lane.b32.xlu0 %v5231, 16
  %v5374 = vpop.permute.xlu0 %5373
  %5375 = vrot.lane.b32.xlu0 %v5232, 16
  %v5376 = vpop.permute.xlu0 %5375
  %5377 = vrot.lane.b32.xlu0 %v5233, 16
  %v5378 = vpop.permute.xlu0 %5377
  %5379 = vrot.lane.b32.xlu0 %v5234, 16
  %v5380 = vpop.permute.xlu0 %5379
  %5381 = vrot.lane.b32.xlu0 %v5235, 16
  %v5382 = vpop.permute.xlu0 %5381
  %5383 = vrot.lane.b32.xlu0 %v5236, 16
  %v5384 = vpop.permute.xlu0 %5383
  %5385 = vrot.lane.b32.xlu0 %v5237, 16
  %v5386 = vpop.permute.xlu0 %5385
  %5387 = vrot.lane.b32.xlu0 %v5238, 16
  %v5388 = vpop.permute.xlu0 %5387
  %5389 = vrot.lane.b32.xlu0 %v5239, 16
  %v5390 = vpop.permute.xlu0 %5389
  %5391 = vrot.lane.b32.xlu0 %v5240, 16
  %v5392 = vpop.permute.xlu0 %5391
  %5393 = vrot.lane.b32.xlu0 %v5241, 16
  %v5394 = vpop.permute.xlu0 %5393
  %5395 = vrot.lane.b32.xlu0 %v5242, 16
  %v5396 = vpop.permute.xlu0 %5395
  %5397 = vrot.lane.b32.xlu0 %v5243, 16
  %v5398 = vpop.permute.xlu0 %5397
  %5399 = vrot.lane.b32.xlu0 %v5244, 16
  %v5400 = vpop.permute.xlu0 %5399
  %5401 = vrot.lane.b32.xlu0 %v5245, 16
  %v5402 = vpop.permute.xlu0 %5401
  %5403 = vrot.lane.b32.xlu0 %v5246, 16
  %v5404 = vpop.permute.xlu0 %5403
  %5405 = vrot.lane.b32.xlu0 %v5247, 16
  %v5406 = vpop.permute.xlu0 %5405
  %5407 = vrot.lane.b32.xlu0 %v5248, 16
  %v5408 = vpop.permute.xlu0 %5407
  %5409 = vrot.lane.b32.xlu0 %v5249, 16
  %v5410 = vpop.permute.xlu0 %5409
  %5411 = vrot.lane.b32.xlu0 %v5250, 16
  %v5412 = vpop.permute.xlu0 %5411
  %5413 = vrot.lane.b32.xlu0 %v5251, 16
  %v5414 = vpop.permute.xlu0 %5413
  %5415 = vrot.lane.b32.xlu0 %v5252, 16
  %v5416 = vpop.permute.xlu0 %5415
  %5417 = vrot.lane.b32.xlu0 %v5253, 16
  %v5418 = vpop.permute.xlu0 %5417
  %5419 = vrot.lane.b32.xlu0 %v5254, 16
  %v5420 = vpop.permute.xlu0 %5419
  %5421 = vrot.lane.b32.xlu0 %v5255, 16
  %v5422 = vpop.permute.xlu0 %5421
  %5423 = vrot.lane.b32.xlu0 %v5256, 16
  %v5424 = vpop.permute.xlu0 %5423
  %5425 = vrot.lane.b32.xlu0 %v5257, 16
  %v5426 = vpop.permute.xlu0 %5425
  %5427 = vrot.lane.b32.xlu0 %v5258, 16
  %v5428 = vpop.permute.xlu0 %5427
  %5429 = vrot.lane.b32.xlu0 %v5259, 16
  %v5430 = vpop.permute.xlu0 %5429
  %5431 = vrot.lane.b32.xlu0 %v5260, 16
  %v5432 = vpop.permute.xlu0 %5431
  %5433 = vrot.lane.b32.xlu0 %v5261, 16
  %v5434 = vpop.permute.xlu0 %5433
  %5435 = vrot.lane.b32.xlu0 %v5262, 16
  %v5436 = vpop.permute.xlu0 %5435
  %5437 = vrot.lane.b32.xlu0 %v5263, 16
  %v5438 = vpop.permute.xlu0 %5437
  %5439 = vrot.lane.b32.xlu0 %v5264, 16
  %v5440 = vpop.permute.xlu0 %5439
  %5441 = vrot.lane.b32.xlu0 %v5265, 16
  %v5442 = vpop.permute.xlu0 %5441
  %5443 = vrot.lane.b32.xlu0 %v5266, 16
  %v5444 = vpop.permute.xlu0 %5443
  %5445 = vrot.lane.b32.xlu0 %v5267, 16
  %v5446 = vpop.permute.xlu0 %5445
  %5447 = vrot.lane.b32.xlu0 %v5268, 16
  %v5448 = vpop.permute.xlu0 %5447
  %5449 = vrot.lane.b32.xlu0 %v5269, 16
  %v5450 = vpop.permute.xlu0 %5449
  %5451 = vrot.lane.b32.xlu0 %v5270, 16
  %v5452 = vpop.permute.xlu0 %5451
  %5453 = vrot.lane.b32.xlu0 %v5271, 16
  %v5454 = vpop.permute.xlu0 %5453
  %5455 = vrot.lane.b32.xlu0 %v5272, 16
  %v5456 = vpop.permute.xlu0 %5455
  %5457 = vrot.lane.b32.xlu0 %v5273, 16
  %v5458 = vpop.permute.xlu0 %5457
  %5459 = vrot.lane.b32.xlu0 %v5274, 16
  %v5460 = vpop.permute.xlu0 %5459
  %5461 = vrot.lane.b32.xlu0 %v5275, 16
  %v5462 = vpop.permute.xlu0 %5461
  %5463 = vrot.lane.b32.xlu0 %v5276, 16
  %v5464 = vpop.permute.xlu0 %5463
  %5465 = vrot.lane.b32.xlu0 %v5277, 16
  %v5466 = vpop.permute.xlu0 %5465
  %5467 = vrot.lane.b32.xlu0 %v5278, 16
  %v5468 = vpop.permute.xlu0 %5467
  %5469 = vrot.lane.b32.xlu0 %v5279, 16
  %v5470 = vpop.permute.xlu0 %5469
  %5471 = vrot.lane.b32.xlu0 %v5280, 16
  %v5472 = vpop.permute.xlu0 %5471
  %vm5537 = vcmask 195712
  %5538 = vst.msk [vmem:[#allocation5] sm:$0xff] %vm5537, %v5346
  %5539 = vst.msk [vmem:[#allocation5 + $0x8] sm:$0xff] %vm5537, %v5348
  %5540 = vst.msk [vmem:[#allocation5 + $0x10] sm:$0xff] %vm5537, %v5350
  %5541 = vst.msk [vmem:[#allocation5 + $0x18] sm:$0xff] %vm5537, %v5352
  %5542 = vst.msk [vmem:[#allocation5 + $0x20] sm:$0xff] %vm5537, %v5354
  %5543 = vst.msk [vmem:[#allocation5 + $0x28] sm:$0xff] %vm5537, %v5356
  %5544 = vst.msk [vmem:[#allocation5 + $0x30] sm:$0xff] %vm5537, %v5358
  %5545 = vst.msk [vmem:[#allocation5 + $0x38] sm:$0xff] %vm5537, %v5360
  %5546 = vst.msk [vmem:[#allocation5 + $0x40] sm:$0xff] %vm5537, %v5362
  %5547 = vst.msk [vmem:[#allocation5 + $0x48] sm:$0xff] %vm5537, %v5364
  %5548 = vst.msk [vmem:[#allocation5 + $0x50] sm:$0xff] %vm5537, %v5366
  %5549 = vst.msk [vmem:[#allocation5 + $0x58] sm:$0xff] %vm5537, %v5368
  %5550 = vst.msk [vmem:[#allocation5 + $0x60] sm:$0xff] %vm5537, %v5370
  %5551 = vst.msk [vmem:[#allocation5 + $0x68] sm:$0xff] %vm5537, %v5372
  %5552 = vst.msk [vmem:[#allocation5 + $0x70] sm:$0xff] %vm5537, %v5374
  %5553 = vst.msk [vmem:[#allocation5 + $0x78] sm:$0xff] %vm5537, %v5376
  %5554 = vst.msk [vmem:[#allocation5 + $0x80] sm:$0xff] %vm5537, %v5378
  %5555 = vst.msk [vmem:[#allocation5 + $0x88] sm:$0xff] %vm5537, %v5380
  %5556 = vst.msk [vmem:[#allocation5 + $0x90] sm:$0xff] %vm5537, %v5382
  %5557 = vst.msk [vmem:[#allocation5 + $0x98] sm:$0xff] %vm5537, %v5384
  %5558 = vst.msk [vmem:[#allocation5 + $0xa0] sm:$0xff] %vm5537, %v5386
  %5559 = vst.msk [vmem:[#allocation5 + $0xa8] sm:$0xff] %vm5537, %v5388
  %5560 = vst.msk [vmem:[#allocation5 + $0xb0] sm:$0xff] %vm5537, %v5390
  %5561 = vst.msk [vmem:[#allocation5 + $0xb8] sm:$0xff] %vm5537, %v5392
  %5562 = vst.msk [vmem:[#allocation5 + $0xc0] sm:$0xff] %vm5537, %v5394
  %5563 = vst.msk [vmem:[#allocation5 + $0xc8] sm:$0xff] %vm5537, %v5396
  %5564 = vst.msk [vmem:[#allocation5 + $0xd0] sm:$0xff] %vm5537, %v5398
  %5565 = vst.msk [vmem:[#allocation5 + $0xd8] sm:$0xff] %vm5537, %v5400
  %5566 = vst.msk [vmem:[#allocation5 + $0xe0] sm:$0xff] %vm5537, %v5402
  %5567 = vst.msk [vmem:[#allocation5 + $0xe8] sm:$0xff] %vm5537, %v5404
  %5568 = vst.msk [vmem:[#allocation5 + $0xf0] sm:$0xff] %vm5537, %v5406
  %5569 = vst.msk [vmem:[#allocation5 + $0xf8] sm:$0xff] %vm5537, %v5408
  %5570 = vst.msk [vmem:[#allocation5 + $0x100] sm:$0xff] %vm5537, %v5410
  %5571 = vst.msk [vmem:[#allocation5 + $0x108] sm:$0xff] %vm5537, %v5412
  %5572 = vst.msk [vmem:[#allocation5 + $0x110] sm:$0xff] %vm5537, %v5414
  %5573 = vst.msk [vmem:[#allocation5 + $0x118] sm:$0xff] %vm5537, %v5416
  %5574 = vst.msk [vmem:[#allocation5 + $0x120] sm:$0xff] %vm5537, %v5418
  %5575 = vst.msk [vmem:[#allocation5 + $0x128] sm:$0xff] %vm5537, %v5420
  %5576 = vst.msk [vmem:[#allocation5 + $0x130] sm:$0xff] %vm5537, %v5422
  %5577 = vst.msk [vmem:[#allocation5 + $0x138] sm:$0xff] %vm5537, %v5424
  %5578 = vst.msk [vmem:[#allocation5 + $0x140] sm:$0xff] %vm5537, %v5426
  %5579 = vst.msk [vmem:[#allocation5 + $0x148] sm:$0xff] %vm5537, %v5428
  %5580 = vst.msk [vmem:[#allocation5 + $0x150] sm:$0xff] %vm5537, %v5430
  %5581 = vst.msk [vmem:[#allocation5 + $0x158] sm:$0xff] %vm5537, %v5432
  %5582 = vst.msk [vmem:[#allocation5 + $0x160] sm:$0xff] %vm5537, %v5434
  %5583 = vst.msk [vmem:[#allocation5 + $0x168] sm:$0xff] %vm5537, %v5436
  %5584 = vst.msk [vmem:[#allocation5 + $0x170] sm:$0xff] %vm5537, %v5438
  %5585 = vst.msk [vmem:[#allocation5 + $0x178] sm:$0xff] %vm5537, %v5440
  %5586 = vst.msk [vmem:[#allocation5 + $0x180] sm:$0xff] %vm5537, %v5442
  %5587 = vst.msk [vmem:[#allocation5 + $0x188] sm:$0xff] %vm5537, %v5444
  %5588 = vst.msk [vmem:[#allocation5 + $0x190] sm:$0xff] %vm5537, %v5446
  %5589 = vst.msk [vmem:[#allocation5 + $0x198] sm:$0xff] %vm5537, %v5448
  %5590 = vst.msk [vmem:[#allocation5 + $0x1a0] sm:$0xff] %vm5537, %v5450
  %5591 = vst.msk [vmem:[#allocation5 + $0x1a8] sm:$0xff] %vm5537, %v5452
  %5592 = vst.msk [vmem:[#allocation5 + $0x1b0] sm:$0xff] %vm5537, %v5454
  %5593 = vst.msk [vmem:[#allocation5 + $0x1b8] sm:$0xff] %vm5537, %v5456
  %5594 = vst.msk [vmem:[#allocation5 + $0x1c0] sm:$0xff] %vm5537, %v5458
  %5595 = vst.msk [vmem:[#allocation5 + $0x1c8] sm:$0xff] %vm5537, %v5460
  %5596 = vst.msk [vmem:[#allocation5 + $0x1d0] sm:$0xff] %vm5537, %v5462
  %5597 = vst.msk [vmem:[#allocation5 + $0x1d8] sm:$0xff] %vm5537, %v5464
  %5598 = vst.msk [vmem:[#allocation5 + $0x1e0] sm:$0xff] %vm5537, %v5466
  %5599 = vst.msk [vmem:[#allocation5 + $0x1e8] sm:$0xff] %vm5537, %v5468
  %5600 = vst.msk [vmem:[#allocation5 + $0x1f0] sm:$0xff] %vm5537, %v5470
  %5601 = vst.msk [vmem:[#allocation5 + $0x1f8] sm:$0xff] %vm5537, %v5472
  %v5602 = vld [vmem:[%s4639] sm:$0xff]
  %v5603 = vld [vmem:[%s4639 + $0x8] sm:$0xff]
  %v5604 = vld [vmem:[%s4639 + $0x18] sm:$0xff]
  %v5605 = vld [vmem:[%s4639 + $0x20] sm:$0xff]
  %v5606 = vld [vmem:[%s4639 + $0x30] sm:$0xff]
  %v5607 = vld [vmem:[%s4639 + $0x38] sm:$0xff]
  %v5608 = vld [vmem:[%s4639 + $0x48] sm:$0xff]
  %v5609 = vld [vmem:[%s4639 + $0x50] sm:$0xff]
  %v5610 = vld [vmem:[%s4639 + $0x60] sm:$0xff]
  %v5611 = vld [vmem:[%s4639 + $0x68] sm:$0xff]
  %v5612 = vld [vmem:[%s4639 + $0x78] sm:$0xff]
  %v5613 = vld [vmem:[%s4639 + $0x80] sm:$0xff]
  %v5614 = vld [vmem:[%s4639 + $0x90] sm:$0xff]
  %v5615 = vld [vmem:[%s4639 + $0x98] sm:$0xff]
  %v5616 = vld [vmem:[%s4639 + $0xa8] sm:$0xff]
  %v5617 = vld [vmem:[%s4639 + $0xb0] sm:$0xff]
  %v5618 = vld [vmem:[%s4639 + $0xc0] sm:$0xff]
  %v5619 = vld [vmem:[%s4639 + $0xc8] sm:$0xff]
  %v5620 = vld [vmem:[%s4639 + $0xd8] sm:$0xff]
  %v5621 = vld [vmem:[%s4639 + $0xe0] sm:$0xff]
  %v5622 = vld [vmem:[%s4639 + $0xf0] sm:$0xff]
  %v5623 = vld [vmem:[%s4639 + $0xf8] sm:$0xff]
  %v5624 = vld [vmem:[%s4639 + $0x108] sm:$0xff]
  %v5625 = vld [vmem:[%s4639 + $0x110] sm:$0xff]
  %v5626 = vld [vmem:[%s4639 + $0x120] sm:$0xff]
  %v5627 = vld [vmem:[%s4639 + $0x128] sm:$0xff]
  %v5628 = vld [vmem:[%s4639 + $0x138] sm:$0xff]
  %v5629 = vld [vmem:[%s4639 + $0x140] sm:$0xff]
  %v5630 = vld [vmem:[%s4639 + $0x150] sm:$0xff]
  %v5631 = vld [vmem:[%s4639 + $0x158] sm:$0xff]
  %v5632 = vld [vmem:[%s4639 + $0x168] sm:$0xff]
  %v5633 = vld [vmem:[%s4639 + $0x170] sm:$0xff]
  %v5634 = vld [vmem:[%s4639 + $0x1b0] sm:$0xff]
  %v5635 = vld [vmem:[%s4639 + $0x1b8] sm:$0xff]
  %v5636 = vld [vmem:[%s4639 + $0x1c8] sm:$0xff]
  %v5637 = vld [vmem:[%s4639 + $0x1d0] sm:$0xff]
  %v5638 = vld [vmem:[%s4639 + $0x1e0] sm:$0xff]
  %v5639 = vld [vmem:[%s4639 + $0x1e8] sm:$0xff]
  %v5640 = vld [vmem:[%s4639 + $0x1f8] sm:$0xff]
  %v5641 = vld [vmem:[%s4639 + $0x200] sm:$0xff]
  %v5642 = vld [vmem:[%s4639 + $0x210] sm:$0xff]
  %v5643 = vld [vmem:[%s4639 + $0x218] sm:$0xff]
  %v5644 = vld [vmem:[%s4639 + $0x228] sm:$0xff]
  %v5645 = vld [vmem:[%s4639 + $0x230] sm:$0xff]
  %v5646 = vld [vmem:[%s4639 + $0x240] sm:$0xff]
  %v5647 = vld [vmem:[%s4639 + $0x248] sm:$0xff]
  %v5648 = vld [vmem:[%s4639 + $0x258] sm:$0xff]
  %v5649 = vld [vmem:[%s4639 + $0x260] sm:$0xff]
  %v5650 = vld [vmem:[%s4639 + $0x270] sm:$0xff]
  %v5651 = vld [vmem:[%s4639 + $0x278] sm:$0xff]
  %v5652 = vld [vmem:[%s4639 + $0x288] sm:$0xff]
  %v5653 = vld [vmem:[%s4639 + $0x290] sm:$0xff]
  %v5654 = vld [vmem:[%s4639 + $0x2a0] sm:$0xff]
  %v5655 = vld [vmem:[%s4639 + $0x2a8] sm:$0xff]
  %v5656 = vld [vmem:[%s4639 + $0x2b8] sm:$0xff]
  %v5657 = vld [vmem:[%s4639 + $0x2c0] sm:$0xff]
  %v5658 = vld [vmem:[%s4639 + $0x2d0] sm:$0xff]
  %v5659 = vld [vmem:[%s4639 + $0x2d8] sm:$0xff]
  %v5660 = vld [vmem:[%s4639 + $0x2e8] sm:$0xff]
  %v5661 = vld [vmem:[%s4639 + $0x2f0] sm:$0xff]
  %v5662 = vld [vmem:[%s4639 + $0x300] sm:$0xff]
  %v5663 = vld [vmem:[%s4639 + $0x308] sm:$0xff]
  %v5664 = vld [vmem:[%s4639 + $0x318] sm:$0xff]
  %v5665 = vld [vmem:[%s4639 + $0x320] sm:$0xff]
  %5730 = vrot.lane.b32.xlu0 %v5602, 24
  %v5731 = vpop.permute.xlu0 %5730
  %5732 = vrot.lane.b32.xlu0 %v5603, 24
  %v5733 = vpop.permute.xlu0 %5732
  %5734 = vrot.lane.b32.xlu0 %v5604, 24
  %v5735 = vpop.permute.xlu0 %5734
  %5736 = vrot.lane.b32.xlu0 %v5605, 24
  %v5737 = vpop.permute.xlu0 %5736
  %5738 = vrot.lane.b32.xlu0 %v5606, 24
  %v5739 = vpop.permute.xlu0 %5738
  %5740 = vrot.lane.b32.xlu0 %v5607, 24
  %v5741 = vpop.permute.xlu0 %5740
  %5742 = vrot.lane.b32.xlu0 %v5608, 24
  %v5743 = vpop.permute.xlu0 %5742
  %5744 = vrot.lane.b32.xlu0 %v5609, 24
  %v5745 = vpop.permute.xlu0 %5744
  %5746 = vrot.lane.b32.xlu0 %v5610, 24
  %v5747 = vpop.permute.xlu0 %5746
  %5748 = vrot.lane.b32.xlu0 %v5611, 24
  %v5749 = vpop.permute.xlu0 %5748
  %5750 = vrot.lane.b32.xlu0 %v5612, 24
  %v5751 = vpop.permute.xlu0 %5750
  %5752 = vrot.lane.b32.xlu0 %v5613, 24
  %v5753 = vpop.permute.xlu0 %5752
  %5754 = vrot.lane.b32.xlu0 %v5614, 24
  %v5755 = vpop.permute.xlu0 %5754
  %5756 = vrot.lane.b32.xlu0 %v5615, 24
  %v5757 = vpop.permute.xlu0 %5756
  %5758 = vrot.lane.b32.xlu0 %v5616, 24
  %v5759 = vpop.permute.xlu0 %5758
  %5760 = vrot.lane.b32.xlu0 %v5617, 24
  %v5761 = vpop.permute.xlu0 %5760
  %5762 = vrot.lane.b32.xlu0 %v5618, 24
  %v5763 = vpop.permute.xlu0 %5762
  %5764 = vrot.lane.b32.xlu0 %v5619, 24
  %v5765 = vpop.permute.xlu0 %5764
  %5766 = vrot.lane.b32.xlu0 %v5620, 24
  %v5767 = vpop.permute.xlu0 %5766
  %5768 = vrot.lane.b32.xlu0 %v5621, 24
  %v5769 = vpop.permute.xlu0 %5768
  %5770 = vrot.lane.b32.xlu0 %v5622, 24
  %v5771 = vpop.permute.xlu0 %5770
  %5772 = vrot.lane.b32.xlu0 %v5623, 24
  %v5773 = vpop.permute.xlu0 %5772
  %5774 = vrot.lane.b32.xlu0 %v5624, 24
  %v5775 = vpop.permute.xlu0 %5774
  %5776 = vrot.lane.b32.xlu0 %v5625, 24
  %v5777 = vpop.permute.xlu0 %5776
  %5778 = vrot.lane.b32.xlu0 %v5626, 24
  %v5779 = vpop.permute.xlu0 %5778
  %5780 = vrot.lane.b32.xlu0 %v5627, 24
  %v5781 = vpop.permute.xlu0 %5780
  %5782 = vrot.lane.b32.xlu0 %v5628, 24
  %v5783 = vpop.permute.xlu0 %5782
  %5784 = vrot.lane.b32.xlu0 %v5629, 24
  %v5785 = vpop.permute.xlu0 %5784
  %5786 = vrot.lane.b32.xlu0 %v5630, 24
  %v5787 = vpop.permute.xlu0 %5786
  %5788 = vrot.lane.b32.xlu0 %v5631, 24
  %v5789 = vpop.permute.xlu0 %5788
  %5790 = vrot.lane.b32.xlu0 %v5632, 24
  %v5791 = vpop.permute.xlu0 %5790
  %5792 = vrot.lane.b32.xlu0 %v5633, 24
  %v5793 = vpop.permute.xlu0 %5792
  %5794 = vrot.lane.b32.xlu0 %v5634, 24
  %v5795 = vpop.permute.xlu0 %5794
  %5796 = vrot.lane.b32.xlu0 %v5635, 24
  %v5797 = vpop.permute.xlu0 %5796
  %5798 = vrot.lane.b32.xlu0 %v5636, 24
  %v5799 = vpop.permute.xlu0 %5798
  %5800 = vrot.lane.b32.xlu0 %v5637, 24
  %v5801 = vpop.permute.xlu0 %5800
  %5802 = vrot.lane.b32.xlu0 %v5638, 24
  %v5803 = vpop.permute.xlu0 %5802
  %5804 = vrot.lane.b32.xlu0 %v5639, 24
  %v5805 = vpop.permute.xlu0 %5804
  %5806 = vrot.lane.b32.xlu0 %v5640, 24
  %v5807 = vpop.permute.xlu0 %5806
  %5808 = vrot.lane.b32.xlu0 %v5641, 24
  %v5809 = vpop.permute.xlu0 %5808
  %5810 = vrot.lane.b32.xlu0 %v5642, 24
  %v5811 = vpop.permute.xlu0 %5810
  %5812 = vrot.lane.b32.xlu0 %v5643, 24
  %v5813 = vpop.permute.xlu0 %5812
  %5814 = vrot.lane.b32.xlu0 %v5644, 24
  %v5815 = vpop.permute.xlu0 %5814
  %5816 = vrot.lane.b32.xlu0 %v5645, 24
  %v5817 = vpop.permute.xlu0 %5816
  %5818 = vrot.lane.b32.xlu0 %v5646, 24
  %v5819 = vpop.permute.xlu0 %5818
  %5820 = vrot.lane.b32.xlu0 %v5647, 24
  %v5821 = vpop.permute.xlu0 %5820
  %5822 = vrot.lane.b32.xlu0 %v5648, 24
  %v5823 = vpop.permute.xlu0 %5822
  %5824 = vrot.lane.b32.xlu0 %v5649, 24
  %v5825 = vpop.permute.xlu0 %5824
  %5826 = vrot.lane.b32.xlu0 %v5650, 24
  %v5827 = vpop.permute.xlu0 %5826
  %5828 = vrot.lane.b32.xlu0 %v5651, 24
  %v5829 = vpop.permute.xlu0 %5828
  %5830 = vrot.lane.b32.xlu0 %v5652, 24
  %v5831 = vpop.permute.xlu0 %5830
  %5832 = vrot.lane.b32.xlu0 %v5653, 24
  %v5833 = vpop.permute.xlu0 %5832
  %5834 = vrot.lane.b32.xlu0 %v5654, 24
  %v5835 = vpop.permute.xlu0 %5834
  %5836 = vrot.lane.b32.xlu0 %v5655, 24
  %v5837 = vpop.permute.xlu0 %5836
  %5838 = vrot.lane.b32.xlu0 %v5656, 24
  %v5839 = vpop.permute.xlu0 %5838
  %5840 = vrot.lane.b32.xlu0 %v5657, 24
  %v5841 = vpop.permute.xlu0 %5840
  %5842 = vrot.lane.b32.xlu0 %v5658, 24
  %v5843 = vpop.permute.xlu0 %5842
  %5844 = vrot.lane.b32.xlu0 %v5659, 24
  %v5845 = vpop.permute.xlu0 %5844
  %5846 = vrot.lane.b32.xlu0 %v5660, 24
  %v5847 = vpop.permute.xlu0 %5846
  %5848 = vrot.lane.b32.xlu0 %v5661, 24
  %v5849 = vpop.permute.xlu0 %5848
  %5850 = vrot.lane.b32.xlu0 %v5662, 24
  %v5851 = vpop.permute.xlu0 %5850
  %5852 = vrot.lane.b32.xlu0 %v5663, 24
  %v5853 = vpop.permute.xlu0 %5852
  %5854 = vrot.lane.b32.xlu0 %v5664, 24
  %v5855 = vpop.permute.xlu0 %5854
  %5856 = vrot.lane.b32.xlu0 %v5665, 24
  %v5857 = vpop.permute.xlu0 %5856
  %vm5922 = vcmask 261312
  %5923 = vst.msk [vmem:[#allocation5] sm:$0xff] %vm5922, %v5731
  %5924 = vst.msk [vmem:[#allocation5 + $0x8] sm:$0xff] %vm5922, %v5733
  %5925 = vst.msk [vmem:[#allocation5 + $0x10] sm:$0xff] %vm5922, %v5735
  %5926 = vst.msk [vmem:[#allocation5 + $0x18] sm:$0xff] %vm5922, %v5737
  %5927 = vst.msk [vmem:[#allocation5 + $0x20] sm:$0xff] %vm5922, %v5739
  %5928 = vst.msk [vmem:[#allocation5 + $0x28] sm:$0xff] %vm5922, %v5741
  %5929 = vst.msk [vmem:[#allocation5 + $0x30] sm:$0xff] %vm5922, %v5743
  %5930 = vst.msk [vmem:[#allocation5 + $0x38] sm:$0xff] %vm5922, %v5745
  %5931 = vst.msk [vmem:[#allocation5 + $0x40] sm:$0xff] %vm5922, %v5747
  %5932 = vst.msk [vmem:[#allocation5 + $0x48] sm:$0xff] %vm5922, %v5749
  %5933 = vst.msk [vmem:[#allocation5 + $0x50] sm:$0xff] %vm5922, %v5751
  %5934 = vst.msk [vmem:[#allocation5 + $0x58] sm:$0xff] %vm5922, %v5753
  %5935 = vst.msk [vmem:[#allocation5 + $0x60] sm:$0xff] %vm5922, %v5755
  %5936 = vst.msk [vmem:[#allocation5 + $0x68] sm:$0xff] %vm5922, %v5757
  %5937 = vst.msk [vmem:[#allocation5 + $0x70] sm:$0xff] %vm5922, %v5759
  %5938 = vst.msk [vmem:[#allocation5 + $0x78] sm:$0xff] %vm5922, %v5761
  %5939 = vst.msk [vmem:[#allocation5 + $0x80] sm:$0xff] %vm5922, %v5763
  %5940 = vst.msk [vmem:[#allocation5 + $0x88] sm:$0xff] %vm5922, %v5765
  %5941 = vst.msk [vmem:[#allocation5 + $0x90] sm:$0xff] %vm5922, %v5767
  %5942 = vst.msk [vmem:[#allocation5 + $0x98] sm:$0xff] %vm5922, %v5769
  %5943 = vst.msk [vmem:[#allocation5 + $0xa0] sm:$0xff] %vm5922, %v5771
  %5944 = vst.msk [vmem:[#allocation5 + $0xa8] sm:$0xff] %vm5922, %v5773
  %5945 = vst.msk [vmem:[#allocation5 + $0xb0] sm:$0xff] %vm5922, %v5775
  %5946 = vst.msk [vmem:[#allocation5 + $0xb8] sm:$0xff] %vm5922, %v5777
  %5947 = vst.msk [vmem:[#allocation5 + $0xc0] sm:$0xff] %vm5922, %v5779
  %5948 = vst.msk [vmem:[#allocation5 + $0xc8] sm:$0xff] %vm5922, %v5781
  %5949 = vst.msk [vmem:[#allocation5 + $0xd0] sm:$0xff] %vm5922, %v5783
  %5950 = vst.msk [vmem:[#allocation5 + $0xd8] sm:$0xff] %vm5922, %v5785
  %5951 = vst.msk [vmem:[#allocation5 + $0xe0] sm:$0xff] %vm5922, %v5787
  %5952 = vst.msk [vmem:[#allocation5 + $0xe8] sm:$0xff] %vm5922, %v5789
  %5953 = vst.msk [vmem:[#allocation5 + $0xf0] sm:$0xff] %vm5922, %v5791
  %5954 = vst.msk [vmem:[#allocation5 + $0xf8] sm:$0xff] %vm5922, %v5793
  %5955 = vst.msk [vmem:[#allocation5 + $0x100] sm:$0xff] %vm5922, %v5795
  %5956 = vst.msk [vmem:[#allocation5 + $0x108] sm:$0xff] %vm5922, %v5797
  %5957 = vst.msk [vmem:[#allocation5 + $0x110] sm:$0xff] %vm5922, %v5799
  %5958 = vst.msk [vmem:[#allocation5 + $0x118] sm:$0xff] %vm5922, %v5801
  %5959 = vst.msk [vmem:[#allocation5 + $0x120] sm:$0xff] %vm5922, %v5803
  %5960 = vst.msk [vmem:[#allocation5 + $0x128] sm:$0xff] %vm5922, %v5805
  %5961 = vst.msk [vmem:[#allocation5 + $0x130] sm:$0xff] %vm5922, %v5807
  %5962 = vst.msk [vmem:[#allocation5 + $0x138] sm:$0xff] %vm5922, %v5809
  %5963 = vst.msk [vmem:[#allocation5 + $0x140] sm:$0xff] %vm5922, %v5811
  %5964 = vst.msk [vmem:[#allocation5 + $0x148] sm:$0xff] %vm5922, %v5813
  %5965 = vst.msk [vmem:[#allocation5 + $0x150] sm:$0xff] %vm5922, %v5815
  %5966 = vst.msk [vmem:[#allocation5 + $0x158] sm:$0xff] %vm5922, %v5817
  %5967 = vst.msk [vmem:[#allocation5 + $0x160] sm:$0xff] %vm5922, %v5819
  %5968 = vst.msk [vmem:[#allocation5 + $0x168] sm:$0xff] %vm5922, %v5821
  %5969 = vst.msk [vmem:[#allocation5 + $0x170] sm:$0xff] %vm5922, %v5823
  %5970 = vst.msk [vmem:[#allocation5 + $0x178] sm:$0xff] %vm5922, %v5825
  %5971 = vst.msk [vmem:[#allocation5 + $0x180] sm:$0xff] %vm5922, %v5827
  %5972 = vst.msk [vmem:[#allocation5 + $0x188] sm:$0xff] %vm5922, %v5829
  %5973 = vst.msk [vmem:[#allocation5 + $0x190] sm:$0xff] %vm5922, %v5831
  %5974 = vst.msk [vmem:[#allocation5 + $0x198] sm:$0xff] %vm5922, %v5833
  %5975 = vst.msk [vmem:[#allocation5 + $0x1a0] sm:$0xff] %vm5922, %v5835
  %5976 = vst.msk [vmem:[#allocation5 + $0x1a8] sm:$0xff] %vm5922, %v5837
  %5977 = vst.msk [vmem:[#allocation5 + $0x1b0] sm:$0xff] %vm5922, %v5839
  %5978 = vst.msk [vmem:[#allocation5 + $0x1b8] sm:$0xff] %vm5922, %v5841
  %5979 = vst.msk [vmem:[#allocation5 + $0x1c0] sm:$0xff] %vm5922, %v5843
  %5980 = vst.msk [vmem:[#allocation5 + $0x1c8] sm:$0xff] %vm5922, %v5845
  %5981 = vst.msk [vmem:[#allocation5 + $0x1d0] sm:$0xff] %vm5922, %v5847
  %5982 = vst.msk [vmem:[#allocation5 + $0x1d8] sm:$0xff] %vm5922, %v5849
  %5983 = vst.msk [vmem:[#allocation5 + $0x1e0] sm:$0xff] %vm5922, %v5851
  %5984 = vst.msk [vmem:[#allocation5 + $0x1e8] sm:$0xff] %vm5922, %v5853
  %5985 = vst.msk [vmem:[#allocation5 + $0x1f0] sm:$0xff] %vm5922, %v5855
  %5986 = vst.msk [vmem:[#allocation5 + $0x1f8] sm:$0xff] %vm5922, %v5857
  %v5987 = vld [vmem:[%s4639 + $0x1] sm:$0xff]
  %v5988 = vld [vmem:[%s4639 + $0x9] sm:$0xff]
  %v5989 = vld [vmem:[%s4639 + $0x19] sm:$0xff]
  %v5990 = vld [vmem:[%s4639 + $0x21] sm:$0xff]
  %v5991 = vld [vmem:[%s4639 + $0x31] sm:$0xff]
  %v5992 = vld [vmem:[%s4639 + $0x39] sm:$0xff]
  %v5993 = vld [vmem:[%s4639 + $0x49] sm:$0xff]
  %v5994 = vld [vmem:[%s4639 + $0x51] sm:$0xff]
  %v5995 = vld [vmem:[%s4639 + $0x61] sm:$0xff]
  %v5996 = vld [vmem:[%s4639 + $0x69] sm:$0xff]
  %v5997 = vld [vmem:[%s4639 + $0x79] sm:$0xff]
  %v5998 = vld [vmem:[%s4639 + $0x81] sm:$0xff]
  %v5999 = vld [vmem:[%s4639 + $0x91] sm:$0xff]
  %v6000 = vld [vmem:[%s4639 + $0x99] sm:$0xff]
  %v6001 = vld [vmem:[%s4639 + $0xa9] sm:$0xff]
  %v6002 = vld [vmem:[%s4639 + $0xb1] sm:$0xff]
  %v6003 = vld [vmem:[%s4639 + $0xc1] sm:$0xff]
  %v6004 = vld [vmem:[%s4639 + $0xc9] sm:$0xff]
  %v6005 = vld [vmem:[%s4639 + $0xd9] sm:$0xff]
  %v6006 = vld [vmem:[%s4639 + $0xe1] sm:$0xff]
  %v6007 = vld [vmem:[%s4639 + $0xf1] sm:$0xff]
  %v6008 = vld [vmem:[%s4639 + $0xf9] sm:$0xff]
  %v6009 = vld [vmem:[%s4639 + $0x109] sm:$0xff]
  %v6010 = vld [vmem:[%s4639 + $0x111] sm:$0xff]
  %v6011 = vld [vmem:[%s4639 + $0x121] sm:$0xff]
  %v6012 = vld [vmem:[%s4639 + $0x129] sm:$0xff]
  %v6013 = vld [vmem:[%s4639 + $0x139] sm:$0xff]
  %v6014 = vld [vmem:[%s4639 + $0x141] sm:$0xff]
  %v6015 = vld [vmem:[%s4639 + $0x151] sm:$0xff]
  %v6016 = vld [vmem:[%s4639 + $0x159] sm:$0xff]
  %v6017 = vld [vmem:[%s4639 + $0x169] sm:$0xff]
  %v6018 = vld [vmem:[%s4639 + $0x171] sm:$0xff]
  %v6019 = vld [vmem:[%s4639 + $0x1b1] sm:$0xff]
  %v6020 = vld [vmem:[%s4639 + $0x1b9] sm:$0xff]
  %v6021 = vld [vmem:[%s4639 + $0x1c9] sm:$0xff]
  %v6022 = vld [vmem:[%s4639 + $0x1d1] sm:$0xff]
  %v6023 = vld [vmem:[%s4639 + $0x1e1] sm:$0xff]
  %v6024 = vld [vmem:[%s4639 + $0x1e9] sm:$0xff]
  %v6025 = vld [vmem:[%s4639 + $0x1f9] sm:$0xff]
  %v6026 = vld [vmem:[%s4639 + $0x201] sm:$0xff]
  %v6027 = vld [vmem:[%s4639 + $0x211] sm:$0xff]
  %v6028 = vld [vmem:[%s4639 + $0x219] sm:$0xff]
  %v6029 = vld [vmem:[%s4639 + $0x229] sm:$0xff]
  %v6030 = vld [vmem:[%s4639 + $0x231] sm:$0xff]
  %v6031 = vld [vmem:[%s4639 + $0x241] sm:$0xff]
  %v6032 = vld [vmem:[%s4639 + $0x249] sm:$0xff]
  %v6033 = vld [vmem:[%s4639 + $0x259] sm:$0xff]
  %v6034 = vld [vmem:[%s4639 + $0x261] sm:$0xff]
  %v6035 = vld [vmem:[%s4639 + $0x271] sm:$0xff]
  %v6036 = vld [vmem:[%s4639 + $0x279] sm:$0xff]
  %v6037 = vld [vmem:[%s4639 + $0x289] sm:$0xff]
  %v6038 = vld [vmem:[%s4639 + $0x291] sm:$0xff]
  %v6039 = vld [vmem:[%s4639 + $0x2a1] sm:$0xff]
  %v6040 = vld [vmem:[%s4639 + $0x2a9] sm:$0xff]
  %v6041 = vld [vmem:[%s4639 + $0x2b9] sm:$0xff]
  %v6042 = vld [vmem:[%s4639 + $0x2c1] sm:$0xff]
  %v6043 = vld [vmem:[%s4639 + $0x2d1] sm:$0xff]
  %v6044 = vld [vmem:[%s4639 + $0x2d9] sm:$0xff]
  %v6045 = vld [vmem:[%s4639 + $0x2e9] sm:$0xff]
  %v6046 = vld [vmem:[%s4639 + $0x2f1] sm:$0xff]
  %v6047 = vld [vmem:[%s4639 + $0x301] sm:$0xff]
  %v6048 = vld [vmem:[%s4639 + $0x309] sm:$0xff]
  %v6049 = vld [vmem:[%s4639 + $0x319] sm:$0xff]
  %v6050 = vld [vmem:[%s4639 + $0x321] sm:$0xff]
  %6115 = vrot.lane.b32.xlu0 %v5987, 32
  %v6116 = vpop.permute.xlu0 %6115
  %6117 = vrot.lane.b32.xlu0 %v5988, 32
  %v6118 = vpop.permute.xlu0 %6117
  %6119 = vrot.lane.b32.xlu0 %v5989, 32
  %v6120 = vpop.permute.xlu0 %6119
  %6121 = vrot.lane.b32.xlu0 %v5990, 32
  %v6122 = vpop.permute.xlu0 %6121
  %6123 = vrot.lane.b32.xlu0 %v5991, 32
  %v6124 = vpop.permute.xlu0 %6123
  %6125 = vrot.lane.b32.xlu0 %v5992, 32
  %v6126 = vpop.permute.xlu0 %6125
  %6127 = vrot.lane.b32.xlu0 %v5993, 32
  %v6128 = vpop.permute.xlu0 %6127
  %6129 = vrot.lane.b32.xlu0 %v5994, 32
  %v6130 = vpop.permute.xlu0 %6129
  %6131 = vrot.lane.b32.xlu0 %v5995, 32
  %v6132 = vpop.permute.xlu0 %6131
  %6133 = vrot.lane.b32.xlu0 %v5996, 32
  %v6134 = vpop.permute.xlu0 %6133
  %6135 = vrot.lane.b32.xlu0 %v5997, 32
  %v6136 = vpop.permute.xlu0 %6135
  %6137 = vrot.lane.b32.xlu0 %v5998, 32
  %v6138 = vpop.permute.xlu0 %6137
  %6139 = vrot.lane.b32.xlu0 %v5999, 32
  %v6140 = vpop.permute.xlu0 %6139
  %6141 = vrot.lane.b32.xlu0 %v6000, 32
  %v6142 = vpop.permute.xlu0 %6141
  %6143 = vrot.lane.b32.xlu0 %v6001, 32
  %v6144 = vpop.permute.xlu0 %6143
  %6145 = vrot.lane.b32.xlu0 %v6002, 32
  %v6146 = vpop.permute.xlu0 %6145
  %6147 = vrot.lane.b32.xlu0 %v6003, 32
  %v6148 = vpop.permute.xlu0 %6147
  %6149 = vrot.lane.b32.xlu0 %v6004, 32
  %v6150 = vpop.permute.xlu0 %6149
  %6151 = vrot.lane.b32.xlu0 %v6005, 32
  %v6152 = vpop.permute.xlu0 %6151
  %6153 = vrot.lane.b32.xlu0 %v6006, 32
  %v6154 = vpop.permute.xlu0 %6153
  %6155 = vrot.lane.b32.xlu0 %v6007, 32
  %v6156 = vpop.permute.xlu0 %6155
  %6157 = vrot.lane.b32.xlu0 %v6008, 32
  %v6158 = vpop.permute.xlu0 %6157
  %6159 = vrot.lane.b32.xlu0 %v6009, 32
  %v6160 = vpop.permute.xlu0 %6159
  %6161 = vrot.lane.b32.xlu0 %v6010, 32
  %v6162 = vpop.permute.xlu0 %6161
  %6163 = vrot.lane.b32.xlu0 %v6011, 32
  %v6164 = vpop.permute.xlu0 %6163
  %6165 = vrot.lane.b32.xlu0 %v6012, 32
  %v6166 = vpop.permute.xlu0 %6165
  %6167 = vrot.lane.b32.xlu0 %v6013, 32
  %v6168 = vpop.permute.xlu0 %6167
  %6169 = vrot.lane.b32.xlu0 %v6014, 32
  %v6170 = vpop.permute.xlu0 %6169
  %6171 = vrot.lane.b32.xlu0 %v6015, 32
  %v6172 = vpop.permute.xlu0 %6171
  %6173 = vrot.lane.b32.xlu0 %v6016, 32
  %v6174 = vpop.permute.xlu0 %6173
  %6175 = vrot.lane.b32.xlu0 %v6017, 32
  %v6176 = vpop.permute.xlu0 %6175
  %6177 = vrot.lane.b32.xlu0 %v6018, 32
  %v6178 = vpop.permute.xlu0 %6177
  %6179 = vrot.lane.b32.xlu0 %v6019, 32
  %v6180 = vpop.permute.xlu0 %6179
  %6181 = vrot.lane.b32.xlu0 %v6020, 32
  %v6182 = vpop.permute.xlu0 %6181
  %6183 = vrot.lane.b32.xlu0 %v6021, 32
  %v6184 = vpop.permute.xlu0 %6183
  %6185 = vrot.lane.b32.xlu0 %v6022, 32
  %v6186 = vpop.permute.xlu0 %6185
  %6187 = vrot.lane.b32.xlu0 %v6023, 32
  %v6188 = vpop.permute.xlu0 %6187
  %6189 = vrot.lane.b32.xlu0 %v6024, 32
  %v6190 = vpop.permute.xlu0 %6189
  %6191 = vrot.lane.b32.xlu0 %v6025, 32
  %v6192 = vpop.permute.xlu0 %6191
  %6193 = vrot.lane.b32.xlu0 %v6026, 32
  %v6194 = vpop.permute.xlu0 %6193
  %6195 = vrot.lane.b32.xlu0 %v6027, 32
  %v6196 = vpop.permute.xlu0 %6195
  %6197 = vrot.lane.b32.xlu0 %v6028, 32
  %v6198 = vpop.permute.xlu0 %6197
  %6199 = vrot.lane.b32.xlu0 %v6029, 32
  %v6200 = vpop.permute.xlu0 %6199
  %6201 = vrot.lane.b32.xlu0 %v6030, 32
  %v6202 = vpop.permute.xlu0 %6201
  %6203 = vrot.lane.b32.xlu0 %v6031, 32
  %v6204 = vpop.permute.xlu0 %6203
  %6205 = vrot.lane.b32.xlu0 %v6032, 32
  %v6206 = vpop.permute.xlu0 %6205
  %6207 = vrot.lane.b32.xlu0 %v6033, 32
  %v6208 = vpop.permute.xlu0 %6207
  %6209 = vrot.lane.b32.xlu0 %v6034, 32
  %v6210 = vpop.permute.xlu0 %6209
  %6211 = vrot.lane.b32.xlu0 %v6035, 32
  %v6212 = vpop.permute.xlu0 %6211
  %6213 = vrot.lane.b32.xlu0 %v6036, 32
  %v6214 = vpop.permute.xlu0 %6213
  %6215 = vrot.lane.b32.xlu0 %v6037, 32
  %v6216 = vpop.permute.xlu0 %6215
  %6217 = vrot.lane.b32.xlu0 %v6038, 32
  %v6218 = vpop.permute.xlu0 %6217
  %6219 = vrot.lane.b32.xlu0 %v6039, 32
  %v6220 = vpop.permute.xlu0 %6219
  %6221 = vrot.lane.b32.xlu0 %v6040, 32
  %v6222 = vpop.permute.xlu0 %6221
  %6223 = vrot.lane.b32.xlu0 %v6041, 32
  %v6224 = vpop.permute.xlu0 %6223
  %6225 = vrot.lane.b32.xlu0 %v6042, 32
  %v6226 = vpop.permute.xlu0 %6225
  %6227 = vrot.lane.b32.xlu0 %v6043, 32
  %v6228 = vpop.permute.xlu0 %6227
  %6229 = vrot.lane.b32.xlu0 %v6044, 32
  %v6230 = vpop.permute.xlu0 %6229
  %6231 = vrot.lane.b32.xlu0 %v6045, 32
  %v6232 = vpop.permute.xlu0 %6231
  %6233 = vrot.lane.b32.xlu0 %v6046, 32
  %v6234 = vpop.permute.xlu0 %6233
  %6235 = vrot.lane.b32.xlu0 %v6047, 32
  %v6236 = vpop.permute.xlu0 %6235
  %6237 = vrot.lane.b32.xlu0 %v6048, 32
  %v6238 = vpop.permute.xlu0 %6237
  %6239 = vrot.lane.b32.xlu0 %v6049, 32
  %v6240 = vpop.permute.xlu0 %6239
  %6241 = vrot.lane.b32.xlu0 %v6050, 32
  %v6242 = vpop.permute.xlu0 %6241
  %vm6307 = vcmask 326912
  %6308 = vst.msk [vmem:[#allocation5] sm:$0xff] %vm6307, %v6116
  %6309 = vst.msk [vmem:[#allocation5 + $0x8] sm:$0xff] %vm6307, %v6118
  %6310 = vst.msk [vmem:[#allocation5 + $0x10] sm:$0xff] %vm6307, %v6120
  %6311 = vst.msk [vmem:[#allocation5 + $0x18] sm:$0xff] %vm6307, %v6122
  %6312 = vst.msk [vmem:[#allocation5 + $0x20] sm:$0xff] %vm6307, %v6124
  %6313 = vst.msk [vmem:[#allocation5 + $0x28] sm:$0xff] %vm6307, %v6126
  %6314 = vst.msk [vmem:[#allocation5 + $0x30] sm:$0xff] %vm6307, %v6128
  %6315 = vst.msk [vmem:[#allocation5 + $0x38] sm:$0xff] %vm6307, %v6130
  %6316 = vst.msk [vmem:[#allocation5 + $0x40] sm:$0xff] %vm6307, %v6132
  %6317 = vst.msk [vmem:[#allocation5 + $0x48] sm:$0xff] %vm6307, %v6134
  %6318 = vst.msk [vmem:[#allocation5 + $0x50] sm:$0xff] %vm6307, %v6136
  %6319 = vst.msk [vmem:[#allocation5 + $0x58] sm:$0xff] %vm6307, %v6138
  %6320 = vst.msk [vmem:[#allocation5 + $0x60] sm:$0xff] %vm6307, %v6140
  %6321 = vst.msk [vmem:[#allocation5 + $0x68] sm:$0xff] %vm6307, %v6142
  %6322 = vst.msk [vmem:[#allocation5 + $0x70] sm:$0xff] %vm6307, %v6144
  %6323 = vst.msk [vmem:[#allocation5 + $0x78] sm:$0xff] %vm6307, %v6146
  %6324 = vst.msk [vmem:[#allocation5 + $0x80] sm:$0xff] %vm6307, %v6148
  %6325 = vst.msk [vmem:[#allocation5 + $0x88] sm:$0xff] %vm6307, %v6150
  %6326 = vst.msk [vmem:[#allocation5 + $0x90] sm:$0xff] %vm6307, %v6152
  %6327 = vst.msk [vmem:[#allocation5 + $0x98] sm:$0xff] %vm6307, %v6154
  %6328 = vst.msk [vmem:[#allocation5 + $0xa0] sm:$0xff] %vm6307, %v6156
  %6329 = vst.msk [vmem:[#allocation5 + $0xa8] sm:$0xff] %vm6307, %v6158
  %6330 = vst.msk [vmem:[#allocation5 + $0xb0] sm:$0xff] %vm6307, %v6160
  %6331 = vst.msk [vmem:[#allocation5 + $0xb8] sm:$0xff] %vm6307, %v6162
  %6332 = vst.msk [vmem:[#allocation5 + $0xc0] sm:$0xff] %vm6307, %v6164
  %6333 = vst.msk [vmem:[#allocation5 + $0xc8] sm:$0xff] %vm6307, %v6166
  %6334 = vst.msk [vmem:[#allocation5 + $0xd0] sm:$0xff] %vm6307, %v6168
  %6335 = vst.msk [vmem:[#allocation5 + $0xd8] sm:$0xff] %vm6307, %v6170
  %6336 = vst.msk [vmem:[#allocation5 + $0xe0] sm:$0xff] %vm6307, %v6172
  %6337 = vst.msk [vmem:[#allocation5 + $0xe8] sm:$0xff] %vm6307, %v6174
  %6338 = vst.msk [vmem:[#allocation5 + $0xf0] sm:$0xff] %vm6307, %v6176
  %6339 = vst.msk [vmem:[#allocation5 + $0xf8] sm:$0xff] %vm6307, %v6178
  %6340 = vst.msk [vmem:[#allocation5 + $0x100] sm:$0xff] %vm6307, %v6180
  %6341 = vst.msk [vmem:[#allocation5 + $0x108] sm:$0xff] %vm6307, %v6182
  %6342 = vst.msk [vmem:[#allocation5 + $0x110] sm:$0xff] %vm6307, %v6184
  %6343 = vst.msk [vmem:[#allocation5 + $0x118] sm:$0xff] %vm6307, %v6186
  %6344 = vst.msk [vmem:[#allocation5 + $0x120] sm:$0xff] %vm6307, %v6188
  %6345 = vst.msk [vmem:[#allocation5 + $0x128] sm:$0xff] %vm6307, %v6190
  %6346 = vst.msk [vmem:[#allocation5 + $0x130] sm:$0xff] %vm6307, %v6192
  %6347 = vst.msk [vmem:[#allocation5 + $0x138] sm:$0xff] %vm6307, %v6194
  %6348 = vst.msk [vmem:[#allocation5 + $0x140] sm:$0xff] %vm6307, %v6196
  %6349 = vst.msk [vmem:[#allocation5 + $0x148] sm:$0xff] %vm6307, %v6198
  %6350 = vst.msk [vmem:[#allocation5 + $0x150] sm:$0xff] %vm6307, %v6200
  %6351 = vst.msk [vmem:[#allocation5 + $0x158] sm:$0xff] %vm6307, %v6202
  %6352 = vst.msk [vmem:[#allocation5 + $0x160] sm:$0xff] %vm6307, %v6204
  %6353 = vst.msk [vmem:[#allocation5 + $0x168] sm:$0xff] %vm6307, %v6206
  %6354 = vst.msk [vmem:[#allocation5 + $0x170] sm:$0xff] %vm6307, %v6208
  %6355 = vst.msk [vmem:[#allocation5 + $0x178] sm:$0xff] %vm6307, %v6210
  %6356 = vst.msk [vmem:[#allocation5 + $0x180] sm:$0xff] %vm6307, %v6212
  %6357 = vst.msk [vmem:[#allocation5 + $0x188] sm:$0xff] %vm6307, %v6214
  %6358 = vst.msk [vmem:[#allocation5 + $0x190] sm:$0xff] %vm6307, %v6216
  %6359 = vst.msk [vmem:[#allocation5 + $0x198] sm:$0xff] %vm6307, %v6218
  %6360 = vst.msk [vmem:[#allocation5 + $0x1a0] sm:$0xff] %vm6307, %v6220
  %6361 = vst.msk [vmem:[#allocation5 + $0x1a8] sm:$0xff] %vm6307, %v6222
  %6362 = vst.msk [vmem:[#allocation5 + $0x1b0] sm:$0xff] %vm6307, %v6224
  %6363 = vst.msk [vmem:[#allocation5 + $0x1b8] sm:$0xff] %vm6307, %v6226
  %6364 = vst.msk [vmem:[#allocation5 + $0x1c0] sm:$0xff] %vm6307, %v6228
  %6365 = vst.msk [vmem:[#allocation5 + $0x1c8] sm:$0xff] %vm6307, %v6230
  %6366 = vst.msk [vmem:[#allocation5 + $0x1d0] sm:$0xff] %vm6307, %v6232
  %6367 = vst.msk [vmem:[#allocation5 + $0x1d8] sm:$0xff] %vm6307, %v6234
  %6368 = vst.msk [vmem:[#allocation5 + $0x1e0] sm:$0xff] %vm6307, %v6236
  %6369 = vst.msk [vmem:[#allocation5 + $0x1e8] sm:$0xff] %vm6307, %v6238
  %6370 = vst.msk [vmem:[#allocation5 + $0x1f0] sm:$0xff] %vm6307, %v6240
  %6371 = vst.msk [vmem:[#allocation5 + $0x1f8] sm:$0xff] %vm6307, %v6242
  %v6372 = vld [vmem:[%s4639 + $0x2] sm:$0xff]
  %v6373 = vld [vmem:[%s4639 + $0xa] sm:$0xff]
  %v6374 = vld [vmem:[%s4639 + $0x1a] sm:$0xff]
  %v6375 = vld [vmem:[%s4639 + $0x22] sm:$0xff]
  %v6376 = vld [vmem:[%s4639 + $0x32] sm:$0xff]
  %v6377 = vld [vmem:[%s4639 + $0x3a] sm:$0xff]
  %v6378 = vld [vmem:[%s4639 + $0x4a] sm:$0xff]
  %v6379 = vld [vmem:[%s4639 + $0x52] sm:$0xff]
  %v6380 = vld [vmem:[%s4639 + $0x62] sm:$0xff]
  %v6381 = vld [vmem:[%s4639 + $0x6a] sm:$0xff]
  %v6382 = vld [vmem:[%s4639 + $0x7a] sm:$0xff]
  %v6383 = vld [vmem:[%s4639 + $0x82] sm:$0xff]
  %v6384 = vld [vmem:[%s4639 + $0x92] sm:$0xff]
  %v6385 = vld [vmem:[%s4639 + $0x9a] sm:$0xff]
  %v6386 = vld [vmem:[%s4639 + $0xaa] sm:$0xff]
  %v6387 = vld [vmem:[%s4639 + $0xb2] sm:$0xff]
  %v6388 = vld [vmem:[%s4639 + $0xc2] sm:$0xff]
  %v6389 = vld [vmem:[%s4639 + $0xca] sm:$0xff]
  %v6390 = vld [vmem:[%s4639 + $0xda] sm:$0xff]
  %v6391 = vld [vmem:[%s4639 + $0xe2] sm:$0xff]
  %v6392 = vld [vmem:[%s4639 + $0xf2] sm:$0xff]
  %v6393 = vld [vmem:[%s4639 + $0xfa] sm:$0xff]
  %v6394 = vld [vmem:[%s4639 + $0x10a] sm:$0xff]
  %v6395 = vld [vmem:[%s4639 + $0x112] sm:$0xff]
  %v6396 = vld [vmem:[%s4639 + $0x122] sm:$0xff]
  %v6397 = vld [vmem:[%s4639 + $0x12a] sm:$0xff]
  %v6398 = vld [vmem:[%s4639 + $0x13a] sm:$0xff]
  %v6399 = vld [vmem:[%s4639 + $0x142] sm:$0xff]
  %v6400 = vld [vmem:[%s4639 + $0x152] sm:$0xff]
  %v6401 = vld [vmem:[%s4639 + $0x15a] sm:$0xff]
  %v6402 = vld [vmem:[%s4639 + $0x16a] sm:$0xff]
  %v6403 = vld [vmem:[%s4639 + $0x172] sm:$0xff]
  %v6404 = vld [vmem:[%s4639 + $0x1b2] sm:$0xff]
  %v6405 = vld [vmem:[%s4639 + $0x1ba] sm:$0xff]
  %v6406 = vld [vmem:[%s4639 + $0x1ca] sm:$0xff]
  %v6407 = vld [vmem:[%s4639 + $0x1d2] sm:$0xff]
  %v6408 = vld [vmem:[%s4639 + $0x1e2] sm:$0xff]
  %v6409 = vld [vmem:[%s4639 + $0x1ea] sm:$0xff]
  %v6410 = vld [vmem:[%s4639 + $0x1fa] sm:$0xff]
  %v6411 = vld [vmem:[%s4639 + $0x202] sm:$0xff]
  %v6412 = vld [vmem:[%s4639 + $0x212] sm:$0xff]
  %v6413 = vld [vmem:[%s4639 + $0x21a] sm:$0xff]
  %v6414 = vld [vmem:[%s4639 + $0x22a] sm:$0xff]
  %v6415 = vld [vmem:[%s4639 + $0x232] sm:$0xff]
  %v6416 = vld [vmem:[%s4639 + $0x242] sm:$0xff]
  %v6417 = vld [vmem:[%s4639 + $0x24a] sm:$0xff]
  %v6418 = vld [vmem:[%s4639 + $0x25a] sm:$0xff]
  %v6419 = vld [vmem:[%s4639 + $0x262] sm:$0xff]
  %v6420 = vld [vmem:[%s4639 + $0x272] sm:$0xff]
  %v6421 = vld [vmem:[%s4639 + $0x27a] sm:$0xff]
  %v6422 = vld [vmem:[%s4639 + $0x28a] sm:$0xff]
  %v6423 = vld [vmem:[%s4639 + $0x292] sm:$0xff]
  %v6424 = vld [vmem:[%s4639 + $0x2a2] sm:$0xff]
  %v6425 = vld [vmem:[%s4639 + $0x2aa] sm:$0xff]
  %v6426 = vld [vmem:[%s4639 + $0x2ba] sm:$0xff]
  %v6427 = vld [vmem:[%s4639 + $0x2c2] sm:$0xff]
  %v6428 = vld [vmem:[%s4639 + $0x2d2] sm:$0xff]
  %v6429 = vld [vmem:[%s4639 + $0x2da] sm:$0xff]
  %v6430 = vld [vmem:[%s4639 + $0x2ea] sm:$0xff]
  %v6431 = vld [vmem:[%s4639 + $0x2f2] sm:$0xff]
  %v6432 = vld [vmem:[%s4639 + $0x302] sm:$0xff]
  %v6433 = vld [vmem:[%s4639 + $0x30a] sm:$0xff]
  %v6434 = vld [vmem:[%s4639 + $0x31a] sm:$0xff]
  %v6435 = vld [vmem:[%s4639 + $0x322] sm:$0xff]
  %6500 = vrot.lane.b32.xlu0 %v6372, 40
  %v6501 = vpop.permute.xlu0 %6500
  %6502 = vrot.lane.b32.xlu0 %v6373, 40
  %v6503 = vpop.permute.xlu0 %6502
  %6504 = vrot.lane.b32.xlu0 %v6374, 40
  %v6505 = vpop.permute.xlu0 %6504
  %6506 = vrot.lane.b32.xlu0 %v6375, 40
  %v6507 = vpop.permute.xlu0 %6506
  %6508 = vrot.lane.b32.xlu0 %v6376, 40
  %v6509 = vpop.permute.xlu0 %6508
  %6510 = vrot.lane.b32.xlu0 %v6377, 40
  %v6511 = vpop.permute.xlu0 %6510
  %6512 = vrot.lane.b32.xlu0 %v6378, 40
  %v6513 = vpop.permute.xlu0 %6512
  %6514 = vrot.lane.b32.xlu0 %v6379, 40
  %v6515 = vpop.permute.xlu0 %6514
  %6516 = vrot.lane.b32.xlu0 %v6380, 40
  %v6517 = vpop.permute.xlu0 %6516
  %6518 = vrot.lane.b32.xlu0 %v6381, 40
  %v6519 = vpop.permute.xlu0 %6518
  %6520 = vrot.lane.b32.xlu0 %v6382, 40
  %v6521 = vpop.permute.xlu0 %6520
  %6522 = vrot.lane.b32.xlu0 %v6383, 40
  %v6523 = vpop.permute.xlu0 %6522
  %6524 = vrot.lane.b32.xlu0 %v6384, 40
  %v6525 = vpop.permute.xlu0 %6524
  %6526 = vrot.lane.b32.xlu0 %v6385, 40
  %v6527 = vpop.permute.xlu0 %6526
  %6528 = vrot.lane.b32.xlu0 %v6386, 40
  %v6529 = vpop.permute.xlu0 %6528
  %6530 = vrot.lane.b32.xlu0 %v6387, 40
  %v6531 = vpop.permute.xlu0 %6530
  %6532 = vrot.lane.b32.xlu0 %v6388, 40
  %v6533 = vpop.permute.xlu0 %6532
  %6534 = vrot.lane.b32.xlu0 %v6389, 40
  %v6535 = vpop.permute.xlu0 %6534
  %6536 = vrot.lane.b32.xlu0 %v6390, 40
  %v6537 = vpop.permute.xlu0 %6536
  %6538 = vrot.lane.b32.xlu0 %v6391, 40
  %v6539 = vpop.permute.xlu0 %6538
  %6540 = vrot.lane.b32.xlu0 %v6392, 40
  %v6541 = vpop.permute.xlu0 %6540
  %6542 = vrot.lane.b32.xlu0 %v6393, 40
  %v6543 = vpop.permute.xlu0 %6542
  %6544 = vrot.lane.b32.xlu0 %v6394, 40
  %v6545 = vpop.permute.xlu0 %6544
  %6546 = vrot.lane.b32.xlu0 %v6395, 40
  %v6547 = vpop.permute.xlu0 %6546
  %6548 = vrot.lane.b32.xlu0 %v6396, 40
  %v6549 = vpop.permute.xlu0 %6548
  %6550 = vrot.lane.b32.xlu0 %v6397, 40
  %v6551 = vpop.permute.xlu0 %6550
  %6552 = vrot.lane.b32.xlu0 %v6398, 40
  %v6553 = vpop.permute.xlu0 %6552
  %6554 = vrot.lane.b32.xlu0 %v6399, 40
  %v6555 = vpop.permute.xlu0 %6554
  %6556 = vrot.lane.b32.xlu0 %v6400, 40
  %v6557 = vpop.permute.xlu0 %6556
  %6558 = vrot.lane.b32.xlu0 %v6401, 40
  %v6559 = vpop.permute.xlu0 %6558
  %6560 = vrot.lane.b32.xlu0 %v6402, 40
  %v6561 = vpop.permute.xlu0 %6560
  %6562 = vrot.lane.b32.xlu0 %v6403, 40
  %v6563 = vpop.permute.xlu0 %6562
  %6564 = vrot.lane.b32.xlu0 %v6404, 40
  %v6565 = vpop.permute.xlu0 %6564
  %6566 = vrot.lane.b32.xlu0 %v6405, 40
  %v6567 = vpop.permute.xlu0 %6566
  %6568 = vrot.lane.b32.xlu0 %v6406, 40
  %v6569 = vpop.permute.xlu0 %6568
  %6570 = vrot.lane.b32.xlu0 %v6407, 40
  %v6571 = vpop.permute.xlu0 %6570
  %6572 = vrot.lane.b32.xlu0 %v6408, 40
  %v6573 = vpop.permute.xlu0 %6572
  %6574 = vrot.lane.b32.xlu0 %v6409, 40
  %v6575 = vpop.permute.xlu0 %6574
  %6576 = vrot.lane.b32.xlu0 %v6410, 40
  %v6577 = vpop.permute.xlu0 %6576
  %6578 = vrot.lane.b32.xlu0 %v6411, 40
  %v6579 = vpop.permute.xlu0 %6578
  %6580 = vrot.lane.b32.xlu0 %v6412, 40
  %v6581 = vpop.permute.xlu0 %6580
  %6582 = vrot.lane.b32.xlu0 %v6413, 40
  %v6583 = vpop.permute.xlu0 %6582
  %6584 = vrot.lane.b32.xlu0 %v6414, 40
  %v6585 = vpop.permute.xlu0 %6584
  %6586 = vrot.lane.b32.xlu0 %v6415, 40
  %v6587 = vpop.permute.xlu0 %6586
  %6588 = vrot.lane.b32.xlu0 %v6416, 40
  %v6589 = vpop.permute.xlu0 %6588
  %6590 = vrot.lane.b32.xlu0 %v6417, 40
  %v6591 = vpop.permute.xlu0 %6590
  %6592 = vrot.lane.b32.xlu0 %v6418, 40
  %v6593 = vpop.permute.xlu0 %6592
  %6594 = vrot.lane.b32.xlu0 %v6419, 40
  %v6595 = vpop.permute.xlu0 %6594
  %6596 = vrot.lane.b32.xlu0 %v6420, 40
  %v6597 = vpop.permute.xlu0 %6596
  %6598 = vrot.lane.b32.xlu0 %v6421, 40
  %v6599 = vpop.permute.xlu0 %6598
  %6600 = vrot.lane.b32.xlu0 %v6422, 40
  %v6601 = vpop.permute.xlu0 %6600
  %6602 = vrot.lane.b32.xlu0 %v6423, 40
  %v6603 = vpop.permute.xlu0 %6602
  %6604 = vrot.lane.b32.xlu0 %v6424, 40
  %v6605 = vpop.permute.xlu0 %6604
  %6606 = vrot.lane.b32.xlu0 %v6425, 40
  %v6607 = vpop.permute.xlu0 %6606
  %6608 = vrot.lane.b32.xlu0 %v6426, 40
  %v6609 = vpop.permute.xlu0 %6608
  %6610 = vrot.lane.b32.xlu0 %v6427, 40
  %v6611 = vpop.permute.xlu0 %6610
  %6612 = vrot.lane.b32.xlu0 %v6428, 40
  %v6613 = vpop.permute.xlu0 %6612
  %6614 = vrot.lane.b32.xlu0 %v6429, 40
  %v6615 = vpop.permute.xlu0 %6614
  %6616 = vrot.lane.b32.xlu0 %v6430, 40
  %v6617 = vpop.permute.xlu0 %6616
  %6618 = vrot.lane.b32.xlu0 %v6431, 40
  %v6619 = vpop.permute.xlu0 %6618
  %6620 = vrot.lane.b32.xlu0 %v6432, 40
  %v6621 = vpop.permute.xlu0 %6620
  %6622 = vrot.lane.b32.xlu0 %v6433, 40
  %v6623 = vpop.permute.xlu0 %6622
  %6624 = vrot.lane.b32.xlu0 %v6434, 40
  %v6625 = vpop.permute.xlu0 %6624
  %6626 = vrot.lane.b32.xlu0 %v6435, 40
  %v6627 = vpop.permute.xlu0 %6626
  %vm6692 = vcmask 392512
  %6693 = vst.msk [vmem:[#allocation5] sm:$0xff] %vm6692, %v6501
  %6694 = vst.msk [vmem:[#allocation5 + $0x8] sm:$0xff] %vm6692, %v6503
  %6695 = vst.msk [vmem:[#allocation5 + $0x10] sm:$0xff] %vm6692, %v6505
  %6696 = vst.msk [vmem:[#allocation5 + $0x18] sm:$0xff] %vm6692, %v6507
  %6697 = vst.msk [vmem:[#allocation5 + $0x20] sm:$0xff] %vm6692, %v6509
  %6698 = vst.msk [vmem:[#allocation5 + $0x28] sm:$0xff] %vm6692, %v6511
  %6699 = vst.msk [vmem:[#allocation5 + $0x30] sm:$0xff] %vm6692, %v6513
  %6700 = vst.msk [vmem:[#allocation5 + $0x38] sm:$0xff] %vm6692, %v6515
  %6701 = vst.msk [vmem:[#allocation5 + $0x40] sm:$0xff] %vm6692, %v6517
  %6702 = vst.msk [vmem:[#allocation5 + $0x48] sm:$0xff] %vm6692, %v6519
  %6703 = vst.msk [vmem:[#allocation5 + $0x50] sm:$0xff] %vm6692, %v6521
  %6704 = vst.msk [vmem:[#allocation5 + $0x58] sm:$0xff] %vm6692, %v6523
  %6705 = vst.msk [vmem:[#allocation5 + $0x60] sm:$0xff] %vm6692, %v6525
  %6706 = vst.msk [vmem:[#allocation5 + $0x68] sm:$0xff] %vm6692, %v6527
  %6707 = vst.msk [vmem:[#allocation5 + $0x70] sm:$0xff] %vm6692, %v6529
  %6708 = vst.msk [vmem:[#allocation5 + $0x78] sm:$0xff] %vm6692, %v6531
  %6709 = vst.msk [vmem:[#allocation5 + $0x80] sm:$0xff] %vm6692, %v6533
  %6710 = vst.msk [vmem:[#allocation5 + $0x88] sm:$0xff] %vm6692, %v6535
  %6711 = vst.msk [vmem:[#allocation5 + $0x90] sm:$0xff] %vm6692, %v6537
  %6712 = vst.msk [vmem:[#allocation5 + $0x98] sm:$0xff] %vm6692, %v6539
  %6713 = vst.msk [vmem:[#allocation5 + $0xa0] sm:$0xff] %vm6692, %v6541
  %6714 = vst.msk [vmem:[#allocation5 + $0xa8] sm:$0xff] %vm6692, %v6543
  %6715 = vst.msk [vmem:[#allocation5 + $0xb0] sm:$0xff] %vm6692, %v6545
  %6716 = vst.msk [vmem:[#allocation5 + $0xb8] sm:$0xff] %vm6692, %v6547
  %6717 = vst.msk [vmem:[#allocation5 + $0xc0] sm:$0xff] %vm6692, %v6549
  %6718 = vst.msk [vmem:[#allocation5 + $0xc8] sm:$0xff] %vm6692, %v6551
  %6719 = vst.msk [vmem:[#allocation5 + $0xd0] sm:$0xff] %vm6692, %v6553
  %6720 = vst.msk [vmem:[#allocation5 + $0xd8] sm:$0xff] %vm6692, %v6555
  %6721 = vst.msk [vmem:[#allocation5 + $0xe0] sm:$0xff] %vm6692, %v6557
  %6722 = vst.msk [vmem:[#allocation5 + $0xe8] sm:$0xff] %vm6692, %v6559
  %6723 = vst.msk [vmem:[#allocation5 + $0xf0] sm:$0xff] %vm6692, %v6561
  %6724 = vst.msk [vmem:[#allocation5 + $0xf8] sm:$0xff] %vm6692, %v6563
  %6725 = vst.msk [vmem:[#allocation5 + $0x100] sm:$0xff] %vm6692, %v6565
  %6726 = vst.msk [vmem:[#allocation5 + $0x108] sm:$0xff] %vm6692, %v6567
  %6727 = vst.msk [vmem:[#allocation5 + $0x110] sm:$0xff] %vm6692, %v6569
  %6728 = vst.msk [vmem:[#allocation5 + $0x118] sm:$0xff] %vm6692, %v6571
  %6729 = vst.msk [vmem:[#allocation5 + $0x120] sm:$0xff] %vm6692, %v6573
  %6730 = vst.msk [vmem:[#allocation5 + $0x128] sm:$0xff] %vm6692, %v6575
  %6731 = vst.msk [vmem:[#allocation5 + $0x130] sm:$0xff] %vm6692, %v6577
  %6732 = vst.msk [vmem:[#allocation5 + $0x138] sm:$0xff] %vm6692, %v6579
  %6733 = vst.msk [vmem:[#allocation5 + $0x140] sm:$0xff] %vm6692, %v6581
  %6734 = vst.msk [vmem:[#allocation5 + $0x148] sm:$0xff] %vm6692, %v6583
  %6735 = vst.msk [vmem:[#allocation5 + $0x150] sm:$0xff] %vm6692, %v6585
  %6736 = vst.msk [vmem:[#allocation5 + $0x158] sm:$0xff] %vm6692, %v6587
  %6737 = vst.msk [vmem:[#allocation5 + $0x160] sm:$0xff] %vm6692, %v6589
  %6738 = vst.msk [vmem:[#allocation5 + $0x168] sm:$0xff] %vm6692, %v6591
  %6739 = vst.msk [vmem:[#allocation5 + $0x170] sm:$0xff] %vm6692, %v6593
  %6740 = vst.msk [vmem:[#allocation5 + $0x178] sm:$0xff] %vm6692, %v6595
  %6741 = vst.msk [vmem:[#allocation5 + $0x180] sm:$0xff] %vm6692, %v6597
  %6742 = vst.msk [vmem:[#allocation5 + $0x188] sm:$0xff] %vm6692, %v6599
  %6743 = vst.msk [vmem:[#allocation5 + $0x190] sm:$0xff] %vm6692, %v6601
  %6744 = vst.msk [vmem:[#allocation5 + $0x198] sm:$0xff] %vm6692, %v6603
  %6745 = vst.msk [vmem:[#allocation5 + $0x1a0] sm:$0xff] %vm6692, %v6605
  %6746 = vst.msk [vmem:[#allocation5 + $0x1a8] sm:$0xff] %vm6692, %v6607
  %6747 = vst.msk [vmem:[#allocation5 + $0x1b0] sm:$0xff] %vm6692, %v6609
  %6748 = vst.msk [vmem:[#allocation5 + $0x1b8] sm:$0xff] %vm6692, %v6611
  %6749 = vst.msk [vmem:[#allocation5 + $0x1c0] sm:$0xff] %vm6692, %v6613
  %6750 = vst.msk [vmem:[#allocation5 + $0x1c8] sm:$0xff] %vm6692, %v6615
  %6751 = vst.msk [vmem:[#allocation5 + $0x1d0] sm:$0xff] %vm6692, %v6617
  %6752 = vst.msk [vmem:[#allocation5 + $0x1d8] sm:$0xff] %vm6692, %v6619
  %6753 = vst.msk [vmem:[#allocation5 + $0x1e0] sm:$0xff] %vm6692, %v6621
  %6754 = vst.msk [vmem:[#allocation5 + $0x1e8] sm:$0xff] %vm6692, %v6623
  %6755 = vst.msk [vmem:[#allocation5 + $0x1f0] sm:$0xff] %vm6692, %v6625
  %6756 = vst.msk [vmem:[#allocation5 + $0x1f8] sm:$0xff] %vm6692, %v6627
  %s6757 = scalar_lea.vmem [#allocation3], 48
  %v6758 = vld [vmem:[%s6757] sm:$0xff]
  %v6759 = vld [vmem:[%s6757 + $0x8] sm:$0xff]
  %v6760 = vld [vmem:[%s6757 + $0x18] sm:$0xff]
  %v6761 = vld [vmem:[%s6757 + $0x20] sm:$0xff]
  %v6762 = vld [vmem:[%s6757 + $0x30] sm:$0xff]
  %v6763 = vld [vmem:[%s6757 + $0x38] sm:$0xff]
  %v6764 = vld [vmem:[%s6757 + $0x48] sm:$0xff]
  %v6765 = vld [vmem:[%s6757 + $0x50] sm:$0xff]
  %v6766 = vld [vmem:[%s6757 + $0x60] sm:$0xff]
  %v6767 = vld [vmem:[%s6757 + $0x68] sm:$0xff]
  %v6768 = vld [vmem:[%s6757 + $0x78] sm:$0xff]
  %v6769 = vld [vmem:[%s6757 + $0x80] sm:$0xff]
  %v6770 = vld [vmem:[%s6757 + $0x90] sm:$0xff]
  %v6771 = vld [vmem:[%s6757 + $0x98] sm:$0xff]
  %v6772 = vld [vmem:[%s6757 + $0xa8] sm:$0xff]
  %v6773 = vld [vmem:[%s6757 + $0xb0] sm:$0xff]
  %v6774 = vld [vmem:[%s6757 + $0xc0] sm:$0xff]
  %v6775 = vld [vmem:[%s6757 + $0xc8] sm:$0xff]
  %v6776 = vld [vmem:[%s6757 + $0xd8] sm:$0xff]
  %v6777 = vld [vmem:[%s6757 + $0xe0] sm:$0xff]
  %v6778 = vld [vmem:[%s6757 + $0xf0] sm:$0xff]
  %v6779 = vld [vmem:[%s6757 + $0xf8] sm:$0xff]
  %v6780 = vld [vmem:[%s6757 + $0x108] sm:$0xff]
  %v6781 = vld [vmem:[%s6757 + $0x110] sm:$0xff]
  %v6782 = vld [vmem:[%s6757 + $0x120] sm:$0xff]
  %v6783 = vld [vmem:[%s6757 + $0x128] sm:$0xff]
  %v6784 = vld [vmem:[%s6757 + $0x138] sm:$0xff]
  %v6785 = vld [vmem:[%s6757 + $0x140] sm:$0xff]
  %v6786 = vld [vmem:[%s6757 + $0x150] sm:$0xff]
  %v6787 = vld [vmem:[%s6757 + $0x158] sm:$0xff]
  %v6788 = vld [vmem:[%s6757 + $0x168] sm:$0xff]
  %v6789 = vld [vmem:[%s6757 + $0x170] sm:$0xff]
  %v6790 = vld [vmem:[%s6757 + $0x1b0] sm:$0xff]
  %v6791 = vld [vmem:[%s6757 + $0x1b8] sm:$0xff]
  %v6792 = vld [vmem:[%s6757 + $0x1c8] sm:$0xff]
  %v6793 = vld [vmem:[%s6757 + $0x1d0] sm:$0xff]
  %v6794 = vld [vmem:[%s6757 + $0x1e0] sm:$0xff]
  %v6795 = vld [vmem:[%s6757 + $0x1e8] sm:$0xff]
  %v6796 = vld [vmem:[%s6757 + $0x1f8] sm:$0xff]
  %v6797 = vld [vmem:[%s6757 + $0x200] sm:$0xff]
  %v6798 = vld [vmem:[%s6757 + $0x210] sm:$0xff]
  %v6799 = vld [vmem:[%s6757 + $0x218] sm:$0xff]
  %v6800 = vld [vmem:[%s6757 + $0x228] sm:$0xff]
  %v6801 = vld [vmem:[%s6757 + $0x230] sm:$0xff]
  %v6802 = vld [vmem:[%s6757 + $0x240] sm:$0xff]
  %v6803 = vld [vmem:[%s6757 + $0x248] sm:$0xff]
  %v6804 = vld [vmem:[%s6757 + $0x258] sm:$0xff]
  %v6805 = vld [vmem:[%s6757 + $0x260] sm:$0xff]
  %v6806 = vld [vmem:[%s6757 + $0x270] sm:$0xff]
  %v6807 = vld [vmem:[%s6757 + $0x278] sm:$0xff]
  %v6808 = vld [vmem:[%s6757 + $0x288] sm:$0xff]
  %v6809 = vld [vmem:[%s6757 + $0x290] sm:$0xff]
  %v6810 = vld [vmem:[%s6757 + $0x2a0] sm:$0xff]
  %v6811 = vld [vmem:[%s6757 + $0x2a8] sm:$0xff]
  %v6812 = vld [vmem:[%s6757 + $0x2b8] sm:$0xff]
  %v6813 = vld [vmem:[%s6757 + $0x2c0] sm:$0xff]
  %v6814 = vld [vmem:[%s6757 + $0x2d0] sm:$0xff]
  %v6815 = vld [vmem:[%s6757 + $0x2d8] sm:$0xff]
  %v6816 = vld [vmem:[%s6757 + $0x2e8] sm:$0xff]
  %v6817 = vld [vmem:[%s6757 + $0x2f0] sm:$0xff]
  %v6818 = vld [vmem:[%s6757 + $0x300] sm:$0xff]
  %v6819 = vld [vmem:[%s6757 + $0x308] sm:$0xff]
  %v6820 = vld [vmem:[%s6757 + $0x318] sm:$0xff]
  %v6821 = vld [vmem:[%s6757 + $0x320] sm:$0xff]
  %6886 = vrot.lane.b32.xlu0 %v6758, 48
  %v6887 = vpop.permute.xlu0 %6886
  %6888 = vrot.lane.b32.xlu0 %v6759, 48
  %v6889 = vpop.permute.xlu0 %6888
  %6890 = vrot.lane.b32.xlu0 %v6760, 48
  %v6891 = vpop.permute.xlu0 %6890
  %6892 = vrot.lane.b32.xlu0 %v6761, 48
  %v6893 = vpop.permute.xlu0 %6892
  %6894 = vrot.lane.b32.xlu0 %v6762, 48
  %v6895 = vpop.permute.xlu0 %6894
  %6896 = vrot.lane.b32.xlu0 %v6763, 48
  %v6897 = vpop.permute.xlu0 %6896
  %6898 = vrot.lane.b32.xlu0 %v6764, 48
  %v6899 = vpop.permute.xlu0 %6898
  %6900 = vrot.lane.b32.xlu0 %v6765, 48
  %v6901 = vpop.permute.xlu0 %6900
  %6902 = vrot.lane.b32.xlu0 %v6766, 48
  %v6903 = vpop.permute.xlu0 %6902
  %6904 = vrot.lane.b32.xlu0 %v6767, 48
  %v6905 = vpop.permute.xlu0 %6904
  %6906 = vrot.lane.b32.xlu0 %v6768, 48
  %v6907 = vpop.permute.xlu0 %6906
  %6908 = vrot.lane.b32.xlu0 %v6769, 48
  %v6909 = vpop.permute.xlu0 %6908
  %6910 = vrot.lane.b32.xlu0 %v6770, 48
  %v6911 = vpop.permute.xlu0 %6910
  %6912 = vrot.lane.b32.xlu0 %v6771, 48
  %v6913 = vpop.permute.xlu0 %6912
  %6914 = vrot.lane.b32.xlu0 %v6772, 48
  %v6915 = vpop.permute.xlu0 %6914
  %6916 = vrot.lane.b32.xlu0 %v6773, 48
  %v6917 = vpop.permute.xlu0 %6916
  %6918 = vrot.lane.b32.xlu0 %v6774, 48
  %v6919 = vpop.permute.xlu0 %6918
  %6920 = vrot.lane.b32.xlu0 %v6775, 48
  %v6921 = vpop.permute.xlu0 %6920
  %6922 = vrot.lane.b32.xlu0 %v6776, 48
  %v6923 = vpop.permute.xlu0 %6922
  %6924 = vrot.lane.b32.xlu0 %v6777, 48
  %v6925 = vpop.permute.xlu0 %6924
  %6926 = vrot.lane.b32.xlu0 %v6778, 48
  %v6927 = vpop.permute.xlu0 %6926
  %6928 = vrot.lane.b32.xlu0 %v6779, 48
  %v6929 = vpop.permute.xlu0 %6928
  %6930 = vrot.lane.b32.xlu0 %v6780, 48
  %v6931 = vpop.permute.xlu0 %6930
  %6932 = vrot.lane.b32.xlu0 %v6781, 48
  %v6933 = vpop.permute.xlu0 %6932
  %6934 = vrot.lane.b32.xlu0 %v6782, 48
  %v6935 = vpop.permute.xlu0 %6934
  %6936 = vrot.lane.b32.xlu0 %v6783, 48
  %v6937 = vpop.permute.xlu0 %6936
  %6938 = vrot.lane.b32.xlu0 %v6784, 48
  %v6939 = vpop.permute.xlu0 %6938
  %6940 = vrot.lane.b32.xlu0 %v6785, 48
  %v6941 = vpop.permute.xlu0 %6940
  %6942 = vrot.lane.b32.xlu0 %v6786, 48
  %v6943 = vpop.permute.xlu0 %6942
  %6944 = vrot.lane.b32.xlu0 %v6787, 48
  %v6945 = vpop.permute.xlu0 %6944
  %6946 = vrot.lane.b32.xlu0 %v6788, 48
  %v6947 = vpop.permute.xlu0 %6946
  %6948 = vrot.lane.b32.xlu0 %v6789, 48
  %v6949 = vpop.permute.xlu0 %6948
  %6950 = vrot.lane.b32.xlu0 %v6790, 48
  %v6951 = vpop.permute.xlu0 %6950
  %6952 = vrot.lane.b32.xlu0 %v6791, 48
  %v6953 = vpop.permute.xlu0 %6952
  %6954 = vrot.lane.b32.xlu0 %v6792, 48
  %v6955 = vpop.permute.xlu0 %6954
  %6956 = vrot.lane.b32.xlu0 %v6793, 48
  %v6957 = vpop.permute.xlu0 %6956
  %6958 = vrot.lane.b32.xlu0 %v6794, 48
  %v6959 = vpop.permute.xlu0 %6958
  %6960 = vrot.lane.b32.xlu0 %v6795, 48
  %v6961 = vpop.permute.xlu0 %6960
  %6962 = vrot.lane.b32.xlu0 %v6796, 48
  %v6963 = vpop.permute.xlu0 %6962
  %6964 = vrot.lane.b32.xlu0 %v6797, 48
  %v6965 = vpop.permute.xlu0 %6964
  %6966 = vrot.lane.b32.xlu0 %v6798, 48
  %v6967 = vpop.permute.xlu0 %6966
  %6968 = vrot.lane.b32.xlu0 %v6799, 48
  %v6969 = vpop.permute.xlu0 %6968
  %6970 = vrot.lane.b32.xlu0 %v6800, 48
  %v6971 = vpop.permute.xlu0 %6970
  %6972 = vrot.lane.b32.xlu0 %v6801, 48
  %v6973 = vpop.permute.xlu0 %6972
  %6974 = vrot.lane.b32.xlu0 %v6802, 48
  %v6975 = vpop.permute.xlu0 %6974
  %6976 = vrot.lane.b32.xlu0 %v6803, 48
  %v6977 = vpop.permute.xlu0 %6976
  %6978 = vrot.lane.b32.xlu0 %v6804, 48
  %v6979 = vpop.permute.xlu0 %6978
  %6980 = vrot.lane.b32.xlu0 %v6805, 48
  %v6981 = vpop.permute.xlu0 %6980
  %6982 = vrot.lane.b32.xlu0 %v6806, 48
  %v6983 = vpop.permute.xlu0 %6982
  %6984 = vrot.lane.b32.xlu0 %v6807, 48
  %v6985 = vpop.permute.xlu0 %6984
  %6986 = vrot.lane.b32.xlu0 %v6808, 48
  %v6987 = vpop.permute.xlu0 %6986
  %6988 = vrot.lane.b32.xlu0 %v6809, 48
  %v6989 = vpop.permute.xlu0 %6988
  %6990 = vrot.lane.b32.xlu0 %v6810, 48
  %v6991 = vpop.permute.xlu0 %6990
  %6992 = vrot.lane.b32.xlu0 %v6811, 48
  %v6993 = vpop.permute.xlu0 %6992
  %6994 = vrot.lane.b32.xlu0 %v6812, 48
  %v6995 = vpop.permute.xlu0 %6994
  %6996 = vrot.lane.b32.xlu0 %v6813, 48
  %v6997 = vpop.permute.xlu0 %6996
  %6998 = vrot.lane.b32.xlu0 %v6814, 48
  %v6999 = vpop.permute.xlu0 %6998
  %7000 = vrot.lane.b32.xlu0 %v6815, 48
  %v7001 = vpop.permute.xlu0 %7000
  %7002 = vrot.lane.b32.xlu0 %v6816, 48
  %v7003 = vpop.permute.xlu0 %7002
  %7004 = vrot.lane.b32.xlu0 %v6817, 48
  %v7005 = vpop.permute.xlu0 %7004
  %7006 = vrot.lane.b32.xlu0 %v6818, 48
  %v7007 = vpop.permute.xlu0 %7006
  %7008 = vrot.lane.b32.xlu0 %v6819, 48
  %v7009 = vpop.permute.xlu0 %7008
  %7010 = vrot.lane.b32.xlu0 %v6820, 48
  %v7011 = vpop.permute.xlu0 %7010
  %7012 = vrot.lane.b32.xlu0 %v6821, 48
  %v7013 = vpop.permute.xlu0 %7012
  %vm7078 = vcmask 458112
  %7079 = vst.msk [vmem:[#allocation5] sm:$0xff] %vm7078, %v6887
  %7080 = vst.msk [vmem:[#allocation5 + $0x8] sm:$0xff] %vm7078, %v6889
  %7081 = vst.msk [vmem:[#allocation5 + $0x10] sm:$0xff] %vm7078, %v6891
  %7082 = vst.msk [vmem:[#allocation5 + $0x18] sm:$0xff] %vm7078, %v6893
  %7083 = vst.msk [vmem:[#allocation5 + $0x20] sm:$0xff] %vm7078, %v6895
  %7084 = vst.msk [vmem:[#allocation5 + $0x28] sm:$0xff] %vm7078, %v6897
  %7085 = vst.msk [vmem:[#allocation5 + $0x30] sm:$0xff] %vm7078, %v6899
  %7086 = vst.msk [vmem:[#allocation5 + $0x38] sm:$0xff] %vm7078, %v6901
  %7087 = vst.msk [vmem:[#allocation5 + $0x40] sm:$0xff] %vm7078, %v6903
  %7088 = vst.msk [vmem:[#allocation5 + $0x48] sm:$0xff] %vm7078, %v6905
  %7089 = vst.msk [vmem:[#allocation5 + $0x50] sm:$0xff] %vm7078, %v6907
  %7090 = vst.msk [vmem:[#allocation5 + $0x58] sm:$0xff] %vm7078, %v6909
  %7091 = vst.msk [vmem:[#allocation5 + $0x60] sm:$0xff] %vm7078, %v6911
  %7092 = vst.msk [vmem:[#allocation5 + $0x68] sm:$0xff] %vm7078, %v6913
  %7093 = vst.msk [vmem:[#allocation5 + $0x70] sm:$0xff] %vm7078, %v6915
  %7094 = vst.msk [vmem:[#allocation5 + $0x78] sm:$0xff] %vm7078, %v6917
  %7095 = vst.msk [vmem:[#allocation5 + $0x80] sm:$0xff] %vm7078, %v6919
  %7096 = vst.msk [vmem:[#allocation5 + $0x88] sm:$0xff] %vm7078, %v6921
  %7097 = vst.msk [vmem:[#allocation5 + $0x90] sm:$0xff] %vm7078, %v6923
  %7098 = vst.msk [vmem:[#allocation5 + $0x98] sm:$0xff] %vm7078, %v6925
  %7099 = vst.msk [vmem:[#allocation5 + $0xa0] sm:$0xff] %vm7078, %v6927
  %7100 = vst.msk [vmem:[#allocation5 + $0xa8] sm:$0xff] %vm7078, %v6929
  %7101 = vst.msk [vmem:[#allocation5 + $0xb0] sm:$0xff] %vm7078, %v6931
  %7102 = vst.msk [vmem:[#allocation5 + $0xb8] sm:$0xff] %vm7078, %v6933
  %7103 = vst.msk [vmem:[#allocation5 + $0xc0] sm:$0xff] %vm7078, %v6935
  %7104 = vst.msk [vmem:[#allocation5 + $0xc8] sm:$0xff] %vm7078, %v6937
  %7105 = vst.msk [vmem:[#allocation5 + $0xd0] sm:$0xff] %vm7078, %v6939
  %7106 = vst.msk [vmem:[#allocation5 + $0xd8] sm:$0xff] %vm7078, %v6941
  %7107 = vst.msk [vmem:[#allocation5 + $0xe0] sm:$0xff] %vm7078, %v6943
  %7108 = vst.msk [vmem:[#allocation5 + $0xe8] sm:$0xff] %vm7078, %v6945
  %7109 = vst.msk [vmem:[#allocation5 + $0xf0] sm:$0xff] %vm7078, %v6947
  %7110 = vst.msk [vmem:[#allocation5 + $0xf8] sm:$0xff] %vm7078, %v6949
  %7111 = vst.msk [vmem:[#allocation5 + $0x100] sm:$0xff] %vm7078, %v6951
  %7112 = vst.msk [vmem:[#allocation5 + $0x108] sm:$0xff] %vm7078, %v6953
  %7113 = vst.msk [vmem:[#allocation5 + $0x110] sm:$0xff] %vm7078, %v6955
  %7114 = vst.msk [vmem:[#allocation5 + $0x118] sm:$0xff] %vm7078, %v6957
  %7115 = vst.msk [vmem:[#allocation5 + $0x120] sm:$0xff] %vm7078, %v6959
  %7116 = vst.msk [vmem:[#allocation5 + $0x128] sm:$0xff] %vm7078, %v6961
  %7117 = vst.msk [vmem:[#allocation5 + $0x130] sm:$0xff] %vm7078, %v6963
  %7118 = vst.msk [vmem:[#allocation5 + $0x138] sm:$0xff] %vm7078, %v6965
  %7119 = vst.msk [vmem:[#allocation5 + $0x140] sm:$0xff] %vm7078, %v6967
  %7120 = vst.msk [vmem:[#allocation5 + $0x148] sm:$0xff] %vm7078, %v6969
  %7121 = vst.msk [vmem:[#allocation5 + $0x150] sm:$0xff] %vm7078, %v6971
  %7122 = vst.msk [vmem:[#allocation5 + $0x158] sm:$0xff] %vm7078, %v6973
  %7123 = vst.msk [vmem:[#allocation5 + $0x160] sm:$0xff] %vm7078, %v6975
  %7124 = vst.msk [vmem:[#allocation5 + $0x168] sm:$0xff] %vm7078, %v6977
  %7125 = vst.msk [vmem:[#allocation5 + $0x170] sm:$0xff] %vm7078, %v6979
  %7126 = vst.msk [vmem:[#allocation5 + $0x178] sm:$0xff] %vm7078, %v6981
  %7127 = vst.msk [vmem:[#allocation5 + $0x180] sm:$0xff] %vm7078, %v6983
  %7128 = vst.msk [vmem:[#allocation5 + $0x188] sm:$0xff] %vm7078, %v6985
  %7129 = vst.msk [vmem:[#allocation5 + $0x190] sm:$0xff] %vm7078, %v6987
  %7130 = vst.msk [vmem:[#allocation5 + $0x198] sm:$0xff] %vm7078, %v6989
  %7131 = vst.msk [vmem:[#allocation5 + $0x1a0] sm:$0xff] %vm7078, %v6991
  %7132 = vst.msk [vmem:[#allocation5 + $0x1a8] sm:$0xff] %vm7078, %v6993
  %7133 = vst.msk [vmem:[#allocation5 + $0x1b0] sm:$0xff] %vm7078, %v6995
  %7134 = vst.msk [vmem:[#allocation5 + $0x1b8] sm:$0xff] %vm7078, %v6997
  %7135 = vst.msk [vmem:[#allocation5 + $0x1c0] sm:$0xff] %vm7078, %v6999
  %7136 = vst.msk [vmem:[#allocation5 + $0x1c8] sm:$0xff] %vm7078, %v7001
  %7137 = vst.msk [vmem:[#allocation5 + $0x1d0] sm:$0xff] %vm7078, %v7003
  %7138 = vst.msk [vmem:[#allocation5 + $0x1d8] sm:$0xff] %vm7078, %v7005
  %7139 = vst.msk [vmem:[#allocation5 + $0x1e0] sm:$0xff] %vm7078, %v7007
  %7140 = vst.msk [vmem:[#allocation5 + $0x1e8] sm:$0xff] %vm7078, %v7009
  %7141 = vst.msk [vmem:[#allocation5 + $0x1f0] sm:$0xff] %vm7078, %v7011
  %7142 = vst.msk [vmem:[#allocation5 + $0x1f8] sm:$0xff] %vm7078, %v7013
  %v7143 = vld [vmem:[%s6757 + $0x1] sm:$0xff]
  %v7144 = vld [vmem:[%s6757 + $0x9] sm:$0xff]
  %v7145 = vld [vmem:[%s6757 + $0x19] sm:$0xff]
  %v7146 = vld [vmem:[%s6757 + $0x21] sm:$0xff]
  %v7147 = vld [vmem:[%s6757 + $0x31] sm:$0xff]
  %v7148 = vld [vmem:[%s6757 + $0x39] sm:$0xff]
  %v7149 = vld [vmem:[%s6757 + $0x49] sm:$0xff]
  %v7150 = vld [vmem:[%s6757 + $0x51] sm:$0xff]
  %v7151 = vld [vmem:[%s6757 + $0x61] sm:$0xff]
  %v7152 = vld [vmem:[%s6757 + $0x69] sm:$0xff]
  %v7153 = vld [vmem:[%s6757 + $0x79] sm:$0xff]
  %v7154 = vld [vmem:[%s6757 + $0x81] sm:$0xff]
  %v7155 = vld [vmem:[%s6757 + $0x91] sm:$0xff]
  %v7156 = vld [vmem:[%s6757 + $0x99] sm:$0xff]
  %v7157 = vld [vmem:[%s6757 + $0xa9] sm:$0xff]
  %v7158 = vld [vmem:[%s6757 + $0xb1] sm:$0xff]
  %v7159 = vld [vmem:[%s6757 + $0xc1] sm:$0xff]
  %v7160 = vld [vmem:[%s6757 + $0xc9] sm:$0xff]
  %v7161 = vld [vmem:[%s6757 + $0xd9] sm:$0xff]
  %v7162 = vld [vmem:[%s6757 + $0xe1] sm:$0xff]
  %v7163 = vld [vmem:[%s6757 + $0xf1] sm:$0xff]
  %v7164 = vld [vmem:[%s6757 + $0xf9] sm:$0xff]
  %v7165 = vld [vmem:[%s6757 + $0x109] sm:$0xff]
  %v7166 = vld [vmem:[%s6757 + $0x111] sm:$0xff]
  %v7167 = vld [vmem:[%s6757 + $0x121] sm:$0xff]
  %v7168 = vld [vmem:[%s6757 + $0x129] sm:$0xff]
  %v7169 = vld [vmem:[%s6757 + $0x139] sm:$0xff]
  %v7170 = vld [vmem:[%s6757 + $0x141] sm:$0xff]
  %v7171 = vld [vmem:[%s6757 + $0x151] sm:$0xff]
  %v7172 = vld [vmem:[%s6757 + $0x159] sm:$0xff]
  %v7173 = vld [vmem:[%s6757 + $0x169] sm:$0xff]
  %v7174 = vld [vmem:[%s6757 + $0x171] sm:$0xff]
  %v7175 = vld [vmem:[%s6757 + $0x1b1] sm:$0xff]
  %v7176 = vld [vmem:[%s6757 + $0x1b9] sm:$0xff]
  %v7177 = vld [vmem:[%s6757 + $0x1c9] sm:$0xff]
  %v7178 = vld [vmem:[%s6757 + $0x1d1] sm:$0xff]
  %v7179 = vld [vmem:[%s6757 + $0x1e1] sm:$0xff]
  %v7180 = vld [vmem:[%s6757 + $0x1e9] sm:$0xff]
  %v7181 = vld [vmem:[%s6757 + $0x1f9] sm:$0xff]
  %v7182 = vld [vmem:[%s6757 + $0x201] sm:$0xff]
  %v7183 = vld [vmem:[%s6757 + $0x211] sm:$0xff]
  %v7184 = vld [vmem:[%s6757 + $0x219] sm:$0xff]
  %v7185 = vld [vmem:[%s6757 + $0x229] sm:$0xff]
  %v7186 = vld [vmem:[%s6757 + $0x231] sm:$0xff]
  %v7187 = vld [vmem:[%s6757 + $0x241] sm:$0xff]
  %v7188 = vld [vmem:[%s6757 + $0x249] sm:$0xff]
  %v7189 = vld [vmem:[%s6757 + $0x259] sm:$0xff]
  %v7190 = vld [vmem:[%s6757 + $0x261] sm:$0xff]
  %v7191 = vld [vmem:[%s6757 + $0x271] sm:$0xff]
  %v7192 = vld [vmem:[%s6757 + $0x279] sm:$0xff]
  %v7193 = vld [vmem:[%s6757 + $0x289] sm:$0xff]
  %v7194 = vld [vmem:[%s6757 + $0x291] sm:$0xff]
  %v7195 = vld [vmem:[%s6757 + $0x2a1] sm:$0xff]
  %v7196 = vld [vmem:[%s6757 + $0x2a9] sm:$0xff]
  %v7197 = vld [vmem:[%s6757 + $0x2b9] sm:$0xff]
  %v7198 = vld [vmem:[%s6757 + $0x2c1] sm:$0xff]
  %v7199 = vld [vmem:[%s6757 + $0x2d1] sm:$0xff]
  %v7200 = vld [vmem:[%s6757 + $0x2d9] sm:$0xff]
  %v7201 = vld [vmem:[%s6757 + $0x2e9] sm:$0xff]
  %v7202 = vld [vmem:[%s6757 + $0x2f1] sm:$0xff]
  %v7203 = vld [vmem:[%s6757 + $0x301] sm:$0xff]
  %v7204 = vld [vmem:[%s6757 + $0x309] sm:$0xff]
  %v7205 = vld [vmem:[%s6757 + $0x319] sm:$0xff]
  %v7206 = vld [vmem:[%s6757 + $0x321] sm:$0xff]
  %7271 = vrot.lane.b32.xlu0 %v7143, 56
  %v7272 = vpop.permute.xlu0 %7271
  %7273 = vrot.lane.b32.xlu0 %v7144, 56
  %v7274 = vpop.permute.xlu0 %7273
  %7275 = vrot.lane.b32.xlu0 %v7145, 56
  %v7276 = vpop.permute.xlu0 %7275
  %7277 = vrot.lane.b32.xlu0 %v7146, 56
  %v7278 = vpop.permute.xlu0 %7277
  %7279 = vrot.lane.b32.xlu0 %v7147, 56
  %v7280 = vpop.permute.xlu0 %7279
  %7281 = vrot.lane.b32.xlu0 %v7148, 56
  %v7282 = vpop.permute.xlu0 %7281
  %7283 = vrot.lane.b32.xlu0 %v7149, 56
  %v7284 = vpop.permute.xlu0 %7283
  %7285 = vrot.lane.b32.xlu0 %v7150, 56
  %v7286 = vpop.permute.xlu0 %7285
  %7287 = vrot.lane.b32.xlu0 %v7151, 56
  %v7288 = vpop.permute.xlu0 %7287
  %7289 = vrot.lane.b32.xlu0 %v7152, 56
  %v7290 = vpop.permute.xlu0 %7289
  %7291 = vrot.lane.b32.xlu0 %v7153, 56
  %v7292 = vpop.permute.xlu0 %7291
  %7293 = vrot.lane.b32.xlu0 %v7154, 56
  %v7294 = vpop.permute.xlu0 %7293
  %7295 = vrot.lane.b32.xlu0 %v7155, 56
  %v7296 = vpop.permute.xlu0 %7295
  %7297 = vrot.lane.b32.xlu0 %v7156, 56
  %v7298 = vpop.permute.xlu0 %7297
  %7299 = vrot.lane.b32.xlu0 %v7157, 56
  %v7300 = vpop.permute.xlu0 %7299
  %7301 = vrot.lane.b32.xlu0 %v7158, 56
  %v7302 = vpop.permute.xlu0 %7301
  %7303 = vrot.lane.b32.xlu0 %v7159, 56
  %v7304 = vpop.permute.xlu0 %7303
  %7305 = vrot.lane.b32.xlu0 %v7160, 56
  %v7306 = vpop.permute.xlu0 %7305
  %7307 = vrot.lane.b32.xlu0 %v7161, 56
  %v7308 = vpop.permute.xlu0 %7307
  %7309 = vrot.lane.b32.xlu0 %v7162, 56
  %v7310 = vpop.permute.xlu0 %7309
  %7311 = vrot.lane.b32.xlu0 %v7163, 56
  %v7312 = vpop.permute.xlu0 %7311
  %7313 = vrot.lane.b32.xlu0 %v7164, 56
  %v7314 = vpop.permute.xlu0 %7313
  %7315 = vrot.lane.b32.xlu0 %v7165, 56
  %v7316 = vpop.permute.xlu0 %7315
  %7317 = vrot.lane.b32.xlu0 %v7166, 56
  %v7318 = vpop.permute.xlu0 %7317
  %7319 = vrot.lane.b32.xlu0 %v7167, 56
  %v7320 = vpop.permute.xlu0 %7319
  %7321 = vrot.lane.b32.xlu0 %v7168, 56
  %v7322 = vpop.permute.xlu0 %7321
  %7323 = vrot.lane.b32.xlu0 %v7169, 56
  %v7324 = vpop.permute.xlu0 %7323
  %7325 = vrot.lane.b32.xlu0 %v7170, 56
  %v7326 = vpop.permute.xlu0 %7325
  %7327 = vrot.lane.b32.xlu0 %v7171, 56
  %v7328 = vpop.permute.xlu0 %7327
  %7329 = vrot.lane.b32.xlu0 %v7172, 56
  %v7330 = vpop.permute.xlu0 %7329
  %7331 = vrot.lane.b32.xlu0 %v7173, 56
  %v7332 = vpop.permute.xlu0 %7331
  %7333 = vrot.lane.b32.xlu0 %v7174, 56
  %v7334 = vpop.permute.xlu0 %7333
  %7335 = vrot.lane.b32.xlu0 %v7175, 56
  %v7336 = vpop.permute.xlu0 %7335
  %7337 = vrot.lane.b32.xlu0 %v7176, 56
  %v7338 = vpop.permute.xlu0 %7337
  %7339 = vrot.lane.b32.xlu0 %v7177, 56
  %v7340 = vpop.permute.xlu0 %7339
  %7341 = vrot.lane.b32.xlu0 %v7178, 56
  %v7342 = vpop.permute.xlu0 %7341
  %7343 = vrot.lane.b32.xlu0 %v7179, 56
  %v7344 = vpop.permute.xlu0 %7343
  %7345 = vrot.lane.b32.xlu0 %v7180, 56
  %v7346 = vpop.permute.xlu0 %7345
  %7347 = vrot.lane.b32.xlu0 %v7181, 56
  %v7348 = vpop.permute.xlu0 %7347
  %7349 = vrot.lane.b32.xlu0 %v7182, 56
  %v7350 = vpop.permute.xlu0 %7349
  %7351 = vrot.lane.b32.xlu0 %v7183, 56
  %v7352 = vpop.permute.xlu0 %7351
  %7353 = vrot.lane.b32.xlu0 %v7184, 56
  %v7354 = vpop.permute.xlu0 %7353
  %7355 = vrot.lane.b32.xlu0 %v7185, 56
  %v7356 = vpop.permute.xlu0 %7355
  %7357 = vrot.lane.b32.xlu0 %v7186, 56
  %v7358 = vpop.permute.xlu0 %7357
  %7359 = vrot.lane.b32.xlu0 %v7187, 56
  %v7360 = vpop.permute.xlu0 %7359
  %7361 = vrot.lane.b32.xlu0 %v7188, 56
  %v7362 = vpop.permute.xlu0 %7361
  %7363 = vrot.lane.b32.xlu0 %v7189, 56
  %v7364 = vpop.permute.xlu0 %7363
  %7365 = vrot.lane.b32.xlu0 %v7190, 56
  %v7366 = vpop.permute.xlu0 %7365
  %7367 = vrot.lane.b32.xlu0 %v7191, 56
  %v7368 = vpop.permute.xlu0 %7367
  %7369 = vrot.lane.b32.xlu0 %v7192, 56
  %v7370 = vpop.permute.xlu0 %7369
  %7371 = vrot.lane.b32.xlu0 %v7193, 56
  %v7372 = vpop.permute.xlu0 %7371
  %7373 = vrot.lane.b32.xlu0 %v7194, 56
  %v7374 = vpop.permute.xlu0 %7373
  %7375 = vrot.lane.b32.xlu0 %v7195, 56
  %v7376 = vpop.permute.xlu0 %7375
  %7377 = vrot.lane.b32.xlu0 %v7196, 56
  %v7378 = vpop.permute.xlu0 %7377
  %7379 = vrot.lane.b32.xlu0 %v7197, 56
  %v7380 = vpop.permute.xlu0 %7379
  %7381 = vrot.lane.b32.xlu0 %v7198, 56
  %v7382 = vpop.permute.xlu0 %7381
  %7383 = vrot.lane.b32.xlu0 %v7199, 56
  %v7384 = vpop.permute.xlu0 %7383
  %7385 = vrot.lane.b32.xlu0 %v7200, 56
  %v7386 = vpop.permute.xlu0 %7385
  %7387 = vrot.lane.b32.xlu0 %v7201, 56
  %v7388 = vpop.permute.xlu0 %7387
  %7389 = vrot.lane.b32.xlu0 %v7202, 56
  %v7390 = vpop.permute.xlu0 %7389
  %7391 = vrot.lane.b32.xlu0 %v7203, 56
  %v7392 = vpop.permute.xlu0 %7391
  %7393 = vrot.lane.b32.xlu0 %v7204, 56
  %v7394 = vpop.permute.xlu0 %7393
  %7395 = vrot.lane.b32.xlu0 %v7205, 56
  %v7396 = vpop.permute.xlu0 %7395
  %7397 = vrot.lane.b32.xlu0 %v7206, 56
  %v7398 = vpop.permute.xlu0 %7397
  %vm7463 = vcmask 523712
  %7464 = vst.msk [vmem:[#allocation5] sm:$0xff] %vm7463, %v7272
  %7465 = vst.msk [vmem:[#allocation5 + $0x8] sm:$0xff] %vm7463, %v7274
  %7466 = vst.msk [vmem:[#allocation5 + $0x10] sm:$0xff] %vm7463, %v7276
  %7467 = vst.msk [vmem:[#allocation5 + $0x18] sm:$0xff] %vm7463, %v7278
  %7468 = vst.msk [vmem:[#allocation5 + $0x20] sm:$0xff] %vm7463, %v7280
  %7469 = vst.msk [vmem:[#allocation5 + $0x28] sm:$0xff] %vm7463, %v7282
  %7470 = vst.msk [vmem:[#allocation5 + $0x30] sm:$0xff] %vm7463, %v7284
  %7471 = vst.msk [vmem:[#allocation5 + $0x38] sm:$0xff] %vm7463, %v7286
  %7472 = vst.msk [vmem:[#allocation5 + $0x40] sm:$0xff] %vm7463, %v7288
  %7473 = vst.msk [vmem:[#allocation5 + $0x48] sm:$0xff] %vm7463, %v7290
  %7474 = vst.msk [vmem:[#allocation5 + $0x50] sm:$0xff] %vm7463, %v7292
  %7475 = vst.msk [vmem:[#allocation5 + $0x58] sm:$0xff] %vm7463, %v7294
  %7476 = vst.msk [vmem:[#allocation5 + $0x60] sm:$0xff] %vm7463, %v7296
  %7477 = vst.msk [vmem:[#allocation5 + $0x68] sm:$0xff] %vm7463, %v7298
  %7478 = vst.msk [vmem:[#allocation5 + $0x70] sm:$0xff] %vm7463, %v7300
  %7479 = vst.msk [vmem:[#allocation5 + $0x78] sm:$0xff] %vm7463, %v7302
  %7480 = vst.msk [vmem:[#allocation5 + $0x80] sm:$0xff] %vm7463, %v7304
  %7481 = vst.msk [vmem:[#allocation5 + $0x88] sm:$0xff] %vm7463, %v7306
  %7482 = vst.msk [vmem:[#allocation5 + $0x90] sm:$0xff] %vm7463, %v7308
  %7483 = vst.msk [vmem:[#allocation5 + $0x98] sm:$0xff] %vm7463, %v7310
  %7484 = vst.msk [vmem:[#allocation5 + $0xa0] sm:$0xff] %vm7463, %v7312
  %7485 = vst.msk [vmem:[#allocation5 + $0xa8] sm:$0xff] %vm7463, %v7314
  %7486 = vst.msk [vmem:[#allocation5 + $0xb0] sm:$0xff] %vm7463, %v7316
  %7487 = vst.msk [vmem:[#allocation5 + $0xb8] sm:$0xff] %vm7463, %v7318
  %7488 = vst.msk [vmem:[#allocation5 + $0xc0] sm:$0xff] %vm7463, %v7320
  %7489 = vst.msk [vmem:[#allocation5 + $0xc8] sm:$0xff] %vm7463, %v7322
  %7490 = vst.msk [vmem:[#allocation5 + $0xd0] sm:$0xff] %vm7463, %v7324
  %7491 = vst.msk [vmem:[#allocation5 + $0xd8] sm:$0xff] %vm7463, %v7326
  %7492 = vst.msk [vmem:[#allocation5 + $0xe0] sm:$0xff] %vm7463, %v7328
  %7493 = vst.msk [vmem:[#allocation5 + $0xe8] sm:$0xff] %vm7463, %v7330
  %7494 = vst.msk [vmem:[#allocation5 + $0xf0] sm:$0xff] %vm7463, %v7332
  %7495 = vst.msk [vmem:[#allocation5 + $0xf8] sm:$0xff] %vm7463, %v7334
  %7496 = vst.msk [vmem:[#allocation5 + $0x100] sm:$0xff] %vm7463, %v7336
  %7497 = vst.msk [vmem:[#allocation5 + $0x108] sm:$0xff] %vm7463, %v7338
  %7498 = vst.msk [vmem:[#allocation5 + $0x110] sm:$0xff] %vm7463, %v7340
  %7499 = vst.msk [vmem:[#allocation5 + $0x118] sm:$0xff] %vm7463, %v7342
  %7500 = vst.msk [vmem:[#allocation5 + $0x120] sm:$0xff] %vm7463, %v7344
  %7501 = vst.msk [vmem:[#allocation5 + $0x128] sm:$0xff] %vm7463, %v7346
  %7502 = vst.msk [vmem:[#allocation5 + $0x130] sm:$0xff] %vm7463, %v7348
  %7503 = vst.msk [vmem:[#allocation5 + $0x138] sm:$0xff] %vm7463, %v7350
  %7504 = vst.msk [vmem:[#allocation5 + $0x140] sm:$0xff] %vm7463, %v7352
  %7505 = vst.msk [vmem:[#allocation5 + $0x148] sm:$0xff] %vm7463, %v7354
  %7506 = vst.msk [vmem:[#allocation5 + $0x150] sm:$0xff] %vm7463, %v7356
  %7507 = vst.msk [vmem:[#allocation5 + $0x158] sm:$0xff] %vm7463, %v7358
  %7508 = vst.msk [vmem:[#allocation5 + $0x160] sm:$0xff] %vm7463, %v7360
  %7509 = vst.msk [vmem:[#allocation5 + $0x168] sm:$0xff] %vm7463, %v7362
  %7510 = vst.msk [vmem:[#allocation5 + $0x170] sm:$0xff] %vm7463, %v7364
  %7511 = vst.msk [vmem:[#allocation5 + $0x178] sm:$0xff] %vm7463, %v7366
  %7512 = vst.msk [vmem:[#allocation5 + $0x180] sm:$0xff] %vm7463, %v7368
  %7513 = vst.msk [vmem:[#allocation5 + $0x188] sm:$0xff] %vm7463, %v7370
  %7514 = vst.msk [vmem:[#allocation5 + $0x190] sm:$0xff] %vm7463, %v7372
  %7515 = vst.msk [vmem:[#allocation5 + $0x198] sm:$0xff] %vm7463, %v7374
  %7516 = vst.msk [vmem:[#allocation5 + $0x1a0] sm:$0xff] %vm7463, %v7376
  %7517 = vst.msk [vmem:[#allocation5 + $0x1a8] sm:$0xff] %vm7463, %v7378
  %7518 = vst.msk [vmem:[#allocation5 + $0x1b0] sm:$0xff] %vm7463, %v7380
  %7519 = vst.msk [vmem:[#allocation5 + $0x1b8] sm:$0xff] %vm7463, %v7382
  %7520 = vst.msk [vmem:[#allocation5 + $0x1c0] sm:$0xff] %vm7463, %v7384
  %7521 = vst.msk [vmem:[#allocation5 + $0x1c8] sm:$0xff] %vm7463, %v7386
  %7522 = vst.msk [vmem:[#allocation5 + $0x1d0] sm:$0xff] %vm7463, %v7388
  %7523 = vst.msk [vmem:[#allocation5 + $0x1d8] sm:$0xff] %vm7463, %v7390
  %7524 = vst.msk [vmem:[#allocation5 + $0x1e0] sm:$0xff] %vm7463, %v7392
  %7525 = vst.msk [vmem:[#allocation5 + $0x1e8] sm:$0xff] %vm7463, %v7394
  %7526 = vst.msk [vmem:[#allocation5 + $0x1f0] sm:$0xff] %vm7463, %v7396
  %7527 = vst.msk [vmem:[#allocation5 + $0x1f8] sm:$0xff] %vm7463, %v7398
  %v7528 = vld [vmem:[%s6757 + $0x2] sm:$0xff]
  %v7529 = vld [vmem:[%s6757 + $0xa] sm:$0xff]
  %v7530 = vld [vmem:[%s6757 + $0x1a] sm:$0xff]
  %v7531 = vld [vmem:[%s6757 + $0x22] sm:$0xff]
  %v7532 = vld [vmem:[%s6757 + $0x32] sm:$0xff]
  %v7533 = vld [vmem:[%s6757 + $0x3a] sm:$0xff]
  %v7534 = vld [vmem:[%s6757 + $0x4a] sm:$0xff]
  %v7535 = vld [vmem:[%s6757 + $0x52] sm:$0xff]
  %v7536 = vld [vmem:[%s6757 + $0x62] sm:$0xff]
  %v7537 = vld [vmem:[%s6757 + $0x6a] sm:$0xff]
  %v7538 = vld [vmem:[%s6757 + $0x7a] sm:$0xff]
  %v7539 = vld [vmem:[%s6757 + $0x82] sm:$0xff]
  %v7540 = vld [vmem:[%s6757 + $0x92] sm:$0xff]
  %v7541 = vld [vmem:[%s6757 + $0x9a] sm:$0xff]
  %v7542 = vld [vmem:[%s6757 + $0xaa] sm:$0xff]
  %v7543 = vld [vmem:[%s6757 + $0xb2] sm:$0xff]
  %v7544 = vld [vmem:[%s6757 + $0xc2] sm:$0xff]
  %v7545 = vld [vmem:[%s6757 + $0xca] sm:$0xff]
  %v7546 = vld [vmem:[%s6757 + $0xda] sm:$0xff]
  %v7547 = vld [vmem:[%s6757 + $0xe2] sm:$0xff]
  %v7548 = vld [vmem:[%s6757 + $0xf2] sm:$0xff]
  %v7549 = vld [vmem:[%s6757 + $0xfa] sm:$0xff]
  %v7550 = vld [vmem:[%s6757 + $0x10a] sm:$0xff]
  %v7551 = vld [vmem:[%s6757 + $0x112] sm:$0xff]
  %v7552 = vld [vmem:[%s6757 + $0x122] sm:$0xff]
  %v7553 = vld [vmem:[%s6757 + $0x12a] sm:$0xff]
  %v7554 = vld [vmem:[%s6757 + $0x13a] sm:$0xff]
  %v7555 = vld [vmem:[%s6757 + $0x142] sm:$0xff]
  %v7556 = vld [vmem:[%s6757 + $0x152] sm:$0xff]
  %v7557 = vld [vmem:[%s6757 + $0x15a] sm:$0xff]
  %v7558 = vld [vmem:[%s6757 + $0x16a] sm:$0xff]
  %v7559 = vld [vmem:[%s6757 + $0x172] sm:$0xff]
  %v7560 = vld [vmem:[%s6757 + $0x1b2] sm:$0xff]
  %v7561 = vld [vmem:[%s6757 + $0x1ba] sm:$0xff]
  %v7562 = vld [vmem:[%s6757 + $0x1ca] sm:$0xff]
  %v7563 = vld [vmem:[%s6757 + $0x1d2] sm:$0xff]
  %v7564 = vld [vmem:[%s6757 + $0x1e2] sm:$0xff]
  %v7565 = vld [vmem:[%s6757 + $0x1ea] sm:$0xff]
  %v7566 = vld [vmem:[%s6757 + $0x1fa] sm:$0xff]
  %v7567 = vld [vmem:[%s6757 + $0x202] sm:$0xff]
  %v7568 = vld [vmem:[%s6757 + $0x212] sm:$0xff]
  %v7569 = vld [vmem:[%s6757 + $0x21a] sm:$0xff]
  %v7570 = vld [vmem:[%s6757 + $0x22a] sm:$0xff]
  %v7571 = vld [vmem:[%s6757 + $0x232] sm:$0xff]
  %v7572 = vld [vmem:[%s6757 + $0x242] sm:$0xff]
  %v7573 = vld [vmem:[%s6757 + $0x24a] sm:$0xff]
  %v7574 = vld [vmem:[%s6757 + $0x25a] sm:$0xff]
  %v7575 = vld [vmem:[%s6757 + $0x262] sm:$0xff]
  %v7576 = vld [vmem:[%s6757 + $0x272] sm:$0xff]
  %v7577 = vld [vmem:[%s6757 + $0x27a] sm:$0xff]
  %v7578 = vld [vmem:[%s6757 + $0x28a] sm:$0xff]
  %v7579 = vld [vmem:[%s6757 + $0x292] sm:$0xff]
  %v7580 = vld [vmem:[%s6757 + $0x2a2] sm:$0xff]
  %v7581 = vld [vmem:[%s6757 + $0x2aa] sm:$0xff]
  %v7582 = vld [vmem:[%s6757 + $0x2ba] sm:$0xff]
  %v7583 = vld [vmem:[%s6757 + $0x2c2] sm:$0xff]
  %v7584 = vld [vmem:[%s6757 + $0x2d2] sm:$0xff]
  %v7585 = vld [vmem:[%s6757 + $0x2da] sm:$0xff]
  %v7586 = vld [vmem:[%s6757 + $0x2ea] sm:$0xff]
  %v7587 = vld [vmem:[%s6757 + $0x2f2] sm:$0xff]
  %v7588 = vld [vmem:[%s6757 + $0x302] sm:$0xff]
  %v7589 = vld [vmem:[%s6757 + $0x30a] sm:$0xff]
  %v7590 = vld [vmem:[%s6757 + $0x31a] sm:$0xff]
  %v7591 = vld [vmem:[%s6757 + $0x322] sm:$0xff]
  %7656 = vrot.lane.b32.xlu0 %v7528, 64
  %v7657 = vpop.permute.xlu0 %7656
  %7658 = vrot.lane.b32.xlu0 %v7529, 64
  %v7659 = vpop.permute.xlu0 %7658
  %7660 = vrot.lane.b32.xlu0 %v7530, 64
  %v7661 = vpop.permute.xlu0 %7660
  %7662 = vrot.lane.b32.xlu0 %v7531, 64
  %v7663 = vpop.permute.xlu0 %7662
  %7664 = vrot.lane.b32.xlu0 %v7532, 64
  %v7665 = vpop.permute.xlu0 %7664
  %7666 = vrot.lane.b32.xlu0 %v7533, 64
  %v7667 = vpop.permute.xlu0 %7666
  %7668 = vrot.lane.b32.xlu0 %v7534, 64
  %v7669 = vpop.permute.xlu0 %7668
  %7670 = vrot.lane.b32.xlu0 %v7535, 64
  %v7671 = vpop.permute.xlu0 %7670
  %7672 = vrot.lane.b32.xlu0 %v7536, 64
  %v7673 = vpop.permute.xlu0 %7672
  %7674 = vrot.lane.b32.xlu0 %v7537, 64
  %v7675 = vpop.permute.xlu0 %7674
  %7676 = vrot.lane.b32.xlu0 %v7538, 64
  %v7677 = vpop.permute.xlu0 %7676
  %7678 = vrot.lane.b32.xlu0 %v7539, 64
  %v7679 = vpop.permute.xlu0 %7678
  %7680 = vrot.lane.b32.xlu0 %v7540, 64
  %v7681 = vpop.permute.xlu0 %7680
  %7682 = vrot.lane.b32.xlu0 %v7541, 64
  %v7683 = vpop.permute.xlu0 %7682
  %7684 = vrot.lane.b32.xlu0 %v7542, 64
  %v7685 = vpop.permute.xlu0 %7684
  %7686 = vrot.lane.b32.xlu0 %v7543, 64
  %v7687 = vpop.permute.xlu0 %7686
  %7688 = vrot.lane.b32.xlu0 %v7544, 64
  %v7689 = vpop.permute.xlu0 %7688
  %7690 = vrot.lane.b32.xlu0 %v7545, 64
  %v7691 = vpop.permute.xlu0 %7690
  %7692 = vrot.lane.b32.xlu0 %v7546, 64
  %v7693 = vpop.permute.xlu0 %7692
  %7694 = vrot.lane.b32.xlu0 %v7547, 64
  %v7695 = vpop.permute.xlu0 %7694
  %7696 = vrot.lane.b32.xlu0 %v7548, 64
  %v7697 = vpop.permute.xlu0 %7696
  %7698 = vrot.lane.b32.xlu0 %v7549, 64
  %v7699 = vpop.permute.xlu0 %7698
  %7700 = vrot.lane.b32.xlu0 %v7550, 64
  %v7701 = vpop.permute.xlu0 %7700
  %7702 = vrot.lane.b32.xlu0 %v7551, 64
  %v7703 = vpop.permute.xlu0 %7702
  %7704 = vrot.lane.b32.xlu0 %v7552, 64
  %v7705 = vpop.permute.xlu0 %7704
  %7706 = vrot.lane.b32.xlu0 %v7553, 64
  %v7707 = vpop.permute.xlu0 %7706
  %7708 = vrot.lane.b32.xlu0 %v7554, 64
  %v7709 = vpop.permute.xlu0 %7708
  %7710 = vrot.lane.b32.xlu0 %v7555, 64
  %v7711 = vpop.permute.xlu0 %7710
  %7712 = vrot.lane.b32.xlu0 %v7556, 64
  %v7713 = vpop.permute.xlu0 %7712
  %7714 = vrot.lane.b32.xlu0 %v7557, 64
  %v7715 = vpop.permute.xlu0 %7714
  %7716 = vrot.lane.b32.xlu0 %v7558, 64
  %v7717 = vpop.permute.xlu0 %7716
  %7718 = vrot.lane.b32.xlu0 %v7559, 64
  %v7719 = vpop.permute.xlu0 %7718
  %7720 = vrot.lane.b32.xlu0 %v7560, 64
  %v7721 = vpop.permute.xlu0 %7720
  %7722 = vrot.lane.b32.xlu0 %v7561, 64
  %v7723 = vpop.permute.xlu0 %7722
  %7724 = vrot.lane.b32.xlu0 %v7562, 64
  %v7725 = vpop.permute.xlu0 %7724
  %7726 = vrot.lane.b32.xlu0 %v7563, 64
  %v7727 = vpop.permute.xlu0 %7726
  %7728 = vrot.lane.b32.xlu0 %v7564, 64
  %v7729 = vpop.permute.xlu0 %7728
  %7730 = vrot.lane.b32.xlu0 %v7565, 64
  %v7731 = vpop.permute.xlu0 %7730
  %7732 = vrot.lane.b32.xlu0 %v7566, 64
  %v7733 = vpop.permute.xlu0 %7732
  %7734 = vrot.lane.b32.xlu0 %v7567, 64
  %v7735 = vpop.permute.xlu0 %7734
  %7736 = vrot.lane.b32.xlu0 %v7568, 64
  %v7737 = vpop.permute.xlu0 %7736
  %7738 = vrot.lane.b32.xlu0 %v7569, 64
  %v7739 = vpop.permute.xlu0 %7738
  %7740 = vrot.lane.b32.xlu0 %v7570, 64
  %v7741 = vpop.permute.xlu0 %7740
  %7742 = vrot.lane.b32.xlu0 %v7571, 64
  %v7743 = vpop.permute.xlu0 %7742
  %7744 = vrot.lane.b32.xlu0 %v7572, 64
  %v7745 = vpop.permute.xlu0 %7744
  %7746 = vrot.lane.b32.xlu0 %v7573, 64
  %v7747 = vpop.permute.xlu0 %7746
  %7748 = vrot.lane.b32.xlu0 %v7574, 64
  %v7749 = vpop.permute.xlu0 %7748
  %7750 = vrot.lane.b32.xlu0 %v7575, 64
  %v7751 = vpop.permute.xlu0 %7750
  %7752 = vrot.lane.b32.xlu0 %v7576, 64
  %v7753 = vpop.permute.xlu0 %7752
  %7754 = vrot.lane.b32.xlu0 %v7577, 64
  %v7755 = vpop.permute.xlu0 %7754
  %7756 = vrot.lane.b32.xlu0 %v7578, 64
  %v7757 = vpop.permute.xlu0 %7756
  %7758 = vrot.lane.b32.xlu0 %v7579, 64
  %v7759 = vpop.permute.xlu0 %7758
  %7760 = vrot.lane.b32.xlu0 %v7580, 64
  %v7761 = vpop.permute.xlu0 %7760
  %7762 = vrot.lane.b32.xlu0 %v7581, 64
  %v7763 = vpop.permute.xlu0 %7762
  %7764 = vrot.lane.b32.xlu0 %v7582, 64
  %v7765 = vpop.permute.xlu0 %7764
  %7766 = vrot.lane.b32.xlu0 %v7583, 64
  %v7767 = vpop.permute.xlu0 %7766
  %7768 = vrot.lane.b32.xlu0 %v7584, 64
  %v7769 = vpop.permute.xlu0 %7768
  %7770 = vrot.lane.b32.xlu0 %v7585, 64
  %v7771 = vpop.permute.xlu0 %7770
  %7772 = vrot.lane.b32.xlu0 %v7586, 64
  %v7773 = vpop.permute.xlu0 %7772
  %7774 = vrot.lane.b32.xlu0 %v7587, 64
  %v7775 = vpop.permute.xlu0 %7774
  %7776 = vrot.lane.b32.xlu0 %v7588, 64
  %v7777 = vpop.permute.xlu0 %7776
  %7778 = vrot.lane.b32.xlu0 %v7589, 64
  %v7779 = vpop.permute.xlu0 %7778
  %7780 = vrot.lane.b32.xlu0 %v7590, 64
  %v7781 = vpop.permute.xlu0 %7780
  %7782 = vrot.lane.b32.xlu0 %v7591, 64
  %v7783 = vpop.permute.xlu0 %7782
  %vm7848 = vcmask 589312
  %7849 = vst.msk [vmem:[#allocation5] sm:$0xff] %vm7848, %v7657
  %7850 = vst.msk [vmem:[#allocation5 + $0x8] sm:$0xff] %vm7848, %v7659
  %7851 = vst.msk [vmem:[#allocation5 + $0x10] sm:$0xff] %vm7848, %v7661
  %7852 = vst.msk [vmem:[#allocation5 + $0x18] sm:$0xff] %vm7848, %v7663
  %7853 = vst.msk [vmem:[#allocation5 + $0x20] sm:$0xff] %vm7848, %v7665
  %7854 = vst.msk [vmem:[#allocation5 + $0x28] sm:$0xff] %vm7848, %v7667
  %7855 = vst.msk [vmem:[#allocation5 + $0x30] sm:$0xff] %vm7848, %v7669
  %7856 = vst.msk [vmem:[#allocation5 + $0x38] sm:$0xff] %vm7848, %v7671
  %7857 = vst.msk [vmem:[#allocation5 + $0x40] sm:$0xff] %vm7848, %v7673
  %7858 = vst.msk [vmem:[#allocation5 + $0x48] sm:$0xff] %vm7848, %v7675
  %7859 = vst.msk [vmem:[#allocation5 + $0x50] sm:$0xff] %vm7848, %v7677
  %7860 = vst.msk [vmem:[#allocation5 + $0x58] sm:$0xff] %vm7848, %v7679
  %7861 = vst.msk [vmem:[#allocation5 + $0x60] sm:$0xff] %vm7848, %v7681
  %7862 = vst.msk [vmem:[#allocation5 + $0x68] sm:$0xff] %vm7848, %v7683
  %7863 = vst.msk [vmem:[#allocation5 + $0x70] sm:$0xff] %vm7848, %v7685
  %7864 = vst.msk [vmem:[#allocation5 + $0x78] sm:$0xff] %vm7848, %v7687
  %7865 = vst.msk [vmem:[#allocation5 + $0x80] sm:$0xff] %vm7848, %v7689
  %7866 = vst.msk [vmem:[#allocation5 + $0x88] sm:$0xff] %vm7848, %v7691
  %7867 = vst.msk [vmem:[#allocation5 + $0x90] sm:$0xff] %vm7848, %v7693
  %7868 = vst.msk [vmem:[#allocation5 + $0x98] sm:$0xff] %vm7848, %v7695
  %7869 = vst.msk [vmem:[#allocation5 + $0xa0] sm:$0xff] %vm7848, %v7697
  %7870 = vst.msk [vmem:[#allocation5 + $0xa8] sm:$0xff] %vm7848, %v7699
  %7871 = vst.msk [vmem:[#allocation5 + $0xb0] sm:$0xff] %vm7848, %v7701
  %7872 = vst.msk [vmem:[#allocation5 + $0xb8] sm:$0xff] %vm7848, %v7703
  %7873 = vst.msk [vmem:[#allocation5 + $0xc0] sm:$0xff] %vm7848, %v7705
  %7874 = vst.msk [vmem:[#allocation5 + $0xc8] sm:$0xff] %vm7848, %v7707
  %7875 = vst.msk [vmem:[#allocation5 + $0xd0] sm:$0xff] %vm7848, %v7709
  %7876 = vst.msk [vmem:[#allocation5 + $0xd8] sm:$0xff] %vm7848, %v7711
  %7877 = vst.msk [vmem:[#allocation5 + $0xe0] sm:$0xff] %vm7848, %v7713
  %7878 = vst.msk [vmem:[#allocation5 + $0xe8] sm:$0xff] %vm7848, %v7715
  %7879 = vst.msk [vmem:[#allocation5 + $0xf0] sm:$0xff] %vm7848, %v7717
  %7880 = vst.msk [vmem:[#allocation5 + $0xf8] sm:$0xff] %vm7848, %v7719
  %7881 = vst.msk [vmem:[#allocation5 + $0x100] sm:$0xff] %vm7848, %v7721
  %7882 = vst.msk [vmem:[#allocation5 + $0x108] sm:$0xff] %vm7848, %v7723
  %7883 = vst.msk [vmem:[#allocation5 + $0x110] sm:$0xff] %vm7848, %v7725
  %7884 = vst.msk [vmem:[#allocation5 + $0x118] sm:$0xff] %vm7848, %v7727
  %7885 = vst.msk [vmem:[#allocation5 + $0x120] sm:$0xff] %vm7848, %v7729
  %7886 = vst.msk [vmem:[#allocation5 + $0x128] sm:$0xff] %vm7848, %v7731
  %7887 = vst.msk [vmem:[#allocation5 + $0x130] sm:$0xff] %vm7848, %v7733
  %7888 = vst.msk [vmem:[#allocation5 + $0x138] sm:$0xff] %vm7848, %v7735
  %7889 = vst.msk [vmem:[#allocation5 + $0x140] sm:$0xff] %vm7848, %v7737
  %7890 = vst.msk [vmem:[#allocation5 + $0x148] sm:$0xff] %vm7848, %v7739
  %7891 = vst.msk [vmem:[#allocation5 + $0x150] sm:$0xff] %vm7848, %v7741
  %7892 = vst.msk [vmem:[#allocation5 + $0x158] sm:$0xff] %vm7848, %v7743
  %7893 = vst.msk [vmem:[#allocation5 + $0x160] sm:$0xff] %vm7848, %v7745
  %7894 = vst.msk [vmem:[#allocation5 + $0x168] sm:$0xff] %vm7848, %v7747
  %7895 = vst.msk [vmem:[#allocation5 + $0x170] sm:$0xff] %vm7848, %v7749
  %7896 = vst.msk [vmem:[#allocation5 + $0x178] sm:$0xff] %vm7848, %v7751
  %7897 = vst.msk [vmem:[#allocation5 + $0x180] sm:$0xff] %vm7848, %v7753
  %7898 = vst.msk [vmem:[#allocation5 + $0x188] sm:$0xff] %vm7848, %v7755
  %7899 = vst.msk [vmem:[#allocation5 + $0x190] sm:$0xff] %vm7848, %v7757
  %7900 = vst.msk [vmem:[#allocation5 + $0x198] sm:$0xff] %vm7848, %v7759
  %7901 = vst.msk [vmem:[#allocation5 + $0x1a0] sm:$0xff] %vm7848, %v7761
  %7902 = vst.msk [vmem:[#allocation5 + $0x1a8] sm:$0xff] %vm7848, %v7763
  %7903 = vst.msk [vmem:[#allocation5 + $0x1b0] sm:$0xff] %vm7848, %v7765
  %7904 = vst.msk [vmem:[#allocation5 + $0x1b8] sm:$0xff] %vm7848, %v7767
  %7905 = vst.msk [vmem:[#allocation5 + $0x1c0] sm:$0xff] %vm7848, %v7769
  %7906 = vst.msk [vmem:[#allocation5 + $0x1c8] sm:$0xff] %vm7848, %v7771
  %7907 = vst.msk [vmem:[#allocation5 + $0x1d0] sm:$0xff] %vm7848, %v7773
  %7908 = vst.msk [vmem:[#allocation5 + $0x1d8] sm:$0xff] %vm7848, %v7775
  %7909 = vst.msk [vmem:[#allocation5 + $0x1e0] sm:$0xff] %vm7848, %v7777
  %7910 = vst.msk [vmem:[#allocation5 + $0x1e8] sm:$0xff] %vm7848, %v7779
  %7911 = vst.msk [vmem:[#allocation5 + $0x1f0] sm:$0xff] %vm7848, %v7781
  %7912 = vst.msk [vmem:[#allocation5 + $0x1f8] sm:$0xff] %vm7848, %v7783
  %v7913 = vld [vmem:[#allocation5] sm:$0xff]
  %v7914 = vld [vmem:[#allocation5 + $0x8] sm:$0xff]
  %v7915 = vld [vmem:[#allocation5 + $0x10] sm:$0xff]
  %v7916 = vld [vmem:[#allocation5 + $0x18] sm:$0xff]
  %v7917 = vld [vmem:[#allocation5 + $0x20] sm:$0xff]
  %v7918 = vld [vmem:[#allocation5 + $0x28] sm:$0xff]
  %v7919 = vld [vmem:[#allocation5 + $0x30] sm:$0xff]
  %v7920 = vld [vmem:[#allocation5 + $0x38] sm:$0xff]
  %v7921 = vld [vmem:[#allocation5 + $0x40] sm:$0xff]
  %v7922 = vld [vmem:[#allocation5 + $0x48] sm:$0xff]
  %v7923 = vld [vmem:[#allocation5 + $0x50] sm:$0xff]
  %v7924 = vld [vmem:[#allocation5 + $0x58] sm:$0xff]
  %v7925 = vld [vmem:[#allocation5 + $0x60] sm:$0xff]
  %v7926 = vld [vmem:[#allocation5 + $0x68] sm:$0xff]
  %v7927 = vld [vmem:[#allocation5 + $0x70] sm:$0xff]
  %v7928 = vld [vmem:[#allocation5 + $0x78] sm:$0xff]
  %v7929 = vld [vmem:[#allocation5 + $0x80] sm:$0xff]
  %v7930 = vld [vmem:[#allocation5 + $0x88] sm:$0xff]
  %v7931 = vld [vmem:[#allocation5 + $0x90] sm:$0xff]
  %v7932 = vld [vmem:[#allocation5 + $0x98] sm:$0xff]
  %v7933 = vld [vmem:[#allocation5 + $0xa0] sm:$0xff]
  %v7934 = vld [vmem:[#allocation5 + $0xa8] sm:$0xff]
  %v7935 = vld [vmem:[#allocation5 + $0xb0] sm:$0xff]
  %v7936 = vld [vmem:[#allocation5 + $0xb8] sm:$0xff]
  %v7937 = vld [vmem:[#allocation5 + $0xc0] sm:$0xff]
  %v7938 = vld [vmem:[#allocation5 + $0xc8] sm:$0xff]
  %v7939 = vld [vmem:[#allocation5 + $0xd0] sm:$0xff]
  %v7940 = vld [vmem:[#allocation5 + $0xd8] sm:$0xff]
  %v7941 = vld [vmem:[#allocation5 + $0xe0] sm:$0xff]
  %v7942 = vld [vmem:[#allocation5 + $0xe8] sm:$0xff]
  %v7943 = vld [vmem:[#allocation5 + $0xf0] sm:$0xff]
  %v7944 = vld [vmem:[#allocation5 + $0xf8] sm:$0xff]
  %v7945 = vld [vmem:[#allocation5 + $0x100] sm:$0xff]
  %v7946 = vld [vmem:[#allocation5 + $0x108] sm:$0xff]
  %v7947 = vld [vmem:[#allocation5 + $0x110] sm:$0xff]
  %v7948 = vld [vmem:[#allocation5 + $0x118] sm:$0xff]
  %v7949 = vld [vmem:[#allocation5 + $0x120] sm:$0xff]
  %v7950 = vld [vmem:[#allocation5 + $0x128] sm:$0xff]
  %v7951 = vld [vmem:[#allocation5 + $0x130] sm:$0xff]
  %v7952 = vld [vmem:[#allocation5 + $0x138] sm:$0xff]
  %v7953 = vld [vmem:[#allocation5 + $0x140] sm:$0xff]
  %v7954 = vld [vmem:[#allocation5 + $0x148] sm:$0xff]
  %v7955 = vld [vmem:[#allocation5 + $0x150] sm:$0xff]
  %v7956 = vld [vmem:[#allocation5 + $0x158] sm:$0xff]
  %v7957 = vld [vmem:[#allocation5 + $0x160] sm:$0xff]
  %v7958 = vld [vmem:[#allocation5 + $0x168] sm:$0xff]
  %v7959 = vld [vmem:[#allocation5 + $0x170] sm:$0xff]
  %v7960 = vld [vmem:[#allocation5 + $0x178] sm:$0xff]
  %v7961 = vld [vmem:[#allocation5 + $0x180] sm:$0xff]
  %v7962 = vld [vmem:[#allocation5 + $0x188] sm:$0xff]
  %v7963 = vld [vmem:[#allocation5 + $0x190] sm:$0xff]
  %v7964 = vld [vmem:[#allocation5 + $0x198] sm:$0xff]
  %v7965 = vld [vmem:[#allocation5 + $0x1a0] sm:$0xff]
  %v7966 = vld [vmem:[#allocation5 + $0x1a8] sm:$0xff]
  %v7967 = vld [vmem:[#allocation5 + $0x1b0] sm:$0xff]
  %v7968 = vld [vmem:[#allocation5 + $0x1b8] sm:$0xff]
  %v7969 = vld [vmem:[#allocation5 + $0x1c0] sm:$0xff]
  %v7970 = vld [vmem:[#allocation5 + $0x1c8] sm:$0xff]
  %v7971 = vld [vmem:[#allocation5 + $0x1d0] sm:$0xff]
  %v7972 = vld [vmem:[#allocation5 + $0x1d8] sm:$0xff]
  %v7973 = vld [vmem:[#allocation5 + $0x1e0] sm:$0xff]
  %v7974 = vld [vmem:[#allocation5 + $0x1e8] sm:$0xff]
  %v7975 = vld [vmem:[#allocation5 + $0x1f0] sm:$0xff]
  %v7976 = vld [vmem:[#allocation5 + $0x1f8] sm:$0xff]
  %v7977 = vpack.c.bf16 %v7914, %v7913
  %v7978 = vpack.c.bf16 %v7916, %v7915
  %v7979 = vpack.c.bf16 %v7918, %v7917
  %v7980 = vpack.c.bf16 %v7920, %v7919
  %v7981 = vpack.c.bf16 %v7922, %v7921
  %v7982 = vpack.c.bf16 %v7924, %v7923
  %v7983 = vpack.c.bf16 %v7926, %v7925
  %v7984 = vpack.c.bf16 %v7928, %v7927
  %v7985 = vpack.c.bf16 %v7930, %v7929
  %v7986 = vpack.c.bf16 %v7932, %v7931
  %v7987 = vpack.c.bf16 %v7934, %v7933
  %v7988 = vpack.c.bf16 %v7936, %v7935
  %v7989 = vpack.c.bf16 %v7938, %v7937
  %v7990 = vpack.c.bf16 %v7940, %v7939
  %v7991 = vpack.c.bf16 %v7942, %v7941
  %v7992 = vpack.c.bf16 %v7944, %v7943
  %v7993 = vpack.c.bf16 %v7946, %v7945
  %v7994 = vpack.c.bf16 %v7948, %v7947
  %v7995 = vpack.c.bf16 %v7950, %v7949
  %v7996 = vpack.c.bf16 %v7952, %v7951
  %v7997 = vpack.c.bf16 %v7954, %v7953
  %v7998 = vpack.c.bf16 %v7956, %v7955
  %v7999 = vpack.c.bf16 %v7958, %v7957
  %v8000 = vpack.c.bf16 %v7960, %v7959
  %v8001 = vpack.c.bf16 %v7962, %v7961
  %v8002 = vpack.c.bf16 %v7964, %v7963
  %v8003 = vpack.c.bf16 %v7966, %v7965
  %v8004 = vpack.c.bf16 %v7968, %v7967
  %v8005 = vpack.c.bf16 %v7970, %v7969
  %v8006 = vpack.c.bf16 %v7972, %v7971
  %v8007 = vpack.c.bf16 %v7974, %v7973
  %v8008 = vpack.c.bf16 %v7976, %v7975
  %v8009 = vld [vmem:[%s4] sm:$0xf]
  %v8010 = vld [vmem:[%s4 + $0x4] sm:$0xf]
  %v8011 = vld [vmem:[%s4 + $0x8] sm:$0xf]
  %v8012 = vld [vmem:[%s4 + $0xc] sm:$0xf]
  %v8013 = vld [vmem:[%s4 + $0x10] sm:$0xf]
  %v8014 = vld [vmem:[%s4 + $0x14] sm:$0xf]
  %v8015 = vld [vmem:[%s4 + $0x18] sm:$0xf]
  %v8016 = vld [vmem:[%s4 + $0x1c] sm:$0xf]
  %v8017 = vld [vmem:[%s4 + $0x20] sm:$0xf]
  %v8027 = vunpack.c.l.b16 %v8009
  %v8028 = vunpack.c.l.b16 %v8010
  %v8029 = vunpack.c.l.b16 %v8011
  %v8030 = vunpack.c.l.b16 %v8012
  %v8031 = vunpack.c.l.b16 %v8013
  %v8032 = vunpack.c.l.b16 %v8014
  %v8033 = vunpack.c.l.b16 %v8015
  %v8034 = vunpack.c.l.b16 %v8016
  %v8035 = vunpack.c.l.b16 %v8017
  %v8036 = vpack.c.b16 %v8028, %v8027
  %v8037 = vpack.c.b16 %v8030, %v8029
  %v8038 = vpack.c.b16 %v8032, %v8031
  %v8039 = vpack.c.b16 %v8034, %v8033
  %v8040 = vpack.c.b16 %v8035, %v8035
  %vm8045 = vcmask 588800
  %v8047 = vsel %vm8045, %v7977, 0
  %v8050 = vsel %vm8045, %v7978, 0
  %v8053 = vsel %vm8045, %v7979, 0
  %v8056 = vsel %vm8045, %v7980, 0
  %v8059 = vsel %vm8045, %v7981, 0
  %v8062 = vsel %vm8045, %v7982, 0
  %v8065 = vsel %vm8045, %v7983, 0
  %v8068 = vsel %vm8045, %v7984, 0
  %v8071 = vsel %vm8045, %v7985, 0
  %v8074 = vsel %vm8045, %v7986, 0
  %v8077 = vsel %vm8045, %v7987, 0
  %v8080 = vsel %vm8045, %v7988, 0
  %v8083 = vsel %vm8045, %v7989, 0
  %v8086 = vsel %vm8045, %v7990, 0
  %v8089 = vsel %vm8045, %v7991, 0
  %v8092 = vsel %vm8045, %v7992, 0
  %v8095 = vsel %vm8045, %v7993, 0
  %v8098 = vsel %vm8045, %v7994, 0
  %v8101 = vsel %vm8045, %v7995, 0
  %v8104 = vsel %vm8045, %v7996, 0
  %v8107 = vsel %vm8045, %v7997, 0
  %v8110 = vsel %vm8045, %v7998, 0
  %v8113 = vsel %vm8045, %v7999, 0
  %v8116 = vsel %vm8045, %v8000, 0
  %v8119 = vsel %vm8045, %v8001, 0
  %v8122 = vsel %vm8045, %v8002, 0
  %v8125 = vsel %vm8045, %v8003, 0
  %v8128 = vsel %vm8045, %v8004, 0
  %v8131 = vsel %vm8045, %v8005, 0
  %v8134 = vsel %vm8045, %v8006, 0
  %v8137 = vsel %vm8045, %v8007, 0
  %v8140 = vsel %vm8045, %v8008, 0
  %vm8142 = vcmask 1043456
  %v8144 = vsel %vm8142, %v8040, 0
  %8146 = vmatprep.subr.bf16.mxu0 0
  %8147 = vmatpush1.bf16.msra.mxu0 0
  %8148 = vmatprep.subr.bf16.mxu0 0
  %8149 = vmatpush1.bf16.msra.mxu0 0
  %8150 = vmatprep.subr.bf16.mxu0 0
  %8151 = vmatpush1.bf16.msra.mxu0 0
  %8152 = vmatprep.subr.bf16.mxu0 0
  %8153 = vmatpush1.bf16.msra.mxu0 %v8144
  %8154 = vmatprep.subr.bf16.mxu0 0
  %8155 = vmatpush1.bf16.msra.mxu0 %v8039
  %8156 = vmatprep.subr.bf16.mxu0 0
  %8157 = vmatpush1.bf16.msra.mxu0 %v8038
  %8158 = vmatprep.subr.bf16.mxu0 0
  %8159 = vmatpush1.bf16.msra.mxu0 %v8037
  %8160 = vmatprep.subr.bf16.mxu0 0
  %8161 = vmatpush1.bf16.msra.mxu0 %v8036
  %8162 = vmatprep.subr.bf16.mxu0 0
  %8163 = vmatpush2.bf16.msra.mxu0 0
  %8164 = vmatprep.subr.bf16.mxu0 0
  %8165 = vmatpush2.bf16.msra.mxu0 0
  %8166 = vmatprep.subr.bf16.mxu0 0
  %8167 = vmatpush2.bf16.msra.mxu0 0
  %8168 = vmatprep.subr.bf16.mxu0 0
  %8169 = vmatpush2.bf16.msra.mxu0 0
  %8170 = vmatprep.subr.bf16.mxu0 0
  %8171 = vmatpush2.bf16.msra.mxu0 0
  %8172 = vmatprep.subr.bf16.mxu0 0
  %8173 = vmatpush2.bf16.msra.mxu0 0
  %8174 = vmatprep.subr.bf16.mxu0 0
  %8175 = vmatpush2.bf16.msra.mxu0 0
  %8176 = vmatprep.subr.bf16.mxu0 0
  %8177 = vmatpush2.bf16.msra.mxu0 0
  %8178 = vmatprep.mubr.bf16.mxu0 0
  %8179 = vmatmul.mubr.bf16.gmra.mxu0 %v8047
  %v8180 = vpop.f32.mrf.mxu0
  %v8181 = vadd.f32 0.0, %v8180
  %v8182 = vpop.f32.mrf.mxu0
  %v8183 = vpop.f32.mrf.mxu0
  %v8184 = vadd.f32 0.0, %v8183
  %v8185 = vpop.f32.mrf.mxu0
  %8186 = vmatprep.mubr.bf16.mxu0 0
  %8187 = vmatmul.mubr.bf16.gmra.mxu0 %v8050
  %v8188 = vpop.f32.mrf.mxu0
  %v8189 = vadd.f32 0.0, %v8188
  %v8190 = vpop.f32.mrf.mxu0
  %v8191 = vpop.f32.mrf.mxu0
  %v8192 = vadd.f32 0.0, %v8191
  %v8193 = vpop.f32.mrf.mxu0
  %8194 = vmatprep.mubr.bf16.mxu0 0
  %8195 = vmatmul.mubr.bf16.gmra.mxu0 %v8053
  %v8196 = vpop.f32.mrf.mxu0
  %v8197 = vadd.f32 0.0, %v8196
  %v8198 = vpop.f32.mrf.mxu0
  %v8199 = vpop.f32.mrf.mxu0
  %v8200 = vadd.f32 0.0, %v8199
  %v8201 = vpop.f32.mrf.mxu0
  %8202 = vmatprep.mubr.bf16.mxu0 0
  %8203 = vmatmul.mubr.bf16.gmra.mxu0 %v8056
  %v8204 = vpop.f32.mrf.mxu0
  %v8205 = vadd.f32 0.0, %v8204
  %v8206 = vpop.f32.mrf.mxu0
  %v8207 = vpop.f32.mrf.mxu0
  %v8208 = vadd.f32 0.0, %v8207
  %v8209 = vpop.f32.mrf.mxu0
  %8210 = vmatprep.mubr.bf16.mxu0 0
  %8211 = vmatmul.mubr.bf16.gmra.mxu0 %v8059
  %v8212 = vpop.f32.mrf.mxu0
  %v8213 = vadd.f32 0.0, %v8212
  %v8214 = vpop.f32.mrf.mxu0
  %v8215 = vpop.f32.mrf.mxu0
  %v8216 = vadd.f32 0.0, %v8215
  %v8217 = vpop.f32.mrf.mxu0
  %8218 = vmatprep.mubr.bf16.mxu0 0
  %8219 = vmatmul.mubr.bf16.gmra.mxu0 %v8062
  %v8220 = vpop.f32.mrf.mxu0
  %v8221 = vadd.f32 0.0, %v8220
  %v8222 = vpop.f32.mrf.mxu0
  %v8223 = vpop.f32.mrf.mxu0
  %v8224 = vadd.f32 0.0, %v8223
  %v8225 = vpop.f32.mrf.mxu0
  %8226 = vmatprep.mubr.bf16.mxu0 0
  %8227 = vmatmul.mubr.bf16.gmra.mxu0 %v8065
  %v8228 = vpop.f32.mrf.mxu0
  %v8229 = vadd.f32 0.0, %v8228
  %v8230 = vpop.f32.mrf.mxu0
  %v8231 = vpop.f32.mrf.mxu0
  %v8232 = vadd.f32 0.0, %v8231
  %v8233 = vpop.f32.mrf.mxu0
  %8234 = vmatprep.mubr.bf16.mxu0 0
  %8235 = vmatmul.mubr.bf16.gmra.mxu0 %v8068
  %v8236 = vpop.f32.mrf.mxu0
  %v8237 = vadd.f32 0.0, %v8236
  %v8238 = vpop.f32.mrf.mxu0
  %v8239 = vpop.f32.mrf.mxu0
  %v8240 = vadd.f32 0.0, %v8239
  %v8241 = vpop.f32.mrf.mxu0
  %8242 = vmatprep.mubr.bf16.mxu0 0
  %8243 = vmatmul.mubr.bf16.gmra.mxu0 %v8071
  %v8244 = vpop.f32.mrf.mxu0
  %v8245 = vadd.f32 0.0, %v8244
  %v8246 = vpop.f32.mrf.mxu0
  %v8247 = vpop.f32.mrf.mxu0
  %v8248 = vadd.f32 0.0, %v8247
  %v8249 = vpop.f32.mrf.mxu0
  %8250 = vmatprep.mubr.bf16.mxu0 0
  %8251 = vmatmul.mubr.bf16.gmra.mxu0 %v8074
  %v8252 = vpop.f32.mrf.mxu0
  %v8253 = vadd.f32 0.0, %v8252
  %v8254 = vpop.f32.mrf.mxu0
  %v8255 = vpop.f32.mrf.mxu0
  %v8256 = vadd.f32 0.0, %v8255
  %v8257 = vpop.f32.mrf.mxu0
  %8258 = vmatprep.mubr.bf16.mxu0 0
  %8259 = vmatmul.mubr.bf16.gmra.mxu0 %v8077
  %v8260 = vpop.f32.mrf.mxu0
  %v8261 = vadd.f32 0.0, %v8260
  %v8262 = vpop.f32.mrf.mxu0
  %v8263 = vpop.f32.mrf.mxu0
  %v8264 = vadd.f32 0.0, %v8263
  %v8265 = vpop.f32.mrf.mxu0
  %8266 = vmatprep.mubr.bf16.mxu0 0
  %8267 = vmatmul.mubr.bf16.gmra.mxu0 %v8080
  %v8268 = vpop.f32.mrf.mxu0
  %v8269 = vadd.f32 0.0, %v8268
  %v8270 = vpop.f32.mrf.mxu0
  %v8271 = vpop.f32.mrf.mxu0
  %v8272 = vadd.f32 0.0, %v8271
  %v8273 = vpop.f32.mrf.mxu0
  %8274 = vmatprep.mubr.bf16.mxu0 0
  %8275 = vmatmul.mubr.bf16.gmra.mxu0 %v8083
  %v8276 = vpop.f32.mrf.mxu0
  %v8277 = vadd.f32 0.0, %v8276
  %v8278 = vpop.f32.mrf.mxu0
  %v8279 = vpop.f32.mrf.mxu0
  %v8280 = vadd.f32 0.0, %v8279
  %v8281 = vpop.f32.mrf.mxu0
  %8282 = vmatprep.mubr.bf16.mxu0 0
  %8283 = vmatmul.mubr.bf16.gmra.mxu0 %v8086
  %v8284 = vpop.f32.mrf.mxu0
  %v8285 = vadd.f32 0.0, %v8284
  %v8286 = vpop.f32.mrf.mxu0
  %v8287 = vpop.f32.mrf.mxu0
  %v8288 = vadd.f32 0.0, %v8287
  %v8289 = vpop.f32.mrf.mxu0
  %8290 = vmatprep.mubr.bf16.mxu0 0
  %8291 = vmatmul.mubr.bf16.gmra.mxu0 %v8089
  %v8292 = vpop.f32.mrf.mxu0
  %v8293 = vadd.f32 0.0, %v8292
  %v8294 = vpop.f32.mrf.mxu0
  %v8295 = vpop.f32.mrf.mxu0
  %v8296 = vadd.f32 0.0, %v8295
  %v8297 = vpop.f32.mrf.mxu0
  %8298 = vmatprep.mubr.bf16.mxu0 0
  %8299 = vmatmul.mubr.bf16.gmra.mxu0 %v8092
  %v8300 = vpop.f32.mrf.mxu0
  %v8301 = vadd.f32 0.0, %v8300
  %v8302 = vpop.f32.mrf.mxu0
  %v8303 = vpop.f32.mrf.mxu0
  %v8304 = vadd.f32 0.0, %v8303
  %v8305 = vpop.f32.mrf.mxu0
  %8306 = vmatprep.mubr.bf16.mxu0 0
  %8307 = vmatmul.mubr.bf16.gmra.mxu0 %v8095
  %v8308 = vpop.f32.mrf.mxu0
  %v8309 = vadd.f32 0.0, %v8308
  %v8310 = vpop.f32.mrf.mxu0
  %v8311 = vpop.f32.mrf.mxu0
  %v8312 = vadd.f32 0.0, %v8311
  %v8313 = vpop.f32.mrf.mxu0
  %8314 = vmatprep.mubr.bf16.mxu0 0
  %8315 = vmatmul.mubr.bf16.gmra.mxu0 %v8098
  %v8316 = vpop.f32.mrf.mxu0
  %v8317 = vadd.f32 0.0, %v8316
  %v8318 = vpop.f32.mrf.mxu0
  %v8319 = vpop.f32.mrf.mxu0
  %v8320 = vadd.f32 0.0, %v8319
  %v8321 = vpop.f32.mrf.mxu0
  %8322 = vmatprep.mubr.bf16.mxu0 0
  %8323 = vmatmul.mubr.bf16.gmra.mxu0 %v8101
  %v8324 = vpop.f32.mrf.mxu0
  %v8325 = vadd.f32 0.0, %v8324
  %v8326 = vpop.f32.mrf.mxu0
  %v8327 = vpop.f32.mrf.mxu0
  %v8328 = vadd.f32 0.0, %v8327
  %v8329 = vpop.f32.mrf.mxu0
  %8330 = vmatprep.mubr.bf16.mxu0 0
  %8331 = vmatmul.mubr.bf16.gmra.mxu0 %v8104
  %v8332 = vpop.f32.mrf.mxu0
  %v8333 = vadd.f32 0.0, %v8332
  %v8334 = vpop.f32.mrf.mxu0
  %v8335 = vpop.f32.mrf.mxu0
  %v8336 = vadd.f32 0.0, %v8335
  %v8337 = vpop.f32.mrf.mxu0
  %8338 = vmatprep.mubr.bf16.mxu0 0
  %8339 = vmatmul.mubr.bf16.gmra.mxu0 %v8107
  %v8340 = vpop.f32.mrf.mxu0
  %v8341 = vadd.f32 0.0, %v8340
  %v8342 = vpop.f32.mrf.mxu0
  %v8343 = vpop.f32.mrf.mxu0
  %v8344 = vadd.f32 0.0, %v8343
  %v8345 = vpop.f32.mrf.mxu0
  %8346 = vmatprep.mubr.bf16.mxu0 0
  %8347 = vmatmul.mubr.bf16.gmra.mxu0 %v8110
  %v8348 = vpop.f32.mrf.mxu0
  %v8349 = vadd.f32 0.0, %v8348
  %v8350 = vpop.f32.mrf.mxu0
  %v8351 = vpop.f32.mrf.mxu0
  %v8352 = vadd.f32 0.0, %v8351
  %v8353 = vpop.f32.mrf.mxu0
  %8354 = vmatprep.mubr.bf16.mxu0 0
  %8355 = vmatmul.mubr.bf16.gmra.mxu0 %v8113
  %v8356 = vpop.f32.mrf.mxu0
  %v8357 = vadd.f32 0.0, %v8356
  %v8358 = vpop.f32.mrf.mxu0
  %v8359 = vpop.f32.mrf.mxu0
  %v8360 = vadd.f32 0.0, %v8359
  %v8361 = vpop.f32.mrf.mxu0
  %8362 = vmatprep.mubr.bf16.mxu0 0
  %8363 = vmatmul.mubr.bf16.gmra.mxu0 %v8116
  %v8364 = vpop.f32.mrf.mxu0
  %v8365 = vadd.f32 0.0, %v8364
  %v8366 = vpop.f32.mrf.mxu0
  %v8367 = vpop.f32.mrf.mxu0
  %v8368 = vadd.f32 0.0, %v8367
  %v8369 = vpop.f32.mrf.mxu0
  %8370 = vmatprep.mubr.bf16.mxu0 0
  %8371 = vmatmul.mubr.bf16.gmra.mxu0 %v8119
  %v8372 = vpop.f32.mrf.mxu0
  %v8373 = vadd.f32 0.0, %v8372
  %v8374 = vpop.f32.mrf.mxu0
  %v8375 = vpop.f32.mrf.mxu0
  %v8376 = vadd.f32 0.0, %v8375
  %v8377 = vpop.f32.mrf.mxu0
  %8378 = vmatprep.mubr.bf16.mxu0 0
  %8379 = vmatmul.mubr.bf16.gmra.mxu0 %v8122
  %v8380 = vpop.f32.mrf.mxu0
  %v8381 = vadd.f32 0.0, %v8380
  %v8382 = vpop.f32.mrf.mxu0
  %v8383 = vpop.f32.mrf.mxu0
  %v8384 = vadd.f32 0.0, %v8383
  %v8385 = vpop.f32.mrf.mxu0
  %8386 = vmatprep.mubr.bf16.mxu0 0
  %8387 = vmatmul.mubr.bf16.gmra.mxu0 %v8125
  %v8388 = vpop.f32.mrf.mxu0
  %v8389 = vadd.f32 0.0, %v8388
  %v8390 = vpop.f32.mrf.mxu0
  %v8391 = vpop.f32.mrf.mxu0
  %v8392 = vadd.f32 0.0, %v8391
  %v8393 = vpop.f32.mrf.mxu0
  %8394 = vmatprep.mubr.bf16.mxu0 0
  %8395 = vmatmul.mubr.bf16.gmra.mxu0 %v8128
  %v8396 = vpop.f32.mrf.mxu0
  %v8397 = vadd.f32 0.0, %v8396
  %v8398 = vpop.f32.mrf.mxu0
  %v8399 = vpop.f32.mrf.mxu0
  %v8400 = vadd.f32 0.0, %v8399
  %v8401 = vpop.f32.mrf.mxu0
  %8402 = vmatprep.mubr.bf16.mxu0 0
  %8403 = vmatmul.mubr.bf16.gmra.mxu0 %v8131
  %v8404 = vpop.f32.mrf.mxu0
  %v8405 = vadd.f32 0.0, %v8404
  %v8406 = vpop.f32.mrf.mxu0
  %v8407 = vpop.f32.mrf.mxu0
  %v8408 = vadd.f32 0.0, %v8407
  %v8409 = vpop.f32.mrf.mxu0
  %8410 = vmatprep.mubr.bf16.mxu0 0
  %8411 = vmatmul.mubr.bf16.gmra.mxu0 %v8134
  %v8412 = vpop.f32.mrf.mxu0
  %v8413 = vadd.f32 0.0, %v8412
  %v8414 = vpop.f32.mrf.mxu0
  %v8415 = vpop.f32.mrf.mxu0
  %v8416 = vadd.f32 0.0, %v8415
  %v8417 = vpop.f32.mrf.mxu0
  %8418 = vmatprep.mubr.bf16.mxu0 0
  %8419 = vmatmul.mubr.bf16.gmra.mxu0 %v8137
  %v8420 = vpop.f32.mrf.mxu0
  %v8421 = vadd.f32 0.0, %v8420
  %v8422 = vpop.f32.mrf.mxu0
  %v8423 = vpop.f32.mrf.mxu0
  %v8424 = vadd.f32 0.0, %v8423
  %v8425 = vpop.f32.mrf.mxu0
  %8426 = vmatprep.mubr.bf16.mxu0 0
  %8427 = vmatmul.mubr.bf16.gmra.mxu0 %v8140
  %v8428 = vpop.f32.mrf.mxu0
  %v8429 = vadd.f32 0.0, %v8428
  %v8430 = vpop.f32.mrf.mxu0
  %v8431 = vpop.f32.mrf.mxu0
  %v8432 = vadd.f32 0.0, %v8431
  %v8433 = vpop.f32.mrf.mxu0
  %8434 = vdwg.mxu0
  %v8435 = vsel %vm3983, %v8181, 0.0
  %v8436 = vsel %vm3983, %v8184, 0.0
  %v8437 = vadd.f32 %v8435, %v8436
  %v8438 = vsel %vm3983, %v8189, 0.0
  %v8439 = vadd.f32 %v8437, %v8438
  %v8440 = vsel %vm3983, %v8192, 0.0
  %v8441 = vadd.f32 %v8439, %v8440
  %v8442 = vsel %vm3983, %v8197, 0.0
  %v8443 = vadd.f32 %v8441, %v8442
  %v8444 = vsel %vm3983, %v8200, 0.0
  %v8445 = vadd.f32 %v8443, %v8444
  %v8446 = vsel %vm3983, %v8205, 0.0
  %v8447 = vadd.f32 %v8445, %v8446
  %v8448 = vsel %vm3983, %v8208, 0.0
  %v8449 = vadd.f32 %v8447, %v8448
  %v8450 = vsel %vm3983, %v8213, 0.0
  %v8451 = vadd.f32 %v8449, %v8450
  %v8452 = vsel %vm3983, %v8216, 0.0
  %v8453 = vadd.f32 %v8451, %v8452
  %v8454 = vsel %vm3983, %v8221, 0.0
  %v8455 = vadd.f32 %v8453, %v8454
  %v8456 = vsel %vm3983, %v8224, 0.0
  %v8457 = vadd.f32 %v8455, %v8456
  %v8458 = vsel %vm3983, %v8229, 0.0
  %v8459 = vadd.f32 %v8457, %v8458
  %v8460 = vsel %vm3983, %v8232, 0.0
  %v8461 = vadd.f32 %v8459, %v8460
  %v8462 = vsel %vm3983, %v8237, 0.0
  %v8463 = vadd.f32 %v8461, %v8462
  %v8464 = vsel %vm3983, %v8240, 0.0
  %v8465 = vadd.f32 %v8463, %v8464
  %v8466 = vsel %vm3983, %v8245, 0.0
  %v8467 = vadd.f32 %v8465, %v8466
  %v8468 = vsel %vm3983, %v8248, 0.0
  %v8469 = vadd.f32 %v8467, %v8468
  %v8470 = vsel %vm3983, %v8253, 0.0
  %v8471 = vadd.f32 %v8469, %v8470
  %v8472 = vsel %vm3983, %v8256, 0.0
  %v8473 = vadd.f32 %v8471, %v8472
  %v8474 = vsel %vm3983, %v8261, 0.0
  %v8475 = vadd.f32 %v8473, %v8474
  %v8476 = vsel %vm3983, %v8264, 0.0
  %v8477 = vadd.f32 %v8475, %v8476
  %v8478 = vsel %vm3983, %v8269, 0.0
  %v8479 = vadd.f32 %v8477, %v8478
  %v8480 = vsel %vm3983, %v8272, 0.0
  %v8481 = vadd.f32 %v8479, %v8480
  %v8482 = vsel %vm3983, %v8277, 0.0
  %v8483 = vadd.f32 %v8481, %v8482
  %v8484 = vsel %vm3983, %v8280, 0.0
  %v8485 = vadd.f32 %v8483, %v8484
  %v8486 = vsel %vm3983, %v8285, 0.0
  %v8487 = vadd.f32 %v8485, %v8486
  %v8488 = vsel %vm3983, %v8288, 0.0
  %v8489 = vadd.f32 %v8487, %v8488
  %v8490 = vsel %vm3983, %v8293, 0.0
  %v8491 = vadd.f32 %v8489, %v8490
  %v8492 = vsel %vm3983, %v8296, 0.0
  %v8493 = vadd.f32 %v8491, %v8492
  %v8494 = vsel %vm3983, %v8301, 0.0
  %v8495 = vadd.f32 %v8493, %v8494
  %v8496 = vsel %vm3983, %v8304, 0.0
  %v8497 = vadd.f32 %v8495, %v8496
  %v8498 = vsel %vm3983, %v8309, 0.0
  %v8499 = vadd.f32 %v8497, %v8498
  %v8500 = vsel %vm3983, %v8312, 0.0
  %v8501 = vadd.f32 %v8499, %v8500
  %v8502 = vsel %vm3983, %v8317, 0.0
  %v8503 = vadd.f32 %v8501, %v8502
  %v8504 = vsel %vm3983, %v8320, 0.0
  %v8505 = vadd.f32 %v8503, %v8504
  %v8506 = vsel %vm3983, %v8325, 0.0
  %v8507 = vadd.f32 %v8505, %v8506
  %v8508 = vsel %vm3983, %v8328, 0.0
  %v8509 = vadd.f32 %v8507, %v8508
  %v8510 = vsel %vm3983, %v8333, 0.0
  %v8511 = vadd.f32 %v8509, %v8510
  %v8512 = vsel %vm3983, %v8336, 0.0
  %v8513 = vadd.f32 %v8511, %v8512
  %v8514 = vsel %vm3983, %v8341, 0.0
  %v8515 = vadd.f32 %v8513, %v8514
  %v8516 = vsel %vm3983, %v8344, 0.0
  %v8517 = vadd.f32 %v8515, %v8516
  %v8518 = vsel %vm3983, %v8349, 0.0
  %v8519 = vadd.f32 %v8517, %v8518
  %v8520 = vsel %vm3983, %v8352, 0.0
  %v8521 = vadd.f32 %v8519, %v8520
  %v8522 = vsel %vm3983, %v8357, 0.0
  %v8523 = vadd.f32 %v8521, %v8522
  %v8524 = vsel %vm3983, %v8360, 0.0
  %v8525 = vadd.f32 %v8523, %v8524
  %v8526 = vsel %vm3983, %v8365, 0.0
  %v8527 = vadd.f32 %v8525, %v8526
  %v8528 = vsel %vm3983, %v8368, 0.0
  %v8529 = vadd.f32 %v8527, %v8528
  %v8530 = vsel %vm3983, %v8373, 0.0
  %v8531 = vadd.f32 %v8529, %v8530
  %v8532 = vsel %vm3983, %v8376, 0.0
  %v8533 = vadd.f32 %v8531, %v8532
  %v8534 = vsel %vm3983, %v8381, 0.0
  %v8535 = vadd.f32 %v8533, %v8534
  %v8536 = vsel %vm3983, %v8384, 0.0
  %v8537 = vadd.f32 %v8535, %v8536
  %v8538 = vsel %vm3983, %v8389, 0.0
  %v8539 = vadd.f32 %v8537, %v8538
  %v8540 = vsel %vm3983, %v8392, 0.0
  %v8541 = vadd.f32 %v8539, %v8540
  %v8542 = vsel %vm3983, %v8397, 0.0
  %v8543 = vadd.f32 %v8541, %v8542
  %v8544 = vsel %vm3983, %v8400, 0.0
  %v8545 = vadd.f32 %v8543, %v8544
  %v8546 = vsel %vm3983, %v8405, 0.0
  %v8547 = vadd.f32 %v8545, %v8546
  %v8548 = vsel %vm3983, %v8408, 0.0
  %v8549 = vadd.f32 %v8547, %v8548
  %v8550 = vsel %vm3983, %v8413, 0.0
  %v8551 = vadd.f32 %v8549, %v8550
  %v8552 = vsel %vm3983, %v8416, 0.0
  %v8553 = vadd.f32 %v8551, %v8552
  %v8554 = vsel %vm3983, %v8421, 0.0
  %v8555 = vadd.f32 %v8553, %v8554
  %v8556 = vsel %vm3983, %v8424, 0.0
  %v8557 = vadd.f32 %v8555, %v8556
  %v8558 = vsel %vm3983, %v8429, 0.0
  %v8559 = vadd.f32 %v8557, %v8558
  %v8560 = vsel %vm3983, %v8432, 0.0
  %v8561 = vadd.f32 %v8559, %v8560
  %v8562 = vrot.slane %v8561, 4
  %v8563 = vadd.f32 %v8561, %v8562
  %v8564 = vrot.slane %v8563, 2
  %v8565 = vadd.f32 %v8563, %v8564
  %v8566 = vrot.slane %v8565, 1
  %v8567 = vadd.f32 %v8565, %v8566
  %v8568 = vmul.f32 %v8567, %v4117
  %v8569 = vmul.f32 %v8181, %v8181
  %v8570 = vmul.f32 %v8184, %v8184
  %v8571 = vmul.f32 %v8189, %v8189
  %v8572 = vmul.f32 %v8192, %v8192
  %v8573 = vmul.f32 %v8197, %v8197
  %v8574 = vmul.f32 %v8200, %v8200
  %v8575 = vmul.f32 %v8205, %v8205
  %v8576 = vmul.f32 %v8208, %v8208
  %v8577 = vmul.f32 %v8213, %v8213
  %v8578 = vmul.f32 %v8216, %v8216
  %v8579 = vmul.f32 %v8221, %v8221
  %v8580 = vmul.f32 %v8224, %v8224
  %v8581 = vmul.f32 %v8229, %v8229
  %v8582 = vmul.f32 %v8232, %v8232
  %v8583 = vmul.f32 %v8237, %v8237
  %v8584 = vmul.f32 %v8240, %v8240
  %v8585 = vmul.f32 %v8245, %v8245
  %v8586 = vmul.f32 %v8248, %v8248
  %v8587 = vmul.f32 %v8253, %v8253
  %v8588 = vmul.f32 %v8256, %v8256
  %v8589 = vmul.f32 %v8261, %v8261
  %v8590 = vmul.f32 %v8264, %v8264
  %v8591 = vmul.f32 %v8269, %v8269
  %v8592 = vmul.f32 %v8272, %v8272
  %v8593 = vmul.f32 %v8277, %v8277
  %v8594 = vmul.f32 %v8280, %v8280
  %v8595 = vmul.f32 %v8285, %v8285
  %v8596 = vmul.f32 %v8288, %v8288
  %v8597 = vmul.f32 %v8293, %v8293
  %v8598 = vmul.f32 %v8296, %v8296
  %v8599 = vmul.f32 %v8301, %v8301
  %v8600 = vmul.f32 %v8304, %v8304
  %v8601 = vmul.f32 %v8309, %v8309
  %v8602 = vmul.f32 %v8312, %v8312
  %v8603 = vmul.f32 %v8317, %v8317
  %v8604 = vmul.f32 %v8320, %v8320
  %v8605 = vmul.f32 %v8325, %v8325
  %v8606 = vmul.f32 %v8328, %v8328
  %v8607 = vmul.f32 %v8333, %v8333
  %v8608 = vmul.f32 %v8336, %v8336
  %v8609 = vmul.f32 %v8341, %v8341
  %v8610 = vmul.f32 %v8344, %v8344
  %v8611 = vmul.f32 %v8349, %v8349
  %v8612 = vmul.f32 %v8352, %v8352
  %v8613 = vmul.f32 %v8357, %v8357
  %v8614 = vmul.f32 %v8360, %v8360
  %v8615 = vmul.f32 %v8365, %v8365
  %v8616 = vmul.f32 %v8368, %v8368
  %v8617 = vmul.f32 %v8373, %v8373
  %v8618 = vmul.f32 %v8376, %v8376
  %v8619 = vmul.f32 %v8381, %v8381
  %v8620 = vmul.f32 %v8384, %v8384
  %v8621 = vmul.f32 %v8389, %v8389
  %v8622 = vmul.f32 %v8392, %v8392
  %v8623 = vmul.f32 %v8397, %v8397
  %v8624 = vmul.f32 %v8400, %v8400
  %v8625 = vmul.f32 %v8405, %v8405
  %v8626 = vmul.f32 %v8408, %v8408
  %v8627 = vmul.f32 %v8413, %v8413
  %v8628 = vmul.f32 %v8416, %v8416
  %v8629 = vmul.f32 %v8421, %v8421
  %v8630 = vmul.f32 %v8424, %v8424
  %v8631 = vmul.f32 %v8429, %v8429
  %v8632 = vmul.f32 %v8432, %v8432
  %v8633 = vsel %vm3983, %v8569, 0.0
  %v8634 = vsel %vm3983, %v8570, 0.0
  %v8635 = vadd.f32 %v8633, %v8634
  %v8636 = vsel %vm3983, %v8571, 0.0
  %v8637 = vadd.f32 %v8635, %v8636
  %v8638 = vsel %vm3983, %v8572, 0.0
  %v8639 = vadd.f32 %v8637, %v8638
  %v8640 = vsel %vm3983, %v8573, 0.0
  %v8641 = vadd.f32 %v8639, %v8640
  %v8642 = vsel %vm3983, %v8574, 0.0
  %v8643 = vadd.f32 %v8641, %v8642
  %v8644 = vsel %vm3983, %v8575, 0.0
  %v8645 = vadd.f32 %v8643, %v8644
  %v8646 = vsel %vm3983, %v8576, 0.0
  %v8647 = vadd.f32 %v8645, %v8646
  %v8648 = vsel %vm3983, %v8577, 0.0
  %v8649 = vadd.f32 %v8647, %v8648
  %v8650 = vsel %vm3983, %v8578, 0.0
  %v8651 = vadd.f32 %v8649, %v8650
  %v8652 = vsel %vm3983, %v8579, 0.0
  %v8653 = vadd.f32 %v8651, %v8652
  %v8654 = vsel %vm3983, %v8580, 0.0
  %v8655 = vadd.f32 %v8653, %v8654
  %v8656 = vsel %vm3983, %v8581, 0.0
  %v8657 = vadd.f32 %v8655, %v8656
  %v8658 = vsel %vm3983, %v8582, 0.0
  %v8659 = vadd.f32 %v8657, %v8658
  %v8660 = vsel %vm3983, %v8583, 0.0
  %v8661 = vadd.f32 %v8659, %v8660
  %v8662 = vsel %vm3983, %v8584, 0.0
  %v8663 = vadd.f32 %v8661, %v8662
  %v8664 = vsel %vm3983, %v8585, 0.0
  %v8665 = vadd.f32 %v8663, %v8664
  %v8666 = vsel %vm3983, %v8586, 0.0
  %v8667 = vadd.f32 %v8665, %v8666
  %v8668 = vsel %vm3983, %v8587, 0.0
  %v8669 = vadd.f32 %v8667, %v8668
  %v8670 = vsel %vm3983, %v8588, 0.0
  %v8671 = vadd.f32 %v8669, %v8670
  %v8672 = vsel %vm3983, %v8589, 0.0
  %v8673 = vadd.f32 %v8671, %v8672
  %v8674 = vsel %vm3983, %v8590, 0.0
  %v8675 = vadd.f32 %v8673, %v8674
  %v8676 = vsel %vm3983, %v8591, 0.0
  %v8677 = vadd.f32 %v8675, %v8676
  %v8678 = vsel %vm3983, %v8592, 0.0
  %v8679 = vadd.f32 %v8677, %v8678
  %v8680 = vsel %vm3983, %v8593, 0.0
  %v8681 = vadd.f32 %v8679, %v8680
  %v8682 = vsel %vm3983, %v8594, 0.0
  %v8683 = vadd.f32 %v8681, %v8682
  %v8684 = vsel %vm3983, %v8595, 0.0
  %v8685 = vadd.f32 %v8683, %v8684
  %v8686 = vsel %vm3983, %v8596, 0.0
  %v8687 = vadd.f32 %v8685, %v8686
  %v8688 = vsel %vm3983, %v8597, 0.0
  %v8689 = vadd.f32 %v8687, %v8688
  %v8690 = vsel %vm3983, %v8598, 0.0
  %v8691 = vadd.f32 %v8689, %v8690
  %v8692 = vsel %vm3983, %v8599, 0.0
  %v8693 = vadd.f32 %v8691, %v8692
  %v8694 = vsel %vm3983, %v8600, 0.0
  %v8695 = vadd.f32 %v8693, %v8694
  %v8696 = vsel %vm3983, %v8601, 0.0
  %v8697 = vadd.f32 %v8695, %v8696
  %v8698 = vsel %vm3983, %v8602, 0.0
  %v8699 = vadd.f32 %v8697, %v8698
  %v8700 = vsel %vm3983, %v8603, 0.0
  %v8701 = vadd.f32 %v8699, %v8700
  %v8702 = vsel %vm3983, %v8604, 0.0
  %v8703 = vadd.f32 %v8701, %v8702
  %v8704 = vsel %vm3983, %v8605, 0.0
  %v8705 = vadd.f32 %v8703, %v8704
  %v8706 = vsel %vm3983, %v8606, 0.0
  %v8707 = vadd.f32 %v8705, %v8706
  %v8708 = vsel %vm3983, %v8607, 0.0
  %v8709 = vadd.f32 %v8707, %v8708
  %v8710 = vsel %vm3983, %v8608, 0.0
  %v8711 = vadd.f32 %v8709, %v8710
  %v8712 = vsel %vm3983, %v8609, 0.0
  %v8713 = vadd.f32 %v8711, %v8712
  %v8714 = vsel %vm3983, %v8610, 0.0
  %v8715 = vadd.f32 %v8713, %v8714
  %v8716 = vsel %vm3983, %v8611, 0.0
  %v8717 = vadd.f32 %v8715, %v8716
  %v8718 = vsel %vm3983, %v8612, 0.0
  %v8719 = vadd.f32 %v8717, %v8718
  %v8720 = vsel %vm3983, %v8613, 0.0
  %v8721 = vadd.f32 %v8719, %v8720
  %v8722 = vsel %vm3983, %v8614, 0.0
  %v8723 = vadd.f32 %v8721, %v8722
  %v8724 = vsel %vm3983, %v8615, 0.0
  %v8725 = vadd.f32 %v8723, %v8724
  %v8726 = vsel %vm3983, %v8616, 0.0
  %v8727 = vadd.f32 %v8725, %v8726
  %v8728 = vsel %vm3983, %v8617, 0.0
  %v8729 = vadd.f32 %v8727, %v8728
  %v8730 = vsel %vm3983, %v8618, 0.0
  %v8731 = vadd.f32 %v8729, %v8730
  %v8732 = vsel %vm3983, %v8619, 0.0
  %v8733 = vadd.f32 %v8731, %v8732
  %v8734 = vsel %vm3983, %v8620, 0.0
  %v8735 = vadd.f32 %v8733, %v8734
  %v8736 = vsel %vm3983, %v8621, 0.0
  %v8737 = vadd.f32 %v8735, %v8736
  %v8738 = vsel %vm3983, %v8622, 0.0
  %v8739 = vadd.f32 %v8737, %v8738
  %v8740 = vsel %vm3983, %v8623, 0.0
  %v8741 = vadd.f32 %v8739, %v8740
  %v8742 = vsel %vm3983, %v8624, 0.0
  %v8743 = vadd.f32 %v8741, %v8742
  %v8744 = vsel %vm3983, %v8625, 0.0
  %v8745 = vadd.f32 %v8743, %v8744
  %v8746 = vsel %vm3983, %v8626, 0.0
  %v8747 = vadd.f32 %v8745, %v8746
  %v8748 = vsel %vm3983, %v8627, 0.0
  %v8749 = vadd.f32 %v8747, %v8748
  %v8750 = vsel %vm3983, %v8628, 0.0
  %v8751 = vadd.f32 %v8749, %v8750
  %v8752 = vsel %vm3983, %v8629, 0.0
  %v8753 = vadd.f32 %v8751, %v8752
  %v8754 = vsel %vm3983, %v8630, 0.0
  %v8755 = vadd.f32 %v8753, %v8754
  %v8756 = vsel %vm3983, %v8631, 0.0
  %v8757 = vadd.f32 %v8755, %v8756
  %v8758 = vsel %vm3983, %v8632, 0.0
  %v8759 = vadd.f32 %v8757, %v8758
  %v8760 = vrot.slane %v8759, 4
  %v8761 = vadd.f32 %v8759, %v8760
  %v8762 = vrot.slane %v8761, 2
  %v8763 = vadd.f32 %v8761, %v8762
  %v8764 = vrot.slane %v8763, 1
  %v8765 = vadd.f32 %v8763, %v8764
  %v8766 = vmul.f32 %v8765, %v4117
  %v8767 = vmul.f32 %v8568, %v8568
  %v8768 = vsub.f32 %v8766, %v8767
  %v8769 = vld [vmem:[%s5] sm:$0x1]
  %v8770 = vadd.f32 %v8768, 1e-05
  %v8771 = vrsqrt.pop %v8770
  %v8772 = vmul.f32 %v8769, %v8771
  %v8773 = vld [vmem:[%s6] sm:$0x1]
  %v8774 = vmul.f32 %v8568, %v8772
  %v8775 = vsub.f32 %v8773, %v8774
  %v8777 = vlaneseq
  %v8778 = vshrl.u32 %v8777, 7
  %v8779 = vsub.s32 0, %v8778
  %v8780 = vrot.slane %v8772, %v8779
  %v8782 = vmul.f32 %v8181, %v8780
  %v8783 = vmul.f32 %v8184, %v8780
  %v8784 = vmul.f32 %v8189, %v8780
  %v8785 = vmul.f32 %v8192, %v8780
  %v8786 = vmul.f32 %v8197, %v8780
  %v8787 = vmul.f32 %v8200, %v8780
  %v8788 = vmul.f32 %v8205, %v8780
  %v8789 = vmul.f32 %v8208, %v8780
  %v8790 = vmul.f32 %v8213, %v8780
  %v8791 = vmul.f32 %v8216, %v8780
  %v8792 = vmul.f32 %v8221, %v8780
  %v8793 = vmul.f32 %v8224, %v8780
  %v8794 = vmul.f32 %v8229, %v8780
  %v8795 = vmul.f32 %v8232, %v8780
  %v8796 = vmul.f32 %v8237, %v8780
  %v8797 = vmul.f32 %v8240, %v8780
  %v8798 = vmul.f32 %v8245, %v8780
  %v8799 = vmul.f32 %v8248, %v8780
  %v8800 = vmul.f32 %v8253, %v8780
  %v8801 = vmul.f32 %v8256, %v8780
  %v8802 = vmul.f32 %v8261, %v8780
  %v8803 = vmul.f32 %v8264, %v8780
  %v8804 = vmul.f32 %v8269, %v8780
  %v8805 = vmul.f32 %v8272, %v8780
  %v8806 = vmul.f32 %v8277, %v8780
  %v8807 = vmul.f32 %v8280, %v8780
  %v8808 = vmul.f32 %v8285, %v8780
  %v8809 = vmul.f32 %v8288, %v8780
  %v8810 = vmul.f32 %v8293, %v8780
  %v8811 = vmul.f32 %v8296, %v8780
  %v8812 = vmul.f32 %v8301, %v8780
  %v8813 = vmul.f32 %v8304, %v8780
  %v8814 = vmul.f32 %v8309, %v8780
  %v8815 = vmul.f32 %v8312, %v8780
  %v8816 = vmul.f32 %v8317, %v8780
  %v8817 = vmul.f32 %v8320, %v8780
  %v8818 = vmul.f32 %v8325, %v8780
  %v8819 = vmul.f32 %v8328, %v8780
  %v8820 = vmul.f32 %v8333, %v8780
  %v8821 = vmul.f32 %v8336, %v8780
  %v8822 = vmul.f32 %v8341, %v8780
  %v8823 = vmul.f32 %v8344, %v8780
  %v8824 = vmul.f32 %v8349, %v8780
  %v8825 = vmul.f32 %v8352, %v8780
  %v8826 = vmul.f32 %v8357, %v8780
  %v8827 = vmul.f32 %v8360, %v8780
  %v8828 = vmul.f32 %v8365, %v8780
  %v8829 = vmul.f32 %v8368, %v8780
  %v8830 = vmul.f32 %v8373, %v8780
  %v8831 = vmul.f32 %v8376, %v8780
  %v8832 = vmul.f32 %v8381, %v8780
  %v8833 = vmul.f32 %v8384, %v8780
  %v8834 = vmul.f32 %v8389, %v8780
  %v8835 = vmul.f32 %v8392, %v8780
  %v8836 = vmul.f32 %v8397, %v8780
  %v8837 = vmul.f32 %v8400, %v8780
  %v8838 = vmul.f32 %v8405, %v8780
  %v8839 = vmul.f32 %v8408, %v8780
  %v8840 = vmul.f32 %v8413, %v8780
  %v8841 = vmul.f32 %v8416, %v8780
  %v8842 = vmul.f32 %v8421, %v8780
  %v8843 = vmul.f32 %v8424, %v8780
  %v8844 = vmul.f32 %v8429, %v8780
  %v8845 = vmul.f32 %v8432, %v8780
  %v8847 = vlaneseq
  %v8848 = vshrl.u32 %v8847, 7
  %v8849 = vsub.s32 0, %v8848
  %v8850 = vrot.slane %v8775, %v8849
  %v8852 = vadd.f32 %v8782, %v8850
  %v8853 = vadd.f32 %v8783, %v8850
  %v8854 = vadd.f32 %v8784, %v8850
  %v8855 = vadd.f32 %v8785, %v8850
  %v8856 = vadd.f32 %v8786, %v8850
  %v8857 = vadd.f32 %v8787, %v8850
  %v8858 = vadd.f32 %v8788, %v8850
  %v8859 = vadd.f32 %v8789, %v8850
  %v8860 = vadd.f32 %v8790, %v8850
  %v8861 = vadd.f32 %v8791, %v8850
  %v8862 = vadd.f32 %v8792, %v8850
  %v8863 = vadd.f32 %v8793, %v8850
  %v8864 = vadd.f32 %v8794, %v8850
  %v8865 = vadd.f32 %v8795, %v8850
  %v8866 = vadd.f32 %v8796, %v8850
  %v8867 = vadd.f32 %v8797, %v8850
  %v8868 = vadd.f32 %v8798, %v8850
  %v8869 = vadd.f32 %v8799, %v8850
  %v8870 = vadd.f32 %v8800, %v8850
  %v8871 = vadd.f32 %v8801, %v8850
  %v8872 = vadd.f32 %v8802, %v8850
  %v8873 = vadd.f32 %v8803, %v8850
  %v8874 = vadd.f32 %v8804, %v8850
  %v8875 = vadd.f32 %v8805, %v8850
  %v8876 = vadd.f32 %v8806, %v8850
  %v8877 = vadd.f32 %v8807, %v8850
  %v8878 = vadd.f32 %v8808, %v8850
  %v8879 = vadd.f32 %v8809, %v8850
  %v8880 = vadd.f32 %v8810, %v8850
  %v8881 = vadd.f32 %v8811, %v8850
  %v8882 = vadd.f32 %v8812, %v8850
  %v8883 = vadd.f32 %v8813, %v8850
  %v8884 = vadd.f32 %v8814, %v8850
  %v8885 = vadd.f32 %v8815, %v8850
  %v8886 = vadd.f32 %v8816, %v8850
  %v8887 = vadd.f32 %v8817, %v8850
  %v8888 = vadd.f32 %v8818, %v8850
  %v8889 = vadd.f32 %v8819, %v8850
  %v8890 = vadd.f32 %v8820, %v8850
  %v8891 = vadd.f32 %v8821, %v8850
  %v8892 = vadd.f32 %v8822, %v8850
  %v8893 = vadd.f32 %v8823, %v8850
  %v8894 = vadd.f32 %v8824, %v8850
  %v8895 = vadd.f32 %v8825, %v8850
  %v8896 = vadd.f32 %v8826, %v8850
  %v8897 = vadd.f32 %v8827, %v8850
  %v8898 = vadd.f32 %v8828, %v8850
  %v8899 = vadd.f32 %v8829, %v8850
  %v8900 = vadd.f32 %v8830, %v8850
  %v8901 = vadd.f32 %v8831, %v8850
  %v8902 = vadd.f32 %v8832, %v8850
  %v8903 = vadd.f32 %v8833, %v8850
  %v8904 = vadd.f32 %v8834, %v8850
  %v8905 = vadd.f32 %v8835, %v8850
  %v8906 = vadd.f32 %v8836, %v8850
  %v8907 = vadd.f32 %v8837, %v8850
  %v8908 = vadd.f32 %v8838, %v8850
  %v8909 = vadd.f32 %v8839, %v8850
  %v8910 = vadd.f32 %v8840, %v8850
  %v8911 = vadd.f32 %v8841, %v8850
  %v8912 = vadd.f32 %v8842, %v8850
  %v8913 = vadd.f32 %v8843, %v8850
  %v8914 = vadd.f32 %v8844, %v8850
  %v8915 = vadd.f32 %v8845, %v8850
  %v8916 = vmax.f32 %v8852, 0.0
  %v8917 = vmax.f32 %v8853, 0.0
  %v8918 = vmax.f32 %v8854, 0.0
  %v8919 = vmax.f32 %v8855, 0.0
  %v8920 = vmax.f32 %v8856, 0.0
  %v8921 = vmax.f32 %v8857, 0.0
  %v8922 = vmax.f32 %v8858, 0.0
  %v8923 = vmax.f32 %v8859, 0.0
  %v8924 = vmax.f32 %v8860, 0.0
  %v8925 = vmax.f32 %v8861, 0.0
  %v8926 = vmax.f32 %v8862, 0.0
  %v8927 = vmax.f32 %v8863, 0.0
  %v8928 = vmax.f32 %v8864, 0.0
  %v8929 = vmax.f32 %v8865, 0.0
  %v8930 = vmax.f32 %v8866, 0.0
  %v8931 = vmax.f32 %v8867, 0.0
  %v8932 = vmax.f32 %v8868, 0.0
  %v8933 = vmax.f32 %v8869, 0.0
  %v8934 = vmax.f32 %v8870, 0.0
  %v8935 = vmax.f32 %v8871, 0.0
  %v8936 = vmax.f32 %v8872, 0.0
  %v8937 = vmax.f32 %v8873, 0.0
  %v8938 = vmax.f32 %v8874, 0.0
  %v8939 = vmax.f32 %v8875, 0.0
  %v8940 = vmax.f32 %v8876, 0.0
  %v8941 = vmax.f32 %v8877, 0.0
  %v8942 = vmax.f32 %v8878, 0.0
  %v8943 = vmax.f32 %v8879, 0.0
  %v8944 = vmax.f32 %v8880, 0.0
  %v8945 = vmax.f32 %v8881, 0.0
  %v8946 = vmax.f32 %v8882, 0.0
  %v8947 = vmax.f32 %v8883, 0.0
  %v8948 = vmax.f32 %v8884, 0.0
  %v8949 = vmax.f32 %v8885, 0.0
  %v8950 = vmax.f32 %v8886, 0.0
  %v8951 = vmax.f32 %v8887, 0.0
  %v8952 = vmax.f32 %v8888, 0.0
  %v8953 = vmax.f32 %v8889, 0.0
  %v8954 = vmax.f32 %v8890, 0.0
  %v8955 = vmax.f32 %v8891, 0.0
  %v8956 = vmax.f32 %v8892, 0.0
  %v8957 = vmax.f32 %v8893, 0.0
  %v8958 = vmax.f32 %v8894, 0.0
  %v8959 = vmax.f32 %v8895, 0.0
  %v8960 = vmax.f32 %v8896, 0.0
  %v8961 = vmax.f32 %v8897, 0.0
  %v8962 = vmax.f32 %v8898, 0.0
  %v8963 = vmax.f32 %v8899, 0.0
  %v8964 = vmax.f32 %v8900, 0.0
  %v8965 = vmax.f32 %v8901, 0.0
  %v8966 = vmax.f32 %v8902, 0.0
  %v8967 = vmax.f32 %v8903, 0.0
  %v8968 = vmax.f32 %v8904, 0.0
  %v8969 = vmax.f32 %v8905, 0.0
  %v8970 = vmax.f32 %v8906, 0.0
  %v8971 = vmax.f32 %v8907, 0.0
  %v8972 = vmax.f32 %v8908, 0.0
  %v8973 = vmax.f32 %v8909, 0.0
  %v8974 = vmax.f32 %v8910, 0.0
  %v8975 = vmax.f32 %v8911, 0.0
  %v8976 = vmax.f32 %v8912, 0.0
  %v8977 = vmax.f32 %v8913, 0.0
  %v8978 = vmax.f32 %v8914, 0.0
  %v8979 = vmax.f32 %v8915, 0.0
  %8980 = vst.msk [vmem:[%s7] sm:$0xff] %vm3983, %v8916
  %8981 = vst.msk [vmem:[%s7 + $0x8] sm:$0xff] %vm3983, %v8917
  %8982 = vst.msk [vmem:[%s7 + $0x10] sm:$0xff] %vm3983, %v8918
  %8983 = vst.msk [vmem:[%s7 + $0x18] sm:$0xff] %vm3983, %v8919
  %8984 = vst.msk [vmem:[%s7 + $0x20] sm:$0xff] %vm3983, %v8920
  %8985 = vst.msk [vmem:[%s7 + $0x28] sm:$0xff] %vm3983, %v8921
  %8986 = vst.msk [vmem:[%s7 + $0x30] sm:$0xff] %vm3983, %v8922
  %8987 = vst.msk [vmem:[%s7 + $0x38] sm:$0xff] %vm3983, %v8923
  %8988 = vst.msk [vmem:[%s7 + $0x40] sm:$0xff] %vm3983, %v8924
  %8989 = vst.msk [vmem:[%s7 + $0x48] sm:$0xff] %vm3983, %v8925
  %8990 = vst.msk [vmem:[%s7 + $0x50] sm:$0xff] %vm3983, %v8926
  %8991 = vst.msk [vmem:[%s7 + $0x58] sm:$0xff] %vm3983, %v8927
  %8992 = vst.msk [vmem:[%s7 + $0x60] sm:$0xff] %vm3983, %v8928
  %8993 = vst.msk [vmem:[%s7 + $0x68] sm:$0xff] %vm3983, %v8929
  %8994 = vst.msk [vmem:[%s7 + $0x70] sm:$0xff] %vm3983, %v8930
  %8995 = vst.msk [vmem:[%s7 + $0x78] sm:$0xff] %vm3983, %v8931
  %8996 = vst.msk [vmem:[%s7 + $0x80] sm:$0xff] %vm3983, %v8932
  %8997 = vst.msk [vmem:[%s7 + $0x88] sm:$0xff] %vm3983, %v8933
  %8998 = vst.msk [vmem:[%s7 + $0x90] sm:$0xff] %vm3983, %v8934
  %8999 = vst.msk [vmem:[%s7 + $0x98] sm:$0xff] %vm3983, %v8935
  %9000 = vst.msk [vmem:[%s7 + $0xa0] sm:$0xff] %vm3983, %v8936
  %9001 = vst.msk [vmem:[%s7 + $0xa8] sm:$0xff] %vm3983, %v8937
  %9002 = vst.msk [vmem:[%s7 + $0xb0] sm:$0xff] %vm3983, %v8938
  %9003 = vst.msk [vmem:[%s7 + $0xb8] sm:$0xff] %vm3983, %v8939
  %9004 = vst.msk [vmem:[%s7 + $0xc0] sm:$0xff] %vm3983, %v8940
  %9005 = vst.msk [vmem:[%s7 + $0xc8] sm:$0xff] %vm3983, %v8941
  %9006 = vst.msk [vmem:[%s7 + $0xd0] sm:$0xff] %vm3983, %v8942
  %9007 = vst.msk [vmem:[%s7 + $0xd8] sm:$0xff] %vm3983, %v8943
  %9008 = vst.msk [vmem:[%s7 + $0xe0] sm:$0xff] %vm3983, %v8944
  %9009 = vst.msk [vmem:[%s7 + $0xe8] sm:$0xff] %vm3983, %v8945
  %9010 = vst.msk [vmem:[%s7 + $0xf0] sm:$0xff] %vm3983, %v8946
  %9011 = vst.msk [vmem:[%s7 + $0xf8] sm:$0xff] %vm3983, %v8947
  %9012 = vst.msk [vmem:[%s7 + $0x100] sm:$0xff] %vm3983, %v8948
  %9013 = vst.msk [vmem:[%s7 + $0x108] sm:$0xff] %vm3983, %v8949
  %9014 = vst.msk [vmem:[%s7 + $0x110] sm:$0xff] %vm3983, %v8950
  %9015 = vst.msk [vmem:[%s7 + $0x118] sm:$0xff] %vm3983, %v8951
  %9016 = vst.msk [vmem:[%s7 + $0x120] sm:$0xff] %vm3983, %v8952
  %9017 = vst.msk [vmem:[%s7 + $0x128] sm:$0xff] %vm3983, %v8953
  %9018 = vst.msk [vmem:[%s7 + $0x130] sm:$0xff] %vm3983, %v8954
  %9019 = vst.msk [vmem:[%s7 + $0x138] sm:$0xff] %vm3983, %v8955
  %9020 = vst.msk [vmem:[%s7 + $0x140] sm:$0xff] %vm3983, %v8956
  %9021 = vst.msk [vmem:[%s7 + $0x148] sm:$0xff] %vm3983, %v8957
  %9022 = vst.msk [vmem:[%s7 + $0x150] sm:$0xff] %vm3983, %v8958
  %9023 = vst.msk [vmem:[%s7 + $0x158] sm:$0xff] %vm3983, %v8959
  %9024 = vst.msk [vmem:[%s7 + $0x160] sm:$0xff] %vm3983, %v8960
  %9025 = vst.msk [vmem:[%s7 + $0x168] sm:$0xff] %vm3983, %v8961
  %9026 = vst.msk [vmem:[%s7 + $0x170] sm:$0xff] %vm3983, %v8962
  %9027 = vst.msk [vmem:[%s7 + $0x178] sm:$0xff] %vm3983, %v8963
  %9028 = vst.msk [vmem:[%s7 + $0x180] sm:$0xff] %vm3983, %v8964
  %9029 = vst.msk [vmem:[%s7 + $0x188] sm:$0xff] %vm3983, %v8965
  %9030 = vst.msk [vmem:[%s7 + $0x190] sm:$0xff] %vm3983, %v8966
  %9031 = vst.msk [vmem:[%s7 + $0x198] sm:$0xff] %vm3983, %v8967
  %9032 = vst.msk [vmem:[%s7 + $0x1a0] sm:$0xff] %vm3983, %v8968
  %9033 = vst.msk [vmem:[%s7 + $0x1a8] sm:$0xff] %vm3983, %v8969
  %9034 = vst.msk [vmem:[%s7 + $0x1b0] sm:$0xff] %vm3983, %v8970
  %9035 = vst.msk [vmem:[%s7 + $0x1b8] sm:$0xff] %vm3983, %v8971
  %9036 = vst.msk [vmem:[%s7 + $0x1c0] sm:$0xff] %vm3983, %v8972
  %9037 = vst.msk [vmem:[%s7 + $0x1c8] sm:$0xff] %vm3983, %v8973
  %9038 = vst.msk [vmem:[%s7 + $0x1d0] sm:$0xff] %vm3983, %v8974
  %9039 = vst.msk [vmem:[%s7 + $0x1d8] sm:$0xff] %vm3983, %v8975
  %9040 = vst.msk [vmem:[%s7 + $0x1e0] sm:$0xff] %vm3983, %v8976
  %9041 = vst.msk [vmem:[%s7 + $0x1e8] sm:$0xff] %vm3983, %v8977
  %9042 = vst.msk [vmem:[%s7 + $0x1f0] sm:$0xff] %vm3983, %v8978
  %9043 = vst.msk [vmem:[%s7 + $0x1f8] sm:$0xff] %vm3983, %v8979
  %9044 = vst.msk [vmem:[#allocation6] sm:$0xff] %vm3983, %v8916
  %9045 = vst.msk [vmem:[#allocation6 + $0x8] sm:$0xff] %vm3983, %v8917
  %9046 = vst.msk [vmem:[#allocation6 + $0x10] sm:$0xff] %vm3983, %v8918
  %9047 = vst.msk [vmem:[#allocation6 + $0x18] sm:$0xff] %vm3983, %v8919
  %9048 = vst.msk [vmem:[#allocation6 + $0x20] sm:$0xff] %vm3983, %v8920
  %9049 = vst.msk [vmem:[#allocation6 + $0x28] sm:$0xff] %vm3983, %v8921
  %9050 = vst.msk [vmem:[#allocation6 + $0x30] sm:$0xff] %vm3983, %v8922
  %9051 = vst.msk [vmem:[#allocation6 + $0x38] sm:$0xff] %vm3983, %v8923
  %9052 = vst.msk [vmem:[#allocation6 + $0x40] sm:$0xff] %vm3983, %v8924
  %9053 = vst.msk [vmem:[#allocation6 + $0x48] sm:$0xff] %vm3983, %v8925
  %9054 = vst.msk [vmem:[#allocation6 + $0x50] sm:$0xff] %vm3983, %v8926
  %9055 = vst.msk [vmem:[#allocation6 + $0x58] sm:$0xff] %vm3983, %v8927
  %9056 = vst.msk [vmem:[#allocation6 + $0x60] sm:$0xff] %vm3983, %v8928
  %9057 = vst.msk [vmem:[#allocation6 + $0x68] sm:$0xff] %vm3983, %v8929
  %9058 = vst.msk [vmem:[#allocation6 + $0x70] sm:$0xff] %vm3983, %v8930
  %9059 = vst.msk [vmem:[#allocation6 + $0x78] sm:$0xff] %vm3983, %v8931
  %9060 = vst.msk [vmem:[#allocation6 + $0x80] sm:$0xff] %vm3983, %v8932
  %9061 = vst.msk [vmem:[#allocation6 + $0x88] sm:$0xff] %vm3983, %v8933
  %9062 = vst.msk [vmem:[#allocation6 + $0x90] sm:$0xff] %vm3983, %v8934
  %9063 = vst.msk [vmem:[#allocation6 + $0x98] sm:$0xff] %vm3983, %v8935
  %9064 = vst.msk [vmem:[#allocation6 + $0xa0] sm:$0xff] %vm3983, %v8936
  %9065 = vst.msk [vmem:[#allocation6 + $0xa8] sm:$0xff] %vm3983, %v8937
  %9066 = vst.msk [vmem:[#allocation6 + $0xb0] sm:$0xff] %vm3983, %v8938
  %9067 = vst.msk [vmem:[#allocation6 + $0xb8] sm:$0xff] %vm3983, %v8939
  %9068 = vst.msk [vmem:[#allocation6 + $0xc0] sm:$0xff] %vm3983, %v8940
  %9069 = vst.msk [vmem:[#allocation6 + $0xc8] sm:$0xff] %vm3983, %v8941
  %9070 = vst.msk [vmem:[#allocation6 + $0xd0] sm:$0xff] %vm3983, %v8942
  %9071 = vst.msk [vmem:[#allocation6 + $0xd8] sm:$0xff] %vm3983, %v8943
  %9072 = vst.msk [vmem:[#allocation6 + $0xe0] sm:$0xff] %vm3983, %v8944
  %9073 = vst.msk [vmem:[#allocation6 + $0xe8] sm:$0xff] %vm3983, %v8945
  %9074 = vst.msk [vmem:[#allocation6 + $0xf0] sm:$0xff] %vm3983, %v8946
  %9075 = vst.msk [vmem:[#allocation6 + $0xf8] sm:$0xff] %vm3983, %v8947
  %9076 = vst.msk [vmem:[#allocation6 + $0x100] sm:$0xff] %vm3983, %v8948
  %9077 = vst.msk [vmem:[#allocation6 + $0x108] sm:$0xff] %vm3983, %v8949
  %9078 = vst.msk [vmem:[#allocation6 + $0x110] sm:$0xff] %vm3983, %v8950
  %9079 = vst.msk [vmem:[#allocation6 + $0x118] sm:$0xff] %vm3983, %v8951
  %9080 = vst.msk [vmem:[#allocation6 + $0x120] sm:$0xff] %vm3983, %v8952
  %9081 = vst.msk [vmem:[#allocation6 + $0x128] sm:$0xff] %vm3983, %v8953
  %9082 = vst.msk [vmem:[#allocation6 + $0x130] sm:$0xff] %vm3983, %v8954
  %9083 = vst.msk [vmem:[#allocation6 + $0x138] sm:$0xff] %vm3983, %v8955
  %9084 = vst.msk [vmem:[#allocation6 + $0x140] sm:$0xff] %vm3983, %v8956
  %9085 = vst.msk [vmem:[#allocation6 + $0x148] sm:$0xff] %vm3983, %v8957
  %9086 = vst.msk [vmem:[#allocation6 + $0x150] sm:$0xff] %vm3983, %v8958
  %9087 = vst.msk [vmem:[#allocation6 + $0x158] sm:$0xff] %vm3983, %v8959
  %9088 = vst.msk [vmem:[#allocation6 + $0x160] sm:$0xff] %vm3983, %v8960
  %9089 = vst.msk [vmem:[#allocation6 + $0x168] sm:$0xff] %vm3983, %v8961
  %9090 = vst.msk [vmem:[#allocation6 + $0x170] sm:$0xff] %vm3983, %v8962
  %9091 = vst.msk [vmem:[#allocation6 + $0x178] sm:$0xff] %vm3983, %v8963
  %9092 = vst.msk [vmem:[#allocation6 + $0x180] sm:$0xff] %vm3983, %v8964
  %9093 = vst.msk [vmem:[#allocation6 + $0x188] sm:$0xff] %vm3983, %v8965
  %9094 = vst.msk [vmem:[#allocation6 + $0x190] sm:$0xff] %vm3983, %v8966
  %9095 = vst.msk [vmem:[#allocation6 + $0x198] sm:$0xff] %vm3983, %v8967
  %9096 = vst.msk [vmem:[#allocation6 + $0x1a0] sm:$0xff] %vm3983, %v8968
  %9097 = vst.msk [vmem:[#allocation6 + $0x1a8] sm:$0xff] %vm3983, %v8969
  %9098 = vst.msk [vmem:[#allocation6 + $0x1b0] sm:$0xff] %vm3983, %v8970
  %9099 = vst.msk [vmem:[#allocation6 + $0x1b8] sm:$0xff] %vm3983, %v8971
  %9100 = vst.msk [vmem:[#allocation6 + $0x1c0] sm:$0xff] %vm3983, %v8972
  %9101 = vst.msk [vmem:[#allocation6 + $0x1c8] sm:$0xff] %vm3983, %v8973
  %9102 = vst.msk [vmem:[#allocation6 + $0x1d0] sm:$0xff] %vm3983, %v8974
  %9103 = vst.msk [vmem:[#allocation6 + $0x1d8] sm:$0xff] %vm3983, %v8975
  %9104 = vst.msk [vmem:[#allocation6 + $0x1e0] sm:$0xff] %vm3983, %v8976
  %9105 = vst.msk [vmem:[#allocation6 + $0x1e8] sm:$0xff] %vm3983, %v8977
  %9106 = vst.msk [vmem:[#allocation6 + $0x1f0] sm:$0xff] %vm3983, %v8978
  %9107 = vst.msk [vmem:[#allocation6 + $0x1f8] sm:$0xff] %vm3983, %v8979
  %v9108 = vld [vmem:[#allocation6] ss:$2 sm:$0xff]
  %s9109 = scalar_lea.vmem [#allocation6], 16
  %v9110 = vld [vmem:[%s9109] ss:$2 sm:$0xff]
  %s9111 = scalar_lea.vmem [#allocation6], 32
  %v9112 = vld [vmem:[%s9111] ss:$2 sm:$0xff]
  %s9113 = scalar_lea.vmem [#allocation6], 48
  %v9114 = vld [vmem:[%s9113] ss:$2 sm:$0xff]
  %s9115 = scalar_lea.vmem [#allocation6], 64
  %v9116 = vld [vmem:[%s9115] ss:$2 sm:$0xff]
  %s9117 = scalar_lea.vmem [#allocation6], 80
  %v9118 = vld [vmem:[%s9117] ss:$2 sm:$0xff]
  %s9119 = scalar_lea.vmem [#allocation6], 96
  %v9120 = vld [vmem:[%s9119] ss:$2 sm:$0xff]
  %s9121 = scalar_lea.vmem [#allocation6], 112
  %v9122 = vld [vmem:[%s9121] ss:$2 sm:$0xff]
  %s9123 = scalar_lea.vmem [#allocation6], 128
  %v9124 = vld [vmem:[%s9123] ss:$2 sm:$0xff]
  %s9125 = scalar_lea.vmem [#allocation6], 144
  %v9126 = vld [vmem:[%s9125] ss:$2 sm:$0xff]
  %s9127 = scalar_lea.vmem [#allocation6], 160
  %v9128 = vld [vmem:[%s9127] ss:$2 sm:$0xff]
  %s9129 = scalar_lea.vmem [#allocation6], 176
  %v9130 = vld [vmem:[%s9129] ss:$2 sm:$0xff]
  %s9131 = scalar_lea.vmem [#allocation6], 192
  %v9132 = vld [vmem:[%s9131] ss:$2 sm:$0xff]
  %s9133 = scalar_lea.vmem [#allocation6], 208
  %v9134 = vld [vmem:[%s9133] ss:$2 sm:$0xff]
  %s9135 = scalar_lea.vmem [#allocation6], 224
  %v9136 = vld [vmem:[%s9135] ss:$2 sm:$0xff]
  %s9137 = scalar_lea.vmem [#allocation6], 240
  %v9138 = vld [vmem:[%s9137] ss:$2 sm:$0xff]
  %s9139 = scalar_lea.vmem [#allocation6], 256
  %v9140 = vld [vmem:[%s9139] ss:$2 sm:$0xff]
  %s9141 = scalar_lea.vmem [#allocation6], 272
  %v9142 = vld [vmem:[%s9141] ss:$2 sm:$0xff]
  %s9143 = scalar_lea.vmem [#allocation6], 288
  %v9144 = vld [vmem:[%s9143] ss:$2 sm:$0xff]
  %s9145 = scalar_lea.vmem [#allocation6], 304
  %v9146 = vld [vmem:[%s9145] ss:$2 sm:$0xff]
  %s9147 = scalar_lea.vmem [#allocation6], 320
  %v9148 = vld [vmem:[%s9147] ss:$2 sm:$0xff]
  %s9149 = scalar_lea.vmem [#allocation6], 336
  %v9150 = vld [vmem:[%s9149] ss:$2 sm:$0xff]
  %s9151 = scalar_lea.vmem [#allocation6], 352
  %v9152 = vld [vmem:[%s9151] ss:$2 sm:$0xff]
  %s9153 = scalar_lea.vmem [#allocation6], 368
  %v9154 = vld [vmem:[%s9153] ss:$2 sm:$0xff]
  %s9155 = scalar_lea.vmem [#allocation6], 384
  %v9156 = vld [vmem:[%s9155] ss:$2 sm:$0xff]
  %s9157 = scalar_lea.vmem [#allocation6], 400
  %v9158 = vld [vmem:[%s9157] ss:$2 sm:$0xff]
  %s9159 = scalar_lea.vmem [#allocation6], 416
  %v9160 = vld [vmem:[%s9159] ss:$2 sm:$0xff]
  %s9161 = scalar_lea.vmem [#allocation6], 432
  %v9162 = vld [vmem:[%s9161] ss:$2 sm:$0xff]
  %s9163 = scalar_lea.vmem [#allocation6], 448
  %v9164 = vld [vmem:[%s9163] ss:$2 sm:$0xff]
  %s9165 = scalar_lea.vmem [#allocation6], 464
  %v9166 = vld [vmem:[%s9165] ss:$2 sm:$0xff]
  %s9167 = scalar_lea.vmem [#allocation6], 480
  %v9168 = vld [vmem:[%s9167] ss:$2 sm:$0xff]
  %s9169 = scalar_lea.vmem [#allocation6], 496
  %v9170 = vld [vmem:[%s9169] ss:$2 sm:$0xff]
  %s9171 = scalar_lea.vmem [#allocation6], 1
  %v9172 = vld [vmem:[%s9171] ss:$2 sm:$0xff]
  %s9173 = scalar_lea.vmem [#allocation6], 17
  %v9174 = vld [vmem:[%s9173] ss:$2 sm:$0xff]
  %s9175 = scalar_lea.vmem [#allocation6], 33
  %v9176 = vld [vmem:[%s9175] ss:$2 sm:$0xff]
  %s9177 = scalar_lea.vmem [#allocation6], 49
  %v9178 = vld [vmem:[%s9177] ss:$2 sm:$0xff]
  %s9179 = scalar_lea.vmem [#allocation6], 65
  %v9180 = vld [vmem:[%s9179] ss:$2 sm:$0xff]
  %s9181 = scalar_lea.vmem [#allocation6], 81
  %v9182 = vld [vmem:[%s9181] ss:$2 sm:$0xff]
  %s9183 = scalar_lea.vmem [#allocation6], 97
  %v9184 = vld [vmem:[%s9183] ss:$2 sm:$0xff]
  %s9185 = scalar_lea.vmem [#allocation6], 113
  %v9186 = vld [vmem:[%s9185] ss:$2 sm:$0xff]
  %s9187 = scalar_lea.vmem [#allocation6], 129
  %v9188 = vld [vmem:[%s9187] ss:$2 sm:$0xff]
  %s9189 = scalar_lea.vmem [#allocation6], 145
  %v9190 = vld [vmem:[%s9189] ss:$2 sm:$0xff]
  %s9191 = scalar_lea.vmem [#allocation6], 161
  %v9192 = vld [vmem:[%s9191] ss:$2 sm:$0xff]
  %s9193 = scalar_lea.vmem [#allocation6], 177
  %v9194 = vld [vmem:[%s9193] ss:$2 sm:$0xff]
  %s9195 = scalar_lea.vmem [#allocation6], 193
  %v9196 = vld [vmem:[%s9195] ss:$2 sm:$0xff]
  %s9197 = scalar_lea.vmem [#allocation6], 209
  %v9198 = vld [vmem:[%s9197] ss:$2 sm:$0xff]
  %s9199 = scalar_lea.vmem [#allocation6], 225
  %v9200 = vld [vmem:[%s9199] ss:$2 sm:$0xff]
  %s9201 = scalar_lea.vmem [#allocation6], 241
  %v9202 = vld [vmem:[%s9201] ss:$2 sm:$0xff]
  %s9203 = scalar_lea.vmem [#allocation6], 257
  %v9204 = vld [vmem:[%s9203] ss:$2 sm:$0xff]
  %s9205 = scalar_lea.vmem [#allocation6], 273
  %v9206 = vld [vmem:[%s9205] ss:$2 sm:$0xff]
  %s9207 = scalar_lea.vmem [#allocation6], 289
  %v9208 = vld [vmem:[%s9207] ss:$2 sm:$0xff]
  %s9209 = scalar_lea.vmem [#allocation6], 305
  %v9210 = vld [vmem:[%s9209] ss:$2 sm:$0xff]
  %s9211 = scalar_lea.vmem [#allocation6], 321
  %v9212 = vld [vmem:[%s9211] ss:$2 sm:$0xff]
  %s9213 = scalar_lea.vmem [#allocation6], 337
  %v9214 = vld [vmem:[%s9213] ss:$2 sm:$0xff]
  %s9215 = scalar_lea.vmem [#allocation6], 353
  %v9216 = vld [vmem:[%s9215] ss:$2 sm:$0xff]
  %s9217 = scalar_lea.vmem [#allocation6], 369
  %v9218 = vld [vmem:[%s9217] ss:$2 sm:$0xff]
  %s9219 = scalar_lea.vmem [#allocation6], 385
  %v9220 = vld [vmem:[%s9219] ss:$2 sm:$0xff]
  %s9221 = scalar_lea.vmem [#allocation6], 401
  %v9222 = vld [vmem:[%s9221] ss:$2 sm:$0xff]
  %s9223 = scalar_lea.vmem [#allocation6], 417
  %v9224 = vld [vmem:[%s9223] ss:$2 sm:$0xff]
  %s9225 = scalar_lea.vmem [#allocation6], 433
  %v9226 = vld [vmem:[%s9225] ss:$2 sm:$0xff]
  %s9227 = scalar_lea.vmem [#allocation6], 449
  %v9228 = vld [vmem:[%s9227] ss:$2 sm:$0xff]
  %s9229 = scalar_lea.vmem [#allocation6], 465
  %v9230 = vld [vmem:[%s9229] ss:$2 sm:$0xff]
  %s9231 = scalar_lea.vmem [#allocation6], 481
  %v9232 = vld [vmem:[%s9231] ss:$2 sm:$0xff]
  %s9233 = scalar_lea.vmem [#allocation6], 497
  %v9234 = vld [vmem:[%s9233] ss:$2 sm:$0xff]
  %v9235 = vmax.f32 %v9108, %v9172
  %v9236 = vmax.f32 %v9110, %v9174
  %v9237 = vmax.f32 %v9112, %v9176
  %v9238 = vmax.f32 %v9114, %v9178
  %v9239 = vmax.f32 %v9116, %v9180
  %v9240 = vmax.f32 %v9118, %v9182
  %v9241 = vmax.f32 %v9120, %v9184
  %v9242 = vmax.f32 %v9122, %v9186
  %v9243 = vmax.f32 %v9124, %v9188
  %v9244 = vmax.f32 %v9126, %v9190
  %v9245 = vmax.f32 %v9128, %v9192
  %v9246 = vmax.f32 %v9130, %v9194
  %v9247 = vmax.f32 %v9132, %v9196
  %v9248 = vmax.f32 %v9134, %v9198
  %v9249 = vmax.f32 %v9136, %v9200
  %v9250 = vmax.f32 %v9138, %v9202
  %v9251 = vmax.f32 %v9140, %v9204
  %v9252 = vmax.f32 %v9142, %v9206
  %v9253 = vmax.f32 %v9144, %v9208
  %v9254 = vmax.f32 %v9146, %v9210
  %v9255 = vmax.f32 %v9148, %v9212
  %v9256 = vmax.f32 %v9150, %v9214
  %v9257 = vmax.f32 %v9152, %v9216
  %v9258 = vmax.f32 %v9154, %v9218
  %v9259 = vmax.f32 %v9156, %v9220
  %v9260 = vmax.f32 %v9158, %v9222
  %v9261 = vmax.f32 %v9160, %v9224
  %v9262 = vmax.f32 %v9162, %v9226
  %v9263 = vmax.f32 %v9164, %v9228
  %v9264 = vmax.f32 %v9166, %v9230
  %v9265 = vmax.f32 %v9168, %v9232
  %v9266 = vmax.f32 %v9170, %v9234
  %v9267 = vmax.f32 %v9235, %v9236
  %v9268 = vmax.f32 %v9237, %v9238
  %v9269 = vmax.f32 %v9239, %v9240
  %v9270 = vmax.f32 %v9241, %v9242
  %v9271 = vmax.f32 %v9243, %v9244
  %v9272 = vmax.f32 %v9245, %v9246
  %v9273 = vmax.f32 %v9247, %v9248
  %v9274 = vmax.f32 %v9249, %v9250
  %v9275 = vmax.f32 %v9251, %v9252
  %v9276 = vmax.f32 %v9253, %v9254
  %v9277 = vmax.f32 %v9255, %v9256
  %v9278 = vmax.f32 %v9257, %v9258
  %v9279 = vmax.f32 %v9259, %v9260
  %v9280 = vmax.f32 %v9261, %v9262
  %v9281 = vmax.f32 %v9263, %v9264
  %v9282 = vmax.f32 %v9265, %v9266
  %9283 = vst.msk [vmem:[%s8] sm:$0xff] %vm3983, %v9267
  %9284 = vst.msk [vmem:[%s8 + $0x8] sm:$0xff] %vm3983, %v9268
  %9285 = vst.msk [vmem:[%s8 + $0x10] sm:$0xff] %vm3983, %v9269
  %9286 = vst.msk [vmem:[%s8 + $0x18] sm:$0xff] %vm3983, %v9270
  %9287 = vst.msk [vmem:[%s8 + $0x20] sm:$0xff] %vm3983, %v9271
  %9288 = vst.msk [vmem:[%s8 + $0x28] sm:$0xff] %vm3983, %v9272
  %9289 = vst.msk [vmem:[%s8 + $0x30] sm:$0xff] %vm3983, %v9273
  %9290 = vst.msk [vmem:[%s8 + $0x38] sm:$0xff] %vm3983, %v9274
  %9291 = vst.msk [vmem:[%s8 + $0x40] sm:$0xff] %vm3983, %v9275
  %9292 = vst.msk [vmem:[%s8 + $0x48] sm:$0xff] %vm3983, %v9276
  %9293 = vst.msk [vmem:[%s8 + $0x50] sm:$0xff] %vm3983, %v9277
  %9294 = vst.msk [vmem:[%s8 + $0x58] sm:$0xff] %vm3983, %v9278
  %9295 = vst.msk [vmem:[%s8 + $0x60] sm:$0xff] %vm3983, %v9279
  %9296 = vst.msk [vmem:[%s8 + $0x68] sm:$0xff] %vm3983, %v9280
  %9297 = vst.msk [vmem:[%s8 + $0x70] sm:$0xff] %vm3983, %v9281
  %9298 = vst.msk [vmem:[%s8 + $0x78] sm:$0xff] %vm3983, %v9282
  // Predicated region
  $region30: #{encoder_block_forward.1} parent=0 // pred_check
    _
  $region31: #{encoder_block_forward.1} parent=0 // pred_check_branch
    %9300 = sbr.rel (0) target = $region33
  $region32: #{encoder_block_forward.1} parent=0 // pred_region
    _
  $region33: #{encoder_block_forward.1} parent=0 // pred_fallthru
    _
  // Predicated region
  $region34: #{encoder_block_forward.1} parent=0 // pred_check
    _
  $region35: #{encoder_block_forward.1} parent=0 // pred_check_branch
    %9302 = sbr.rel (0) target = $region37
  $region36: #{encoder_block_forward.1} parent=0 // pred_region
    _
  $region37: #{encoder_block_forward.1} parent=0 // pred_fallthru
    _
  // Predicated region
  $region38: #{encoder_block_forward.1} parent=0 // pred_check
    _
  $region39: #{encoder_block_forward.1} parent=0 // pred_check_branch
    %9304 = sbr.rel (0) target = $region41
  $region40: #{encoder_block_forward.1} parent=0 // pred_region
    _
  $region41: #{encoder_block_forward.1} parent=0 // pred_fallthru
    _
  // Predicated region
  $region42: #{encoder_block_forward.1} parent=0 // pred_check
    _
  $region43: #{encoder_block_forward.1} parent=0 // pred_check_branch
    %9306 = sbr.rel (0) target = $region45
  $region44: #{encoder_block_forward.1} parent=0 // pred_region
    _
  $region45: #{encoder_block_forward.1} parent=0 // pred_fallthru
    _

</llo_original>
